<compile_context>
chip_gen: v7x
topology: tpu7x:2x2x1
jax: 0.10.0
libtpu: 0.0.40
codegen_flags: <defaults>
</compile_context>

<pallas_src>
import functools
import math

import jax
import jax.numpy as jnp
from jax.experimental import pallas as pl
from jax.experimental.pallas import tpu as pltpu

EPS = 1e-5
NEG_INF = -1e9
COMPUTE_DTYPE = jnp.bfloat16

WEIGHT_ORDER = ("ln1_w", "ln1_b", "wqkv", "bqkv", "wo", "bo",
                "ln2_w", "ln2_b", "w1", "b1", "w2", "b2")


def _default_vmem_limit():
    # ~48 MiB on v7x (64 MiB physical), ~96 MiB on v5e/v6e (128 MiB physical).
    try:
        cap = pltpu.get_tpu_info().vmem_capacity_bytes
        return int(cap * 3 // 4)
    except Exception:
        return 64 * 1024 * 1024


def _layernorm_f32(x, w, b):
    """LayerNorm with statistics in float32. Returns float32."""
    xf = x.astype(jnp.float32)
    mu = jnp.mean(xf, axis=-1, keepdims=True)
    var = jnp.mean(jnp.square(xf - mu), axis=-1, keepdims=True)
    return (xf - mu) * jax.lax.rsqrt(var + EPS) * w.astype(jnp.float32) \
        + b.astype(jnp.float32)


# --------------------- fused full-depth transformer kernel ------------------

def _encoder_kernel(x_ref, mask_ref, pos_ref, *rest, num_heads, n_layers,
                    depth, n_ctx, gelu_in_bf16):
    # rest = [ctx_ref?] + 12 stacked-weight refs + [o_ref, res_ref]
    idx = 0
    ctx_ref = None
    if n_ctx > 0:
        ctx_ref = rest[idx]
        idx += 1
    (ln1w_ref, ln1b_ref, wqkv_ref, bqkv_ref, wo_ref, bo_ref,
     ln2w_ref, ln2b_ref, w1_ref, b1_ref, w2_ref, b2_ref) = rest[idx:idx + 12]
    o_ref = rest[idx + 12]
    res_ref = rest[idx + 13]

    l = pl.program_id(1)                     # layer index (inner, "arbitrary")
    Bt, S, D = res_ref.shape
    H = num_heads
    hd = D // H
    BH = H * Bt
    M = Bt * S
    cd = x_ref.dtype                         # compute dtype (bf16)
    scale = 1.0 / math.sqrt(hd)

    # ---- layer 0: load the batch block, fuse positional-embedding add ----
    @pl.when(l == 0)
    def _():
        res_ref[...] = (x_ref[...].astype(jnp.float32)
                        + pos_ref[...].astype(jnp.float32)[None, :, :])

    # ---- MaPLe compound-prompt overwrite for layers 1..depth ----
    if n_ctx > 0:
        @pl.when((l >= 1) & (l <= depth))
        def _():
            row = jax.lax.broadcasted_iota(jnp.int32, (S, D), 0)
            keep = (row < 1) | (row >= 1 + n_ctx)       # keep SOS and suffix
            res_ref[...] = jnp.where(
                keep[None, :, :], res_ref[...],
                ctx_ref[0].astype(jnp.float32)[None, :, :])

    x2d = res_ref[...].reshape(M, D)                     # f32 residual

    # ---- multi-head self attention (pre-LN, head-batched) ----
    xln = _layernorm_f32(x2d, ln1w_ref[0], ln1b_ref[0])
    qkv = jnp.dot(xln.astype(cd), wqkv_ref[0],
                  preferred_element_type=jnp.float32) \
        + bqkv_ref[0].astype(jnp.float32)                # (M, 3D) f32

    # Split into per-head (S, hd) matrices once (lane slices + leading-axis
    # stack) and run a SINGLE batched softmax/attention over the (H*Bt) batch.
    heads = []
    for g in range(3):                                   # q, k, v blocks
        for h in range(H):
            off = g * D + h * hd
            heads.append(qkv[:, off:off + hd].reshape(Bt, S, hd))
    qkvh = jnp.stack(heads, axis=0)                      # (3H, Bt, S, hd) f32
    q = (qkvh[:H] * scale).reshape(BH, S, hd).astype(cd)
    k = qkvh[H:2 * H].reshape(BH, S, hd).astype(cd)
    v = qkvh[2 * H:].reshape(BH, S, hd).astype(cd)

    s = jnp.einsum('bqd,bkd->bqk', q, k,
                   preferred_element_type=jnp.float32)   # (BH, S, S) f32
    s = s + mask_ref[...][None, :, :]                    # causal + pad mask
    m = jnp.max(s, axis=-1, keepdims=True)
    e = jnp.exp(s - m)
    denom = jnp.sum(e, axis=-1, keepdims=True)
    p = (e * pl.reciprocal(denom, approx=True)).astype(cd)
    av = jnp.einsum('bqk,bkd->bqd', p, v,
                    preferred_element_type=jnp.float32)  # (BH, S, hd) f32
    avh = av.reshape(H, M, hd)
    attn_cat = jnp.concatenate([avh[h] for h in range(H)], axis=-1)  # (M, D)
    attn = jnp.dot(attn_cat.astype(cd), wo_ref[0],
                   preferred_element_type=jnp.float32) \
        + bo_ref[0].astype(jnp.float32)
    xr = x2d + attn                                      # residual (f32)

    # ---- MLP: Linear -> QuickGELU -> Linear (pre-LN) ----
    xln2 = _layernorm_f32(xr, ln2w_ref[0], ln2b_ref[0])
    h1 = jnp.dot(xln2.astype(cd), w1_ref[0],
                 preferred_element_type=jnp.float32) \
        + b1_ref[0].astype(jnp.float32)
    if gelu_in_bf16:
        h1 = h1.astype(cd)        # bf16 VPU/EUP path (v6e/v7x); False on v5e
    act = (h1 * jax.nn.sigmoid(1.702 * h1)).astype(cd)
    mlp = jnp.dot(act, w2_ref[0],
                  preferred_element_type=jnp.float32) \
        + b2_ref[0].astype(jnp.float32)
    out = (xr + mlp).reshape(Bt, S, D)

    res_ref[...] = out                                   # stays f32 in VMEM

    @pl.when(l == n_layers - 1)
    def _():
        o_ref[...] = out.astype(o_ref.dtype)


def clip_text_transformer(x, mask, pos, ctx_stack, weights, *, num_heads,
                          n_layers, depth, n_ctx, batch_block,
                          gelu_in_bf16=True, vmem_limit_bytes=None):
    B, S, D = x.shape
    bt = batch_block
    assert B % bt == 0, "batch must be divisible by the batch block"

    in_specs = [
        pl.BlockSpec((bt, S, D), lambda b, l: (b, 0, 0)),   # residual input
        pl.BlockSpec((S, S), lambda b, l: (0, 0)),          # additive mask
        pl.BlockSpec((S, D), lambda b, l: (0, 0)),          # positional emb
    ]
    operands = [x, mask, pos]
    if n_ctx > 0:
        hi = depth - 1
        in_specs.append(pl.BlockSpec(
            (1, S, D),
            lambda b, l: (jnp.minimum(jnp.maximum(l - 1, 0), hi), 0, 0)))
        operands.append(ctx_stack)
    for name in WEIGHT_ORDER:                              # all (L, ., .)
        in_specs.append(pl.BlockSpec((1,) + weights[name].shape[1:],
                                     lambda b, l: (l, 0, 0)))
        operands.append(weights[name])

    kern = functools.partial(_encoder_kernel, num_heads=num_heads,
                             n_layers=n_layers, depth=depth, n_ctx=n_ctx,
                             gelu_in_bf16=gelu_in_bf16)
    if vmem_limit_bytes is None:
        vmem_limit_bytes = _default_vmem_limit()

    return pl.pallas_call(
        kern,
        out_shape=jax.ShapeDtypeStruct((B, S, D), x.dtype),
        grid=(B // bt, n_layers),
        in_specs=in_specs,
        out_specs=pl.BlockSpec((bt, S, D), lambda b, l: (b, 0, 0)),
        scratch_shapes=[pltpu.VMEM((bt, S, D), jnp.float32)],  # f32 residual
        compiler_params=pltpu.CompilerParams(
            dimension_semantics=("parallel", "arbitrary"),
            vmem_limit_bytes=vmem_limit_bytes),
    )(*operands)


# ---------- fused EOT gather + ln_final + text_projection tail kernel -------

def _tail_kernel(eot_ref, x_hbm, lnw_ref, lnb_ref, proj_ref, o_ref,
                 gath_ref, sem):
    n_rows = gath_ref.shape[0]

    def _copy(b):
        return pltpu.make_async_copy(
            x_hbm.at[pl.ds(eot_ref[b], 1), :],     # one EOT row from HBM
            gath_ref.at[pl.ds(b, 1), :],
            sem)

    def _start(b, c):
        _copy(b).start()
        return c
    jax.lax.fori_loop(0, n_rows, _start, 0)

    def _wait(b, c):
        _copy(b).wait()
        return c
    jax.lax.fori_loop(0, n_rows, _wait, 0)

    xln = _layernorm_f32(gath_ref[...], lnw_ref[...], lnb_ref[...])
    o_ref[...] = jnp.dot(xln.astype(proj_ref.dtype), proj_ref[...],
                         preferred_element_type=jnp.float32).astype(o_ref.dtype)


def ln_project_eot(x, eot, lnf_w, lnf_b, text_projection):
    B, S, D = x.shape
    E = text_projection.shape[1]
    eot_flat = jnp.arange(B, dtype=jnp.int32) * S + eot.astype(jnp.int32)
    x2d = x.reshape(B * S, D)
    grid_spec = pltpu.PrefetchScalarGridSpec(
        num_scalar_prefetch=1,
        grid=(1,),
        in_specs=[pl.BlockSpec(memory_space=pl.ANY),        # residual in HBM
                  pl.BlockSpec(lnf_w.shape, lambda i, e: (0, 0)),
                  pl.BlockSpec(lnf_b.shape, lambda i, e: (0, 0)),
                  pl.BlockSpec(text_projection.shape, lambda i, e: (0, 0))],
        out_specs=pl.BlockSpec((B, E), lambda i, e: (0, 0)),
        scratch_shapes=[pltpu.VMEM((B, D), x.dtype),
                        pltpu.SemaphoreType.DMA],
    )
    return pl.pallas_call(
        _tail_kernel,
        out_shape=jax.ShapeDtypeStruct((B, E), jnp.float32),
        grid_spec=grid_spec,
    )(eot_flat, x2d, lnf_w, lnf_b, text_projection)


# ------------------------------ TextEncoder ---------------------------------

def text_encoder_forward(params, prompts, tokenized_prompts,
                         compound_prompts_deeper_text, *, batch_block=8,
                         seq_pad_multiple=128, gelu_in_bf16=True,
                         vmem_limit_bytes=None):
    B, S, D = prompts.shape
    cd = params["compute_dtype"]
    lw = params["layers"]
    L = lw["wqkv"].shape[0]
    H = params["num_heads"]
    depth = len(compound_prompts_deeper_text)
    n_ctx = int(compound_prompts_deeper_text[0].shape[0]) if depth else 0

    # Pad the sequence dim to a lane-dense multiple (exact: pad keys masked,
    # pad rows never gathered, LN/softmax reductions never cross tokens).
    if seq_pad_multiple and S % seq_pad_multiple:
        s_pad = ((S + seq_pad_multiple - 1) // seq_pad_multiple) * seq_pad_multiple
    else:
        s_pad = S

    x = jnp.zeros((B, s_pad, D), cd).at[:, :S, :].set(prompts.astype(cd))
    pos = jnp.zeros((s_pad, D), cd).at[:S, :].set(
        params["positional_embedding"].astype(cd))

    causal = jnp.triu(jnp.full((s_pad, s_pad), NEG_INF, jnp.float32), k=1)
    key_pad = jnp.where(jnp.arange(s_pad)[None, :] >= S, NEG_INF, 0.0)
    mask = (causal + key_pad).astype(jnp.float32)

    ctx_stack = None
    if depth:
        ctx = jnp.stack([c.astype(cd) for c in compound_prompts_deeper_text], 0)
        ctx_stack = jnp.zeros((depth, s_pad, D), cd).at[:, 1:1 + n_ctx, :].set(ctx)

    # Batch block: largest divisor of B not exceeding batch_block so the
    # batch grid axis has multiple pipelined (and megacore-shardable) steps.
    bt = max(d for d in range(1, min(batch_block, B) + 1) if B % d == 0)

    y = clip_text_transformer(
        x, mask, pos, ctx_stack, lw, num_heads=H, n_layers=L, depth=depth,
        n_ctx=n_ctx, batch_block=bt, gelu_in_bf16=gelu_in_bf16,
        vmem_limit_bytes=vmem_limit_bytes)

    # EOT index from the tokenized prompts (plain-JAX glue; gather itself is
    # done inside the tail kernel via scalar prefetch + row DMAs).
    eot = jnp.argmax(tokenized_prompts, axis=-1).astype(jnp.int32)
    return ln_project_eot(y, eot, params["lnf_w"], params["lnf_b"],
                          params["text_projection"])


# --------------------------- parameter construction -------------------------

def init_params(key, *, n_layers, seq_len, width, heads, embed_dim,
                compute_dtype=COMPUTE_DTYPE):
    D, E, L = width, embed_dim, n_layers
    k = jax.random.split(key, 6)

    def nrm(kk, shape):
        return (0.02 * jax.random.normal(kk, shape)).astype(compute_dtype)

    layers = dict(
        ln1_w=jnp.ones((L, 1, D), jnp.float32),
        ln1_b=jnp.zeros((L, 1, D), jnp.float32),
        wqkv=nrm(k[2], (L, D, 3 * D)),
        bqkv=jnp.zeros((L, 1, 3 * D), jnp.float32),
        wo=nrm(k[3], (L, D, D)),
        bo=jnp.zeros((L, 1, D), jnp.float32),
        ln2_w=jnp.ones((L, 1, D), jnp.float32),
        ln2_b=jnp.zeros((L, 1, D), jnp.float32),
        w1=nrm(k[4], (L, D, 4 * D)),
        b1=jnp.zeros((L, 1, 4 * D), jnp.float32),
        w2=nrm(k[5], (L, 4 * D, D)),
        b2=jnp.zeros((L, 1, D), jnp.float32),
    )
    return dict(
        positional_embedding=nrm(k[0], (seq_len, D)),
        text_projection=nrm(k[1], (D, E)),
        lnf_w=jnp.ones((1, D), jnp.float32),
        lnf_b=jnp.zeros((1, D), jnp.float32),
        num_heads=heads,
        compute_dtype=compute_dtype,
        layers=layers,
    )


# ----------------------------------- main ------------------------------------

if __name__ == "__main__":
    B, S, D, H, L, E = 2, 8, 64, 4, 3, 64     # batch, seq, width, heads, layers, proj
    N_CTX, COMPOUND_DEPTH = 2, 2              # MaPLe compound-prompt config

    root = jax.random.PRNGKey(0)
    k_param, k_prompt, k_tok, k_cp = jax.random.split(root, 4)

    params = init_params(k_param, n_layers=L, seq_len=S, width=D, heads=H,
                         embed_dim=E)

    prompts = 0.02 * jax.random.normal(k_prompt, (B, S, D), jnp.float32)
    tokenized_prompts = jax.random.randint(k_tok, (B, S), 0, 1000, jnp.int32)
    cp_keys = jax.random.split(k_cp, COMPOUND_DEPTH)
    compound_prompts_deeper_text = [
        0.02 * jax.random.normal(cp_keys[i], (N_CTX, D), jnp.float32)
        for i in range(COMPOUND_DEPTH)
    ]

    out = text_encoder_forward(params, prompts, tokenized_prompts,
                               compound_prompts_deeper_text)
    out = jax.block_until_ready(out)
    assert out.shape == (B, E), out.shape
    print("KERNEL_OK")
</pallas_src>

<mosaic_0001>
module attributes {stable_mosaic.version = 11 : i64} {
  func.func @_encoder_kernel(%arg0: i32, %arg1: i32, %arg2: memref<2x128x64xbf16, #tpu.memory_space<vmem>>, %arg3: memref<128x128xf32, #tpu.memory_space<vmem>>, %arg4: memref<128x64xbf16, #tpu.memory_space<vmem>>, %arg5: memref<1x128x64xbf16, #tpu.memory_space<vmem>>, %arg6: memref<1x1x64xf32, #tpu.memory_space<vmem>>, %arg7: memref<1x1x64xf32, #tpu.memory_space<vmem>>, %arg8: memref<1x64x192xbf16, #tpu.memory_space<vmem>>, %arg9: memref<1x1x192xf32, #tpu.memory_space<vmem>>, %arg10: memref<1x64x64xbf16, #tpu.memory_space<vmem>>, %arg11: memref<1x1x64xf32, #tpu.memory_space<vmem>>, %arg12: memref<1x1x64xf32, #tpu.memory_space<vmem>>, %arg13: memref<1x1x64xf32, #tpu.memory_space<vmem>>, %arg14: memref<1x64x256xbf16, #tpu.memory_space<vmem>>, %arg15: memref<1x1x256xf32, #tpu.memory_space<vmem>>, %arg16: memref<1x256x64xbf16, #tpu.memory_space<vmem>>, %arg17: memref<1x1x64xf32, #tpu.memory_space<vmem>>, %arg18: memref<2x128x64xbf16, #tpu.memory_space<vmem>>, %arg19: memref<2x128x64xf32, #tpu.memory_space<vmem>>) attributes {dimension_semantics = [#tpu.dimension_semantics<parallel>, #tpu.dimension_semantics<arbitrary>], iteration_bounds = array<i64: 1, 3>, scalar_prefetch = 0 : i64, scratch_operands = 1 : i64, tpu.core_type = #tpu.core_type<tc>, window_params = [{transform_indices = @transform_0, window_bounds = array<i64: 2, 128, 64>}, {pipeline_mode = #tpu.pipeline_mode<synchronous>, transform_indices = @transform_1, window_bounds = array<i64: 128, 128>}, {pipeline_mode = #tpu.pipeline_mode<synchronous>, transform_indices = @transform_2, window_bounds = array<i64: 128, 64>}, {transform_indices = @transform_3, window_bounds = array<i64: 1, 128, 64>}, {transform_indices = @transform_4, window_bounds = array<i64: 1, 1, 64>}, {transform_indices = @transform_5, window_bounds = array<i64: 1, 1, 64>}, {transform_indices = @transform_6, window_bounds = array<i64: 1, 64, 192>}, {transform_indices = @transform_7, window_bounds = array<i64: 1, 1, 192>}, {transform_indices = @transform_8, window_bounds = array<i64: 1, 64, 64>}, {transform_indices = @transform_9, window_bounds = array<i64: 1, 1, 64>}, {transform_indices = @transform_10, window_bounds = array<i64: 1, 1, 64>}, {transform_indices = @transform_11, window_bounds = array<i64: 1, 1, 64>}, {transform_indices = @transform_12, window_bounds = array<i64: 1, 64, 256>}, {transform_indices = @transform_13, window_bounds = array<i64: 1, 1, 256>}, {transform_indices = @transform_14, window_bounds = array<i64: 1, 256, 64>}, {transform_indices = @transform_15, window_bounds = array<i64: 1, 1, 64>}, {transform_indices = @transform_16, window_bounds = array<i64: 2, 128, 64>}]} {
    %c0_i32 = arith.constant 0 : i32
    %0 = arith.cmpi eq, %arg1, %c0_i32 : i32
    %1 = arith.extui %0 : i1 to i32
    %c0_i32_0 = arith.constant 0 : i32
    %2 = arith.cmpi ne, %1, %c0_i32_0 : i32
    scf.if %2 {
      %c0_67 = arith.constant 0 : index
      %c0_68 = arith.constant 0 : index
      %c0_69 = arith.constant 0 : index
      %184 = vector.load %arg2[%c0_67, %c0_68, %c0_69] : memref<2x128x64xbf16, #tpu.memory_space<vmem>>, vector<2x128x64xbf16>
      %185 = arith.extf %184 : vector<2x128x64xbf16> to vector<2x128x64xf32>
      %c0_70 = arith.constant 0 : index
      %c0_71 = arith.constant 0 : index
      %186 = vector.load %arg4[%c0_70, %c0_71] : memref<128x64xbf16, #tpu.memory_space<vmem>>, vector<128x64xbf16>
      %187 = arith.extf %186 : vector<128x64xbf16> to vector<128x64xf32>
      %188 = vector.shape_cast %187 : vector<128x64xf32> to vector<1x128x64xf32>
      %189 = vector.broadcast %188 : vector<1x128x64xf32> to vector<2x128x64xf32>
      %190 = arith.addf %185, %189 : vector<2x128x64xf32>
      %c0_72 = arith.constant 0 : index
      %c0_73 = arith.constant 0 : index
      %c0_74 = arith.constant 0 : index
      %191 = vector.load %arg19[%c0_72, %c0_73, %c0_74] : memref<2x128x64xf32, #tpu.memory_space<vmem>>, vector<2x128x64xf32>
      tpu.vector_store %arg19[%c0_72, %c0_73, %c0_74], %190 {strides = array<i32>} : memref<2x128x64xf32, #tpu.memory_space<vmem>>, vector<2x128x64xf32>,
    } else {
    }
    %c1_i32 = arith.constant 1 : i32
    %3 = arith.cmpi sge, %arg1, %c1_i32 : i32
    %c2_i32 = arith.constant 2 : i32
    %4 = arith.cmpi sle, %arg1, %c2_i32 : i32
    %5 = arith.andi %3, %4 : i1
    %6 = arith.extui %5 : i1 to i32
    %c0_i32_1 = arith.constant 0 : i32
    %7 = arith.cmpi ne, %6, %c0_i32_1 : i32
    scf.if %7 {
      %184 = tpu.iota {dimensions = array<i32: 0>} : vector<128x64xi32>
      %c1_i32_67 = arith.constant 1 : i32
      %185 = vector.broadcast %c1_i32_67 : i32 to vector<128x64xi32>
      %186 = arith.cmpi slt, %184, %185 : vector<128x64xi32>
      %c3_i32 = arith.constant 3 : i32
      %187 = vector.broadcast %c3_i32 : i32 to vector<128x64xi32>
      %188 = arith.cmpi sge, %184, %187 : vector<128x64xi32>
      %189 = arith.ori %186, %188 : vector<128x64xi1>
      %190 = vector.shape_cast %189 : vector<128x64xi1> to vector<1x128x64xi1>
      %c0_68 = arith.constant 0 : index
      %c0_69 = arith.constant 0 : index
      %c0_70 = arith.constant 0 : index
      %191 = vector.load %arg19[%c0_68, %c0_69, %c0_70] : memref<2x128x64xf32, #tpu.memory_space<vmem>>, vector<2x128x64xf32>
      %c0_71 = arith.constant 0 : index
      %c0_72 = arith.constant 0 : index
      %c0_73 = arith.constant 0 : index
      %192 = vector.load %arg5[%c0_71, %c0_72, %c0_73] : memref<1x128x64xbf16, #tpu.memory_space<vmem>>, vector<1x128x64xbf16>
      %193 = vector.shape_cast %192 : vector<1x128x64xbf16> to vector<128x64xbf16>
      %194 = arith.extf %193 : vector<128x64xbf16> to vector<128x64xf32>
      %195 = vector.shape_cast %194 : vector<128x64xf32> to vector<1x128x64xf32>
      %196 = vector.shape_cast %190 : vector<1x128x64xi1> to vector<1x128x64xi1>
      %197 = vector.broadcast %196 : vector<1x128x64xi1> to vector<2x128x64xi1>
      %198 = vector.shape_cast %195 : vector<1x128x64xf32> to vector<1x128x64xf32>
      %199 = vector.broadcast %198 : vector<1x128x64xf32> to vector<2x128x64xf32>
      %200 = arith.select %197, %191, %199 : vector<2x128x64xi1>, vector<2x128x64xf32>
      %c0_74 = arith.constant 0 : index
      %c0_75 = arith.constant 0 : index
      %c0_76 = arith.constant 0 : index
      %201 = vector.load %arg19[%c0_74, %c0_75, %c0_76] : memref<2x128x64xf32, #tpu.memory_space<vmem>>, vector<2x128x64xf32>
      tpu.vector_store %arg19[%c0_74, %c0_75, %c0_76], %200 {strides = array<i32>} : memref<2x128x64xf32, #tpu.memory_space<vmem>>, vector<2x128x64xf32>,
    } else {
    }
    %c0 = arith.constant 0 : index
    %c0_2 = arith.constant 0 : index
    %c0_3 = arith.constant 0 : index
    %8 = vector.load %arg19[%c0, %c0_2, %c0_3] : memref<2x128x64xf32, #tpu.memory_space<vmem>>, vector<2x128x64xf32>
    %9 = vector.shape_cast %8 : vector<2x128x64xf32> to vector<256x64xf32>
    %c0_4 = arith.constant 0 : index
    %c0_5 = arith.constant 0 : index
    %c0_6 = arith.constant 0 : index
    %10 = vector.load %arg6[%c0_4, %c0_5, %c0_6] : memref<1x1x64xf32, #tpu.memory_space<vmem>>, vector<1x1x64xf32>
    %11 = vector.shape_cast %10 : vector<1x1x64xf32> to vector<1x64xf32>
    %c0_7 = arith.constant 0 : index
    %c0_8 = arith.constant 0 : index
    %c0_9 = arith.constant 0 : index
    %12 = vector.load %arg7[%c0_7, %c0_8, %c0_9] : memref<1x1x64xf32, #tpu.memory_space<vmem>>, vector<1x1x64xf32>
    %13 = vector.shape_cast %12 : vector<1x1x64xf32> to vector<1x64xf32>
    %cst = arith.constant dense<0.000000e+00> : vector<256xf32>
    %14 = vector.multi_reduction <add>, %9, %cst [1] : vector<256x64xf32> to vector<256xf32>
    %15 = vector.shape_cast %14 : vector<256xf32> to vector<256x1xf32>
    %cst_10 = arith.constant 6.400000e+01 : f32
    %16 = vector.broadcast %cst_10 : f32 to vector<256x1xf32>
    %17 = arith.divf %15, %16 : vector<256x1xf32>
    %18 = vector.broadcast %17 : vector<256x1xf32> to vector<256x64xf32>
    %19 = arith.subf %9, %18 : vector<256x64xf32>
    %20 = arith.mulf %19, %19 : vector<256x64xf32>
    %cst_11 = arith.constant dense<0.000000e+00> : vector<256xf32>
    %21 = vector.multi_reduction <add>, %20, %cst_11 [1] : vector<256x64xf32> to vector<256xf32>
    %22 = vector.shape_cast %21 : vector<256xf32> to vector<256x1xf32>
    %cst_12 = arith.constant 6.400000e+01 : f32
    %23 = vector.broadcast %cst_12 : f32 to vector<256x1xf32>
    %24 = arith.divf %22, %23 : vector<256x1xf32>
    %25 = vector.broadcast %17 : vector<256x1xf32> to vector<256x64xf32>
    %26 = arith.subf %9, %25 : vector<256x64xf32>
    %cst_13 = arith.constant 9.99999974E-6 : f32
    %27 = vector.broadcast %cst_13 : f32 to vector<256x1xf32>
    %28 = arith.addf %24, %27 : vector<256x1xf32>
    %29 = math.rsqrt %28 : vector<256x1xf32>
    %30 = vector.broadcast %29 : vector<256x1xf32> to vector<256x64xf32>
    %31 = arith.mulf %26, %30 : vector<256x64xf32>
    %32 = vector.broadcast %11 : vector<1x64xf32> to vector<256x64xf32>
    %33 = arith.mulf %31, %32 : vector<256x64xf32>
    %34 = vector.broadcast %13 : vector<1x64xf32> to vector<256x64xf32>
    %35 = arith.addf %33, %34 : vector<256x64xf32>
    %36 = arith.truncf %35 : vector<256x64xf32> to vector<256x64xbf16>
    %c0_14 = arith.constant 0 : index
    %c0_15 = arith.constant 0 : index
    %c0_16 = arith.constant 0 : index
    %37 = vector.load %arg8[%c0_14, %c0_15, %c0_16] : memref<1x64x192xbf16, #tpu.memory_space<vmem>>, vector<1x64x192xbf16>
    %38 = vector.shape_cast %37 : vector<1x64x192xbf16> to vector<64x192xbf16>
    %cst_17 = arith.constant dense<0.000000e+00> : vector<256x192xf32>
    %39 = tpu.matmul %36, %38, %cst_17 {dimension_numbers = #tpu.dot_dimension_numbers<[1], [0], [0], [1], [0, 0, 1, 1], [], []>} : vector<256x64xbf16>, vector<64x192xbf16>, vector<256x192xf32> -> vector<256x192xf32>
    %c0_18 = arith.constant 0 : index
    %c0_19 = arith.constant 0 : index
    %c0_20 = arith.constant 0 : index
    %40 = vector.load %arg9[%c0_18, %c0_19, %c0_20] : memref<1x1x192xf32, #tpu.memory_space<vmem>>, vector<1x1x192xf32>
    %41 = vector.shape_cast %40 : vector<1x1x192xf32> to vector<1x192xf32>
    %42 = vector.broadcast %41 : vector<1x192xf32> to vector<256x192xf32>
    %43 = arith.addf %39, %42 : vector<256x192xf32>
    %44 = vector.extract_strided_slice %43 {offsets = [0, 0], sizes = [256, 16], strides = [1, 1]} : vector<256x192xf32> to vector<256x16xf32>
    %45 = vector.shape_cast %44 : vector<256x16xf32> to vector<2x128x16xf32>
    %46 = vector.extract_strided_slice %43 {offsets = [0, 16], sizes = [256, 16], strides = [1, 1]} : vector<256x192xf32> to vector<256x16xf32>
    %47 = vector.shape_cast %46 : vector<256x16xf32> to vector<2x128x16xf32>
    %48 = vector.extract_strided_slice %43 {offsets = [0, 32], sizes = [256, 16], strides = [1, 1]} : vector<256x192xf32> to vector<256x16xf32>
    %49 = vector.shape_cast %48 : vector<256x16xf32> to vector<2x128x16xf32>
    %50 = vector.extract_strided_slice %43 {offsets = [0, 48], sizes = [256, 16], strides = [1, 1]} : vector<256x192xf32> to vector<256x16xf32>
    %51 = vector.shape_cast %50 : vector<256x16xf32> to vector<2x128x16xf32>
    %52 = vector.extract_strided_slice %43 {offsets = [0, 64], sizes = [256, 16], strides = [1, 1]} : vector<256x192xf32> to vector<256x16xf32>
    %53 = vector.shape_cast %52 : vector<256x16xf32> to vector<2x128x16xf32>
    %54 = vector.extract_strided_slice %43 {offsets = [0, 80], sizes = [256, 16], strides = [1, 1]} : vector<256x192xf32> to vector<256x16xf32>
    %55 = vector.shape_cast %54 : vector<256x16xf32> to vector<2x128x16xf32>
    %56 = vector.extract_strided_slice %43 {offsets = [0, 96], sizes = [256, 16], strides = [1, 1]} : vector<256x192xf32> to vector<256x16xf32>
    %57 = vector.shape_cast %56 : vector<256x16xf32> to vector<2x128x16xf32>
    %58 = vector.extract_strided_slice %43 {offsets = [0, 112], sizes = [256, 16], strides = [1, 1]} : vector<256x192xf32> to vector<256x16xf32>
    %59 = vector.shape_cast %58 : vector<256x16xf32> to vector<2x128x16xf32>
    %60 = vector.extract_strided_slice %43 {offsets = [0, 128], sizes = [256, 16], strides = [1, 1]} : vector<256x192xf32> to vector<256x16xf32>
    %61 = vector.shape_cast %60 : vector<256x16xf32> to vector<2x128x16xf32>
    %62 = vector.extract_strided_slice %43 {offsets = [0, 144], sizes = [256, 16], strides = [1, 1]} : vector<256x192xf32> to vector<256x16xf32>
    %63 = vector.shape_cast %62 : vector<256x16xf32> to vector<2x128x16xf32>
    %64 = vector.extract_strided_slice %43 {offsets = [0, 160], sizes = [256, 16], strides = [1, 1]} : vector<256x192xf32> to vector<256x16xf32>
    %65 = vector.shape_cast %64 : vector<256x16xf32> to vector<2x128x16xf32>
    %66 = vector.extract_strided_slice %43 {offsets = [0, 176], sizes = [256, 16], strides = [1, 1]} : vector<256x192xf32> to vector<256x16xf32>
    %67 = vector.shape_cast %66 : vector<256x16xf32> to vector<2x128x16xf32>
    %68 = vector.shape_cast %45 : vector<2x128x16xf32> to vector<1x2x128x16xf32>
    %69 = vector.shape_cast %47 : vector<2x128x16xf32> to vector<1x2x128x16xf32>
    %70 = vector.shape_cast %49 : vector<2x128x16xf32> to vector<1x2x128x16xf32>
    %71 = vector.shape_cast %51 : vector<2x128x16xf32> to vector<1x2x128x16xf32>
    %72 = vector.shape_cast %53 : vector<2x128x16xf32> to vector<1x2x128x16xf32>
    %73 = vector.shape_cast %55 : vector<2x128x16xf32> to vector<1x2x128x16xf32>
    %74 = vector.shape_cast %57 : vector<2x128x16xf32> to vector<1x2x128x16xf32>
    %75 = vector.shape_cast %59 : vector<2x128x16xf32> to vector<1x2x128x16xf32>
    %76 = vector.shape_cast %61 : vector<2x128x16xf32> to vector<1x2x128x16xf32>
    %77 = vector.shape_cast %63 : vector<2x128x16xf32> to vector<1x2x128x16xf32>
    %78 = vector.shape_cast %65 : vector<2x128x16xf32> to vector<1x2x128x16xf32>
    %79 = vector.shape_cast %67 : vector<2x128x16xf32> to vector<1x2x128x16xf32>
    %80 = tpu.concatenate %68, %69, %70, %71, %72, %73, %74, %75, %76, %77, %78, %79 in 0 : vector<1x2x128x16xf32>, vector<1x2x128x16xf32>, vector<1x2x128x16xf32>, vector<1x2x128x16xf32>, vector<1x2x128x16xf32>, vector<1x2x128x16xf32>, vector<1x2x128x16xf32>, vector<1x2x128x16xf32>, vector<1x2x128x16xf32>, vector<1x2x128x16xf32>, vector<1x2x128x16xf32>, vector<1x2x128x16xf32> -> vector<12x2x128x16xf32>
    %81 = vector.extract_strided_slice %80 {offsets = [0, 0, 0, 0], sizes = [4, 2, 128, 16], strides = [1, 1, 1, 1]} : vector<12x2x128x16xf32> to vector<4x2x128x16xf32>
    %cst_21 = arith.constant 2.500000e-01 : f32
    %82 = vector.broadcast %cst_21 : f32 to vector<4x2x128x16xf32>
    %83 = arith.mulf %81, %82 : vector<4x2x128x16xf32>
    %84 = vector.shape_cast %83 : vector<4x2x128x16xf32> to vector<8x128x16xf32>
    %85 = arith.truncf %84 : vector<8x128x16xf32> to vector<8x128x16xbf16>
    %86 = vector.extract_strided_slice %80 {offsets = [4, 0, 0, 0], sizes = [4, 2, 128, 16], strides = [1, 1, 1, 1]} : vector<12x2x128x16xf32> to vector<4x2x128x16xf32>
    %87 = vector.shape_cast %86 : vector<4x2x128x16xf32> to vector<8x128x16xf32>
    %88 = arith.truncf %87 : vector<8x128x16xf32> to vector<8x128x16xbf16>
    %89 = vector.extract_strided_slice %80 {offsets = [8, 0, 0, 0], sizes = [4, 2, 128, 16], strides = [1, 1, 1, 1]} : vector<12x2x128x16xf32> to vector<4x2x128x16xf32>
    %90 = vector.shape_cast %89 : vector<4x2x128x16xf32> to vector<8x128x16xf32>
    %91 = arith.truncf %90 : vector<8x128x16xf32> to vector<8x128x16xbf16>
    "tpu.trace_start"() <{level = 10 : i32, message = "bqd,bkd->bqk"}> : () -> ()
    %cst_22 = arith.constant dense<0.000000e+00> : vector<8x128x128xf32>
    %92 = tpu.matmul %85, %88, %cst_22 {dimension_numbers = #tpu.dot_dimension_numbers<[2], [2], [1], [1], [0, 0, 0, 1, 1, 1], [0], [0]>} : vector<8x128x16xbf16>, vector<8x128x16xbf16>, vector<8x128x128xf32> -> vector<8x128x128xf32>
    "tpu.trace_stop"() : () -> ()
    %c0_23 = arith.constant 0 : index
    %c0_24 = arith.constant 0 : index
    %93 = vector.load %arg3[%c0_23, %c0_24] : memref<128x128xf32, #tpu.memory_space<vmem>>, vector<128x128xf32>
    %94 = vector.shape_cast %93 : vector<128x128xf32> to vector<1x128x128xf32>
    %95 = vector.broadcast %94 : vector<1x128x128xf32> to vector<8x128x128xf32>
    %96 = arith.addf %92, %95 : vector<8x128x128xf32>
    %cst_25 = arith.constant dense<0xFF800000> : vector<8x128xf32>
    %97 = vector.multi_reduction <maximumf>, %96, %cst_25 [2] : vector<8x128x128xf32> to vector<8x128xf32>
    %98 = vector.shape_cast %97 : vector<8x128xf32> to vector<8x128x1xf32>
    %99 = vector.broadcast %98 : vector<8x128x1xf32> to vector<8x128x128xf32>
    %100 = arith.subf %96, %99 : vector<8x128x128xf32>
    %101 = math.exp %100 : vector<8x128x128xf32>
    %cst_26 = arith.constant dense<0.000000e+00> : vector<8x128xf32>
    %102 = vector.multi_reduction <add>, %101, %cst_26 [2] : vector<8x128x128xf32> to vector<8x128xf32>
    %103 = vector.shape_cast %102 : vector<8x128xf32> to vector<8x128x1xf32>
    %104 = tpu.reciprocal %103 {approx = true} : vector<8x128x1xf32> -> vector<8x128x1xf32>
    %105 = vector.broadcast %104 : vector<8x128x1xf32> to vector<8x128x128xf32>
    %106 = arith.mulf %101, %105 : vector<8x128x128xf32>
    %107 = arith.truncf %106 : vector<8x128x128xf32> to vector<8x128x128xbf16>
    "tpu.trace_start"() <{level = 10 : i32, message = "bqk,bkd->bqd"}> : () -> ()
    %cst_27 = arith.constant dense<0.000000e+00> : vector<8x128x16xf32>
    %108 = tpu.matmul %107, %91, %cst_27 {dimension_numbers = #tpu.dot_dimension_numbers<[2], [1], [1], [2], [0, 0, 0, 1, 1, 2], [0], [0]>} : vector<8x128x128xbf16>, vector<8x128x16xbf16>, vector<8x128x16xf32> -> vector<8x128x16xf32>
    "tpu.trace_stop"() : () -> ()
    %109 = vector.shape_cast %108 : vector<8x128x16xf32> to vector<4x256x16xf32>
    %110 = vector.extract_strided_slice %109 {offsets = [0, 0, 0], sizes = [1, 256, 16], strides = [1, 1, 1]} : vector<4x256x16xf32> to vector<1x256x16xf32>
    %111 = vector.shape_cast %110 : vector<1x256x16xf32> to vector<256x16xf32>
    %112 = vector.extract_strided_slice %109 {offsets = [1, 0, 0], sizes = [1, 256, 16], strides = [1, 1, 1]} : vector<4x256x16xf32> to vector<1x256x16xf32>
    %113 = vector.shape_cast %112 : vector<1x256x16xf32> to vector<256x16xf32>
    %114 = vector.extract_strided_slice %109 {offsets = [2, 0, 0], sizes = [1, 256, 16], strides = [1, 1, 1]} : vector<4x256x16xf32> to vector<1x256x16xf32>
    %115 = vector.shape_cast %114 : vector<1x256x16xf32> to vector<256x16xf32>
    %116 = vector.extract_strided_slice %109 {offsets = [3, 0, 0], sizes = [1, 256, 16], strides = [1, 1, 1]} : vector<4x256x16xf32> to vector<1x256x16xf32>
    %117 = vector.shape_cast %116 : vector<1x256x16xf32> to vector<256x16xf32>
    %118 = tpu.concatenate %111, %113, %115, %117 in 1 : vector<256x16xf32>, vector<256x16xf32>, vector<256x16xf32>, vector<256x16xf32> -> vector<256x64xf32>
    %119 = arith.truncf %118 : vector<256x64xf32> to vector<256x64xbf16>
    %c0_28 = arith.constant 0 : index
    %c0_29 = arith.constant 0 : index
    %c0_30 = arith.constant 0 : index
    %120 = vector.load %arg10[%c0_28, %c0_29, %c0_30] : memref<1x64x64xbf16, #tpu.memory_space<vmem>>, vector<1x64x64xbf16>
    %121 = vector.shape_cast %120 : vector<1x64x64xbf16> to vector<64x64xbf16>
    %cst_31 = arith.constant dense<0.000000e+00> : vector<256x64xf32>
    %122 = tpu.matmul %119, %121, %cst_31 {dimension_numbers = #tpu.dot_dimension_numbers<[1], [0], [0], [1], [0, 0, 1, 1], [], []>} : vector<256x64xbf16>, vector<64x64xbf16>, vector<256x64xf32> -> vector<256x64xf32>
    %c0_32 = arith.constant 0 : index
    %c0_33 = arith.constant 0 : index
    %c0_34 = arith.constant 0 : index
    %123 = vector.load %arg11[%c0_32, %c0_33, %c0_34] : memref<1x1x64xf32, #tpu.memory_space<vmem>>, vector<1x1x64xf32>
    %124 = vector.shape_cast %123 : vector<1x1x64xf32> to vector<1x64xf32>
    %125 = vector.broadcast %124 : vector<1x64xf32> to vector<256x64xf32>
    %126 = arith.addf %122, %125 : vector<256x64xf32>
    %127 = arith.addf %9, %126 : vector<256x64xf32>
    %c0_35 = arith.constant 0 : index
    %c0_36 = arith.constant 0 : index
    %c0_37 = arith.constant 0 : index
    %128 = vector.load %arg12[%c0_35, %c0_36, %c0_37] : memref<1x1x64xf32, #tpu.memory_space<vmem>>, vector<1x1x64xf32>
    %129 = vector.shape_cast %128 : vector<1x1x64xf32> to vector<1x64xf32>
    %c0_38 = arith.constant 0 : index
    %c0_39 = arith.constant 0 : index
    %c0_40 = arith.constant 0 : index
    %130 = vector.load %arg13[%c0_38, %c0_39, %c0_40] : memref<1x1x64xf32, #tpu.memory_space<vmem>>, vector<1x1x64xf32>
    %131 = vector.shape_cast %130 : vector<1x1x64xf32> to vector<1x64xf32>
    %cst_41 = arith.constant dense<0.000000e+00> : vector<256xf32>
    %132 = vector.multi_reduction <add>, %127, %cst_41 [1] : vector<256x64xf32> to vector<256xf32>
    %133 = vector.shape_cast %132 : vector<256xf32> to vector<256x1xf32>
    %cst_42 = arith.constant 6.400000e+01 : f32
    %134 = vector.broadcast %cst_42 : f32 to vector<256x1xf32>
    %135 = arith.divf %133, %134 : vector<256x1xf32>
    %136 = vector.broadcast %135 : vector<256x1xf32> to vector<256x64xf32>
    %137 = arith.subf %127, %136 : vector<256x64xf32>
    %138 = arith.mulf %137, %137 : vector<256x64xf32>
    %cst_43 = arith.constant dense<0.000000e+00> : vector<256xf32>
    %139 = vector.multi_reduction <add>, %138, %cst_43 [1] : vector<256x64xf32> to vector<256xf32>
    %140 = vector.shape_cast %139 : vector<256xf32> to vector<256x1xf32>
    %cst_44 = arith.constant 6.400000e+01 : f32
    %141 = vector.broadcast %cst_44 : f32 to vector<256x1xf32>
    %142 = arith.divf %140, %141 : vector<256x1xf32>
    %143 = vector.broadcast %135 : vector<256x1xf32> to vector<256x64xf32>
    %144 = arith.subf %127, %143 : vector<256x64xf32>
    %cst_45 = arith.constant 9.99999974E-6 : f32
    %145 = vector.broadcast %cst_45 : f32 to vector<256x1xf32>
    %146 = arith.addf %142, %145 : vector<256x1xf32>
    %147 = math.rsqrt %146 : vector<256x1xf32>
    %148 = vector.broadcast %147 : vector<256x1xf32> to vector<256x64xf32>
    %149 = arith.mulf %144, %148 : vector<256x64xf32>
    %150 = vector.broadcast %129 : vector<1x64xf32> to vector<256x64xf32>
    %151 = arith.mulf %149, %150 : vector<256x64xf32>
    %152 = vector.broadcast %131 : vector<1x64xf32> to vector<256x64xf32>
    %153 = arith.addf %151, %152 : vector<256x64xf32>
    %154 = arith.truncf %153 : vector<256x64xf32> to vector<256x64xbf16>
    %c0_46 = arith.constant 0 : index
    %c0_47 = arith.constant 0 : index
    %c0_48 = arith.constant 0 : index
    %155 = vector.load %arg14[%c0_46, %c0_47, %c0_48] : memref<1x64x256xbf16, #tpu.memory_space<vmem>>, vector<1x64x256xbf16>
    %156 = vector.shape_cast %155 : vector<1x64x256xbf16> to vector<64x256xbf16>
    %cst_49 = arith.constant dense<0.000000e+00> : vector<256x256xf32>
    %157 = tpu.matmul %154, %156, %cst_49 {dimension_numbers = #tpu.dot_dimension_numbers<[1], [0], [0], [1], [0, 0, 1, 1], [], []>} : vector<256x64xbf16>, vector<64x256xbf16>, vector<256x256xf32> -> vector<256x256xf32>
    %c0_50 = arith.constant 0 : index
    %c0_51 = arith.constant 0 : index
    %c0_52 = arith.constant 0 : index
    %158 = vector.load %arg15[%c0_50, %c0_51, %c0_52] : memref<1x1x256xf32, #tpu.memory_space<vmem>>, vector<1x1x256xf32>
    %159 = vector.shape_cast %158 : vector<1x1x256xf32> to vector<1x256xf32>
    %160 = vector.broadcast %159 : vector<1x256xf32> to vector<256x256xf32>
    %161 = arith.addf %157, %160 : vector<256x256xf32>
    %162 = arith.truncf %161 : vector<256x256xf32> to vector<256x256xbf16>
    %cst_53 = arith.constant 1.703130e+00 : bf16
    %163 = vector.broadcast %cst_53 : bf16 to vector<256x256xbf16>
    %164 = arith.mulf %163, %162 : vector<256x256xbf16>
    %165 = arith.negf %164 : vector<256x256xbf16>
    %166 = math.exp %165 : vector<256x256xbf16>
    %cst_54 = arith.constant 1.000000e+00 : bf16
    %167 = vector.broadcast %cst_54 : bf16 to vector<256x256xbf16>
    %168 = arith.addf %167, %166 : vector<256x256xbf16>
    %169 = arith.divf %167, %168 : vector<256x256xbf16>
    %170 = arith.mulf %162, %169 : vector<256x256xbf16>
    %c0_55 = arith.constant 0 : index
    %c0_56 = arith.constant 0 : index
    %c0_57 = arith.constant 0 : index
    %171 = vector.load %arg16[%c0_55, %c0_56, %c0_57] : memref<1x256x64xbf16, #tpu.memory_space<vmem>>, vector<1x256x64xbf16>
    %172 = vector.shape_cast %171 : vector<1x256x64xbf16> to vector<256x64xbf16>
    %cst_58 = arith.constant dense<0.000000e+00> : vector<256x64xf32>
    %173 = tpu.matmul %170, %172, %cst_58 {dimension_numbers = #tpu.dot_dimension_numbers<[1], [0], [0], [1], [0, 0, 1, 1], [], []>} : vector<256x256xbf16>, vector<256x64xbf16>, vector<256x64xf32> -> vector<256x64xf32>
    %c0_59 = arith.constant 0 : index
    %c0_60 = arith.constant 0 : index
    %c0_61 = arith.constant 0 : index
    %174 = vector.load %arg17[%c0_59, %c0_60, %c0_61] : memref<1x1x64xf32, #tpu.memory_space<vmem>>, vector<1x1x64xf32>
    %175 = vector.shape_cast %174 : vector<1x1x64xf32> to vector<1x64xf32>
    %176 = vector.broadcast %175 : vector<1x64xf32> to vector<256x64xf32>
    %177 = arith.addf %173, %176 : vector<256x64xf32>
    %178 = arith.addf %127, %177 : vector<256x64xf32>
    %179 = vector.shape_cast %178 : vector<256x64xf32> to vector<2x128x64xf32>
    %c0_62 = arith.constant 0 : index
    %c0_63 = arith.constant 0 : index
    %c0_64 = arith.constant 0 : index
    %180 = vector.load %arg19[%c0_62, %c0_63, %c0_64] : memref<2x128x64xf32, #tpu.memory_space<vmem>>, vector<2x128x64xf32>
    tpu.vector_store %arg19[%c0_62, %c0_63, %c0_64], %179 {strides = array<i32>} : memref<2x128x64xf32, #tpu.memory_space<vmem>>, vector<2x128x64xf32>,
    %c2_i32_65 = arith.constant 2 : i32
    %181 = arith.cmpi eq, %arg1, %c2_i32_65 : i32
    %182 = arith.extui %181 : i1 to i32
    %c0_i32_66 = arith.constant 0 : i32
    %183 = arith.cmpi ne, %182, %c0_i32_66 : i32
    scf.if %183 {
      %184 = arith.truncf %179 : vector<2x128x64xf32> to vector<2x128x64xbf16>
      %c0_67 = arith.constant 0 : index
      %c0_68 = arith.constant 0 : index
      %c0_69 = arith.constant 0 : index
      %185 = vector.load %arg18[%c0_67, %c0_68, %c0_69] : memref<2x128x64xbf16, #tpu.memory_space<vmem>>, vector<2x128x64xbf16>
      tpu.vector_store %arg18[%c0_67, %c0_68, %c0_69], %184 {strides = array<i32>} : memref<2x128x64xbf16, #tpu.memory_space<vmem>>, vector<2x128x64xbf16>,
    } else {
    }
    return
  }
  func.func @transform_0(%arg0: i32, %arg1: i32) -> (i32, i32, i32) {
    %c0_i32 = arith.constant 0 : i32
    %c0_i32_0 = arith.constant 0 : i32
    %c0_i32_1 = arith.constant 0 : i32
    return %arg0, %c0_i32, %c0_i32_0 : i32, i32, i32
  }
  func.func @transform_1(%arg0: i32, %arg1: i32) -> (i32, i32) {
    %c0_i32 = arith.constant 0 : i32
    %c0_i32_0 = arith.constant 0 : i32
    %c0_i32_1 = arith.constant 0 : i32
    return %c0_i32, %c0_i32_0 : i32, i32
  }
  func.func @transform_2(%arg0: i32, %arg1: i32) -> (i32, i32) {
    %c0_i32 = arith.constant 0 : i32
    %c0_i32_0 = arith.constant 0 : i32
    %c0_i32_1 = arith.constant 0 : i32
    return %c0_i32, %c0_i32_0 : i32, i32
  }
  func.func @transform_3(%arg0: i32, %arg1: i32) -> (i32, i32, i32) {
    %c1_i32 = arith.constant 1 : i32
    %0 = arith.subi %arg1, %c1_i32 : i32
    %c0_i32 = arith.constant 0 : i32
    %1 = arith.maxsi %0, %c0_i32 : i32
    %c1_i32_0 = arith.constant 1 : i32
    %2 = arith.minsi %1, %c1_i32_0 : i32
    %c0_i32_1 = arith.constant 0 : i32
    %c0_i32_2 = arith.constant 0 : i32
    %c0_i32_3 = arith.constant 0 : i32
    return %2, %c0_i32_1, %c0_i32_2 : i32, i32, i32
  }
  func.func @transform_4(%arg0: i32, %arg1: i32) -> (i32, i32, i32) {
    %c0_i32 = arith.constant 0 : i32
    %c0_i32_0 = arith.constant 0 : i32
    %c0_i32_1 = arith.constant 0 : i32
    return %arg1, %c0_i32, %c0_i32_0 : i32, i32, i32
  }
  func.func @transform_5(%arg0: i32, %arg1: i32) -> (i32, i32, i32) {
    %c0_i32 = arith.constant 0 : i32
    %c0_i32_0 = arith.constant 0 : i32
    %c0_i32_1 = arith.constant 0 : i32
    return %arg1, %c0_i32, %c0_i32_0 : i32, i32, i32
  }
  func.func @transform_6(%arg0: i32, %arg1: i32) -> (i32, i32, i32) {
    %c0_i32 = arith.constant 0 : i32
    %c0_i32_0 = arith.constant 0 : i32
    %c0_i32_1 = arith.constant 0 : i32
    return %arg1, %c0_i32, %c0_i32_0 : i32, i32, i32
  }
  func.func @transform_7(%arg0: i32, %arg1: i32) -> (i32, i32, i32) {
    %c0_i32 = arith.constant 0 : i32
    %c0_i32_0 = arith.constant 0 : i32
    %c0_i32_1 = arith.constant 0 : i32
    return %arg1, %c0_i32, %c0_i32_0 : i32, i32, i32
  }
  func.func @transform_8(%arg0: i32, %arg1: i32) -> (i32, i32, i32) {
    %c0_i32 = arith.constant 0 : i32
    %c0_i32_0 = arith.constant 0 : i32
    %c0_i32_1 = arith.constant 0 : i32
    return %arg1, %c0_i32, %c0_i32_0 : i32, i32, i32
  }
  func.func @transform_9(%arg0: i32, %arg1: i32) -> (i32, i32, i32) {
    %c0_i32 = arith.constant 0 : i32
    %c0_i32_0 = arith.constant 0 : i32
    %c0_i32_1 = arith.constant 0 : i32
    return %arg1, %c0_i32, %c0_i32_0 : i32, i32, i32
  }
  func.func @transform_10(%arg0: i32, %arg1: i32) -> (i32, i32, i32) {
    %c0_i32 = arith.constant 0 : i32
    %c0_i32_0 = arith.constant 0 : i32
    %c0_i32_1 = arith.constant 0 : i32
    return %arg1, %c0_i32, %c0_i32_0 : i32, i32, i32
  }
  func.func @transform_11(%arg0: i32, %arg1: i32) -> (i32, i32, i32) {
    %c0_i32 = arith.constant 0 : i32
    %c0_i32_0 = arith.constant 0 : i32
    %c0_i32_1 = arith.constant 0 : i32
    return %arg1, %c0_i32, %c0_i32_0 : i32, i32, i32
  }
  func.func @transform_12(%arg0: i32, %arg1: i32) -> (i32, i32, i32) {
    %c0_i32 = arith.constant 0 : i32
    %c0_i32_0 = arith.constant 0 : i32
    %c0_i32_1 = arith.constant 0 : i32
    return %arg1, %c0_i32, %c0_i32_0 : i32, i32, i32
  }
  func.func @transform_13(%arg0: i32, %arg1: i32) -> (i32, i32, i32) {
    %c0_i32 = arith.constant 0 : i32
    %c0_i32_0 = arith.constant 0 : i32
    %c0_i32_1 = arith.constant 0 : i32
    return %arg1, %c0_i32, %c0_i32_0 : i32, i32, i32
  }
  func.func @transform_14(%arg0: i32, %arg1: i32) -> (i32, i32, i32) {
    %c0_i32 = arith.constant 0 : i32
    %c0_i32_0 = arith.constant 0 : i32
    %c0_i32_1 = arith.constant 0 : i32
    return %arg1, %c0_i32, %c0_i32_0 : i32, i32, i32
  }
  func.func @transform_15(%arg0: i32, %arg1: i32) -> (i32, i32, i32) {
    %c0_i32 = arith.constant 0 : i32
    %c0_i32_0 = arith.constant 0 : i32
    %c0_i32_1 = arith.constant 0 : i32
    return %arg1, %c0_i32, %c0_i32_0 : i32, i32, i32
  }
  func.func @transform_16(%arg0: i32, %arg1: i32) -> (i32, i32, i32) {
    %c0_i32 = arith.constant 0 : i32
    %c0_i32_0 = arith.constant 0 : i32
    %c0_i32_1 = arith.constant 0 : i32
    return %arg0, %c0_i32, %c0_i32_0 : i32, i32, i32
  }
}

</mosaic_0001>

<llo_original>
// kernel: tpu_custom_call.1
$region0: #{tpu_custom_call.1}
  #allocation0 [shape = 'u32[]', space=smem, size = 0x4, offset = 0x4, fixed_abs, tag = 'smem constant byte address 0x4 - core index']
  #allocation1 [shape = 'u32[144,128]{1,0:T(1,128)}', space=vmem, size = 0x12000, scoped, tag = 'internal scratch']
  #allocation2 [shape = 'f32[2,128,64]{2,1,0:T(8,128)}', space=vmem, size = 0x20000, scoped, tag = 'scratch operand']
  %s0 = inlined_call_operand.hbm [shape: bf16[2,128,64], index: 0, kind: input, shape index: {}]
  %s1 = inlined_call_operand.hbm [shape: f32[128,128], index: 1, kind: input, shape index: {}]
  %s2 = inlined_call_operand.hbm [shape: bf16[128,64], index: 2, kind: input, shape index: {}]
  %s3 = inlined_call_operand.hbm [shape: bf16[2,128,64], index: 3, kind: input, shape index: {}]
  %s4 = inlined_call_operand.hbm [shape: f32[3,1,64], index: 4, kind: input, shape index: {}]
  %s5 = inlined_call_operand.hbm [shape: f32[3,1,64], index: 5, kind: input, shape index: {}]
  %s6 = inlined_call_operand.hbm [shape: bf16[3,64,192], index: 6, kind: input, shape index: {}]
  %s7 = inlined_call_operand.hbm [shape: f32[3,1,192], index: 7, kind: input, shape index: {}]
  %s8 = inlined_call_operand.hbm [shape: bf16[3,64,64], index: 8, kind: input, shape index: {}]
  %s9 = inlined_call_operand.hbm [shape: f32[3,1,64], index: 9, kind: input, shape index: {}]
  %s10 = inlined_call_operand.hbm [shape: f32[3,1,64], index: 10, kind: input, shape index: {}]
  %s11 = inlined_call_operand.hbm [shape: f32[3,1,64], index: 11, kind: input, shape index: {}]
  %s12 = inlined_call_operand.hbm [shape: bf16[3,64,256], index: 12, kind: input, shape index: {}]
  %s13 = inlined_call_operand.hbm [shape: f32[3,1,256], index: 13, kind: input, shape index: {}]
  %s14 = inlined_call_operand.hbm [shape: bf16[3,256,64], index: 14, kind: input, shape index: {}]
  %s15 = inlined_call_operand.hbm [shape: f32[3,1,64], index: 15, kind: input, shape index: {}]
  %s16 = inlined_call_operand.hbm [shape: bf16[2,128,64], index: 16, kind: output, shape index: {}]
  %s17 = sld [smem:[#allocation0]]
  $region173: #{tpu_custom_call.1} parent=0
    _
  %s19 = ssub.s32 1, %s17
  %s20 = scalar_select 0, %s19, %s17
  $region1: #{tpu_custom_call.1} parent=0
    #allocation3 [shape = 'u8[65536]{0}', space=vmem, size = 0x10000, scoped, tag = 'input window, operand 0, single buffered']
    #allocation4 [shape = 's32[2]{0}', space=sflag, size = 0x8, scoped, tag = 'scoped memory for tpu_custom_call.1']
    #allocation5 [shape = 's32[2]{0}', space=sflag, size = 0x8, scoped, tag = 'scoped memory for tpu_custom_call.1']
    #allocation6 [shape = 'u8[65536]{0}', space=vmem, size = 0x10000, scoped, tag = 'input window, operand 1, single buffered']
    #allocation7 [shape = 's32[1]{0}', space=sflag, size = 0x4, scoped, tag = 'scoped memory for tpu_custom_call.1']
    #allocation8 [shape = 'u8[32768]{0}', space=vmem, size = 0x8000, scoped, tag = 'input window, operand 2, single buffered']
    #allocation9 [shape = 'u8[65536]{0}', space=vmem, size = 0x10000, scoped, tag = 'input window, operand 3']
    #allocation10 [shape = 's32[2]{0}', space=sflag, size = 0x8, scoped, tag = 'scoped memory for tpu_custom_call.1']
    #allocation11 [shape = 'u8[1024]{0}', space=vmem, size = 0x400, scoped, tag = 'input window, operand 4']
    #allocation12 [shape = 'u8[1024]{0}', space=vmem, size = 0x400, scoped, tag = 'input window, operand 5']
    #allocation13 [shape = 's32[2]{0}', space=sflag, size = 0x8, scoped, tag = 'scoped memory for tpu_custom_call.1']
    #allocation14 [shape = 'u8[65536]{0}', space=vmem, size = 0x10000, scoped, tag = 'input window, operand 6']
    #allocation15 [shape = 'u8[2048]{0}', space=vmem, size = 0x800, scoped, tag = 'input window, operand 7']
    #allocation16 [shape = 's32[2]{0}', space=sflag, size = 0x8, scoped, tag = 'scoped memory for tpu_custom_call.1']
    #allocation17 [shape = 'u8[32768]{0}', space=vmem, size = 0x8000, scoped, tag = 'input window, operand 8']
    #allocation18 [shape = 'u8[1024]{0}', space=vmem, size = 0x400, scoped, tag = 'input window, operand 9']
    #allocation19 [shape = 's32[2]{0}', space=sflag, size = 0x8, scoped, tag = 'scoped memory for tpu_custom_call.1']
    #allocation20 [shape = 'u8[1024]{0}', space=vmem, size = 0x400, scoped, tag = 'input window, operand 10']
    #allocation21 [shape = 'u8[1024]{0}', space=vmem, size = 0x400, scoped, tag = 'input window, operand 11']
    #allocation22 [shape = 's32[2]{0}', space=sflag, size = 0x8, scoped, tag = 'scoped memory for tpu_custom_call.1']
    #allocation23 [shape = 'u8[65536]{0}', space=vmem, size = 0x10000, scoped, tag = 'input window, operand 12']
    #allocation24 [shape = 'u8[2048]{0}', space=vmem, size = 0x800, scoped, tag = 'input window, operand 13']
    #allocation25 [shape = 's32[2]{0}', space=sflag, size = 0x8, scoped, tag = 'scoped memory for tpu_custom_call.1']
    #allocation26 [shape = 'u8[131072]{0}', space=vmem, size = 0x20000, scoped, tag = 'input window, operand 14']
    #allocation27 [shape = 'u8[1024]{0}', space=vmem, size = 0x400, scoped, tag = 'input window, operand 15']
    #allocation28 [shape = 's32[2]{0}', space=sflag, size = 0x8, scoped, tag = 'scoped memory for tpu_custom_call.1']
    #allocation29 [shape = 'u8[65536]{0}', space=vmem, size = 0x10000, scoped, tag = 'output window, operand 0, single buffered']
    %21 = vsyncpa [#allocation4], 0
    %22 = vsyncpa [#allocation7], 0
    %23 = vsyncpa [#allocation10], 0
    %s24 = scalar_lea.sflag [#allocation10], 1
    %25 = vsyncpa %s24, 0
    %26 = vsyncpa [#allocation13], 0
    %s27 = scalar_lea.sflag [#allocation13], 1
    %28 = vsyncpa %s27, 0
    %29 = vsyncpa [#allocation16], 0
    %s30 = scalar_lea.sflag [#allocation16], 1
    %31 = vsyncpa %s30, 0
    %32 = vsyncpa [#allocation19], 0
    %s33 = scalar_lea.sflag [#allocation19], 1
    %34 = vsyncpa %s33, 0
    %35 = vsyncpa [#allocation22], 0
    %s36 = scalar_lea.sflag [#allocation22], 1
    %37 = vsyncpa %s36, 0
    %38 = vsyncpa [#allocation25], 0
    %s39 = scalar_lea.sflag [#allocation25], 1
    %40 = vsyncpa %s39, 0
    %41 = vsyncpa [#allocation28], 0
    %s42 = scalar_lea.sflag [#allocation28], 1
    %43 = vsyncpa %s42, 0
    %44 = vsyncpa [#allocation5], 0
    loop: start=0, step=1, limit=5
    $region2: #{tpu_custom_call.1} parent=1 // loop_pre_header
      _
    $region3: #{tpu_custom_call.1} parent=1 // loop_header
      %s46 = sphi 0, %s50
      %p47 = scmp.ge.s32.totalorder %s46, 5
      %s53 = sphi 0, %s65
      %s54 = sphi 0, %s61
      %s55 = sphi 0, %s53
      %s56 = sphi 0, %s54
      %s57 = sphi 0, %s55
      %s58 = sphi 0, %s56
      %s68 = sphi 0, %s70
      %s71 = sphi 0, %s68
      %s72 = sphi 0, %s71
      %s88 = sphi 0, %s72
      %s92 = sphi 0, %s92
      %s94 = sphi 0, %s92
      %s95 = sphi 0, %s94
      %s109 = sphi 0, %s95
      %s113 = sphi 0, %s113
      %s115 = sphi 0, %s113
      %s116 = sphi 0, %s115
      %s130 = sphi 0, %s116
      %s146 = sphi 0, %s148
      %s149 = sphi 0, %s146
      %s150 = sphi 0, %s149
      %s166 = sphi 0, %s150
      %s172 = sphi 0, %s174
      %s175 = sphi 0, %s172
      %s176 = sphi 0, %s175
      %s192 = sphi 0, %s176
      %s198 = sphi 0, %s200
      %s201 = sphi 0, %s198
      %s202 = sphi 0, %s201
      %s218 = sphi 0, %s202
      %s224 = sphi 0, %s226
      %s227 = sphi 0, %s224
      %s228 = sphi 0, %s227
      %s244 = sphi 0, %s228
      %s250 = sphi 0, %s252
      %s253 = sphi 0, %s250
      %s254 = sphi 0, %s253
      %s270 = sphi 0, %s254
      %s276 = sphi 0, %s278
      %s279 = sphi 0, %s276
      %s280 = sphi 0, %s279
      %s296 = sphi 0, %s280
      %s302 = sphi 0, %s304
      %s305 = sphi 0, %s302
      %s306 = sphi 0, %s305
      %s322 = sphi 0, %s306
      %s328 = sphi 0, %s330
      %s331 = sphi 0, %s328
      %s332 = sphi 0, %s331
      %s348 = sphi 0, %s332
      %s354 = sphi 0, %s356
      %s357 = sphi 0, %s354
      %s358 = sphi 0, %s357
      %s374 = sphi 0, %s358
      %s380 = sphi 0, %s382
      %s383 = sphi 0, %s380
      %s384 = sphi 0, %s383
      %s400 = sphi 0, %s384
      %s406 = sphi 0, %s408
      %s409 = sphi 0, %s406
      %s410 = sphi 0, %s409
      %s426 = sphi 0, %s410
      %s432 = sphi 0, %s434
      %s435 = sphi 0, %s432
      %s436 = sphi 0, %s435
      %s452 = sphi 0, %s436
      %s458 = sphi 0, %s460
      %s461 = sphi 0, %s458
      %s462 = sphi 0, %s461
      %s478 = sphi 0, %s462
      %s484 = sphi 0, %s486
      %s487 = sphi 0, %s484
      %s488 = sphi 0, %s487
      %s504 = sphi 0, %s488
    $region4: #{tpu_custom_call.1} parent=1 // loop_header_branch
      %49 = sbr.rel (%p47) target = $region8
    $region5: #{tpu_custom_call.1} parent=1 // loop_body
      %s51 = ssub.s32 %s46, 1
      %s52 = ssub.s32 %s46, 2
      %s59 = sadd.s32 1, %s54
      %p60 = scmp.ge.s32.totalorder %s59, 3
      %s61 = scalar_select %p60, 0, %s59
      %s62 = sadd.s32 1, %s53
      %s63 = scalar_select %p60, %s62, %s53
      %p64 = scmp.ge.s32.totalorder %s63, 1
      %s65 = scalar_select %p64, 0, %s63
      %s66 = ssub.s32 %s53, %s65
      %p67 = scmp.eq.s32.totalorder %s66, 0
      %s69 = sadd.s32 %s68, 1
      %s70 = scalar_select %p67, %s68, %s69
      %p73 = pneg %p67
      %p74 = scmp.eq.s32.totalorder %s46, 2
      %p75 = por %p73, %p74
      %p76 = scmp.ne.s32.totalorder %s68, %s71
      %p77 = scmp.eq.s32.totalorder %s46, 0
      %p78 = por %p76, %p77
      %p79 = scmp.ne.s32.totalorder %s68, %s71
      %p80 = scmp.eq.s32.totalorder %s51, 2
      %p81 = por %p79, %p80
      %p82 = scmp.ne.s32.totalorder %s71, %s72
      %p83 = scmp.eq.s32.totalorder %s51, 0
      %p84 = por %p82, %p83
      %p85 = scmp.ne.s32.totalorder %s71, %s72
      %p86 = scmp.eq.s32.totalorder %s52, 2
      %p87 = por %p85, %p86
      %p89 = scmp.ne.s32.totalorder %s72, %s88
      %p90 = scmp.eq.s32.totalorder %s52, 0
      %p91 = por %p89, %p90
      %s93 = sadd.s32 %s92, 1
      %p96 = scmp.eq.s32.totalorder %s46, 2
      %p97 = scmp.ne.s32.totalorder %s92, %s94
      %p98 = scmp.eq.s32.totalorder %s46, 0
      %p99 = por %p97, %p98
      %p100 = scmp.ne.s32.totalorder %s92, %s94
      %p101 = scmp.eq.s32.totalorder %s51, 2
      %p102 = por %p100, %p101
      %p103 = scmp.ne.s32.totalorder %s94, %s95
      %p104 = scmp.eq.s32.totalorder %s51, 0
      %p105 = por %p103, %p104
      %p106 = scmp.ne.s32.totalorder %s94, %s95
      %p107 = scmp.eq.s32.totalorder %s52, 2
      %p108 = por %p106, %p107
      %p110 = scmp.ne.s32.totalorder %s95, %s109
      %p111 = scmp.eq.s32.totalorder %s52, 0
      %p112 = por %p110, %p111
      %s114 = sadd.s32 %s113, 1
      %p117 = scmp.eq.s32.totalorder %s46, 2
      %p118 = scmp.ne.s32.totalorder %s113, %s115
      %p119 = scmp.eq.s32.totalorder %s46, 0
      %p120 = por %p118, %p119
      %p121 = scmp.ne.s32.totalorder %s113, %s115
      %p122 = scmp.eq.s32.totalorder %s51, 2
      %p123 = por %p121, %p122
      %p124 = scmp.ne.s32.totalorder %s115, %s116
      %p125 = scmp.eq.s32.totalorder %s51, 0
      %p126 = por %p124, %p125
      %p127 = scmp.ne.s32.totalorder %s115, %s116
      %p128 = scmp.eq.s32.totalorder %s52, 2
      %p129 = por %p127, %p128
      %p131 = scmp.ne.s32.totalorder %s116, %s130
      %p132 = scmp.eq.s32.totalorder %s52, 0
      %p133 = por %p131, %p132
      %s134 = ssub.s32 %s54, 1
      %p135 = scmp.gt.s32.totalorder %s134, 0
      %s136 = scalar_select %p135, %s134, 0
      %p137 = scmp.lt.s32.totalorder %s136, 1
      %s138 = scalar_select %p137, %s136, 1
      %s139 = ssub.s32 %s61, 1
      %p140 = scmp.gt.s32.totalorder %s139, 0
      %s141 = scalar_select %p140, %s139, 0
      %p142 = scmp.lt.s32.totalorder %s141, 1
      %s143 = scalar_select %p142, %s141, 1
      %s144 = ssub.s32 %s138, %s143
      %p145 = scmp.eq.s32.totalorder %s144, 0
      %s147 = sadd.s32 %s146, 1
      %s148 = scalar_select %p145, %s146, %s147
      %p151 = pneg %p145
      %p152 = scmp.eq.s32.totalorder %s46, 2
      %p153 = por %p151, %p152
      %p154 = scmp.ne.s32.totalorder %s146, %s149
      %p155 = scmp.eq.s32.totalorder %s46, 0
      %p156 = por %p154, %p155
      %p157 = scmp.ne.s32.totalorder %s146, %s149
      %p158 = scmp.eq.s32.totalorder %s51, 2
      %p159 = por %p157, %p158
      %p160 = scmp.ne.s32.totalorder %s149, %s150
      %p161 = scmp.eq.s32.totalorder %s51, 0
      %p162 = por %p160, %p161
      %p163 = scmp.ne.s32.totalorder %s149, %s150
      %p164 = scmp.eq.s32.totalorder %s52, 2
      %p165 = por %p163, %p164
      %p167 = scmp.ne.s32.totalorder %s150, %s166
      %p168 = scmp.eq.s32.totalorder %s52, 0
      %p169 = por %p167, %p168
      %s170 = ssub.s32 %s54, %s61
      %p171 = scmp.eq.s32.totalorder %s170, 0
      %s173 = sadd.s32 %s172, 1
      %s174 = scalar_select %p171, %s172, %s173
      %p177 = pneg %p171
      %p178 = scmp.eq.s32.totalorder %s46, 2
      %p179 = por %p177, %p178
      %p180 = scmp.ne.s32.totalorder %s172, %s175
      %p181 = scmp.eq.s32.totalorder %s46, 0
      %p182 = por %p180, %p181
      %p183 = scmp.ne.s32.totalorder %s172, %s175
      %p184 = scmp.eq.s32.totalorder %s51, 2
      %p185 = por %p183, %p184
      %p186 = scmp.ne.s32.totalorder %s175, %s176
      %p187 = scmp.eq.s32.totalorder %s51, 0
      %p188 = por %p186, %p187
      %p189 = scmp.ne.s32.totalorder %s175, %s176
      %p190 = scmp.eq.s32.totalorder %s52, 2
      %p191 = por %p189, %p190
      %p193 = scmp.ne.s32.totalorder %s176, %s192
      %p194 = scmp.eq.s32.totalorder %s52, 0
      %p195 = por %p193, %p194
      %s196 = ssub.s32 %s54, %s61
      %p197 = scmp.eq.s32.totalorder %s196, 0
      %s199 = sadd.s32 %s198, 1
      %s200 = scalar_select %p197, %s198, %s199
      %p203 = pneg %p197
      %p204 = scmp.eq.s32.totalorder %s46, 2
      %p205 = por %p203, %p204
      %p206 = scmp.ne.s32.totalorder %s198, %s201
      %p207 = scmp.eq.s32.totalorder %s46, 0
      %p208 = por %p206, %p207
      %p209 = scmp.ne.s32.totalorder %s198, %s201
      %p210 = scmp.eq.s32.totalorder %s51, 2
      %p211 = por %p209, %p210
      %p212 = scmp.ne.s32.totalorder %s201, %s202
      %p213 = scmp.eq.s32.totalorder %s51, 0
      %p214 = por %p212, %p213
      %p215 = scmp.ne.s32.totalorder %s201, %s202
      %p216 = scmp.eq.s32.totalorder %s52, 2
      %p217 = por %p215, %p216
      %p219 = scmp.ne.s32.totalorder %s202, %s218
      %p220 = scmp.eq.s32.totalorder %s52, 0
      %p221 = por %p219, %p220
      %s222 = ssub.s32 %s54, %s61
      %p223 = scmp.eq.s32.totalorder %s222, 0
      %s225 = sadd.s32 %s224, 1
      %s226 = scalar_select %p223, %s224, %s225
      %p229 = pneg %p223
      %p230 = scmp.eq.s32.totalorder %s46, 2
      %p231 = por %p229, %p230
      %p232 = scmp.ne.s32.totalorder %s224, %s227
      %p233 = scmp.eq.s32.totalorder %s46, 0
      %p234 = por %p232, %p233
      %p235 = scmp.ne.s32.totalorder %s224, %s227
      %p236 = scmp.eq.s32.totalorder %s51, 2
      %p237 = por %p235, %p236
      %p238 = scmp.ne.s32.totalorder %s227, %s228
      %p239 = scmp.eq.s32.totalorder %s51, 0
      %p240 = por %p238, %p239
      %p241 = scmp.ne.s32.totalorder %s227, %s228
      %p242 = scmp.eq.s32.totalorder %s52, 2
      %p243 = por %p241, %p242
      %p245 = scmp.ne.s32.totalorder %s228, %s244
      %p246 = scmp.eq.s32.totalorder %s52, 0
      %p247 = por %p245, %p246
      %s248 = ssub.s32 %s54, %s61
      %p249 = scmp.eq.s32.totalorder %s248, 0
      %s251 = sadd.s32 %s250, 1
      %s252 = scalar_select %p249, %s250, %s251
      %p255 = pneg %p249
      %p256 = scmp.eq.s32.totalorder %s46, 2
      %p257 = por %p255, %p256
      %p258 = scmp.ne.s32.totalorder %s250, %s253
      %p259 = scmp.eq.s32.totalorder %s46, 0
      %p260 = por %p258, %p259
      %p261 = scmp.ne.s32.totalorder %s250, %s253
      %p262 = scmp.eq.s32.totalorder %s51, 2
      %p263 = por %p261, %p262
      %p264 = scmp.ne.s32.totalorder %s253, %s254
      %p265 = scmp.eq.s32.totalorder %s51, 0
      %p266 = por %p264, %p265
      %p267 = scmp.ne.s32.totalorder %s253, %s254
      %p268 = scmp.eq.s32.totalorder %s52, 2
      %p269 = por %p267, %p268
      %p271 = scmp.ne.s32.totalorder %s254, %s270
      %p272 = scmp.eq.s32.totalorder %s52, 0
      %p273 = por %p271, %p272
      %s274 = ssub.s32 %s54, %s61
      %p275 = scmp.eq.s32.totalorder %s274, 0
      %s277 = sadd.s32 %s276, 1
      %s278 = scalar_select %p275, %s276, %s277
      %p281 = pneg %p275
      %p282 = scmp.eq.s32.totalorder %s46, 2
      %p283 = por %p281, %p282
      %p284 = scmp.ne.s32.totalorder %s276, %s279
      %p285 = scmp.eq.s32.totalorder %s46, 0
      %p286 = por %p284, %p285
      %p287 = scmp.ne.s32.totalorder %s276, %s279
      %p288 = scmp.eq.s32.totalorder %s51, 2
      %p289 = por %p287, %p288
      %p290 = scmp.ne.s32.totalorder %s279, %s280
      %p291 = scmp.eq.s32.totalorder %s51, 0
      %p292 = por %p290, %p291
      %p293 = scmp.ne.s32.totalorder %s279, %s280
      %p294 = scmp.eq.s32.totalorder %s52, 2
      %p295 = por %p293, %p294
      %p297 = scmp.ne.s32.totalorder %s280, %s296
      %p298 = scmp.eq.s32.totalorder %s52, 0
      %p299 = por %p297, %p298
      %s300 = ssub.s32 %s54, %s61
      %p301 = scmp.eq.s32.totalorder %s300, 0
      %s303 = sadd.s32 %s302, 1
      %s304 = scalar_select %p301, %s302, %s303
      %p307 = pneg %p301
      %p308 = scmp.eq.s32.totalorder %s46, 2
      %p309 = por %p307, %p308
      %p310 = scmp.ne.s32.totalorder %s302, %s305
      %p311 = scmp.eq.s32.totalorder %s46, 0
      %p312 = por %p310, %p311
      %p313 = scmp.ne.s32.totalorder %s302, %s305
      %p314 = scmp.eq.s32.totalorder %s51, 2
      %p315 = por %p313, %p314
      %p316 = scmp.ne.s32.totalorder %s305, %s306
      %p317 = scmp.eq.s32.totalorder %s51, 0
      %p318 = por %p316, %p317
      %p319 = scmp.ne.s32.totalorder %s305, %s306
      %p320 = scmp.eq.s32.totalorder %s52, 2
      %p321 = por %p319, %p320
      %p323 = scmp.ne.s32.totalorder %s306, %s322
      %p324 = scmp.eq.s32.totalorder %s52, 0
      %p325 = por %p323, %p324
      %s326 = ssub.s32 %s54, %s61
      %p327 = scmp.eq.s32.totalorder %s326, 0
      %s329 = sadd.s32 %s328, 1
      %s330 = scalar_select %p327, %s328, %s329
      %p333 = pneg %p327
      %p334 = scmp.eq.s32.totalorder %s46, 2
      %p335 = por %p333, %p334
      %p336 = scmp.ne.s32.totalorder %s328, %s331
      %p337 = scmp.eq.s32.totalorder %s46, 0
      %p338 = por %p336, %p337
      %p339 = scmp.ne.s32.totalorder %s328, %s331
      %p340 = scmp.eq.s32.totalorder %s51, 2
      %p341 = por %p339, %p340
      %p342 = scmp.ne.s32.totalorder %s331, %s332
      %p343 = scmp.eq.s32.totalorder %s51, 0
      %p344 = por %p342, %p343
      %p345 = scmp.ne.s32.totalorder %s331, %s332
      %p346 = scmp.eq.s32.totalorder %s52, 2
      %p347 = por %p345, %p346
      %p349 = scmp.ne.s32.totalorder %s332, %s348
      %p350 = scmp.eq.s32.totalorder %s52, 0
      %p351 = por %p349, %p350
      %s352 = ssub.s32 %s54, %s61
      %p353 = scmp.eq.s32.totalorder %s352, 0
      %s355 = sadd.s32 %s354, 1
      %s356 = scalar_select %p353, %s354, %s355
      %p359 = pneg %p353
      %p360 = scmp.eq.s32.totalorder %s46, 2
      %p361 = por %p359, %p360
      %p362 = scmp.ne.s32.totalorder %s354, %s357
      %p363 = scmp.eq.s32.totalorder %s46, 0
      %p364 = por %p362, %p363
      %p365 = scmp.ne.s32.totalorder %s354, %s357
      %p366 = scmp.eq.s32.totalorder %s51, 2
      %p367 = por %p365, %p366
      %p368 = scmp.ne.s32.totalorder %s357, %s358
      %p369 = scmp.eq.s32.totalorder %s51, 0
      %p370 = por %p368, %p369
      %p371 = scmp.ne.s32.totalorder %s357, %s358
      %p372 = scmp.eq.s32.totalorder %s52, 2
      %p373 = por %p371, %p372
      %p375 = scmp.ne.s32.totalorder %s358, %s374
      %p376 = scmp.eq.s32.totalorder %s52, 0
      %p377 = por %p375, %p376
      %s378 = ssub.s32 %s54, %s61
      %p379 = scmp.eq.s32.totalorder %s378, 0
      %s381 = sadd.s32 %s380, 1
      %s382 = scalar_select %p379, %s380, %s381
      %p385 = pneg %p379
      %p386 = scmp.eq.s32.totalorder %s46, 2
      %p387 = por %p385, %p386
      %p388 = scmp.ne.s32.totalorder %s380, %s383
      %p389 = scmp.eq.s32.totalorder %s46, 0
      %p390 = por %p388, %p389
      %p391 = scmp.ne.s32.totalorder %s380, %s383
      %p392 = scmp.eq.s32.totalorder %s51, 2
      %p393 = por %p391, %p392
      %p394 = scmp.ne.s32.totalorder %s383, %s384
      %p395 = scmp.eq.s32.totalorder %s51, 0
      %p396 = por %p394, %p395
      %p397 = scmp.ne.s32.totalorder %s383, %s384
      %p398 = scmp.eq.s32.totalorder %s52, 2
      %p399 = por %p397, %p398
      %p401 = scmp.ne.s32.totalorder %s384, %s400
      %p402 = scmp.eq.s32.totalorder %s52, 0
      %p403 = por %p401, %p402
      %s404 = ssub.s32 %s54, %s61
      %p405 = scmp.eq.s32.totalorder %s404, 0
      %s407 = sadd.s32 %s406, 1
      %s408 = scalar_select %p405, %s406, %s407
      %p411 = pneg %p405
      %p412 = scmp.eq.s32.totalorder %s46, 2
      %p413 = por %p411, %p412
      %p414 = scmp.ne.s32.totalorder %s406, %s409
      %p415 = scmp.eq.s32.totalorder %s46, 0
      %p416 = por %p414, %p415
      %p417 = scmp.ne.s32.totalorder %s406, %s409
      %p418 = scmp.eq.s32.totalorder %s51, 2
      %p419 = por %p417, %p418
      %p420 = scmp.ne.s32.totalorder %s409, %s410
      %p421 = scmp.eq.s32.totalorder %s51, 0
      %p422 = por %p420, %p421
      %p423 = scmp.ne.s32.totalorder %s409, %s410
      %p424 = scmp.eq.s32.totalorder %s52, 2
      %p425 = por %p423, %p424
      %p427 = scmp.ne.s32.totalorder %s410, %s426
      %p428 = scmp.eq.s32.totalorder %s52, 0
      %p429 = por %p427, %p428
      %s430 = ssub.s32 %s54, %s61
      %p431 = scmp.eq.s32.totalorder %s430, 0
      %s433 = sadd.s32 %s432, 1
      %s434 = scalar_select %p431, %s432, %s433
      %p437 = pneg %p431
      %p438 = scmp.eq.s32.totalorder %s46, 2
      %p439 = por %p437, %p438
      %p440 = scmp.ne.s32.totalorder %s432, %s435
      %p441 = scmp.eq.s32.totalorder %s46, 0
      %p442 = por %p440, %p441
      %p443 = scmp.ne.s32.totalorder %s432, %s435
      %p444 = scmp.eq.s32.totalorder %s51, 2
      %p445 = por %p443, %p444
      %p446 = scmp.ne.s32.totalorder %s435, %s436
      %p447 = scmp.eq.s32.totalorder %s51, 0
      %p448 = por %p446, %p447
      %p449 = scmp.ne.s32.totalorder %s435, %s436
      %p450 = scmp.eq.s32.totalorder %s52, 2
      %p451 = por %p449, %p450
      %p453 = scmp.ne.s32.totalorder %s436, %s452
      %p454 = scmp.eq.s32.totalorder %s52, 0
      %p455 = por %p453, %p454
      %s456 = ssub.s32 %s54, %s61
      %p457 = scmp.eq.s32.totalorder %s456, 0
      %s459 = sadd.s32 %s458, 1
      %s460 = scalar_select %p457, %s458, %s459
      %p463 = pneg %p457
      %p464 = scmp.eq.s32.totalorder %s46, 2
      %p465 = por %p463, %p464
      %p466 = scmp.ne.s32.totalorder %s458, %s461
      %p467 = scmp.eq.s32.totalorder %s46, 0
      %p468 = por %p466, %p467
      %p469 = scmp.ne.s32.totalorder %s458, %s461
      %p470 = scmp.eq.s32.totalorder %s51, 2
      %p471 = por %p469, %p470
      %p472 = scmp.ne.s32.totalorder %s461, %s462
      %p473 = scmp.eq.s32.totalorder %s51, 0
      %p474 = por %p472, %p473
      %p475 = scmp.ne.s32.totalorder %s461, %s462
      %p476 = scmp.eq.s32.totalorder %s52, 2
      %p477 = por %p475, %p476
      %p479 = scmp.ne.s32.totalorder %s462, %s478
      %p480 = scmp.eq.s32.totalorder %s52, 0
      %p481 = por %p479, %p480
      %s482 = ssub.s32 %s53, %s65
      %p483 = scmp.eq.s32.totalorder %s482, 0
      %s485 = sadd.s32 %s484, 1
      %s486 = scalar_select %p483, %s484, %s485
      %p489 = pneg %p483
      %p490 = scmp.eq.s32.totalorder %s46, 2
      %p491 = por %p489, %p490
      %p492 = scmp.ne.s32.totalorder %s484, %s487
      %p493 = scmp.eq.s32.totalorder %s46, 0
      %p494 = por %p492, %p493
      %p495 = scmp.ne.s32.totalorder %s484, %s487
      %p496 = scmp.eq.s32.totalorder %s51, 2
      %p497 = por %p495, %p496
      %p498 = scmp.ne.s32.totalorder %s487, %s488
      %p499 = scmp.eq.s32.totalorder %s51, 0
      %p500 = por %p498, %p499
      %p501 = scmp.ne.s32.totalorder %s487, %s488
      %p502 = scmp.eq.s32.totalorder %s52, 2
      %p503 = por %p501, %p502
      %p505 = scmp.ne.s32.totalorder %s488, %s504
      %p506 = scmp.eq.s32.totalorder %s52, 0
      %p507 = por %p505, %p506
      %p508 = scmp.le.s32.totalorder 1, %s46
      %p509 = scmp.lt.s32.totalorder %s46, 4
      %p510 = pnand %p508, %p509
      %p511 = pneg %p510
      // Predicated region
      $region9: #{tpu_custom_call.1} parent=5 // pred_check
        _
      $region10: #{tpu_custom_call.1} parent=5 // pred_check_branch
        %513 = sbr.rel (%p510) target = $region12
      $region11: #{tpu_custom_call.1} parent=5 // pred_region
        %s514 = ssub.s32 %s46, 1
        // Predicated region
        $region13: #{tpu_custom_call.1} parent=11 // pred_check
          %p515 = pneg %p84
        $region14: #{tpu_custom_call.1} parent=11 // pred_check_branch
          %517 = sbr.rel (%p515) target = $region16
        $region15: #{tpu_custom_call.1} parent=11 // pred_region
          %s518 = smul.u32 2, %s55
          %s520 = ssub.s32 2048, 2048
          %521 = vsyncadd [#allocation4], %s520
          %s522 = smul.addr %s518, 16
          %s523 = smul.addr %s522, 64
          %s524 = scalar_lea.hbm %s0, %s523
          %s525 = sshll.u32 [#allocation3], 4
          %s526 = int_to_ptr.vmem [resolvable:$true] %s525
          %531 = dma.hbm_to_vmem [thread:$0]  %s524, 2048, %s526, [#allocation4], 64, 64, 4
        $region16: #{tpu_custom_call.1} parent=11 // pred_fallthru
          _
        // Predicated region
        $region17: #{tpu_custom_call.1} parent=11 // pred_check
          %p532 = pneg %p105
        $region18: #{tpu_custom_call.1} parent=11 // pred_check_branch
          %534 = sbr.rel (%p532) target = $region20
        $region19: #{tpu_custom_call.1} parent=11 // pred_region
          %s536 = ssub.s32 2048, 2048
          %537 = vsyncadd [#allocation7], %s536
          %s538 = sshll.u32 [#allocation6], 4
          %s539 = int_to_ptr.vmem [resolvable:$true] %s538
          %544 = dma.hbm_to_vmem [thread:$0]  %s1, 2048, %s539, [#allocation7], 128, 128, 8
        $region20: #{tpu_custom_call.1} parent=11 // pred_fallthru
          _
        // Predicated region
        $region21: #{tpu_custom_call.1} parent=11 // pred_check
          %p545 = pneg %p126
        $region22: #{tpu_custom_call.1} parent=11 // pred_check_branch
          %547 = sbr.rel (%p545) target = $region24
        $region23: #{tpu_custom_call.1} parent=11 // pred_region
          %s549 = ssub.s32 1024, 1024
          %550 = vsyncadd [#allocation7], %s549
          %s551 = sshll.u32 [#allocation8], 4
          %s552 = int_to_ptr.vmem [resolvable:$true] %s551
          %557 = dma.hbm_to_vmem [thread:$0]  %s2, 1024, %s552, [#allocation7], 64, 64, 4
        $region24: #{tpu_custom_call.1} parent=11 // pred_fallthru
          _
      $region12: #{tpu_custom_call.1} parent=5 // pred_fallthru
        _
      %p558 = scmp.lt.s32.totalorder %s46, 3
      // Predicated region
      $region25: #{tpu_custom_call.1} parent=5 // pred_check
        %p559 = pneg %p558
      $region26: #{tpu_custom_call.1} parent=5 // pred_check_branch
        %561 = sbr.rel (%p559) target = $region28
      $region27: #{tpu_custom_call.1} parent=5 // pred_region
        // Predicated region
        $region29: #{tpu_custom_call.1} parent=27 // pred_check
          %p562 = pneg %p156
        $region30: #{tpu_custom_call.1} parent=27 // pred_check_branch
          %564 = sbr.rel (%p562) target = $region32
        $region31: #{tpu_custom_call.1} parent=27 // pred_region
          %s565 = sand.u32 %s46, 1
          %s566 = scalar_lea.sflag [#allocation10], %s565
          %s567 = sand.u32 %s146, 1
          %s568 = smul.addr %s567, 64
          %s569 = scalar_lea.vmem [#allocation9], %s568
          %s570 = ssub.s32 %s54, 1
          %p571 = scmp.gt.s32.totalorder %s570, 0
          %s572 = scalar_select %p571, %s570, 0
          %p573 = scmp.lt.s32.totalorder %s572, 1
          %s574 = scalar_select %p573, %s572, 1
          %s576 = ssub.s32 1024, 1024
          %577 = vsyncadd %s566, %s576
          %s578 = smul.addr %s574, 16
          %s579 = smul.addr %s578, 64
          %s580 = scalar_lea.hbm %s3, %s579
          %s581 = sshll.u32 %s569, 4
          %s582 = int_to_ptr.vmem [resolvable:$true] %s581
          %587 = dma.hbm_to_vmem [thread:$0]  %s580, 1024, %s582, %s566, 64, 64, 4
        $region32: #{tpu_custom_call.1} parent=27 // pred_fallthru
          _
        // Predicated region
        $region33: #{tpu_custom_call.1} parent=27 // pred_check
          %p588 = pneg %p182
        $region34: #{tpu_custom_call.1} parent=27 // pred_check_branch
          %590 = sbr.rel (%p588) target = $region36
        $region35: #{tpu_custom_call.1} parent=27 // pred_region
          %s591 = sand.u32 %s46, 1
          %s592 = scalar_lea.sflag [#allocation10], %s591
          %s593 = sand.u32 %s172, 1
          %s594 = scalar_lea.vmem [#allocation11], %s593
          %s596 = ssub.s32 16, 16
          %597 = vsyncadd %s592, %s596
          %s598 = smul.addr %s54, 16
          %s599 = scalar_lea.hbm %s4, %s598
          %s601 = sshll.u32 %s594, 4
          %s602 = int_to_ptr.vmem [resolvable:$true] %s601
          %604 = dma.hbm_to_vmem [thread:$0]  %s599, 16, %s602, %s592
        $region36: #{tpu_custom_call.1} parent=27 // pred_fallthru
          _
        // Predicated region
        $region37: #{tpu_custom_call.1} parent=27 // pred_check
          %p605 = pneg %p208
        $region38: #{tpu_custom_call.1} parent=27 // pred_check_branch
          %607 = sbr.rel (%p605) target = $region40
        $region39: #{tpu_custom_call.1} parent=27 // pred_region
          %s608 = sand.u32 %s46, 1
          %s609 = scalar_lea.sflag [#allocation13], %s608
          %s610 = sand.u32 %s198, 1
          %s611 = scalar_lea.vmem [#allocation12], %s610
          %s613 = ssub.s32 16, 16
          %614 = vsyncadd %s609, %s613
          %s615 = smul.addr %s54, 16
          %s616 = scalar_lea.hbm %s5, %s615
          %s618 = sshll.u32 %s611, 4
          %s619 = int_to_ptr.vmem [resolvable:$true] %s618
          %621 = dma.hbm_to_vmem [thread:$0]  %s616, 16, %s619, %s609
        $region40: #{tpu_custom_call.1} parent=27 // pred_fallthru
          _
        // Predicated region
        $region41: #{tpu_custom_call.1} parent=27 // pred_check
          %p622 = pneg %p234
        $region42: #{tpu_custom_call.1} parent=27 // pred_check_branch
          %624 = sbr.rel (%p622) target = $region44
        $region43: #{tpu_custom_call.1} parent=27 // pred_region
          %s625 = sand.u32 %s46, 1
          %s626 = scalar_lea.sflag [#allocation13], %s625
          %s627 = sand.u32 %s224, 1
          %s628 = smul.addr %s627, 64
          %s629 = scalar_lea.vmem [#allocation14], %s628
          %s631 = ssub.s32 1024, 1024
          %632 = vsyncadd %s626, %s631
          %s633 = smul.addr %s54, 16
          %s634 = smul.addr %s633, 64
          %s635 = scalar_lea.hbm %s6, %s634
          %s636 = sshll.u32 %s629, 4
          %s637 = int_to_ptr.vmem [resolvable:$true] %s636
          %642 = dma.hbm_to_vmem [thread:$0]  %s635, 1024, %s637, %s626, 128, 128, 8
        $region44: #{tpu_custom_call.1} parent=27 // pred_fallthru
          _
        // Predicated region
        $region45: #{tpu_custom_call.1} parent=27 // pred_check
          %p643 = pneg %p260
        $region46: #{tpu_custom_call.1} parent=27 // pred_check_branch
          %645 = sbr.rel (%p643) target = $region48
        $region47: #{tpu_custom_call.1} parent=27 // pred_region
          %s646 = sand.u32 %s46, 1
          %s647 = scalar_lea.sflag [#allocation16], %s646
          %s648 = sand.u32 %s250, 1
          %s649 = smul.addr %s648, 2
          %s650 = scalar_lea.vmem [#allocation15], %s649
          %s652 = ssub.s32 32, 32
          %653 = vsyncadd %s647, %s652
          %s654 = smul.addr %s54, 2
          %s655 = smul.addr %s654, 16
          %s656 = scalar_lea.hbm %s7, %s655
          %s658 = sshll.u32 %s650, 4
          %s659 = int_to_ptr.vmem [resolvable:$true] %s658
          %661 = dma.hbm_to_vmem [thread:$0]  %s656, 32, %s659, %s647
        $region48: #{tpu_custom_call.1} parent=27 // pred_fallthru
          _
        // Predicated region
        $region49: #{tpu_custom_call.1} parent=27 // pred_check
          %p662 = pneg %p286
        $region50: #{tpu_custom_call.1} parent=27 // pred_check_branch
          %664 = sbr.rel (%p662) target = $region52
        $region51: #{tpu_custom_call.1} parent=27 // pred_region
          %s665 = sand.u32 %s46, 1
          %s666 = scalar_lea.sflag [#allocation16], %s665
          %s667 = sand.u32 %s276, 1
          %s668 = smul.addr %s667, 32
          %s669 = scalar_lea.vmem [#allocation17], %s668
          %s671 = ssub.s32 512, 512
          %672 = vsyncadd %s666, %s671
          %s673 = smul.addr %s54, 8
          %s674 = smul.addr %s673, 64
          %s675 = scalar_lea.hbm %s8, %s674
          %s676 = sshll.u32 %s669, 4
          %s677 = int_to_ptr.vmem [resolvable:$true] %s676
          %682 = dma.hbm_to_vmem [thread:$0]  %s675, 512, %s677, %s666, 64, 64, 4
        $region52: #{tpu_custom_call.1} parent=27 // pred_fallthru
          _
        // Predicated region
        $region53: #{tpu_custom_call.1} parent=27 // pred_check
          %p683 = pneg %p312
        $region54: #{tpu_custom_call.1} parent=27 // pred_check_branch
          %685 = sbr.rel (%p683) target = $region56
        $region55: #{tpu_custom_call.1} parent=27 // pred_region
          %s686 = sand.u32 %s46, 1
          %s687 = scalar_lea.sflag [#allocation19], %s686
          %s688 = sand.u32 %s302, 1
          %s689 = scalar_lea.vmem [#allocation18], %s688
          %s691 = ssub.s32 16, 16
          %692 = vsyncadd %s687, %s691
          %s693 = smul.addr %s54, 16
          %s694 = scalar_lea.hbm %s9, %s693
          %s696 = sshll.u32 %s689, 4
          %s697 = int_to_ptr.vmem [resolvable:$true] %s696
          %699 = dma.hbm_to_vmem [thread:$0]  %s694, 16, %s697, %s687
        $region56: #{tpu_custom_call.1} parent=27 // pred_fallthru
          _
        // Predicated region
        $region57: #{tpu_custom_call.1} parent=27 // pred_check
          %p700 = pneg %p338
        $region58: #{tpu_custom_call.1} parent=27 // pred_check_branch
          %702 = sbr.rel (%p700) target = $region60
        $region59: #{tpu_custom_call.1} parent=27 // pred_region
          %s703 = sand.u32 %s46, 1
          %s704 = scalar_lea.sflag [#allocation19], %s703
          %s705 = sand.u32 %s328, 1
          %s706 = scalar_lea.vmem [#allocation20], %s705
          %s708 = ssub.s32 16, 16
          %709 = vsyncadd %s704, %s708
          %s710 = smul.addr %s54, 16
          %s711 = scalar_lea.hbm %s10, %s710
          %s713 = sshll.u32 %s706, 4
          %s714 = int_to_ptr.vmem [resolvable:$true] %s713
          %716 = dma.hbm_to_vmem [thread:$0]  %s711, 16, %s714, %s704
        $region60: #{tpu_custom_call.1} parent=27 // pred_fallthru
          _
        // Predicated region
        $region61: #{tpu_custom_call.1} parent=27 // pred_check
          %p717 = pneg %p364
        $region62: #{tpu_custom_call.1} parent=27 // pred_check_branch
          %719 = sbr.rel (%p717) target = $region64
        $region63: #{tpu_custom_call.1} parent=27 // pred_region
          %s720 = sand.u32 %s46, 1
          %s721 = scalar_lea.sflag [#allocation22], %s720
          %s722 = sand.u32 %s354, 1
          %s723 = scalar_lea.vmem [#allocation21], %s722
          %s725 = ssub.s32 16, 16
          %726 = vsyncadd %s721, %s725
          %s727 = smul.addr %s54, 16
          %s728 = scalar_lea.hbm %s11, %s727
          %s730 = sshll.u32 %s723, 4
          %s731 = int_to_ptr.vmem [resolvable:$true] %s730
          %733 = dma.hbm_to_vmem [thread:$0]  %s728, 16, %s731, %s721
        $region64: #{tpu_custom_call.1} parent=27 // pred_fallthru
          _
        // Predicated region
        $region65: #{tpu_custom_call.1} parent=27 // pred_check
          %p734 = pneg %p390
        $region66: #{tpu_custom_call.1} parent=27 // pred_check_branch
          %736 = sbr.rel (%p734) target = $region68
        $region67: #{tpu_custom_call.1} parent=27 // pred_region
          %s737 = sand.u32 %s46, 1
          %s738 = scalar_lea.sflag [#allocation22], %s737
          %s739 = sand.u32 %s380, 1
          %s740 = smul.addr %s739, 64
          %s741 = scalar_lea.vmem [#allocation23], %s740
          %s743 = ssub.s32 1024, 1024
          %744 = vsyncadd %s738, %s743
          %s745 = smul.addr %s54, 16
          %s746 = smul.addr %s745, 64
          %s747 = scalar_lea.hbm %s12, %s746
          %s748 = sshll.u32 %s741, 4
          %s749 = int_to_ptr.vmem [resolvable:$true] %s748
          %754 = dma.hbm_to_vmem [thread:$0]  %s747, 1024, %s749, %s738, 128, 128, 8
        $region68: #{tpu_custom_call.1} parent=27 // pred_fallthru
          _
        // Predicated region
        $region69: #{tpu_custom_call.1} parent=27 // pred_check
          %p755 = pneg %p416
        $region70: #{tpu_custom_call.1} parent=27 // pred_check_branch
          %757 = sbr.rel (%p755) target = $region72
        $region71: #{tpu_custom_call.1} parent=27 // pred_region
          %s758 = sand.u32 %s46, 1
          %s759 = scalar_lea.sflag [#allocation25], %s758
          %s760 = sand.u32 %s406, 1
          %s761 = smul.addr %s760, 2
          %s762 = scalar_lea.vmem [#allocation24], %s761
          %s764 = ssub.s32 32, 32
          %765 = vsyncadd %s759, %s764
          %s766 = smul.addr %s54, 2
          %s767 = smul.addr %s766, 16
          %s768 = scalar_lea.hbm %s13, %s767
          %s770 = sshll.u32 %s762, 4
          %s771 = int_to_ptr.vmem [resolvable:$true] %s770
          %773 = dma.hbm_to_vmem [thread:$0]  %s768, 32, %s771, %s759
        $region72: #{tpu_custom_call.1} parent=27 // pred_fallthru
          _
        // Predicated region
        $region73: #{tpu_custom_call.1} parent=27 // pred_check
          %p774 = pneg %p442
        $region74: #{tpu_custom_call.1} parent=27 // pred_check_branch
          %776 = sbr.rel (%p774) target = $region76
        $region75: #{tpu_custom_call.1} parent=27 // pred_region
          %s777 = sand.u32 %s46, 1
          %s778 = scalar_lea.sflag [#allocation25], %s777
          %s779 = sand.u32 %s432, 1
          %s780 = smul.addr %s779, 128
          %s781 = scalar_lea.vmem [#allocation26], %s780
          %s783 = ssub.s32 2048, 2048
          %784 = vsyncadd %s778, %s783
          %s785 = smul.addr %s54, 32
          %s786 = smul.addr %s785, 64
          %s787 = scalar_lea.hbm %s14, %s786
          %s788 = sshll.u32 %s781, 4
          %s789 = int_to_ptr.vmem [resolvable:$true] %s788
          %794 = dma.hbm_to_vmem [thread:$0]  %s787, 2048, %s789, %s778, 64, 64, 4
        $region76: #{tpu_custom_call.1} parent=27 // pred_fallthru
          _
        // Predicated region
        $region77: #{tpu_custom_call.1} parent=27 // pred_check
          %p795 = pneg %p468
        $region78: #{tpu_custom_call.1} parent=27 // pred_check_branch
          %797 = sbr.rel (%p795) target = $region80
        $region79: #{tpu_custom_call.1} parent=27 // pred_region
          %s798 = sand.u32 %s458, 1
          %s799 = scalar_lea.sflag [#allocation28], %s798
          %s800 = sand.u32 %s458, 1
          %s801 = scalar_lea.vmem [#allocation27], %s800
          %s803 = ssub.s32 16, 16
          %804 = vsyncadd %s799, %s803
          %s805 = smul.addr %s54, 16
          %s806 = scalar_lea.hbm %s15, %s805
          %s808 = sshll.u32 %s801, 4
          %s809 = int_to_ptr.vmem [resolvable:$true] %s808
          %811 = dma.hbm_to_vmem [thread:$0]  %s806, 16, %s809, %s799
        $region80: #{tpu_custom_call.1} parent=27 // pred_fallthru
          _
      $region28: #{tpu_custom_call.1} parent=5 // pred_fallthru
        _
      %p812 = scmp.le.s32.totalorder 1, %s46
      %p813 = scmp.lt.s32.totalorder %s46, 4
      %p814 = pnand %p812, %p813
      %p815 = pneg %p814
      // Predicated region
      $region81: #{tpu_custom_call.1} parent=5 // pred_check
        _
      $region82: #{tpu_custom_call.1} parent=5 // pred_check_branch
        %817 = sbr.rel (%p814) target = $region84
      $region83: #{tpu_custom_call.1} parent=5 // pred_region
        %s818 = ssub.s32 %s46, 1
        // Predicated region
        $region85: #{tpu_custom_call.1} parent=83 // pred_check
          %p819 = pneg %p84
        $region86: #{tpu_custom_call.1} parent=83 // pred_check_branch
          %821 = sbr.rel (%p819) target = $region88
        $region87: #{tpu_custom_call.1} parent=83 // pred_region
          %822 = dma.done [#allocation4], 2048
        $region88: #{tpu_custom_call.1} parent=83 // pred_fallthru
          _
        // Predicated region
        $region89: #{tpu_custom_call.1} parent=83 // pred_check
          %p823 = pneg %p105
        $region90: #{tpu_custom_call.1} parent=83 // pred_check_branch
          %825 = sbr.rel (%p823) target = $region92
        $region91: #{tpu_custom_call.1} parent=83 // pred_region
          %826 = dma.done [#allocation7], 2048
        $region92: #{tpu_custom_call.1} parent=83 // pred_fallthru
          _
        // Predicated region
        $region93: #{tpu_custom_call.1} parent=83 // pred_check
          %p827 = pneg %p126
        $region94: #{tpu_custom_call.1} parent=83 // pred_check_branch
          %829 = sbr.rel (%p827) target = $region96
        $region95: #{tpu_custom_call.1} parent=83 // pred_region
          %830 = dma.done [#allocation7], 1024
        $region96: #{tpu_custom_call.1} parent=83 // pred_fallthru
          _
        %s831 = sand.u32 %s51, 1
        %s832 = scalar_lea.sflag [#allocation10], %s831
        %s833 = sand.u32 %s149, 1
        %s834 = smul.addr %s833, 64
        %s835 = scalar_lea.vmem [#allocation9], %s834
        // Predicated region
        $region97: #{tpu_custom_call.1} parent=83 // pred_check
          %p836 = pneg %p162
        $region98: #{tpu_custom_call.1} parent=83 // pred_check_branch
          %838 = sbr.rel (%p836) target = $region100
        $region99: #{tpu_custom_call.1} parent=83 // pred_region
          %839 = dma.done %s832, 1024
        $region100: #{tpu_custom_call.1} parent=83 // pred_fallthru
          _
        %s840 = sand.u32 %s51, 1
        %s841 = scalar_lea.sflag [#allocation10], %s840
        %s842 = sand.u32 %s175, 1
        %s843 = scalar_lea.vmem [#allocation11], %s842
        // Predicated region
        $region101: #{tpu_custom_call.1} parent=83 // pred_check
          %p844 = pneg %p188
        $region102: #{tpu_custom_call.1} parent=83 // pred_check_branch
          %846 = sbr.rel (%p844) target = $region104
        $region103: #{tpu_custom_call.1} parent=83 // pred_region
          %847 = dma.done %s841, 16
        $region104: #{tpu_custom_call.1} parent=83 // pred_fallthru
          _
        %s848 = sand.u32 %s51, 1
        %s849 = scalar_lea.sflag [#allocation13], %s848
        %s850 = sand.u32 %s201, 1
        %s851 = scalar_lea.vmem [#allocation12], %s850
        // Predicated region
        $region105: #{tpu_custom_call.1} parent=83 // pred_check
          %p852 = pneg %p214
        $region106: #{tpu_custom_call.1} parent=83 // pred_check_branch
          %854 = sbr.rel (%p852) target = $region108
        $region107: #{tpu_custom_call.1} parent=83 // pred_region
          %855 = dma.done %s849, 16
        $region108: #{tpu_custom_call.1} parent=83 // pred_fallthru
          _
        %s856 = sand.u32 %s51, 1
        %s857 = scalar_lea.sflag [#allocation13], %s856
        %s858 = sand.u32 %s227, 1
        %s859 = smul.addr %s858, 64
        %s860 = scalar_lea.vmem [#allocation14], %s859
        // Predicated region
        $region109: #{tpu_custom_call.1} parent=83 // pred_check
          %p861 = pneg %p240
        $region110: #{tpu_custom_call.1} parent=83 // pred_check_branch
          %863 = sbr.rel (%p861) target = $region112
        $region111: #{tpu_custom_call.1} parent=83 // pred_region
          %864 = dma.done %s857, 1024
        $region112: #{tpu_custom_call.1} parent=83 // pred_fallthru
          _
        %s865 = sand.u32 %s51, 1
        %s866 = scalar_lea.sflag [#allocation16], %s865
        %s867 = sand.u32 %s253, 1
        %s868 = smul.addr %s867, 2
        %s869 = scalar_lea.vmem [#allocation15], %s868
        // Predicated region
        $region113: #{tpu_custom_call.1} parent=83 // pred_check
          %p870 = pneg %p266
        $region114: #{tpu_custom_call.1} parent=83 // pred_check_branch
          %872 = sbr.rel (%p870) target = $region116
        $region115: #{tpu_custom_call.1} parent=83 // pred_region
          %873 = dma.done %s866, 32
        $region116: #{tpu_custom_call.1} parent=83 // pred_fallthru
          _
        %s874 = sand.u32 %s51, 1
        %s875 = scalar_lea.sflag [#allocation16], %s874
        %s876 = sand.u32 %s279, 1
        %s877 = smul.addr %s876, 32
        %s878 = scalar_lea.vmem [#allocation17], %s877
        // Predicated region
        $region117: #{tpu_custom_call.1} parent=83 // pred_check
          %p879 = pneg %p292
        $region118: #{tpu_custom_call.1} parent=83 // pred_check_branch
          %881 = sbr.rel (%p879) target = $region120
        $region119: #{tpu_custom_call.1} parent=83 // pred_region
          %882 = dma.done %s875, 512
        $region120: #{tpu_custom_call.1} parent=83 // pred_fallthru
          _
        %s883 = sand.u32 %s51, 1
        %s884 = scalar_lea.sflag [#allocation19], %s883
        %s885 = sand.u32 %s305, 1
        %s886 = scalar_lea.vmem [#allocation18], %s885
        // Predicated region
        $region121: #{tpu_custom_call.1} parent=83 // pred_check
          %p887 = pneg %p318
        $region122: #{tpu_custom_call.1} parent=83 // pred_check_branch
          %889 = sbr.rel (%p887) target = $region124
        $region123: #{tpu_custom_call.1} parent=83 // pred_region
          %890 = dma.done %s884, 16
        $region124: #{tpu_custom_call.1} parent=83 // pred_fallthru
          _
        %s891 = sand.u32 %s51, 1
        %s892 = scalar_lea.sflag [#allocation19], %s891
        %s893 = sand.u32 %s331, 1
        %s894 = scalar_lea.vmem [#allocation20], %s893
        // Predicated region
        $region125: #{tpu_custom_call.1} parent=83 // pred_check
          %p895 = pneg %p344
        $region126: #{tpu_custom_call.1} parent=83 // pred_check_branch
          %897 = sbr.rel (%p895) target = $region128
        $region127: #{tpu_custom_call.1} parent=83 // pred_region
          %898 = dma.done %s892, 16
        $region128: #{tpu_custom_call.1} parent=83 // pred_fallthru
          _
        %s899 = sand.u32 %s51, 1
        %s900 = scalar_lea.sflag [#allocation22], %s899
        %s901 = sand.u32 %s357, 1
        %s902 = scalar_lea.vmem [#allocation21], %s901
        // Predicated region
        $region129: #{tpu_custom_call.1} parent=83 // pred_check
          %p903 = pneg %p370
        $region130: #{tpu_custom_call.1} parent=83 // pred_check_branch
          %905 = sbr.rel (%p903) target = $region132
        $region131: #{tpu_custom_call.1} parent=83 // pred_region
          %906 = dma.done %s900, 16
        $region132: #{tpu_custom_call.1} parent=83 // pred_fallthru
          _
        %s907 = sand.u32 %s51, 1
        %s908 = scalar_lea.sflag [#allocation22], %s907
        %s909 = sand.u32 %s383, 1
        %s910 = smul.addr %s909, 64
        %s911 = scalar_lea.vmem [#allocation23], %s910
        // Predicated region
        $region133: #{tpu_custom_call.1} parent=83 // pred_check
          %p912 = pneg %p396
        $region134: #{tpu_custom_call.1} parent=83 // pred_check_branch
          %914 = sbr.rel (%p912) target = $region136
        $region135: #{tpu_custom_call.1} parent=83 // pred_region
          %915 = dma.done %s908, 1024
        $region136: #{tpu_custom_call.1} parent=83 // pred_fallthru
          _
        %s916 = sand.u32 %s51, 1
        %s917 = scalar_lea.sflag [#allocation25], %s916
        %s918 = sand.u32 %s409, 1
        %s919 = smul.addr %s918, 2
        %s920 = scalar_lea.vmem [#allocation24], %s919
        // Predicated region
        $region137: #{tpu_custom_call.1} parent=83 // pred_check
          %p921 = pneg %p422
        $region138: #{tpu_custom_call.1} parent=83 // pred_check_branch
          %923 = sbr.rel (%p921) target = $region140
        $region139: #{tpu_custom_call.1} parent=83 // pred_region
          %924 = dma.done %s917, 32
        $region140: #{tpu_custom_call.1} parent=83 // pred_fallthru
          _
        %s925 = sand.u32 %s51, 1
        %s926 = scalar_lea.sflag [#allocation25], %s925
        %s927 = sand.u32 %s435, 1
        %s928 = smul.addr %s927, 128
        %s929 = scalar_lea.vmem [#allocation26], %s928
        // Predicated region
        $region141: #{tpu_custom_call.1} parent=83 // pred_check
          %p930 = pneg %p448
        $region142: #{tpu_custom_call.1} parent=83 // pred_check_branch
          %932 = sbr.rel (%p930) target = $region144
        $region143: #{tpu_custom_call.1} parent=83 // pred_region
          %933 = dma.done %s926, 2048
        $region144: #{tpu_custom_call.1} parent=83 // pred_fallthru
          _
        %s934 = sand.u32 %s461, 1
        %s935 = scalar_lea.sflag [#allocation28], %s934
        %s936 = sand.u32 %s461, 1
        %s937 = scalar_lea.vmem [#allocation27], %s936
        // Predicated region
        $region145: #{tpu_custom_call.1} parent=83 // pred_check
          %p938 = pneg %p474
        $region146: #{tpu_custom_call.1} parent=83 // pred_check_branch
          %940 = sbr.rel (%p938) target = $region148
        $region147: #{tpu_custom_call.1} parent=83 // pred_region
          %941 = dma.done %s935, 16
        $region148: #{tpu_custom_call.1} parent=83 // pred_fallthru
          _
        %p942 = pneg %p84
        %p943 = pneg %p81
        %p944 = pneg %p105
        %p945 = pneg %p102
        %p946 = pneg %p126
        %p947 = pneg %p123
        %s948 = sand.u32 %s51, 1
        %s949 = scalar_lea.sflag [#allocation10], %s948
        %s950 = sand.u32 %s149, 1
        %s951 = smul.addr %s950, 64
        %s952 = scalar_lea.vmem [#allocation9], %s951
        %p953 = pneg %p162
        %p954 = pneg %p159
        %s955 = sand.u32 %s51, 1
        %s956 = scalar_lea.sflag [#allocation10], %s955
        %s957 = sand.u32 %s175, 1
        %s958 = scalar_lea.vmem [#allocation11], %s957
        %p959 = pneg %p188
        %p960 = pneg %p185
        %s961 = sand.u32 %s51, 1
        %s962 = scalar_lea.sflag [#allocation13], %s961
        %s963 = sand.u32 %s201, 1
        %s964 = scalar_lea.vmem [#allocation12], %s963
        %p965 = pneg %p214
        %p966 = pneg %p211
        %s967 = sand.u32 %s51, 1
        %s968 = scalar_lea.sflag [#allocation13], %s967
        %s969 = sand.u32 %s227, 1
        %s970 = smul.addr %s969, 64
        %s971 = scalar_lea.vmem [#allocation14], %s970
        %p972 = pneg %p240
        %p973 = pneg %p237
        %s974 = sand.u32 %s51, 1
        %s975 = scalar_lea.sflag [#allocation16], %s974
        %s976 = sand.u32 %s253, 1
        %s977 = smul.addr %s976, 2
        %s978 = scalar_lea.vmem [#allocation15], %s977
        %p979 = pneg %p266
        %p980 = pneg %p263
        %s981 = sand.u32 %s51, 1
        %s982 = scalar_lea.sflag [#allocation16], %s981
        %s983 = sand.u32 %s279, 1
        %s984 = smul.addr %s983, 32
        %s985 = scalar_lea.vmem [#allocation17], %s984
        %p986 = pneg %p292
        %p987 = pneg %p289
        %s988 = sand.u32 %s51, 1
        %s989 = scalar_lea.sflag [#allocation19], %s988
        %s990 = sand.u32 %s305, 1
        %s991 = scalar_lea.vmem [#allocation18], %s990
        %p992 = pneg %p318
        %p993 = pneg %p315
        %s994 = sand.u32 %s51, 1
        %s995 = scalar_lea.sflag [#allocation19], %s994
        %s996 = sand.u32 %s331, 1
        %s997 = scalar_lea.vmem [#allocation20], %s996
        %p998 = pneg %p344
        %p999 = pneg %p341
        %s1000 = sand.u32 %s51, 1
        %s1001 = scalar_lea.sflag [#allocation22], %s1000
        %s1002 = sand.u32 %s357, 1
        %s1003 = scalar_lea.vmem [#allocation21], %s1002
        %p1004 = pneg %p370
        %p1005 = pneg %p367
        %s1006 = sand.u32 %s51, 1
        %s1007 = scalar_lea.sflag [#allocation22], %s1006
        %s1008 = sand.u32 %s383, 1
        %s1009 = smul.addr %s1008, 64
        %s1010 = scalar_lea.vmem [#allocation23], %s1009
        %p1011 = pneg %p396
        %p1012 = pneg %p393
        %s1013 = sand.u32 %s51, 1
        %s1014 = scalar_lea.sflag [#allocation25], %s1013
        %s1015 = sand.u32 %s409, 1
        %s1016 = smul.addr %s1015, 2
        %s1017 = scalar_lea.vmem [#allocation24], %s1016
        %p1018 = pneg %p422
        %p1019 = pneg %p419
        %s1020 = sand.u32 %s51, 1
        %s1021 = scalar_lea.sflag [#allocation25], %s1020
        %s1022 = sand.u32 %s435, 1
        %s1023 = smul.addr %s1022, 128
        %s1024 = scalar_lea.vmem [#allocation26], %s1023
        %p1025 = pneg %p448
        %p1026 = pneg %p445
        %s1027 = sand.u32 %s461, 1
        %s1028 = scalar_lea.sflag [#allocation28], %s1027
        %s1029 = sand.u32 %s461, 1
        %s1030 = scalar_lea.vmem [#allocation27], %s1029
        %p1031 = pneg %p474
        %p1032 = pneg %p471
        %p1033 = pneg %p500
        %p1034 = pneg %p497
        %s1035 = smul.u32 2, %s55
        %s1036 = ssub.s32 %s56, 1
        %p1037 = scmp.gt.s32.totalorder %s1036, 0
        %s1038 = scalar_select %p1037, %s1036, 0
        %p1039 = scmp.lt.s32.totalorder %s1038, 1
        %s1040 = scalar_select %p1039, %s1038, 1
        %s1041 = smul.u32 2, %s55
        %p1045 = scmp.eq.s32.totalorder %s56, 0
        // Predicated region
        $region149: #{tpu_custom_call.1} parent=83 // pred_check
          %p1046 = pneg %p1045
        $region150: #{tpu_custom_call.1} parent=83 // pred_check_branch
          %1048 = sbr.rel (%p1046) target = $region152
        $region151: #{tpu_custom_call.1} parent=83 // pred_region
          %v1049 = vld [vmem:[#allocation3] sm:$0xf]
          %v1050 = vld [vmem:[#allocation3 + $0x4] sm:$0xf]
          %v1051 = vld [vmem:[#allocation3 + $0x8] sm:$0xf]
          %v1052 = vld [vmem:[#allocation3 + $0xc] sm:$0xf]
          %v1053 = vld [vmem:[#allocation3 + $0x10] sm:$0xf]
          %v1054 = vld [vmem:[#allocation3 + $0x14] sm:$0xf]
          %v1055 = vld [vmem:[#allocation3 + $0x18] sm:$0xf]
          %v1056 = vld [vmem:[#allocation3 + $0x1c] sm:$0xf]
          %v1057 = vld [vmem:[#allocation3 + $0x20] sm:$0xf]
          %v1058 = vld [vmem:[#allocation3 + $0x24] sm:$0xf]
          %v1059 = vld [vmem:[#allocation3 + $0x28] sm:$0xf]
          %v1060 = vld [vmem:[#allocation3 + $0x2c] sm:$0xf]
          %v1061 = vld [vmem:[#allocation3 + $0x30] sm:$0xf]
          %v1062 = vld [vmem:[#allocation3 + $0x34] sm:$0xf]
          %v1063 = vld [vmem:[#allocation3 + $0x38] sm:$0xf]
          %v1064 = vld [vmem:[#allocation3 + $0x3c] sm:$0xf]
          %v1065 = vld [vmem:[#allocation3 + $0x40] sm:$0xf]
          %v1066 = vld [vmem:[#allocation3 + $0x44] sm:$0xf]
          %v1067 = vld [vmem:[#allocation3 + $0x48] sm:$0xf]
          %v1068 = vld [vmem:[#allocation3 + $0x4c] sm:$0xf]
          %v1069 = vld [vmem:[#allocation3 + $0x50] sm:$0xf]
          %v1070 = vld [vmem:[#allocation3 + $0x54] sm:$0xf]
          %v1071 = vld [vmem:[#allocation3 + $0x58] sm:$0xf]
          %v1072 = vld [vmem:[#allocation3 + $0x5c] sm:$0xf]
          %v1073 = vld [vmem:[#allocation3 + $0x60] sm:$0xf]
          %v1074 = vld [vmem:[#allocation3 + $0x64] sm:$0xf]
          %v1075 = vld [vmem:[#allocation3 + $0x68] sm:$0xf]
          %v1076 = vld [vmem:[#allocation3 + $0x6c] sm:$0xf]
          %v1077 = vld [vmem:[#allocation3 + $0x70] sm:$0xf]
          %v1078 = vld [vmem:[#allocation3 + $0x74] sm:$0xf]
          %v1079 = vld [vmem:[#allocation3 + $0x78] sm:$0xf]
          %v1080 = vld [vmem:[#allocation3 + $0x7c] sm:$0xf]
          %v1081 = vunpack.c.l.bf16 %v1049
          %v1082 = vunpack.c.l.bf16 %v1050
          %v1083 = vunpack.c.l.bf16 %v1051
          %v1084 = vunpack.c.l.bf16 %v1052
          %v1085 = vunpack.c.l.bf16 %v1053
          %v1086 = vunpack.c.l.bf16 %v1054
          %v1087 = vunpack.c.l.bf16 %v1055
          %v1088 = vunpack.c.l.bf16 %v1056
          %v1089 = vunpack.c.l.bf16 %v1057
          %v1090 = vunpack.c.l.bf16 %v1058
          %v1091 = vunpack.c.l.bf16 %v1059
          %v1092 = vunpack.c.l.bf16 %v1060
          %v1093 = vunpack.c.l.bf16 %v1061
          %v1094 = vunpack.c.l.bf16 %v1062
          %v1095 = vunpack.c.l.bf16 %v1063
          %v1096 = vunpack.c.l.bf16 %v1064
          %v1097 = vunpack.c.l.bf16 %v1065
          %v1098 = vunpack.c.l.bf16 %v1066
          %v1099 = vunpack.c.l.bf16 %v1067
          %v1100 = vunpack.c.l.bf16 %v1068
          %v1101 = vunpack.c.l.bf16 %v1069
          %v1102 = vunpack.c.l.bf16 %v1070
          %v1103 = vunpack.c.l.bf16 %v1071
          %v1104 = vunpack.c.l.bf16 %v1072
          %v1105 = vunpack.c.l.bf16 %v1073
          %v1106 = vunpack.c.l.bf16 %v1074
          %v1107 = vunpack.c.l.bf16 %v1075
          %v1108 = vunpack.c.l.bf16 %v1076
          %v1109 = vunpack.c.l.bf16 %v1077
          %v1110 = vunpack.c.l.bf16 %v1078
          %v1111 = vunpack.c.l.bf16 %v1079
          %v1112 = vunpack.c.l.bf16 %v1080
          %v1113 = vld [vmem:[#allocation8] sm:$0xf]
          %v1114 = vld [vmem:[#allocation8 + $0x4] sm:$0xf]
          %v1115 = vld [vmem:[#allocation8 + $0x8] sm:$0xf]
          %v1116 = vld [vmem:[#allocation8 + $0xc] sm:$0xf]
          %v1117 = vld [vmem:[#allocation8 + $0x10] sm:$0xf]
          %v1118 = vld [vmem:[#allocation8 + $0x14] sm:$0xf]
          %v1119 = vld [vmem:[#allocation8 + $0x18] sm:$0xf]
          %v1120 = vld [vmem:[#allocation8 + $0x1c] sm:$0xf]
          %v1121 = vld [vmem:[#allocation8 + $0x20] sm:$0xf]
          %v1122 = vld [vmem:[#allocation8 + $0x24] sm:$0xf]
          %v1123 = vld [vmem:[#allocation8 + $0x28] sm:$0xf]
          %v1124 = vld [vmem:[#allocation8 + $0x2c] sm:$0xf]
          %v1125 = vld [vmem:[#allocation8 + $0x30] sm:$0xf]
          %v1126 = vld [vmem:[#allocation8 + $0x34] sm:$0xf]
          %v1127 = vld [vmem:[#allocation8 + $0x38] sm:$0xf]
          %v1128 = vld [vmem:[#allocation8 + $0x3c] sm:$0xf]
          %v1129 = vunpack.c.l.bf16 %v1113
          %v1130 = vunpack.c.l.bf16 %v1114
          %v1131 = vunpack.c.l.bf16 %v1115
          %v1132 = vunpack.c.l.bf16 %v1116
          %v1133 = vunpack.c.l.bf16 %v1117
          %v1134 = vunpack.c.l.bf16 %v1118
          %v1135 = vunpack.c.l.bf16 %v1119
          %v1136 = vunpack.c.l.bf16 %v1120
          %v1137 = vunpack.c.l.bf16 %v1121
          %v1138 = vunpack.c.l.bf16 %v1122
          %v1139 = vunpack.c.l.bf16 %v1123
          %v1140 = vunpack.c.l.bf16 %v1124
          %v1141 = vunpack.c.l.bf16 %v1125
          %v1142 = vunpack.c.l.bf16 %v1126
          %v1143 = vunpack.c.l.bf16 %v1127
          %v1144 = vunpack.c.l.bf16 %v1128
          %v1145 = vadd.f32 %v1081, %v1129
          %v1146 = vadd.f32 %v1082, %v1130
          %v1147 = vadd.f32 %v1083, %v1131
          %v1148 = vadd.f32 %v1084, %v1132
          %v1149 = vadd.f32 %v1085, %v1133
          %v1150 = vadd.f32 %v1086, %v1134
          %v1151 = vadd.f32 %v1087, %v1135
          %v1152 = vadd.f32 %v1088, %v1136
          %v1153 = vadd.f32 %v1089, %v1137
          %v1154 = vadd.f32 %v1090, %v1138
          %v1155 = vadd.f32 %v1091, %v1139
          %v1156 = vadd.f32 %v1092, %v1140
          %v1157 = vadd.f32 %v1093, %v1141
          %v1158 = vadd.f32 %v1094, %v1142
          %v1159 = vadd.f32 %v1095, %v1143
          %v1160 = vadd.f32 %v1096, %v1144
          %v1161 = vadd.f32 %v1097, %v1129
          %v1162 = vadd.f32 %v1098, %v1130
          %v1163 = vadd.f32 %v1099, %v1131
          %v1164 = vadd.f32 %v1100, %v1132
          %v1165 = vadd.f32 %v1101, %v1133
          %v1166 = vadd.f32 %v1102, %v1134
          %v1167 = vadd.f32 %v1103, %v1135
          %v1168 = vadd.f32 %v1104, %v1136
          %v1169 = vadd.f32 %v1105, %v1137
          %v1170 = vadd.f32 %v1106, %v1138
          %v1171 = vadd.f32 %v1107, %v1139
          %v1172 = vadd.f32 %v1108, %v1140
          %v1173 = vadd.f32 %v1109, %v1141
          %v1174 = vadd.f32 %v1110, %v1142
          %v1175 = vadd.f32 %v1111, %v1143
          %v1176 = vadd.f32 %v1112, %v1144
          %vm1177 = vcmask 523264
          %1178 = vst.msk [vmem:[#allocation2] sm:$0xff] %vm1177, %v1145
          %1179 = vst.msk [vmem:[#allocation2 + $0x8] sm:$0xff] %vm1177, %v1146
          %1180 = vst.msk [vmem:[#allocation2 + $0x10] sm:$0xff] %vm1177, %v1147
          %1181 = vst.msk [vmem:[#allocation2 + $0x18] sm:$0xff] %vm1177, %v1148
          %1182 = vst.msk [vmem:[#allocation2 + $0x20] sm:$0xff] %vm1177, %v1149
          %1183 = vst.msk [vmem:[#allocation2 + $0x28] sm:$0xff] %vm1177, %v1150
          %1184 = vst.msk [vmem:[#allocation2 + $0x30] sm:$0xff] %vm1177, %v1151
          %1185 = vst.msk [vmem:[#allocation2 + $0x38] sm:$0xff] %vm1177, %v1152
          %1186 = vst.msk [vmem:[#allocation2 + $0x40] sm:$0xff] %vm1177, %v1153
          %1187 = vst.msk [vmem:[#allocation2 + $0x48] sm:$0xff] %vm1177, %v1154
          %1188 = vst.msk [vmem:[#allocation2 + $0x50] sm:$0xff] %vm1177, %v1155
          %1189 = vst.msk [vmem:[#allocation2 + $0x58] sm:$0xff] %vm1177, %v1156
          %1190 = vst.msk [vmem:[#allocation2 + $0x60] sm:$0xff] %vm1177, %v1157
          %1191 = vst.msk [vmem:[#allocation2 + $0x68] sm:$0xff] %vm1177, %v1158
          %1192 = vst.msk [vmem:[#allocation2 + $0x70] sm:$0xff] %vm1177, %v1159
          %1193 = vst.msk [vmem:[#allocation2 + $0x78] sm:$0xff] %vm1177, %v1160
          %1194 = vst.msk [vmem:[#allocation2 + $0x80] sm:$0xff] %vm1177, %v1161
          %1195 = vst.msk [vmem:[#allocation2 + $0x88] sm:$0xff] %vm1177, %v1162
          %1196 = vst.msk [vmem:[#allocation2 + $0x90] sm:$0xff] %vm1177, %v1163
          %1197 = vst.msk [vmem:[#allocation2 + $0x98] sm:$0xff] %vm1177, %v1164
          %1198 = vst.msk [vmem:[#allocation2 + $0xa0] sm:$0xff] %vm1177, %v1165
          %1199 = vst.msk [vmem:[#allocation2 + $0xa8] sm:$0xff] %vm1177, %v1166
          %1200 = vst.msk [vmem:[#allocation2 + $0xb0] sm:$0xff] %vm1177, %v1167
          %1201 = vst.msk [vmem:[#allocation2 + $0xb8] sm:$0xff] %vm1177, %v1168
          %1202 = vst.msk [vmem:[#allocation2 + $0xc0] sm:$0xff] %vm1177, %v1169
          %1203 = vst.msk [vmem:[#allocation2 + $0xc8] sm:$0xff] %vm1177, %v1170
          %1204 = vst.msk [vmem:[#allocation2 + $0xd0] sm:$0xff] %vm1177, %v1171
          %1205 = vst.msk [vmem:[#allocation2 + $0xd8] sm:$0xff] %vm1177, %v1172
          %1206 = vst.msk [vmem:[#allocation2 + $0xe0] sm:$0xff] %vm1177, %v1173
          %1207 = vst.msk [vmem:[#allocation2 + $0xe8] sm:$0xff] %vm1177, %v1174
          %1208 = vst.msk [vmem:[#allocation2 + $0xf0] sm:$0xff] %vm1177, %v1175
          %1209 = vst.msk [vmem:[#allocation2 + $0xf8] sm:$0xff] %vm1177, %v1176
        $region152: #{tpu_custom_call.1} parent=83 // pred_fallthru
          _
        %p1210 = scmp.ge.s32.totalorder %s56, 1
        %p1211 = scmp.le.s32.totalorder %s56, 2
        %p1212 = pnand %p1210, %p1211
        %p1213 = pneg %p1212
        // Predicated region
        $region153: #{tpu_custom_call.1} parent=83 // pred_check
          _
        $region154: #{tpu_custom_call.1} parent=83 // pred_check_branch
          %1215 = sbr.rel (%p1212) target = $region156
        $region155: #{tpu_custom_call.1} parent=83 // pred_region
          %v1216 = vlaneseq
          %v1217 = vshrl.u32 %v1216, 7
          %v1218 = vadd.s32 %v1217, 8
          %v1219 = vadd.s32 %v1217, 16
          %v1220 = vadd.s32 %v1217, 24
          %v1221 = vadd.s32 %v1217, 32
          %v1222 = vadd.s32 %v1217, 40
          %v1223 = vadd.s32 %v1217, 48
          %v1224 = vadd.s32 %v1217, 56
          %v1225 = vadd.s32 %v1217, 64
          %v1226 = vadd.s32 %v1217, 72
          %v1227 = vadd.s32 %v1217, 80
          %v1228 = vadd.s32 %v1217, 88
          %v1229 = vadd.s32 %v1217, 96
          %v1230 = vadd.s32 %v1217, 104
          %v1231 = vadd.s32 %v1217, 112
          %v1232 = vadd.s32 %v1217, 120
          %vm1233 = vcmp.lt.s32.totalorder %v1217, 1
          %vm1234 = vcmp.lt.s32.totalorder %v1218, 1
          %vm1235 = vcmp.lt.s32.totalorder %v1219, 1
          %vm1236 = vcmp.lt.s32.totalorder %v1220, 1
          %vm1237 = vcmp.lt.s32.totalorder %v1221, 1
          %vm1238 = vcmp.lt.s32.totalorder %v1222, 1
          %vm1239 = vcmp.lt.s32.totalorder %v1223, 1
          %vm1240 = vcmp.lt.s32.totalorder %v1224, 1
          %vm1241 = vcmp.lt.s32.totalorder %v1225, 1
          %vm1242 = vcmp.lt.s32.totalorder %v1226, 1
          %vm1243 = vcmp.lt.s32.totalorder %v1227, 1
          %vm1244 = vcmp.lt.s32.totalorder %v1228, 1
          %vm1245 = vcmp.lt.s32.totalorder %v1229, 1
          %vm1246 = vcmp.lt.s32.totalorder %v1230, 1
          %vm1247 = vcmp.lt.s32.totalorder %v1231, 1
          %vm1248 = vcmp.lt.s32.totalorder %v1232, 1
          %vm1249 = vcmp.ge.s32.totalorder %v1217, 3
          %vm1250 = vcmp.ge.s32.totalorder %v1218, 3
          %vm1251 = vcmp.ge.s32.totalorder %v1219, 3
          %vm1252 = vcmp.ge.s32.totalorder %v1220, 3
          %vm1253 = vcmp.ge.s32.totalorder %v1221, 3
          %vm1254 = vcmp.ge.s32.totalorder %v1222, 3
          %vm1255 = vcmp.ge.s32.totalorder %v1223, 3
          %vm1256 = vcmp.ge.s32.totalorder %v1224, 3
          %vm1257 = vcmp.ge.s32.totalorder %v1225, 3
          %vm1258 = vcmp.ge.s32.totalorder %v1226, 3
          %vm1259 = vcmp.ge.s32.totalorder %v1227, 3
          %vm1260 = vcmp.ge.s32.totalorder %v1228, 3
          %vm1261 = vcmp.ge.s32.totalorder %v1229, 3
          %vm1262 = vcmp.ge.s32.totalorder %v1230, 3
          %vm1263 = vcmp.ge.s32.totalorder %v1231, 3
          %vm1264 = vcmp.ge.s32.totalorder %v1232, 3
          %vm1265 = vmor %vm1233, %vm1249
          %vm1266 = vmor %vm1234, %vm1250
          %vm1267 = vmor %vm1235, %vm1251
          %vm1268 = vmor %vm1236, %vm1252
          %vm1269 = vmor %vm1237, %vm1253
          %vm1270 = vmor %vm1238, %vm1254
          %vm1271 = vmor %vm1239, %vm1255
          %vm1272 = vmor %vm1240, %vm1256
          %vm1273 = vmor %vm1241, %vm1257
          %vm1274 = vmor %vm1242, %vm1258
          %vm1275 = vmor %vm1243, %vm1259
          %vm1276 = vmor %vm1244, %vm1260
          %vm1277 = vmor %vm1245, %vm1261
          %vm1278 = vmor %vm1246, %vm1262
          %vm1279 = vmor %vm1247, %vm1263
          %vm1280 = vmor %vm1248, %vm1264
          %v1281 = vld [vmem:[#allocation2] sm:$0xff]
          %v1282 = vld [vmem:[#allocation2 + $0x8] sm:$0xff]
          %v1283 = vld [vmem:[#allocation2 + $0x10] sm:$0xff]
          %v1284 = vld [vmem:[#allocation2 + $0x18] sm:$0xff]
          %v1285 = vld [vmem:[#allocation2 + $0x20] sm:$0xff]
          %v1286 = vld [vmem:[#allocation2 + $0x28] sm:$0xff]
          %v1287 = vld [vmem:[#allocation2 + $0x30] sm:$0xff]
          %v1288 = vld [vmem:[#allocation2 + $0x38] sm:$0xff]
          %v1289 = vld [vmem:[#allocation2 + $0x40] sm:$0xff]
          %v1290 = vld [vmem:[#allocation2 + $0x48] sm:$0xff]
          %v1291 = vld [vmem:[#allocation2 + $0x50] sm:$0xff]
          %v1292 = vld [vmem:[#allocation2 + $0x58] sm:$0xff]
          %v1293 = vld [vmem:[#allocation2 + $0x60] sm:$0xff]
          %v1294 = vld [vmem:[#allocation2 + $0x68] sm:$0xff]
          %v1295 = vld [vmem:[#allocation2 + $0x70] sm:$0xff]
          %v1296 = vld [vmem:[#allocation2 + $0x78] sm:$0xff]
          %v1297 = vld [vmem:[#allocation2 + $0x80] sm:$0xff]
          %v1298 = vld [vmem:[#allocation2 + $0x88] sm:$0xff]
          %v1299 = vld [vmem:[#allocation2 + $0x90] sm:$0xff]
          %v1300 = vld [vmem:[#allocation2 + $0x98] sm:$0xff]
          %v1301 = vld [vmem:[#allocation2 + $0xa0] sm:$0xff]
          %v1302 = vld [vmem:[#allocation2 + $0xa8] sm:$0xff]
          %v1303 = vld [vmem:[#allocation2 + $0xb0] sm:$0xff]
          %v1304 = vld [vmem:[#allocation2 + $0xb8] sm:$0xff]
          %v1305 = vld [vmem:[#allocation2 + $0xc0] sm:$0xff]
          %v1306 = vld [vmem:[#allocation2 + $0xc8] sm:$0xff]
          %v1307 = vld [vmem:[#allocation2 + $0xd0] sm:$0xff]
          %v1308 = vld [vmem:[#allocation2 + $0xd8] sm:$0xff]
          %v1309 = vld [vmem:[#allocation2 + $0xe0] sm:$0xff]
          %v1310 = vld [vmem:[#allocation2 + $0xe8] sm:$0xff]
          %v1311 = vld [vmem:[#allocation2 + $0xf0] sm:$0xff]
          %v1312 = vld [vmem:[#allocation2 + $0xf8] sm:$0xff]
          %v1313 = vld [vmem:[%s835] sm:$0xf]
          %v1314 = vld [vmem:[%s835 + $0x4] sm:$0xf]
          %v1315 = vld [vmem:[%s835 + $0x8] sm:$0xf]
          %v1316 = vld [vmem:[%s835 + $0xc] sm:$0xf]
          %v1317 = vld [vmem:[%s835 + $0x10] sm:$0xf]
          %v1318 = vld [vmem:[%s835 + $0x14] sm:$0xf]
          %v1319 = vld [vmem:[%s835 + $0x18] sm:$0xf]
          %v1320 = vld [vmem:[%s835 + $0x1c] sm:$0xf]
          %v1321 = vld [vmem:[%s835 + $0x20] sm:$0xf]
          %v1322 = vld [vmem:[%s835 + $0x24] sm:$0xf]
          %v1323 = vld [vmem:[%s835 + $0x28] sm:$0xf]
          %v1324 = vld [vmem:[%s835 + $0x2c] sm:$0xf]
          %v1325 = vld [vmem:[%s835 + $0x30] sm:$0xf]
          %v1326 = vld [vmem:[%s835 + $0x34] sm:$0xf]
          %v1327 = vld [vmem:[%s835 + $0x38] sm:$0xf]
          %v1328 = vld [vmem:[%s835 + $0x3c] sm:$0xf]
          %v1329 = vunpack.c.l.bf16 %v1313
          %v1330 = vunpack.c.l.bf16 %v1314
          %v1331 = vunpack.c.l.bf16 %v1315
          %v1332 = vunpack.c.l.bf16 %v1316
          %v1333 = vunpack.c.l.bf16 %v1317
          %v1334 = vunpack.c.l.bf16 %v1318
          %v1335 = vunpack.c.l.bf16 %v1319
          %v1336 = vunpack.c.l.bf16 %v1320
          %v1337 = vunpack.c.l.bf16 %v1321
          %v1338 = vunpack.c.l.bf16 %v1322
          %v1339 = vunpack.c.l.bf16 %v1323
          %v1340 = vunpack.c.l.bf16 %v1324
          %v1341 = vunpack.c.l.bf16 %v1325
          %v1342 = vunpack.c.l.bf16 %v1326
          %v1343 = vunpack.c.l.bf16 %v1327
          %v1344 = vunpack.c.l.bf16 %v1328
          %v1345 = vsel %vm1265, 1, 0
          %v1346 = vsel %vm1266, 1, 0
          %v1347 = vsel %vm1267, 1, 0
          %v1348 = vsel %vm1268, 1, 0
          %v1349 = vsel %vm1269, 1, 0
          %v1350 = vsel %vm1270, 1, 0
          %v1351 = vsel %vm1271, 1, 0
          %v1352 = vsel %vm1272, 1, 0
          %v1353 = vsel %vm1273, 1, 0
          %v1354 = vsel %vm1274, 1, 0
          %v1355 = vsel %vm1275, 1, 0
          %v1356 = vsel %vm1276, 1, 0
          %v1357 = vsel %vm1277, 1, 0
          %v1358 = vsel %vm1278, 1, 0
          %v1359 = vsel %vm1279, 1, 0
          %v1360 = vsel %vm1280, 1, 0
          %vm1361 = vcmp.eq.s32.totalorder %v1345, 1
          %vm1362 = vcmp.eq.s32.totalorder %v1346, 1
          %vm1363 = vcmp.eq.s32.totalorder %v1347, 1
          %vm1364 = vcmp.eq.s32.totalorder %v1348, 1
          %vm1365 = vcmp.eq.s32.totalorder %v1349, 1
          %vm1366 = vcmp.eq.s32.totalorder %v1350, 1
          %vm1367 = vcmp.eq.s32.totalorder %v1351, 1
          %vm1368 = vcmp.eq.s32.totalorder %v1352, 1
          %vm1369 = vcmp.eq.s32.totalorder %v1353, 1
          %vm1370 = vcmp.eq.s32.totalorder %v1354, 1
          %vm1371 = vcmp.eq.s32.totalorder %v1355, 1
          %vm1372 = vcmp.eq.s32.totalorder %v1356, 1
          %vm1373 = vcmp.eq.s32.totalorder %v1357, 1
          %vm1374 = vcmp.eq.s32.totalorder %v1358, 1
          %vm1375 = vcmp.eq.s32.totalorder %v1359, 1
          %vm1376 = vcmp.eq.s32.totalorder %v1360, 1
          %v1377 = vsel %vm1361, %v1281, %v1329
          %v1378 = vsel %vm1362, %v1282, %v1330
          %v1379 = vsel %vm1363, %v1283, %v1331
          %v1380 = vsel %vm1364, %v1284, %v1332
          %v1381 = vsel %vm1365, %v1285, %v1333
          %v1382 = vsel %vm1366, %v1286, %v1334
          %v1383 = vsel %vm1367, %v1287, %v1335
          %v1384 = vsel %vm1368, %v1288, %v1336
          %v1385 = vsel %vm1369, %v1289, %v1337
          %v1386 = vsel %vm1370, %v1290, %v1338
          %v1387 = vsel %vm1371, %v1291, %v1339
          %v1388 = vsel %vm1372, %v1292, %v1340
          %v1389 = vsel %vm1373, %v1293, %v1341
          %v1390 = vsel %vm1374, %v1294, %v1342
          %v1391 = vsel %vm1375, %v1295, %v1343
          %v1392 = vsel %vm1376, %v1296, %v1344
          %v1393 = vsel %vm1361, %v1297, %v1329
          %v1394 = vsel %vm1362, %v1298, %v1330
          %v1395 = vsel %vm1363, %v1299, %v1331
          %v1396 = vsel %vm1364, %v1300, %v1332
          %v1397 = vsel %vm1365, %v1301, %v1333
          %v1398 = vsel %vm1366, %v1302, %v1334
          %v1399 = vsel %vm1367, %v1303, %v1335
          %v1400 = vsel %vm1368, %v1304, %v1336
          %v1401 = vsel %vm1369, %v1305, %v1337
          %v1402 = vsel %vm1370, %v1306, %v1338
          %v1403 = vsel %vm1371, %v1307, %v1339
          %v1404 = vsel %vm1372, %v1308, %v1340
          %v1405 = vsel %vm1373, %v1309, %v1341
          %v1406 = vsel %vm1374, %v1310, %v1342
          %v1407 = vsel %vm1375, %v1311, %v1343
          %v1408 = vsel %vm1376, %v1312, %v1344
          %vm1409 = vcmask 523264
          %1410 = vst.msk [vmem:[#allocation2] sm:$0xff] %vm1409, %v1377
          %1411 = vst.msk [vmem:[#allocation2 + $0x8] sm:$0xff] %vm1409, %v1378
          %1412 = vst.msk [vmem:[#allocation2 + $0x10] sm:$0xff] %vm1409, %v1379
          %1413 = vst.msk [vmem:[#allocation2 + $0x18] sm:$0xff] %vm1409, %v1380
          %1414 = vst.msk [vmem:[#allocation2 + $0x20] sm:$0xff] %vm1409, %v1381
          %1415 = vst.msk [vmem:[#allocation2 + $0x28] sm:$0xff] %vm1409, %v1382
          %1416 = vst.msk [vmem:[#allocation2 + $0x30] sm:$0xff] %vm1409, %v1383
          %1417 = vst.msk [vmem:[#allocation2 + $0x38] sm:$0xff] %vm1409, %v1384
          %1418 = vst.msk [vmem:[#allocation2 + $0x40] sm:$0xff] %vm1409, %v1385
          %1419 = vst.msk [vmem:[#allocation2 + $0x48] sm:$0xff] %vm1409, %v1386
          %1420 = vst.msk [vmem:[#allocation2 + $0x50] sm:$0xff] %vm1409, %v1387
          %1421 = vst.msk [vmem:[#allocation2 + $0x58] sm:$0xff] %vm1409, %v1388
          %1422 = vst.msk [vmem:[#allocation2 + $0x60] sm:$0xff] %vm1409, %v1389
          %1423 = vst.msk [vmem:[#allocation2 + $0x68] sm:$0xff] %vm1409, %v1390
          %1424 = vst.msk [vmem:[#allocation2 + $0x70] sm:$0xff] %vm1409, %v1391
          %1425 = vst.msk [vmem:[#allocation2 + $0x78] sm:$0xff] %vm1409, %v1392
          %1426 = vst.msk [vmem:[#allocation2 + $0x80] sm:$0xff] %vm1409, %v1393
          %1427 = vst.msk [vmem:[#allocation2 + $0x88] sm:$0xff] %vm1409, %v1394
          %1428 = vst.msk [vmem:[#allocation2 + $0x90] sm:$0xff] %vm1409, %v1395
          %1429 = vst.msk [vmem:[#allocation2 + $0x98] sm:$0xff] %vm1409, %v1396
          %1430 = vst.msk [vmem:[#allocation2 + $0xa0] sm:$0xff] %vm1409, %v1397
          %1431 = vst.msk [vmem:[#allocation2 + $0xa8] sm:$0xff] %vm1409, %v1398
          %1432 = vst.msk [vmem:[#allocation2 + $0xb0] sm:$0xff] %vm1409, %v1399
          %1433 = vst.msk [vmem:[#allocation2 + $0xb8] sm:$0xff] %vm1409, %v1400
          %1434 = vst.msk [vmem:[#allocation2 + $0xc0] sm:$0xff] %vm1409, %v1401
          %1435 = vst.msk [vmem:[#allocation2 + $0xc8] sm:$0xff] %vm1409, %v1402
          %1436 = vst.msk [vmem:[#allocation2 + $0xd0] sm:$0xff] %vm1409, %v1403
          %1437 = vst.msk [vmem:[#allocation2 + $0xd8] sm:$0xff] %vm1409, %v1404
          %1438 = vst.msk [vmem:[#allocation2 + $0xe0] sm:$0xff] %vm1409, %v1405
          %1439 = vst.msk [vmem:[#allocation2 + $0xe8] sm:$0xff] %vm1409, %v1406
          %1440 = vst.msk [vmem:[#allocation2 + $0xf0] sm:$0xff] %vm1409, %v1407
          %1441 = vst.msk [vmem:[#allocation2 + $0xf8] sm:$0xff] %vm1409, %v1408
        $region156: #{tpu_custom_call.1} parent=83 // pred_fallthru
          _
        %v1442 = vld [vmem:[#allocation2] sm:$0xff]
        %v1443 = vld [vmem:[#allocation2 + $0x8] sm:$0xff]
        %v1444 = vld [vmem:[#allocation2 + $0x10] sm:$0xff]
        %v1445 = vld [vmem:[#allocation2 + $0x18] sm:$0xff]
        %v1446 = vld [vmem:[#allocation2 + $0x20] sm:$0xff]
        %v1447 = vld [vmem:[#allocation2 + $0x28] sm:$0xff]
        %v1448 = vld [vmem:[#allocation2 + $0x30] sm:$0xff]
        %v1449 = vld [vmem:[#allocation2 + $0x38] sm:$0xff]
        %v1450 = vld [vmem:[#allocation2 + $0x40] sm:$0xff]
        %v1451 = vld [vmem:[#allocation2 + $0x48] sm:$0xff]
        %v1452 = vld [vmem:[#allocation2 + $0x50] sm:$0xff]
        %v1453 = vld [vmem:[#allocation2 + $0x58] sm:$0xff]
        %v1454 = vld [vmem:[#allocation2 + $0x60] sm:$0xff]
        %v1455 = vld [vmem:[#allocation2 + $0x68] sm:$0xff]
        %v1456 = vld [vmem:[#allocation2 + $0x70] sm:$0xff]
        %v1457 = vld [vmem:[#allocation2 + $0x78] sm:$0xff]
        %v1458 = vld [vmem:[#allocation2 + $0x80] sm:$0xff]
        %v1459 = vld [vmem:[#allocation2 + $0x88] sm:$0xff]
        %v1460 = vld [vmem:[#allocation2 + $0x90] sm:$0xff]
        %v1461 = vld [vmem:[#allocation2 + $0x98] sm:$0xff]
        %v1462 = vld [vmem:[#allocation2 + $0xa0] sm:$0xff]
        %v1463 = vld [vmem:[#allocation2 + $0xa8] sm:$0xff]
        %v1464 = vld [vmem:[#allocation2 + $0xb0] sm:$0xff]
        %v1465 = vld [vmem:[#allocation2 + $0xb8] sm:$0xff]
        %v1466 = vld [vmem:[#allocation2 + $0xc0] sm:$0xff]
        %v1467 = vld [vmem:[#allocation2 + $0xc8] sm:$0xff]
        %v1468 = vld [vmem:[#allocation2 + $0xd0] sm:$0xff]
        %v1469 = vld [vmem:[#allocation2 + $0xd8] sm:$0xff]
        %v1470 = vld [vmem:[#allocation2 + $0xe0] sm:$0xff]
        %v1471 = vld [vmem:[#allocation2 + $0xe8] sm:$0xff]
        %v1472 = vld [vmem:[#allocation2 + $0xf0] sm:$0xff]
        %v1473 = vld [vmem:[#allocation2 + $0xf8] sm:$0xff]
        %v1474 = vld [vmem:[%s843] sm:$0x1]
        %v1475 = vld [vmem:[%s851] sm:$0x1]
        %vm1476 = vcmask 523264
        %v1477 = vsel %vm1476, %v1442, 0.0
        %1478 = vadd.xlane.f32.xlu0 %v1477
        %v1479 = vpop.xlane.xlu0 %1478
        %v1480 = vsel %vm1476, %v1443, 0.0
        %1481 = vadd.xlane.f32.xlu0 %v1480
        %v1482 = vpop.xlane.xlu0 %1481
        %v1483 = vsel %vm1476, %v1444, 0.0
        %1484 = vadd.xlane.f32.xlu0 %v1483
        %v1485 = vpop.xlane.xlu0 %1484
        %v1486 = vsel %vm1476, %v1445, 0.0
        %1487 = vadd.xlane.f32.xlu0 %v1486
        %v1488 = vpop.xlane.xlu0 %1487
        %v1489 = vsel %vm1476, %v1446, 0.0
        %1490 = vadd.xlane.f32.xlu0 %v1489
        %v1491 = vpop.xlane.xlu0 %1490
        %v1492 = vsel %vm1476, %v1447, 0.0
        %1493 = vadd.xlane.f32.xlu0 %v1492
        %v1494 = vpop.xlane.xlu0 %1493
        %v1495 = vsel %vm1476, %v1448, 0.0
        %1496 = vadd.xlane.f32.xlu0 %v1495
        %v1497 = vpop.xlane.xlu0 %1496
        %v1498 = vsel %vm1476, %v1449, 0.0
        %1499 = vadd.xlane.f32.xlu0 %v1498
        %v1500 = vpop.xlane.xlu0 %1499
        %v1501 = vsel %vm1476, %v1450, 0.0
        %1502 = vadd.xlane.f32.xlu0 %v1501
        %v1503 = vpop.xlane.xlu0 %1502
        %v1504 = vsel %vm1476, %v1451, 0.0
        %1505 = vadd.xlane.f32.xlu0 %v1504
        %v1506 = vpop.xlane.xlu0 %1505
        %v1507 = vsel %vm1476, %v1452, 0.0
        %1508 = vadd.xlane.f32.xlu0 %v1507
        %v1509 = vpop.xlane.xlu0 %1508
        %v1510 = vsel %vm1476, %v1453, 0.0
        %1511 = vadd.xlane.f32.xlu0 %v1510
        %v1512 = vpop.xlane.xlu0 %1511
        %v1513 = vsel %vm1476, %v1454, 0.0
        %1514 = vadd.xlane.f32.xlu0 %v1513
        %v1515 = vpop.xlane.xlu0 %1514
        %v1516 = vsel %vm1476, %v1455, 0.0
        %1517 = vadd.xlane.f32.xlu0 %v1516
        %v1518 = vpop.xlane.xlu0 %1517
        %v1519 = vsel %vm1476, %v1456, 0.0
        %1520 = vadd.xlane.f32.xlu0 %v1519
        %v1521 = vpop.xlane.xlu0 %1520
        %v1522 = vsel %vm1476, %v1457, 0.0
        %1523 = vadd.xlane.f32.xlu0 %v1522
        %v1524 = vpop.xlane.xlu0 %1523
        %v1525 = vsel %vm1476, %v1458, 0.0
        %1526 = vadd.xlane.f32.xlu0 %v1525
        %v1527 = vpop.xlane.xlu0 %1526
        %v1528 = vsel %vm1476, %v1459, 0.0
        %1529 = vadd.xlane.f32.xlu0 %v1528
        %v1530 = vpop.xlane.xlu0 %1529
        %v1531 = vsel %vm1476, %v1460, 0.0
        %1532 = vadd.xlane.f32.xlu0 %v1531
        %v1533 = vpop.xlane.xlu0 %1532
        %v1534 = vsel %vm1476, %v1461, 0.0
        %1535 = vadd.xlane.f32.xlu0 %v1534
        %v1536 = vpop.xlane.xlu0 %1535
        %v1537 = vsel %vm1476, %v1462, 0.0
        %1538 = vadd.xlane.f32.xlu0 %v1537
        %v1539 = vpop.xlane.xlu0 %1538
        %v1540 = vsel %vm1476, %v1463, 0.0
        %1541 = vadd.xlane.f32.xlu0 %v1540
        %v1542 = vpop.xlane.xlu0 %1541
        %v1543 = vsel %vm1476, %v1464, 0.0
        %1544 = vadd.xlane.f32.xlu0 %v1543
        %v1545 = vpop.xlane.xlu0 %1544
        %v1546 = vsel %vm1476, %v1465, 0.0
        %1547 = vadd.xlane.f32.xlu0 %v1546
        %v1548 = vpop.xlane.xlu0 %1547
        %v1549 = vsel %vm1476, %v1466, 0.0
        %1550 = vadd.xlane.f32.xlu0 %v1549
        %v1551 = vpop.xlane.xlu0 %1550
        %v1552 = vsel %vm1476, %v1467, 0.0
        %1553 = vadd.xlane.f32.xlu0 %v1552
        %v1554 = vpop.xlane.xlu0 %1553
        %v1555 = vsel %vm1476, %v1468, 0.0
        %1556 = vadd.xlane.f32.xlu0 %v1555
        %v1557 = vpop.xlane.xlu0 %1556
        %v1558 = vsel %vm1476, %v1469, 0.0
        %1559 = vadd.xlane.f32.xlu0 %v1558
        %v1560 = vpop.xlane.xlu0 %1559
        %v1561 = vsel %vm1476, %v1470, 0.0
        %1562 = vadd.xlane.f32.xlu0 %v1561
        %v1563 = vpop.xlane.xlu0 %1562
        %v1564 = vsel %vm1476, %v1471, 0.0
        %1565 = vadd.xlane.f32.xlu0 %v1564
        %v1566 = vpop.xlane.xlu0 %1565
        %v1567 = vsel %vm1476, %v1472, 0.0
        %1568 = vadd.xlane.f32.xlu0 %v1567
        %v1569 = vpop.xlane.xlu0 %1568
        %v1570 = vsel %vm1476, %v1473, 0.0
        %1571 = vadd.xlane.f32.xlu0 %v1570
        %v1572 = vpop.xlane.xlu0 %1571
        %v1573 = vrcp.pop 64.0
        %v1574 = vmul.f32 %v1479, %v1573
        %v1575 = vmul.f32 %v1482, %v1573
        %v1576 = vmul.f32 %v1485, %v1573
        %v1577 = vmul.f32 %v1488, %v1573
        %v1578 = vmul.f32 %v1491, %v1573
        %v1579 = vmul.f32 %v1494, %v1573
        %v1580 = vmul.f32 %v1497, %v1573
        %v1581 = vmul.f32 %v1500, %v1573
        %v1582 = vmul.f32 %v1503, %v1573
        %v1583 = vmul.f32 %v1506, %v1573
        %v1584 = vmul.f32 %v1509, %v1573
        %v1585 = vmul.f32 %v1512, %v1573
        %v1586 = vmul.f32 %v1515, %v1573
        %v1587 = vmul.f32 %v1518, %v1573
        %v1588 = vmul.f32 %v1521, %v1573
        %v1589 = vmul.f32 %v1524, %v1573
        %v1590 = vmul.f32 %v1527, %v1573
        %v1591 = vmul.f32 %v1530, %v1573
        %v1592 = vmul.f32 %v1533, %v1573
        %v1593 = vmul.f32 %v1536, %v1573
        %v1594 = vmul.f32 %v1539, %v1573
        %v1595 = vmul.f32 %v1542, %v1573
        %v1596 = vmul.f32 %v1545, %v1573
        %v1597 = vmul.f32 %v1548, %v1573
        %v1598 = vmul.f32 %v1551, %v1573
        %v1599 = vmul.f32 %v1554, %v1573
        %v1600 = vmul.f32 %v1557, %v1573
        %v1601 = vmul.f32 %v1560, %v1573
        %v1602 = vmul.f32 %v1563, %v1573
        %v1603 = vmul.f32 %v1566, %v1573
        %v1604 = vmul.f32 %v1569, %v1573
        %v1605 = vmul.f32 %v1572, %v1573
        %v1606 = vsub.f32 %v1442, %v1574
        %v1607 = vsub.f32 %v1443, %v1575
        %v1608 = vsub.f32 %v1444, %v1576
        %v1609 = vsub.f32 %v1445, %v1577
        %v1610 = vsub.f32 %v1446, %v1578
        %v1611 = vsub.f32 %v1447, %v1579
        %v1612 = vsub.f32 %v1448, %v1580
        %v1613 = vsub.f32 %v1449, %v1581
        %v1614 = vsub.f32 %v1450, %v1582
        %v1615 = vsub.f32 %v1451, %v1583
        %v1616 = vsub.f32 %v1452, %v1584
        %v1617 = vsub.f32 %v1453, %v1585
        %v1618 = vsub.f32 %v1454, %v1586
        %v1619 = vsub.f32 %v1455, %v1587
        %v1620 = vsub.f32 %v1456, %v1588
        %v1621 = vsub.f32 %v1457, %v1589
        %v1622 = vsub.f32 %v1458, %v1590
        %v1623 = vsub.f32 %v1459, %v1591
        %v1624 = vsub.f32 %v1460, %v1592
        %v1625 = vsub.f32 %v1461, %v1593
        %v1626 = vsub.f32 %v1462, %v1594
        %v1627 = vsub.f32 %v1463, %v1595
        %v1628 = vsub.f32 %v1464, %v1596
        %v1629 = vsub.f32 %v1465, %v1597
        %v1630 = vsub.f32 %v1466, %v1598
        %v1631 = vsub.f32 %v1467, %v1599
        %v1632 = vsub.f32 %v1468, %v1600
        %v1633 = vsub.f32 %v1469, %v1601
        %v1634 = vsub.f32 %v1470, %v1602
        %v1635 = vsub.f32 %v1471, %v1603
        %v1636 = vsub.f32 %v1472, %v1604
        %v1637 = vsub.f32 %v1473, %v1605
        %v1638 = vmul.f32 %v1606, %v1606
        %v1639 = vmul.f32 %v1607, %v1607
        %v1640 = vmul.f32 %v1608, %v1608
        %v1641 = vmul.f32 %v1609, %v1609
        %v1642 = vmul.f32 %v1610, %v1610
        %v1643 = vmul.f32 %v1611, %v1611
        %v1644 = vmul.f32 %v1612, %v1612
        %v1645 = vmul.f32 %v1613, %v1613
        %v1646 = vmul.f32 %v1614, %v1614
        %v1647 = vmul.f32 %v1615, %v1615
        %v1648 = vmul.f32 %v1616, %v1616
        %v1649 = vmul.f32 %v1617, %v1617
        %v1650 = vmul.f32 %v1618, %v1618
        %v1651 = vmul.f32 %v1619, %v1619
        %v1652 = vmul.f32 %v1620, %v1620
        %v1653 = vmul.f32 %v1621, %v1621
        %v1654 = vmul.f32 %v1622, %v1622
        %v1655 = vmul.f32 %v1623, %v1623
        %v1656 = vmul.f32 %v1624, %v1624
        %v1657 = vmul.f32 %v1625, %v1625
        %v1658 = vmul.f32 %v1626, %v1626
        %v1659 = vmul.f32 %v1627, %v1627
        %v1660 = vmul.f32 %v1628, %v1628
        %v1661 = vmul.f32 %v1629, %v1629
        %v1662 = vmul.f32 %v1630, %v1630
        %v1663 = vmul.f32 %v1631, %v1631
        %v1664 = vmul.f32 %v1632, %v1632
        %v1665 = vmul.f32 %v1633, %v1633
        %v1666 = vmul.f32 %v1634, %v1634
        %v1667 = vmul.f32 %v1635, %v1635
        %v1668 = vmul.f32 %v1636, %v1636
        %v1669 = vmul.f32 %v1637, %v1637
        %v1670 = vsel %vm1476, %v1638, 0.0
        %1671 = vadd.xlane.f32.xlu0 %v1670
        %v1672 = vpop.xlane.xlu0 %1671
        %v1673 = vsel %vm1476, %v1639, 0.0
        %1674 = vadd.xlane.f32.xlu0 %v1673
        %v1675 = vpop.xlane.xlu0 %1674
        %v1676 = vsel %vm1476, %v1640, 0.0
        %1677 = vadd.xlane.f32.xlu0 %v1676
        %v1678 = vpop.xlane.xlu0 %1677
        %v1679 = vsel %vm1476, %v1641, 0.0
        %1680 = vadd.xlane.f32.xlu0 %v1679
        %v1681 = vpop.xlane.xlu0 %1680
        %v1682 = vsel %vm1476, %v1642, 0.0
        %1683 = vadd.xlane.f32.xlu0 %v1682
        %v1684 = vpop.xlane.xlu0 %1683
        %v1685 = vsel %vm1476, %v1643, 0.0
        %1686 = vadd.xlane.f32.xlu0 %v1685
        %v1687 = vpop.xlane.xlu0 %1686
        %v1688 = vsel %vm1476, %v1644, 0.0
        %1689 = vadd.xlane.f32.xlu0 %v1688
        %v1690 = vpop.xlane.xlu0 %1689
        %v1691 = vsel %vm1476, %v1645, 0.0
        %1692 = vadd.xlane.f32.xlu0 %v1691
        %v1693 = vpop.xlane.xlu0 %1692
        %v1694 = vsel %vm1476, %v1646, 0.0
        %1695 = vadd.xlane.f32.xlu0 %v1694
        %v1696 = vpop.xlane.xlu0 %1695
        %v1697 = vsel %vm1476, %v1647, 0.0
        %1698 = vadd.xlane.f32.xlu0 %v1697
        %v1699 = vpop.xlane.xlu0 %1698
        %v1700 = vsel %vm1476, %v1648, 0.0
        %1701 = vadd.xlane.f32.xlu0 %v1700
        %v1702 = vpop.xlane.xlu0 %1701
        %v1703 = vsel %vm1476, %v1649, 0.0
        %1704 = vadd.xlane.f32.xlu0 %v1703
        %v1705 = vpop.xlane.xlu0 %1704
        %v1706 = vsel %vm1476, %v1650, 0.0
        %1707 = vadd.xlane.f32.xlu0 %v1706
        %v1708 = vpop.xlane.xlu0 %1707
        %v1709 = vsel %vm1476, %v1651, 0.0
        %1710 = vadd.xlane.f32.xlu0 %v1709
        %v1711 = vpop.xlane.xlu0 %1710
        %v1712 = vsel %vm1476, %v1652, 0.0
        %1713 = vadd.xlane.f32.xlu0 %v1712
        %v1714 = vpop.xlane.xlu0 %1713
        %v1715 = vsel %vm1476, %v1653, 0.0
        %1716 = vadd.xlane.f32.xlu0 %v1715
        %v1717 = vpop.xlane.xlu0 %1716
        %v1718 = vsel %vm1476, %v1654, 0.0
        %1719 = vadd.xlane.f32.xlu0 %v1718
        %v1720 = vpop.xlane.xlu0 %1719
        %v1721 = vsel %vm1476, %v1655, 0.0
        %1722 = vadd.xlane.f32.xlu0 %v1721
        %v1723 = vpop.xlane.xlu0 %1722
        %v1724 = vsel %vm1476, %v1656, 0.0
        %1725 = vadd.xlane.f32.xlu0 %v1724
        %v1726 = vpop.xlane.xlu0 %1725
        %v1727 = vsel %vm1476, %v1657, 0.0
        %1728 = vadd.xlane.f32.xlu0 %v1727
        %v1729 = vpop.xlane.xlu0 %1728
        %v1730 = vsel %vm1476, %v1658, 0.0
        %1731 = vadd.xlane.f32.xlu0 %v1730
        %v1732 = vpop.xlane.xlu0 %1731
        %v1733 = vsel %vm1476, %v1659, 0.0
        %1734 = vadd.xlane.f32.xlu0 %v1733
        %v1735 = vpop.xlane.xlu0 %1734
        %v1736 = vsel %vm1476, %v1660, 0.0
        %1737 = vadd.xlane.f32.xlu0 %v1736
        %v1738 = vpop.xlane.xlu0 %1737
        %v1739 = vsel %vm1476, %v1661, 0.0
        %1740 = vadd.xlane.f32.xlu0 %v1739
        %v1741 = vpop.xlane.xlu0 %1740
        %v1742 = vsel %vm1476, %v1662, 0.0
        %1743 = vadd.xlane.f32.xlu0 %v1742
        %v1744 = vpop.xlane.xlu0 %1743
        %v1745 = vsel %vm1476, %v1663, 0.0
        %1746 = vadd.xlane.f32.xlu0 %v1745
        %v1747 = vpop.xlane.xlu0 %1746
        %v1748 = vsel %vm1476, %v1664, 0.0
        %1749 = vadd.xlane.f32.xlu0 %v1748
        %v1750 = vpop.xlane.xlu0 %1749
        %v1751 = vsel %vm1476, %v1665, 0.0
        %1752 = vadd.xlane.f32.xlu0 %v1751
        %v1753 = vpop.xlane.xlu0 %1752
        %v1754 = vsel %vm1476, %v1666, 0.0
        %1755 = vadd.xlane.f32.xlu0 %v1754
        %v1756 = vpop.xlane.xlu0 %1755
        %v1757 = vsel %vm1476, %v1667, 0.0
        %1758 = vadd.xlane.f32.xlu0 %v1757
        %v1759 = vpop.xlane.xlu0 %1758
        %v1760 = vsel %vm1476, %v1668, 0.0
        %1761 = vadd.xlane.f32.xlu0 %v1760
        %v1762 = vpop.xlane.xlu0 %1761
        %v1763 = vsel %vm1476, %v1669, 0.0
        %1764 = vadd.xlane.f32.xlu0 %v1763
        %v1765 = vpop.xlane.xlu0 %1764
        %v1766 = vmul.f32 %v1672, %v1573
        %v1767 = vmul.f32 %v1675, %v1573
        %v1768 = vmul.f32 %v1678, %v1573
        %v1769 = vmul.f32 %v1681, %v1573
        %v1770 = vmul.f32 %v1684, %v1573
        %v1771 = vmul.f32 %v1687, %v1573
        %v1772 = vmul.f32 %v1690, %v1573
        %v1773 = vmul.f32 %v1693, %v1573
        %v1774 = vmul.f32 %v1696, %v1573
        %v1775 = vmul.f32 %v1699, %v1573
        %v1776 = vmul.f32 %v1702, %v1573
        %v1777 = vmul.f32 %v1705, %v1573
        %v1778 = vmul.f32 %v1708, %v1573
        %v1779 = vmul.f32 %v1711, %v1573
        %v1780 = vmul.f32 %v1714, %v1573
        %v1781 = vmul.f32 %v1717, %v1573
        %v1782 = vmul.f32 %v1720, %v1573
        %v1783 = vmul.f32 %v1723, %v1573
        %v1784 = vmul.f32 %v1726, %v1573
        %v1785 = vmul.f32 %v1729, %v1573
        %v1786 = vmul.f32 %v1732, %v1573
        %v1787 = vmul.f32 %v1735, %v1573
        %v1788 = vmul.f32 %v1738, %v1573
        %v1789 = vmul.f32 %v1741, %v1573
        %v1790 = vmul.f32 %v1744, %v1573
        %v1791 = vmul.f32 %v1747, %v1573
        %v1792 = vmul.f32 %v1750, %v1573
        %v1793 = vmul.f32 %v1753, %v1573
        %v1794 = vmul.f32 %v1756, %v1573
        %v1795 = vmul.f32 %v1759, %v1573
        %v1796 = vmul.f32 %v1762, %v1573
        %v1797 = vmul.f32 %v1765, %v1573
        %v1798 = vadd.f32 %v1766, 1e-05
        %v1799 = vadd.f32 %v1767, 1e-05
        %v1800 = vadd.f32 %v1768, 1e-05
        %v1801 = vadd.f32 %v1769, 1e-05
        %v1802 = vadd.f32 %v1770, 1e-05
        %v1803 = vadd.f32 %v1771, 1e-05
        %v1804 = vadd.f32 %v1772, 1e-05
        %v1805 = vadd.f32 %v1773, 1e-05
        %v1806 = vadd.f32 %v1774, 1e-05
        %v1807 = vadd.f32 %v1775, 1e-05
        %v1808 = vadd.f32 %v1776, 1e-05
        %v1809 = vadd.f32 %v1777, 1e-05
        %v1810 = vadd.f32 %v1778, 1e-05
        %v1811 = vadd.f32 %v1779, 1e-05
        %v1812 = vadd.f32 %v1780, 1e-05
        %v1813 = vadd.f32 %v1781, 1e-05
        %v1814 = vadd.f32 %v1782, 1e-05
        %v1815 = vadd.f32 %v1783, 1e-05
        %v1816 = vadd.f32 %v1784, 1e-05
        %v1817 = vadd.f32 %v1785, 1e-05
        %v1818 = vadd.f32 %v1786, 1e-05
        %v1819 = vadd.f32 %v1787, 1e-05
        %v1820 = vadd.f32 %v1788, 1e-05
        %v1821 = vadd.f32 %v1789, 1e-05
        %v1822 = vadd.f32 %v1790, 1e-05
        %v1823 = vadd.f32 %v1791, 1e-05
        %v1824 = vadd.f32 %v1792, 1e-05
        %v1825 = vadd.f32 %v1793, 1e-05
        %v1826 = vadd.f32 %v1794, 1e-05
        %v1827 = vadd.f32 %v1795, 1e-05
        %v1828 = vadd.f32 %v1796, 1e-05
        %v1829 = vadd.f32 %v1797, 1e-05
        %v1830 = vrsqrt.pop %v1798
        %v1831 = vrsqrt.pop %v1799
        %v1832 = vrsqrt.pop %v1800
        %v1833 = vrsqrt.pop %v1801
        %v1834 = vrsqrt.pop %v1802
        %v1835 = vrsqrt.pop %v1803
        %v1836 = vrsqrt.pop %v1804
        %v1837 = vrsqrt.pop %v1805
        %v1838 = vrsqrt.pop %v1806
        %v1839 = vrsqrt.pop %v1807
        %v1840 = vrsqrt.pop %v1808
        %v1841 = vrsqrt.pop %v1809
        %v1842 = vrsqrt.pop %v1810
        %v1843 = vrsqrt.pop %v1811
        %v1844 = vrsqrt.pop %v1812
        %v1845 = vrsqrt.pop %v1813
        %v1846 = vrsqrt.pop %v1814
        %v1847 = vrsqrt.pop %v1815
        %v1848 = vrsqrt.pop %v1816
        %v1849 = vrsqrt.pop %v1817
        %v1850 = vrsqrt.pop %v1818
        %v1851 = vrsqrt.pop %v1819
        %v1852 = vrsqrt.pop %v1820
        %v1853 = vrsqrt.pop %v1821
        %v1854 = vrsqrt.pop %v1822
        %v1855 = vrsqrt.pop %v1823
        %v1856 = vrsqrt.pop %v1824
        %v1857 = vrsqrt.pop %v1825
        %v1858 = vrsqrt.pop %v1826
        %v1859 = vrsqrt.pop %v1827
        %v1860 = vrsqrt.pop %v1828
        %v1861 = vrsqrt.pop %v1829
        %v1862 = vmul.f32 %v1606, %v1830
        %v1863 = vmul.f32 %v1607, %v1831
        %v1864 = vmul.f32 %v1608, %v1832
        %v1865 = vmul.f32 %v1609, %v1833
        %v1866 = vmul.f32 %v1610, %v1834
        %v1867 = vmul.f32 %v1611, %v1835
        %v1868 = vmul.f32 %v1612, %v1836
        %v1869 = vmul.f32 %v1613, %v1837
        %v1870 = vmul.f32 %v1614, %v1838
        %v1871 = vmul.f32 %v1615, %v1839
        %v1872 = vmul.f32 %v1616, %v1840
        %v1873 = vmul.f32 %v1617, %v1841
        %v1874 = vmul.f32 %v1618, %v1842
        %v1875 = vmul.f32 %v1619, %v1843
        %v1876 = vmul.f32 %v1620, %v1844
        %v1877 = vmul.f32 %v1621, %v1845
        %v1878 = vmul.f32 %v1622, %v1846
        %v1879 = vmul.f32 %v1623, %v1847
        %v1880 = vmul.f32 %v1624, %v1848
        %v1881 = vmul.f32 %v1625, %v1849
        %v1882 = vmul.f32 %v1626, %v1850
        %v1883 = vmul.f32 %v1627, %v1851
        %v1884 = vmul.f32 %v1628, %v1852
        %v1885 = vmul.f32 %v1629, %v1853
        %v1886 = vmul.f32 %v1630, %v1854
        %v1887 = vmul.f32 %v1631, %v1855
        %v1888 = vmul.f32 %v1632, %v1856
        %v1889 = vmul.f32 %v1633, %v1857
        %v1890 = vmul.f32 %v1634, %v1858
        %v1891 = vmul.f32 %v1635, %v1859
        %v1892 = vmul.f32 %v1636, %v1860
        %v1893 = vmul.f32 %v1637, %v1861
        %v1895 = vlaneseq
        %v1896 = vshrl.u32 %v1895, 7
        %v1897 = vsub.s32 0, %v1896
        %v1898 = vrot.slane %v1474, %v1897
        %v1900 = vmul.f32 %v1862, %v1898
        %v1901 = vmul.f32 %v1863, %v1898
        %v1902 = vmul.f32 %v1864, %v1898
        %v1903 = vmul.f32 %v1865, %v1898
        %v1904 = vmul.f32 %v1866, %v1898
        %v1905 = vmul.f32 %v1867, %v1898
        %v1906 = vmul.f32 %v1868, %v1898
        %v1907 = vmul.f32 %v1869, %v1898
        %v1908 = vmul.f32 %v1870, %v1898
        %v1909 = vmul.f32 %v1871, %v1898
        %v1910 = vmul.f32 %v1872, %v1898
        %v1911 = vmul.f32 %v1873, %v1898
        %v1912 = vmul.f32 %v1874, %v1898
        %v1913 = vmul.f32 %v1875, %v1898
        %v1914 = vmul.f32 %v1876, %v1898
        %v1915 = vmul.f32 %v1877, %v1898
        %v1916 = vmul.f32 %v1878, %v1898
        %v1917 = vmul.f32 %v1879, %v1898
        %v1918 = vmul.f32 %v1880, %v1898
        %v1919 = vmul.f32 %v1881, %v1898
        %v1920 = vmul.f32 %v1882, %v1898
        %v1921 = vmul.f32 %v1883, %v1898
        %v1922 = vmul.f32 %v1884, %v1898
        %v1923 = vmul.f32 %v1885, %v1898
        %v1924 = vmul.f32 %v1886, %v1898
        %v1925 = vmul.f32 %v1887, %v1898
        %v1926 = vmul.f32 %v1888, %v1898
        %v1927 = vmul.f32 %v1889, %v1898
        %v1928 = vmul.f32 %v1890, %v1898
        %v1929 = vmul.f32 %v1891, %v1898
        %v1930 = vmul.f32 %v1892, %v1898
        %v1931 = vmul.f32 %v1893, %v1898
        %v1933 = vlaneseq
        %v1934 = vshrl.u32 %v1933, 7
        %v1935 = vsub.s32 0, %v1934
        %v1936 = vrot.slane %v1475, %v1935
        %v1938 = vadd.f32 %v1900, %v1936
        %v1939 = vadd.f32 %v1901, %v1936
        %v1940 = vadd.f32 %v1902, %v1936
        %v1941 = vadd.f32 %v1903, %v1936
        %v1942 = vadd.f32 %v1904, %v1936
        %v1943 = vadd.f32 %v1905, %v1936
        %v1944 = vadd.f32 %v1906, %v1936
        %v1945 = vadd.f32 %v1907, %v1936
        %v1946 = vadd.f32 %v1908, %v1936
        %v1947 = vadd.f32 %v1909, %v1936
        %v1948 = vadd.f32 %v1910, %v1936
        %v1949 = vadd.f32 %v1911, %v1936
        %v1950 = vadd.f32 %v1912, %v1936
        %v1951 = vadd.f32 %v1913, %v1936
        %v1952 = vadd.f32 %v1914, %v1936
        %v1953 = vadd.f32 %v1915, %v1936
        %v1954 = vadd.f32 %v1916, %v1936
        %v1955 = vadd.f32 %v1917, %v1936
        %v1956 = vadd.f32 %v1918, %v1936
        %v1957 = vadd.f32 %v1919, %v1936
        %v1958 = vadd.f32 %v1920, %v1936
        %v1959 = vadd.f32 %v1921, %v1936
        %v1960 = vadd.f32 %v1922, %v1936
        %v1961 = vadd.f32 %v1923, %v1936
        %v1962 = vadd.f32 %v1924, %v1936
        %v1963 = vadd.f32 %v1925, %v1936
        %v1964 = vadd.f32 %v1926, %v1936
        %v1965 = vadd.f32 %v1927, %v1936
        %v1966 = vadd.f32 %v1928, %v1936
        %v1967 = vadd.f32 %v1929, %v1936
        %v1968 = vadd.f32 %v1930, %v1936
        %v1969 = vadd.f32 %v1931, %v1936
        %v1970 = vpack.c.bf16 %v1939, %v1938
        %v1971 = vpack.c.bf16 %v1941, %v1940
        %v1972 = vpack.c.bf16 %v1943, %v1942
        %v1973 = vpack.c.bf16 %v1945, %v1944
        %v1974 = vpack.c.bf16 %v1947, %v1946
        %v1975 = vpack.c.bf16 %v1949, %v1948
        %v1976 = vpack.c.bf16 %v1951, %v1950
        %v1977 = vpack.c.bf16 %v1953, %v1952
        %v1978 = vpack.c.bf16 %v1955, %v1954
        %v1979 = vpack.c.bf16 %v1957, %v1956
        %v1980 = vpack.c.bf16 %v1959, %v1958
        %v1981 = vpack.c.bf16 %v1961, %v1960
        %v1982 = vpack.c.bf16 %v1963, %v1962
        %v1983 = vpack.c.bf16 %v1965, %v1964
        %v1984 = vpack.c.bf16 %v1967, %v1966
        %v1985 = vpack.c.bf16 %v1969, %v1968
        %v1986 = vld [vmem:[%s860] sm:$0xff]
        %v1987 = vld [vmem:[%s860 + $0x8] sm:$0xff]
        %v1988 = vld [vmem:[%s860 + $0x10] sm:$0xff]
        %v1989 = vld [vmem:[%s860 + $0x18] sm:$0xff]
        %v1990 = vld [vmem:[%s860 + $0x20] sm:$0xff]
        %v1991 = vld [vmem:[%s860 + $0x28] sm:$0xff]
        %v1992 = vld [vmem:[%s860 + $0x30] sm:$0xff]
        %v1993 = vld [vmem:[%s860 + $0x38] sm:$0xff]
        %v1994 = vld [vmem:[%s869] sm:$0x3]
        %v1996 = vlaneseq
        %v1997 = vshrl.u32 %v1996, 7
        %v1998 = vsub.s32 0, %v1997
        %v1999 = vrot.slane %v1994, %v1998
        %v2000 = vlaneseq
        %v2001 = vshrl.u32 %v2000, 7
        %v2002 = vsub.s32 1, %v2001
        %v2003 = vrot.slane %v1994, %v2002
        %v2014 = vunpack.c.l.b16 %v1986
        %v2015 = vunpack.c.h.b16 %v1986
        %v2016 = vunpack.c.l.b16 %v1987
        %v2017 = vunpack.c.h.b16 %v1987
        %v2018 = vunpack.c.l.b16 %v1988
        %v2019 = vunpack.c.h.b16 %v1988
        %v2020 = vunpack.c.l.b16 %v1989
        %v2021 = vunpack.c.h.b16 %v1989
        %v2022 = vunpack.c.l.b16 %v1990
        %v2023 = vunpack.c.h.b16 %v1990
        %v2024 = vunpack.c.l.b16 %v1991
        %v2025 = vunpack.c.h.b16 %v1991
        %v2026 = vunpack.c.l.b16 %v1992
        %v2027 = vunpack.c.h.b16 %v1992
        %v2028 = vunpack.c.l.b16 %v1993
        %v2029 = vunpack.c.h.b16 %v1993
        %v2030 = vpack.c.b16 %v2016, %v2014
        %v2031 = vpack.c.b16 %v2017, %v2015
        %v2032 = vpack.c.b16 %v2020, %v2018
        %v2033 = vpack.c.b16 %v2021, %v2019
        %v2034 = vpack.c.b16 %v2024, %v2022
        %v2035 = vpack.c.b16 %v2025, %v2023
        %v2036 = vpack.c.b16 %v2028, %v2026
        %v2037 = vpack.c.b16 %v2029, %v2027
        %v2047 = vsel %vm1476, %v1970, 0
        %v2050 = vsel %vm1476, %v1971, 0
        %v2053 = vsel %vm1476, %v1972, 0
        %v2056 = vsel %vm1476, %v1973, 0
        %v2059 = vsel %vm1476, %v1974, 0
        %v2062 = vsel %vm1476, %v1975, 0
        %v2065 = vsel %vm1476, %v1976, 0
        %v2068 = vsel %vm1476, %v1977, 0
        %v2071 = vsel %vm1476, %v1978, 0
        %v2074 = vsel %vm1476, %v1979, 0
        %v2077 = vsel %vm1476, %v1980, 0
        %v2080 = vsel %vm1476, %v1981, 0
        %v2083 = vsel %vm1476, %v1982, 0
        %v2086 = vsel %vm1476, %v1983, 0
        %v2089 = vsel %vm1476, %v1984, 0
        %v2092 = vsel %vm1476, %v1985, 0
        %2094 = vmatprep.subr.bf16.mxu0 %v2031
        %2095 = vmatpush1.bf16.msra.mxu0 %v2030
        %2096 = vmatprep.subr.bf16.mxu0 %v2033
        %2097 = vmatpush1.bf16.msra.mxu0 %v2032
        %2098 = vmatprep.subr.bf16.mxu0 %v2035
        %2099 = vmatpush1.bf16.msra.mxu0 %v2034
        %2100 = vmatprep.subr.bf16.mxu0 %v2037
        %2101 = vmatpush1.bf16.msra.mxu0 %v2036
        %2102 = vmatprep.subr.bf16.mxu0 0
        %2103 = vmatpush1.bf16.msra.mxu0 0
        %2104 = vmatprep.subr.bf16.mxu0 0
        %2105 = vmatpush1.bf16.msra.mxu0 0
        %2106 = vmatprep.subr.bf16.mxu0 0
        %2107 = vmatpush1.bf16.msra.mxu0 0
        %2108 = vmatprep.subr.bf16.mxu0 0
        %2109 = vmatpush1.bf16.msra.mxu0 0
        %2110 = vmatprep.subr.bf16.mxu0 0
        %2111 = vmatpush1.bf16.msra.mxu0 0
        %2112 = vmatprep.subr.bf16.mxu0 0
        %2113 = vmatpush1.bf16.msra.mxu0 0
        %2114 = vmatprep.subr.bf16.mxu0 0
        %2115 = vmatpush1.bf16.msra.mxu0 0
        %2116 = vmatprep.subr.bf16.mxu0 0
        %2117 = vmatpush1.bf16.msra.mxu0 0
        %2118 = vmatprep.subr.bf16.mxu0 0
        %2119 = vmatpush1.bf16.msra.mxu0 0
        %2120 = vmatprep.subr.bf16.mxu0 0
        %2121 = vmatpush1.bf16.msra.mxu0 0
        %2122 = vmatprep.subr.bf16.mxu0 0
        %2123 = vmatpush1.bf16.msra.mxu0 0
        %2124 = vmatprep.subr.bf16.mxu0 0
        %2125 = vmatpush1.bf16.msra.mxu0 0
        %2126 = vmatprep.mubr.bf16.mxu0 0
        %2127 = vmatmul.mubr.bf16.gmra.mrb[0].mxu0 %v2047
        %v2128 = vpop.f32.mrb[0].mxu0
        %v2129 = vadd.f32 %v1999, %v2128
        %v2130 = vpop.f32.mrb[0].mxu0
        %v2131 = vadd.f32 %v2003, %v2130
        %v2132 = vpop.f32.mrb[0].mxu0
        %v2133 = vadd.f32 %v1999, %v2132
        %v2134 = vpop.f32.mrb[0].mxu0
        %v2135 = vadd.f32 %v2003, %v2134
        %2136 = vmatprep.mubr.bf16.mxu0 0
        %2137 = vmatmul.mubr.bf16.gmra.mrb[0].mxu0 %v2050
        %v2138 = vpop.f32.mrb[0].mxu0
        %v2139 = vadd.f32 %v1999, %v2138
        %v2140 = vpop.f32.mrb[0].mxu0
        %v2141 = vadd.f32 %v2003, %v2140
        %v2142 = vpop.f32.mrb[0].mxu0
        %v2143 = vadd.f32 %v1999, %v2142
        %v2144 = vpop.f32.mrb[0].mxu0
        %v2145 = vadd.f32 %v2003, %v2144
        %2146 = vmatprep.mubr.bf16.mxu0 0
        %2147 = vmatmul.mubr.bf16.gmra.mrb[0].mxu0 %v2053
        %v2148 = vpop.f32.mrb[0].mxu0
        %v2149 = vadd.f32 %v1999, %v2148
        %v2150 = vpop.f32.mrb[0].mxu0
        %v2151 = vadd.f32 %v2003, %v2150
        %v2152 = vpop.f32.mrb[0].mxu0
        %v2153 = vadd.f32 %v1999, %v2152
        %v2154 = vpop.f32.mrb[0].mxu0
        %v2155 = vadd.f32 %v2003, %v2154
        %2156 = vmatprep.mubr.bf16.mxu0 0
        %2157 = vmatmul.mubr.bf16.gmra.mrb[0].mxu0 %v2056
        %v2158 = vpop.f32.mrb[0].mxu0
        %v2159 = vadd.f32 %v1999, %v2158
        %v2160 = vpop.f32.mrb[0].mxu0
        %v2161 = vadd.f32 %v2003, %v2160
        %v2162 = vpop.f32.mrb[0].mxu0
        %v2163 = vadd.f32 %v1999, %v2162
        %v2164 = vpop.f32.mrb[0].mxu0
        %v2165 = vadd.f32 %v2003, %v2164
        %2166 = vmatprep.mubr.bf16.mxu0 0
        %2167 = vmatmul.mubr.bf16.gmra.mrb[0].mxu0 %v2059
        %v2168 = vpop.f32.mrb[0].mxu0
        %v2169 = vadd.f32 %v1999, %v2168
        %v2170 = vpop.f32.mrb[0].mxu0
        %v2171 = vadd.f32 %v2003, %v2170
        %v2172 = vpop.f32.mrb[0].mxu0
        %v2173 = vadd.f32 %v1999, %v2172
        %v2174 = vpop.f32.mrb[0].mxu0
        %v2175 = vadd.f32 %v2003, %v2174
        %2176 = vmatprep.mubr.bf16.mxu0 0
        %2177 = vmatmul.mubr.bf16.gmra.mrb[0].mxu0 %v2062
        %v2178 = vpop.f32.mrb[0].mxu0
        %v2179 = vadd.f32 %v1999, %v2178
        %v2180 = vpop.f32.mrb[0].mxu0
        %v2181 = vadd.f32 %v2003, %v2180
        %v2182 = vpop.f32.mrb[0].mxu0
        %v2183 = vadd.f32 %v1999, %v2182
        %v2184 = vpop.f32.mrb[0].mxu0
        %v2185 = vadd.f32 %v2003, %v2184
        %2186 = vmatprep.mubr.bf16.mxu0 0
        %2187 = vmatmul.mubr.bf16.gmra.mrb[0].mxu0 %v2065
        %v2188 = vpop.f32.mrb[0].mxu0
        %v2189 = vadd.f32 %v1999, %v2188
        %v2190 = vpop.f32.mrb[0].mxu0
        %v2191 = vadd.f32 %v2003, %v2190
        %v2192 = vpop.f32.mrb[0].mxu0
        %v2193 = vadd.f32 %v1999, %v2192
        %v2194 = vpop.f32.mrb[0].mxu0
        %v2195 = vadd.f32 %v2003, %v2194
        %2196 = vmatprep.mubr.bf16.mxu0 0
        %2197 = vmatmul.mubr.bf16.gmra.mrb[0].mxu0 %v2068
        %v2198 = vpop.f32.mrb[0].mxu0
        %v2199 = vadd.f32 %v1999, %v2198
        %v2200 = vpop.f32.mrb[0].mxu0
        %v2201 = vadd.f32 %v2003, %v2200
        %v2202 = vpop.f32.mrb[0].mxu0
        %v2203 = vadd.f32 %v1999, %v2202
        %v2204 = vpop.f32.mrb[0].mxu0
        %v2205 = vadd.f32 %v2003, %v2204
        %2206 = vmatprep.mubr.bf16.mxu0 0
        %2207 = vmatmul.mubr.bf16.gmra.mrb[0].mxu0 %v2071
        %v2208 = vpop.f32.mrb[0].mxu0
        %v2209 = vadd.f32 %v1999, %v2208
        %v2210 = vpop.f32.mrb[0].mxu0
        %v2211 = vadd.f32 %v2003, %v2210
        %v2212 = vpop.f32.mrb[0].mxu0
        %v2213 = vadd.f32 %v1999, %v2212
        %v2214 = vpop.f32.mrb[0].mxu0
        %v2215 = vadd.f32 %v2003, %v2214
        %2216 = vmatprep.mubr.bf16.mxu0 0
        %2217 = vmatmul.mubr.bf16.gmra.mrb[0].mxu0 %v2074
        %v2218 = vpop.f32.mrb[0].mxu0
        %v2219 = vadd.f32 %v1999, %v2218
        %v2220 = vpop.f32.mrb[0].mxu0
        %v2221 = vadd.f32 %v2003, %v2220
        %v2222 = vpop.f32.mrb[0].mxu0
        %v2223 = vadd.f32 %v1999, %v2222
        %v2224 = vpop.f32.mrb[0].mxu0
        %v2225 = vadd.f32 %v2003, %v2224
        %2226 = vmatprep.mubr.bf16.mxu0 0
        %2227 = vmatmul.mubr.bf16.gmra.mrb[0].mxu0 %v2077
        %v2228 = vpop.f32.mrb[0].mxu0
        %v2229 = vadd.f32 %v1999, %v2228
        %v2230 = vpop.f32.mrb[0].mxu0
        %v2231 = vadd.f32 %v2003, %v2230
        %v2232 = vpop.f32.mrb[0].mxu0
        %v2233 = vadd.f32 %v1999, %v2232
        %v2234 = vpop.f32.mrb[0].mxu0
        %v2235 = vadd.f32 %v2003, %v2234
        %2236 = vmatprep.mubr.bf16.mxu0 0
        %2237 = vmatmul.mubr.bf16.gmra.mrb[0].mxu0 %v2080
        %v2238 = vpop.f32.mrb[0].mxu0
        %v2239 = vadd.f32 %v1999, %v2238
        %v2240 = vpop.f32.mrb[0].mxu0
        %v2241 = vadd.f32 %v2003, %v2240
        %v2242 = vpop.f32.mrb[0].mxu0
        %v2243 = vadd.f32 %v1999, %v2242
        %v2244 = vpop.f32.mrb[0].mxu0
        %v2245 = vadd.f32 %v2003, %v2244
        %2246 = vmatprep.mubr.bf16.mxu0 0
        %2247 = vmatmul.mubr.bf16.gmra.mrb[0].mxu0 %v2083
        %v2248 = vpop.f32.mrb[0].mxu0
        %v2249 = vadd.f32 %v1999, %v2248
        %v2250 = vpop.f32.mrb[0].mxu0
        %v2251 = vadd.f32 %v2003, %v2250
        %v2252 = vpop.f32.mrb[0].mxu0
        %v2253 = vadd.f32 %v1999, %v2252
        %v2254 = vpop.f32.mrb[0].mxu0
        %v2255 = vadd.f32 %v2003, %v2254
        %2256 = vmatprep.mubr.bf16.mxu0 0
        %2257 = vmatmul.mubr.bf16.gmra.mrb[0].mxu0 %v2086
        %v2258 = vpop.f32.mrb[0].mxu0
        %v2259 = vadd.f32 %v1999, %v2258
        %v2260 = vpop.f32.mrb[0].mxu0
        %v2261 = vadd.f32 %v2003, %v2260
        %v2262 = vpop.f32.mrb[0].mxu0
        %v2263 = vadd.f32 %v1999, %v2262
        %v2264 = vpop.f32.mrb[0].mxu0
        %v2265 = vadd.f32 %v2003, %v2264
        %2266 = vmatprep.mubr.bf16.mxu0 0
        %2267 = vmatmul.mubr.bf16.gmra.mrb[0].mxu0 %v2089
        %v2268 = vpop.f32.mrb[0].mxu0
        %v2269 = vadd.f32 %v1999, %v2268
        %v2270 = vpop.f32.mrb[0].mxu0
        %v2271 = vadd.f32 %v2003, %v2270
        %v2272 = vpop.f32.mrb[0].mxu0
        %v2273 = vadd.f32 %v1999, %v2272
        %v2274 = vpop.f32.mrb[0].mxu0
        %v2275 = vadd.f32 %v2003, %v2274
        %2276 = vmatprep.mubr.bf16.mxu0 0
        %2277 = vmatmul.mubr.bf16.gmra.mrb[0].mxu0 %v2092
        %v2278 = vpop.f32.mrb[0].mxu0
        %v2279 = vadd.f32 %v1999, %v2278
        %v2280 = vpop.f32.mrb[0].mxu0
        %v2281 = vadd.f32 %v2003, %v2280
        %v2282 = vpop.f32.mrb[0].mxu0
        %v2283 = vadd.f32 %v1999, %v2282
        %v2284 = vpop.f32.mrb[0].mxu0
        %v2285 = vadd.f32 %v2003, %v2284
        %2286 = vdwg.mxu0
        %2319 = vrot.lane.b32.xlu0 %v2129, 112
        %v2320 = vpop.permute.xlu0 %2319
        %2321 = vrot.lane.b32.xlu0 %v2133, 112
        %v2322 = vpop.permute.xlu0 %2321
        %2323 = vrot.lane.b32.xlu0 %v2139, 112
        %v2324 = vpop.permute.xlu0 %2323
        %2325 = vrot.lane.b32.xlu0 %v2143, 112
        %v2326 = vpop.permute.xlu0 %2325
        %2327 = vrot.lane.b32.xlu0 %v2149, 112
        %v2328 = vpop.permute.xlu0 %2327
        %2329 = vrot.lane.b32.xlu0 %v2153, 112
        %v2330 = vpop.permute.xlu0 %2329
        %2331 = vrot.lane.b32.xlu0 %v2159, 112
        %v2332 = vpop.permute.xlu0 %2331
        %2333 = vrot.lane.b32.xlu0 %v2163, 112
        %v2334 = vpop.permute.xlu0 %2333
        %2335 = vrot.lane.b32.xlu0 %v2169, 112
        %v2336 = vpop.permute.xlu0 %2335
        %2337 = vrot.lane.b32.xlu0 %v2173, 112
        %v2338 = vpop.permute.xlu0 %2337
        %2339 = vrot.lane.b32.xlu0 %v2179, 112
        %v2340 = vpop.permute.xlu0 %2339
        %2341 = vrot.lane.b32.xlu0 %v2183, 112
        %v2342 = vpop.permute.xlu0 %2341
        %2343 = vrot.lane.b32.xlu0 %v2189, 112
        %v2344 = vpop.permute.xlu0 %2343
        %2345 = vrot.lane.b32.xlu0 %v2193, 112
        %v2346 = vpop.permute.xlu0 %2345
        %2347 = vrot.lane.b32.xlu0 %v2199, 112
        %v2348 = vpop.permute.xlu0 %2347
        %2349 = vrot.lane.b32.xlu0 %v2203, 112
        %v2350 = vpop.permute.xlu0 %2349
        %2351 = vrot.lane.b32.xlu0 %v2209, 112
        %v2352 = vpop.permute.xlu0 %2351
        %2353 = vrot.lane.b32.xlu0 %v2213, 112
        %v2354 = vpop.permute.xlu0 %2353
        %2355 = vrot.lane.b32.xlu0 %v2219, 112
        %v2356 = vpop.permute.xlu0 %2355
        %2357 = vrot.lane.b32.xlu0 %v2223, 112
        %v2358 = vpop.permute.xlu0 %2357
        %2359 = vrot.lane.b32.xlu0 %v2229, 112
        %v2360 = vpop.permute.xlu0 %2359
        %2361 = vrot.lane.b32.xlu0 %v2233, 112
        %v2362 = vpop.permute.xlu0 %2361
        %2363 = vrot.lane.b32.xlu0 %v2239, 112
        %v2364 = vpop.permute.xlu0 %2363
        %2365 = vrot.lane.b32.xlu0 %v2243, 112
        %v2366 = vpop.permute.xlu0 %2365
        %2367 = vrot.lane.b32.xlu0 %v2249, 112
        %v2368 = vpop.permute.xlu0 %2367
        %2369 = vrot.lane.b32.xlu0 %v2253, 112
        %v2370 = vpop.permute.xlu0 %2369
        %2371 = vrot.lane.b32.xlu0 %v2259, 112
        %v2372 = vpop.permute.xlu0 %2371
        %2373 = vrot.lane.b32.xlu0 %v2263, 112
        %v2374 = vpop.permute.xlu0 %2373
        %2375 = vrot.lane.b32.xlu0 %v2269, 112
        %v2376 = vpop.permute.xlu0 %2375
        %2377 = vrot.lane.b32.xlu0 %v2273, 112
        %v2378 = vpop.permute.xlu0 %2377
        %2379 = vrot.lane.b32.xlu0 %v2279, 112
        %v2380 = vpop.permute.xlu0 %2379
        %2381 = vrot.lane.b32.xlu0 %v2283, 112
        %v2382 = vpop.permute.xlu0 %2381
        %2415 = vrot.lane.b32.xlu0 %v2129, 96
        %v2416 = vpop.permute.xlu0 %2415
        %2417 = vrot.lane.b32.xlu0 %v2133, 96
        %v2418 = vpop.permute.xlu0 %2417
        %2419 = vrot.lane.b32.xlu0 %v2139, 96
        %v2420 = vpop.permute.xlu0 %2419
        %2421 = vrot.lane.b32.xlu0 %v2143, 96
        %v2422 = vpop.permute.xlu0 %2421
        %2423 = vrot.lane.b32.xlu0 %v2149, 96
        %v2424 = vpop.permute.xlu0 %2423
        %2425 = vrot.lane.b32.xlu0 %v2153, 96
        %v2426 = vpop.permute.xlu0 %2425
        %2427 = vrot.lane.b32.xlu0 %v2159, 96
        %v2428 = vpop.permute.xlu0 %2427
        %2429 = vrot.lane.b32.xlu0 %v2163, 96
        %v2430 = vpop.permute.xlu0 %2429
        %2431 = vrot.lane.b32.xlu0 %v2169, 96
        %v2432 = vpop.permute.xlu0 %2431
        %2433 = vrot.lane.b32.xlu0 %v2173, 96
        %v2434 = vpop.permute.xlu0 %2433
        %2435 = vrot.lane.b32.xlu0 %v2179, 96
        %v2436 = vpop.permute.xlu0 %2435
        %2437 = vrot.lane.b32.xlu0 %v2183, 96
        %v2438 = vpop.permute.xlu0 %2437
        %2439 = vrot.lane.b32.xlu0 %v2189, 96
        %v2440 = vpop.permute.xlu0 %2439
        %2441 = vrot.lane.b32.xlu0 %v2193, 96
        %v2442 = vpop.permute.xlu0 %2441
        %2443 = vrot.lane.b32.xlu0 %v2199, 96
        %v2444 = vpop.permute.xlu0 %2443
        %2445 = vrot.lane.b32.xlu0 %v2203, 96
        %v2446 = vpop.permute.xlu0 %2445
        %2447 = vrot.lane.b32.xlu0 %v2209, 96
        %v2448 = vpop.permute.xlu0 %2447
        %2449 = vrot.lane.b32.xlu0 %v2213, 96
        %v2450 = vpop.permute.xlu0 %2449
        %2451 = vrot.lane.b32.xlu0 %v2219, 96
        %v2452 = vpop.permute.xlu0 %2451
        %2453 = vrot.lane.b32.xlu0 %v2223, 96
        %v2454 = vpop.permute.xlu0 %2453
        %2455 = vrot.lane.b32.xlu0 %v2229, 96
        %v2456 = vpop.permute.xlu0 %2455
        %2457 = vrot.lane.b32.xlu0 %v2233, 96
        %v2458 = vpop.permute.xlu0 %2457
        %2459 = vrot.lane.b32.xlu0 %v2239, 96
        %v2460 = vpop.permute.xlu0 %2459
        %2461 = vrot.lane.b32.xlu0 %v2243, 96
        %v2462 = vpop.permute.xlu0 %2461
        %2463 = vrot.lane.b32.xlu0 %v2249, 96
        %v2464 = vpop.permute.xlu0 %2463
        %2465 = vrot.lane.b32.xlu0 %v2253, 96
        %v2466 = vpop.permute.xlu0 %2465
        %2467 = vrot.lane.b32.xlu0 %v2259, 96
        %v2468 = vpop.permute.xlu0 %2467
        %2469 = vrot.lane.b32.xlu0 %v2263, 96
        %v2470 = vpop.permute.xlu0 %2469
        %2471 = vrot.lane.b32.xlu0 %v2269, 96
        %v2472 = vpop.permute.xlu0 %2471
        %2473 = vrot.lane.b32.xlu0 %v2273, 96
        %v2474 = vpop.permute.xlu0 %2473
        %2475 = vrot.lane.b32.xlu0 %v2279, 96
        %v2476 = vpop.permute.xlu0 %2475
        %2477 = vrot.lane.b32.xlu0 %v2283, 96
        %v2478 = vpop.permute.xlu0 %2477
        %2511 = vrot.lane.b32.xlu0 %v2129, 80
        %v2512 = vpop.permute.xlu0 %2511
        %2513 = vrot.lane.b32.xlu0 %v2133, 80
        %v2514 = vpop.permute.xlu0 %2513
        %2515 = vrot.lane.b32.xlu0 %v2139, 80
        %v2516 = vpop.permute.xlu0 %2515
        %2517 = vrot.lane.b32.xlu0 %v2143, 80
        %v2518 = vpop.permute.xlu0 %2517
        %2519 = vrot.lane.b32.xlu0 %v2149, 80
        %v2520 = vpop.permute.xlu0 %2519
        %2521 = vrot.lane.b32.xlu0 %v2153, 80
        %v2522 = vpop.permute.xlu0 %2521
        %2523 = vrot.lane.b32.xlu0 %v2159, 80
        %v2524 = vpop.permute.xlu0 %2523
        %2525 = vrot.lane.b32.xlu0 %v2163, 80
        %v2526 = vpop.permute.xlu0 %2525
        %2527 = vrot.lane.b32.xlu0 %v2169, 80
        %v2528 = vpop.permute.xlu0 %2527
        %2529 = vrot.lane.b32.xlu0 %v2173, 80
        %v2530 = vpop.permute.xlu0 %2529
        %2531 = vrot.lane.b32.xlu0 %v2179, 80
        %v2532 = vpop.permute.xlu0 %2531
        %2533 = vrot.lane.b32.xlu0 %v2183, 80
        %v2534 = vpop.permute.xlu0 %2533
        %2535 = vrot.lane.b32.xlu0 %v2189, 80
        %v2536 = vpop.permute.xlu0 %2535
        %2537 = vrot.lane.b32.xlu0 %v2193, 80
        %v2538 = vpop.permute.xlu0 %2537
        %2539 = vrot.lane.b32.xlu0 %v2199, 80
        %v2540 = vpop.permute.xlu0 %2539
        %2541 = vrot.lane.b32.xlu0 %v2203, 80
        %v2542 = vpop.permute.xlu0 %2541
        %2543 = vrot.lane.b32.xlu0 %v2209, 80
        %v2544 = vpop.permute.xlu0 %2543
        %2545 = vrot.lane.b32.xlu0 %v2213, 80
        %v2546 = vpop.permute.xlu0 %2545
        %2547 = vrot.lane.b32.xlu0 %v2219, 80
        %v2548 = vpop.permute.xlu0 %2547
        %2549 = vrot.lane.b32.xlu0 %v2223, 80
        %v2550 = vpop.permute.xlu0 %2549
        %2551 = vrot.lane.b32.xlu0 %v2229, 80
        %v2552 = vpop.permute.xlu0 %2551
        %2553 = vrot.lane.b32.xlu0 %v2233, 80
        %v2554 = vpop.permute.xlu0 %2553
        %2555 = vrot.lane.b32.xlu0 %v2239, 80
        %v2556 = vpop.permute.xlu0 %2555
        %2557 = vrot.lane.b32.xlu0 %v2243, 80
        %v2558 = vpop.permute.xlu0 %2557
        %2559 = vrot.lane.b32.xlu0 %v2249, 80
        %v2560 = vpop.permute.xlu0 %2559
        %2561 = vrot.lane.b32.xlu0 %v2253, 80
        %v2562 = vpop.permute.xlu0 %2561
        %2563 = vrot.lane.b32.xlu0 %v2259, 80
        %v2564 = vpop.permute.xlu0 %2563
        %2565 = vrot.lane.b32.xlu0 %v2263, 80
        %v2566 = vpop.permute.xlu0 %2565
        %2567 = vrot.lane.b32.xlu0 %v2269, 80
        %v2568 = vpop.permute.xlu0 %2567
        %2569 = vrot.lane.b32.xlu0 %v2273, 80
        %v2570 = vpop.permute.xlu0 %2569
        %2571 = vrot.lane.b32.xlu0 %v2279, 80
        %v2572 = vpop.permute.xlu0 %2571
        %2573 = vrot.lane.b32.xlu0 %v2283, 80
        %v2574 = vpop.permute.xlu0 %2573
        %2607 = vrot.lane.b32.xlu0 %v2129, 64
        %v2608 = vpop.permute.xlu0 %2607
        %2609 = vrot.lane.b32.xlu0 %v2133, 64
        %v2610 = vpop.permute.xlu0 %2609
        %2611 = vrot.lane.b32.xlu0 %v2139, 64
        %v2612 = vpop.permute.xlu0 %2611
        %2613 = vrot.lane.b32.xlu0 %v2143, 64
        %v2614 = vpop.permute.xlu0 %2613
        %2615 = vrot.lane.b32.xlu0 %v2149, 64
        %v2616 = vpop.permute.xlu0 %2615
        %2617 = vrot.lane.b32.xlu0 %v2153, 64
        %v2618 = vpop.permute.xlu0 %2617
        %2619 = vrot.lane.b32.xlu0 %v2159, 64
        %v2620 = vpop.permute.xlu0 %2619
        %2621 = vrot.lane.b32.xlu0 %v2163, 64
        %v2622 = vpop.permute.xlu0 %2621
        %2623 = vrot.lane.b32.xlu0 %v2169, 64
        %v2624 = vpop.permute.xlu0 %2623
        %2625 = vrot.lane.b32.xlu0 %v2173, 64
        %v2626 = vpop.permute.xlu0 %2625
        %2627 = vrot.lane.b32.xlu0 %v2179, 64
        %v2628 = vpop.permute.xlu0 %2627
        %2629 = vrot.lane.b32.xlu0 %v2183, 64
        %v2630 = vpop.permute.xlu0 %2629
        %2631 = vrot.lane.b32.xlu0 %v2189, 64
        %v2632 = vpop.permute.xlu0 %2631
        %2633 = vrot.lane.b32.xlu0 %v2193, 64
        %v2634 = vpop.permute.xlu0 %2633
        %2635 = vrot.lane.b32.xlu0 %v2199, 64
        %v2636 = vpop.permute.xlu0 %2635
        %2637 = vrot.lane.b32.xlu0 %v2203, 64
        %v2638 = vpop.permute.xlu0 %2637
        %2639 = vrot.lane.b32.xlu0 %v2209, 64
        %v2640 = vpop.permute.xlu0 %2639
        %2641 = vrot.lane.b32.xlu0 %v2213, 64
        %v2642 = vpop.permute.xlu0 %2641
        %2643 = vrot.lane.b32.xlu0 %v2219, 64
        %v2644 = vpop.permute.xlu0 %2643
        %2645 = vrot.lane.b32.xlu0 %v2223, 64
        %v2646 = vpop.permute.xlu0 %2645
        %2647 = vrot.lane.b32.xlu0 %v2229, 64
        %v2648 = vpop.permute.xlu0 %2647
        %2649 = vrot.lane.b32.xlu0 %v2233, 64
        %v2650 = vpop.permute.xlu0 %2649
        %2651 = vrot.lane.b32.xlu0 %v2239, 64
        %v2652 = vpop.permute.xlu0 %2651
        %2653 = vrot.lane.b32.xlu0 %v2243, 64
        %v2654 = vpop.permute.xlu0 %2653
        %2655 = vrot.lane.b32.xlu0 %v2249, 64
        %v2656 = vpop.permute.xlu0 %2655
        %2657 = vrot.lane.b32.xlu0 %v2253, 64
        %v2658 = vpop.permute.xlu0 %2657
        %2659 = vrot.lane.b32.xlu0 %v2259, 64
        %v2660 = vpop.permute.xlu0 %2659
        %2661 = vrot.lane.b32.xlu0 %v2263, 64
        %v2662 = vpop.permute.xlu0 %2661
        %2663 = vrot.lane.b32.xlu0 %v2269, 64
        %v2664 = vpop.permute.xlu0 %2663
        %2665 = vrot.lane.b32.xlu0 %v2273, 64
        %v2666 = vpop.permute.xlu0 %2665
        %2667 = vrot.lane.b32.xlu0 %v2279, 64
        %v2668 = vpop.permute.xlu0 %2667
        %2669 = vrot.lane.b32.xlu0 %v2283, 64
        %v2670 = vpop.permute.xlu0 %2669
        %2703 = vrot.lane.b32.xlu0 %v2129, 48
        %v2704 = vpop.permute.xlu0 %2703
        %2705 = vrot.lane.b32.xlu0 %v2133, 48
        %v2706 = vpop.permute.xlu0 %2705
        %2707 = vrot.lane.b32.xlu0 %v2139, 48
        %v2708 = vpop.permute.xlu0 %2707
        %2709 = vrot.lane.b32.xlu0 %v2143, 48
        %v2710 = vpop.permute.xlu0 %2709
        %2711 = vrot.lane.b32.xlu0 %v2149, 48
        %v2712 = vpop.permute.xlu0 %2711
        %2713 = vrot.lane.b32.xlu0 %v2153, 48
        %v2714 = vpop.permute.xlu0 %2713
        %2715 = vrot.lane.b32.xlu0 %v2159, 48
        %v2716 = vpop.permute.xlu0 %2715
        %2717 = vrot.lane.b32.xlu0 %v2163, 48
        %v2718 = vpop.permute.xlu0 %2717
        %2719 = vrot.lane.b32.xlu0 %v2169, 48
        %v2720 = vpop.permute.xlu0 %2719
        %2721 = vrot.lane.b32.xlu0 %v2173, 48
        %v2722 = vpop.permute.xlu0 %2721
        %2723 = vrot.lane.b32.xlu0 %v2179, 48
        %v2724 = vpop.permute.xlu0 %2723
        %2725 = vrot.lane.b32.xlu0 %v2183, 48
        %v2726 = vpop.permute.xlu0 %2725
        %2727 = vrot.lane.b32.xlu0 %v2189, 48
        %v2728 = vpop.permute.xlu0 %2727
        %2729 = vrot.lane.b32.xlu0 %v2193, 48
        %v2730 = vpop.permute.xlu0 %2729
        %2731 = vrot.lane.b32.xlu0 %v2199, 48
        %v2732 = vpop.permute.xlu0 %2731
        %2733 = vrot.lane.b32.xlu0 %v2203, 48
        %v2734 = vpop.permute.xlu0 %2733
        %2735 = vrot.lane.b32.xlu0 %v2209, 48
        %v2736 = vpop.permute.xlu0 %2735
        %2737 = vrot.lane.b32.xlu0 %v2213, 48
        %v2738 = vpop.permute.xlu0 %2737
        %2739 = vrot.lane.b32.xlu0 %v2219, 48
        %v2740 = vpop.permute.xlu0 %2739
        %2741 = vrot.lane.b32.xlu0 %v2223, 48
        %v2742 = vpop.permute.xlu0 %2741
        %2743 = vrot.lane.b32.xlu0 %v2229, 48
        %v2744 = vpop.permute.xlu0 %2743
        %2745 = vrot.lane.b32.xlu0 %v2233, 48
        %v2746 = vpop.permute.xlu0 %2745
        %2747 = vrot.lane.b32.xlu0 %v2239, 48
        %v2748 = vpop.permute.xlu0 %2747
        %2749 = vrot.lane.b32.xlu0 %v2243, 48
        %v2750 = vpop.permute.xlu0 %2749
        %2751 = vrot.lane.b32.xlu0 %v2249, 48
        %v2752 = vpop.permute.xlu0 %2751
        %2753 = vrot.lane.b32.xlu0 %v2253, 48
        %v2754 = vpop.permute.xlu0 %2753
        %2755 = vrot.lane.b32.xlu0 %v2259, 48
        %v2756 = vpop.permute.xlu0 %2755
        %2757 = vrot.lane.b32.xlu0 %v2263, 48
        %v2758 = vpop.permute.xlu0 %2757
        %2759 = vrot.lane.b32.xlu0 %v2269, 48
        %v2760 = vpop.permute.xlu0 %2759
        %2761 = vrot.lane.b32.xlu0 %v2273, 48
        %v2762 = vpop.permute.xlu0 %2761
        %2763 = vrot.lane.b32.xlu0 %v2279, 48
        %v2764 = vpop.permute.xlu0 %2763
        %2765 = vrot.lane.b32.xlu0 %v2283, 48
        %v2766 = vpop.permute.xlu0 %2765
        %2799 = vrot.lane.b32.xlu0 %v2129, 32
        %v2800 = vpop.permute.xlu0 %2799
        %2801 = vrot.lane.b32.xlu0 %v2133, 32
        %v2802 = vpop.permute.xlu0 %2801
        %2803 = vrot.lane.b32.xlu0 %v2139, 32
        %v2804 = vpop.permute.xlu0 %2803
        %2805 = vrot.lane.b32.xlu0 %v2143, 32
        %v2806 = vpop.permute.xlu0 %2805
        %2807 = vrot.lane.b32.xlu0 %v2149, 32
        %v2808 = vpop.permute.xlu0 %2807
        %2809 = vrot.lane.b32.xlu0 %v2153, 32
        %v2810 = vpop.permute.xlu0 %2809
        %2811 = vrot.lane.b32.xlu0 %v2159, 32
        %v2812 = vpop.permute.xlu0 %2811
        %2813 = vrot.lane.b32.xlu0 %v2163, 32
        %v2814 = vpop.permute.xlu0 %2813
        %2815 = vrot.lane.b32.xlu0 %v2169, 32
        %v2816 = vpop.permute.xlu0 %2815
        %2817 = vrot.lane.b32.xlu0 %v2173, 32
        %v2818 = vpop.permute.xlu0 %2817
        %2819 = vrot.lane.b32.xlu0 %v2179, 32
        %v2820 = vpop.permute.xlu0 %2819
        %2821 = vrot.lane.b32.xlu0 %v2183, 32
        %v2822 = vpop.permute.xlu0 %2821
        %2823 = vrot.lane.b32.xlu0 %v2189, 32
        %v2824 = vpop.permute.xlu0 %2823
        %2825 = vrot.lane.b32.xlu0 %v2193, 32
        %v2826 = vpop.permute.xlu0 %2825
        %2827 = vrot.lane.b32.xlu0 %v2199, 32
        %v2828 = vpop.permute.xlu0 %2827
        %2829 = vrot.lane.b32.xlu0 %v2203, 32
        %v2830 = vpop.permute.xlu0 %2829
        %2831 = vrot.lane.b32.xlu0 %v2209, 32
        %v2832 = vpop.permute.xlu0 %2831
        %2833 = vrot.lane.b32.xlu0 %v2213, 32
        %v2834 = vpop.permute.xlu0 %2833
        %2835 = vrot.lane.b32.xlu0 %v2219, 32
        %v2836 = vpop.permute.xlu0 %2835
        %2837 = vrot.lane.b32.xlu0 %v2223, 32
        %v2838 = vpop.permute.xlu0 %2837
        %2839 = vrot.lane.b32.xlu0 %v2229, 32
        %v2840 = vpop.permute.xlu0 %2839
        %2841 = vrot.lane.b32.xlu0 %v2233, 32
        %v2842 = vpop.permute.xlu0 %2841
        %2843 = vrot.lane.b32.xlu0 %v2239, 32
        %v2844 = vpop.permute.xlu0 %2843
        %2845 = vrot.lane.b32.xlu0 %v2243, 32
        %v2846 = vpop.permute.xlu0 %2845
        %2847 = vrot.lane.b32.xlu0 %v2249, 32
        %v2848 = vpop.permute.xlu0 %2847
        %2849 = vrot.lane.b32.xlu0 %v2253, 32
        %v2850 = vpop.permute.xlu0 %2849
        %2851 = vrot.lane.b32.xlu0 %v2259, 32
        %v2852 = vpop.permute.xlu0 %2851
        %2853 = vrot.lane.b32.xlu0 %v2263, 32
        %v2854 = vpop.permute.xlu0 %2853
        %2855 = vrot.lane.b32.xlu0 %v2269, 32
        %v2856 = vpop.permute.xlu0 %2855
        %2857 = vrot.lane.b32.xlu0 %v2273, 32
        %v2858 = vpop.permute.xlu0 %2857
        %2859 = vrot.lane.b32.xlu0 %v2279, 32
        %v2860 = vpop.permute.xlu0 %2859
        %2861 = vrot.lane.b32.xlu0 %v2283, 32
        %v2862 = vpop.permute.xlu0 %2861
        %2895 = vrot.lane.b32.xlu0 %v2129, 16
        %v2896 = vpop.permute.xlu0 %2895
        %2897 = vrot.lane.b32.xlu0 %v2133, 16
        %v2898 = vpop.permute.xlu0 %2897
        %2899 = vrot.lane.b32.xlu0 %v2139, 16
        %v2900 = vpop.permute.xlu0 %2899
        %2901 = vrot.lane.b32.xlu0 %v2143, 16
        %v2902 = vpop.permute.xlu0 %2901
        %2903 = vrot.lane.b32.xlu0 %v2149, 16
        %v2904 = vpop.permute.xlu0 %2903
        %2905 = vrot.lane.b32.xlu0 %v2153, 16
        %v2906 = vpop.permute.xlu0 %2905
        %2907 = vrot.lane.b32.xlu0 %v2159, 16
        %v2908 = vpop.permute.xlu0 %2907
        %2909 = vrot.lane.b32.xlu0 %v2163, 16
        %v2910 = vpop.permute.xlu0 %2909
        %2911 = vrot.lane.b32.xlu0 %v2169, 16
        %v2912 = vpop.permute.xlu0 %2911
        %2913 = vrot.lane.b32.xlu0 %v2173, 16
        %v2914 = vpop.permute.xlu0 %2913
        %2915 = vrot.lane.b32.xlu0 %v2179, 16
        %v2916 = vpop.permute.xlu0 %2915
        %2917 = vrot.lane.b32.xlu0 %v2183, 16
        %v2918 = vpop.permute.xlu0 %2917
        %2919 = vrot.lane.b32.xlu0 %v2189, 16
        %v2920 = vpop.permute.xlu0 %2919
        %2921 = vrot.lane.b32.xlu0 %v2193, 16
        %v2922 = vpop.permute.xlu0 %2921
        %2923 = vrot.lane.b32.xlu0 %v2199, 16
        %v2924 = vpop.permute.xlu0 %2923
        %2925 = vrot.lane.b32.xlu0 %v2203, 16
        %v2926 = vpop.permute.xlu0 %2925
        %2927 = vrot.lane.b32.xlu0 %v2209, 16
        %v2928 = vpop.permute.xlu0 %2927
        %2929 = vrot.lane.b32.xlu0 %v2213, 16
        %v2930 = vpop.permute.xlu0 %2929
        %2931 = vrot.lane.b32.xlu0 %v2219, 16
        %v2932 = vpop.permute.xlu0 %2931
        %2933 = vrot.lane.b32.xlu0 %v2223, 16
        %v2934 = vpop.permute.xlu0 %2933
        %2935 = vrot.lane.b32.xlu0 %v2229, 16
        %v2936 = vpop.permute.xlu0 %2935
        %2937 = vrot.lane.b32.xlu0 %v2233, 16
        %v2938 = vpop.permute.xlu0 %2937
        %2939 = vrot.lane.b32.xlu0 %v2239, 16
        %v2940 = vpop.permute.xlu0 %2939
        %2941 = vrot.lane.b32.xlu0 %v2243, 16
        %v2942 = vpop.permute.xlu0 %2941
        %2943 = vrot.lane.b32.xlu0 %v2249, 16
        %v2944 = vpop.permute.xlu0 %2943
        %2945 = vrot.lane.b32.xlu0 %v2253, 16
        %v2946 = vpop.permute.xlu0 %2945
        %2947 = vrot.lane.b32.xlu0 %v2259, 16
        %v2948 = vpop.permute.xlu0 %2947
        %2949 = vrot.lane.b32.xlu0 %v2263, 16
        %v2950 = vpop.permute.xlu0 %2949
        %2951 = vrot.lane.b32.xlu0 %v2269, 16
        %v2952 = vpop.permute.xlu0 %2951
        %2953 = vrot.lane.b32.xlu0 %v2273, 16
        %v2954 = vpop.permute.xlu0 %2953
        %2955 = vrot.lane.b32.xlu0 %v2279, 16
        %v2956 = vpop.permute.xlu0 %2955
        %2957 = vrot.lane.b32.xlu0 %v2283, 16
        %v2958 = vpop.permute.xlu0 %2957
        %3023 = vrot.lane.b32.xlu0 %v2131, 112
        %v3024 = vpop.permute.xlu0 %3023
        %3025 = vrot.lane.b32.xlu0 %v2135, 112
        %v3026 = vpop.permute.xlu0 %3025
        %3027 = vrot.lane.b32.xlu0 %v2141, 112
        %v3028 = vpop.permute.xlu0 %3027
        %3029 = vrot.lane.b32.xlu0 %v2145, 112
        %v3030 = vpop.permute.xlu0 %3029
        %3031 = vrot.lane.b32.xlu0 %v2151, 112
        %v3032 = vpop.permute.xlu0 %3031
        %3033 = vrot.lane.b32.xlu0 %v2155, 112
        %v3034 = vpop.permute.xlu0 %3033
        %3035 = vrot.lane.b32.xlu0 %v2161, 112
        %v3036 = vpop.permute.xlu0 %3035
        %3037 = vrot.lane.b32.xlu0 %v2165, 112
        %v3038 = vpop.permute.xlu0 %3037
        %3039 = vrot.lane.b32.xlu0 %v2171, 112
        %v3040 = vpop.permute.xlu0 %3039
        %3041 = vrot.lane.b32.xlu0 %v2175, 112
        %v3042 = vpop.permute.xlu0 %3041
        %3043 = vrot.lane.b32.xlu0 %v2181, 112
        %v3044 = vpop.permute.xlu0 %3043
        %3045 = vrot.lane.b32.xlu0 %v2185, 112
        %v3046 = vpop.permute.xlu0 %3045
        %3047 = vrot.lane.b32.xlu0 %v2191, 112
        %v3048 = vpop.permute.xlu0 %3047
        %3049 = vrot.lane.b32.xlu0 %v2195, 112
        %v3050 = vpop.permute.xlu0 %3049
        %3051 = vrot.lane.b32.xlu0 %v2201, 112
        %v3052 = vpop.permute.xlu0 %3051
        %3053 = vrot.lane.b32.xlu0 %v2205, 112
        %v3054 = vpop.permute.xlu0 %3053
        %3055 = vrot.lane.b32.xlu0 %v2211, 112
        %v3056 = vpop.permute.xlu0 %3055
        %3057 = vrot.lane.b32.xlu0 %v2215, 112
        %v3058 = vpop.permute.xlu0 %3057
        %3059 = vrot.lane.b32.xlu0 %v2221, 112
        %v3060 = vpop.permute.xlu0 %3059
        %3061 = vrot.lane.b32.xlu0 %v2225, 112
        %v3062 = vpop.permute.xlu0 %3061
        %3063 = vrot.lane.b32.xlu0 %v2231, 112
        %v3064 = vpop.permute.xlu0 %3063
        %3065 = vrot.lane.b32.xlu0 %v2235, 112
        %v3066 = vpop.permute.xlu0 %3065
        %3067 = vrot.lane.b32.xlu0 %v2241, 112
        %v3068 = vpop.permute.xlu0 %3067
        %3069 = vrot.lane.b32.xlu0 %v2245, 112
        %v3070 = vpop.permute.xlu0 %3069
        %3071 = vrot.lane.b32.xlu0 %v2251, 112
        %v3072 = vpop.permute.xlu0 %3071
        %3073 = vrot.lane.b32.xlu0 %v2255, 112
        %v3074 = vpop.permute.xlu0 %3073
        %3075 = vrot.lane.b32.xlu0 %v2261, 112
        %v3076 = vpop.permute.xlu0 %3075
        %3077 = vrot.lane.b32.xlu0 %v2265, 112
        %v3078 = vpop.permute.xlu0 %3077
        %3079 = vrot.lane.b32.xlu0 %v2271, 112
        %v3080 = vpop.permute.xlu0 %3079
        %3081 = vrot.lane.b32.xlu0 %v2275, 112
        %v3082 = vpop.permute.xlu0 %3081
        %3083 = vrot.lane.b32.xlu0 %v2281, 112
        %v3084 = vpop.permute.xlu0 %3083
        %3085 = vrot.lane.b32.xlu0 %v2285, 112
        %v3086 = vpop.permute.xlu0 %3085
        %3119 = vrot.lane.b32.xlu0 %v2131, 96
        %v3120 = vpop.permute.xlu0 %3119
        %3121 = vrot.lane.b32.xlu0 %v2135, 96
        %v3122 = vpop.permute.xlu0 %3121
        %3123 = vrot.lane.b32.xlu0 %v2141, 96
        %v3124 = vpop.permute.xlu0 %3123
        %3125 = vrot.lane.b32.xlu0 %v2145, 96
        %v3126 = vpop.permute.xlu0 %3125
        %3127 = vrot.lane.b32.xlu0 %v2151, 96
        %v3128 = vpop.permute.xlu0 %3127
        %3129 = vrot.lane.b32.xlu0 %v2155, 96
        %v3130 = vpop.permute.xlu0 %3129
        %3131 = vrot.lane.b32.xlu0 %v2161, 96
        %v3132 = vpop.permute.xlu0 %3131
        %3133 = vrot.lane.b32.xlu0 %v2165, 96
        %v3134 = vpop.permute.xlu0 %3133
        %3135 = vrot.lane.b32.xlu0 %v2171, 96
        %v3136 = vpop.permute.xlu0 %3135
        %3137 = vrot.lane.b32.xlu0 %v2175, 96
        %v3138 = vpop.permute.xlu0 %3137
        %3139 = vrot.lane.b32.xlu0 %v2181, 96
        %v3140 = vpop.permute.xlu0 %3139
        %3141 = vrot.lane.b32.xlu0 %v2185, 96
        %v3142 = vpop.permute.xlu0 %3141
        %3143 = vrot.lane.b32.xlu0 %v2191, 96
        %v3144 = vpop.permute.xlu0 %3143
        %3145 = vrot.lane.b32.xlu0 %v2195, 96
        %v3146 = vpop.permute.xlu0 %3145
        %3147 = vrot.lane.b32.xlu0 %v2201, 96
        %v3148 = vpop.permute.xlu0 %3147
        %3149 = vrot.lane.b32.xlu0 %v2205, 96
        %v3150 = vpop.permute.xlu0 %3149
        %3151 = vrot.lane.b32.xlu0 %v2211, 96
        %v3152 = vpop.permute.xlu0 %3151
        %3153 = vrot.lane.b32.xlu0 %v2215, 96
        %v3154 = vpop.permute.xlu0 %3153
        %3155 = vrot.lane.b32.xlu0 %v2221, 96
        %v3156 = vpop.permute.xlu0 %3155
        %3157 = vrot.lane.b32.xlu0 %v2225, 96
        %v3158 = vpop.permute.xlu0 %3157
        %3159 = vrot.lane.b32.xlu0 %v2231, 96
        %v3160 = vpop.permute.xlu0 %3159
        %3161 = vrot.lane.b32.xlu0 %v2235, 96
        %v3162 = vpop.permute.xlu0 %3161
        %3163 = vrot.lane.b32.xlu0 %v2241, 96
        %v3164 = vpop.permute.xlu0 %3163
        %3165 = vrot.lane.b32.xlu0 %v2245, 96
        %v3166 = vpop.permute.xlu0 %3165
        %3167 = vrot.lane.b32.xlu0 %v2251, 96
        %v3168 = vpop.permute.xlu0 %3167
        %3169 = vrot.lane.b32.xlu0 %v2255, 96
        %v3170 = vpop.permute.xlu0 %3169
        %3171 = vrot.lane.b32.xlu0 %v2261, 96
        %v3172 = vpop.permute.xlu0 %3171
        %3173 = vrot.lane.b32.xlu0 %v2265, 96
        %v3174 = vpop.permute.xlu0 %3173
        %3175 = vrot.lane.b32.xlu0 %v2271, 96
        %v3176 = vpop.permute.xlu0 %3175
        %3177 = vrot.lane.b32.xlu0 %v2275, 96
        %v3178 = vpop.permute.xlu0 %3177
        %3179 = vrot.lane.b32.xlu0 %v2281, 96
        %v3180 = vpop.permute.xlu0 %3179
        %3181 = vrot.lane.b32.xlu0 %v2285, 96
        %v3182 = vpop.permute.xlu0 %3181
        %3215 = vrot.lane.b32.xlu0 %v2131, 80
        %v3216 = vpop.permute.xlu0 %3215
        %3217 = vrot.lane.b32.xlu0 %v2135, 80
        %v3218 = vpop.permute.xlu0 %3217
        %3219 = vrot.lane.b32.xlu0 %v2141, 80
        %v3220 = vpop.permute.xlu0 %3219
        %3221 = vrot.lane.b32.xlu0 %v2145, 80
        %v3222 = vpop.permute.xlu0 %3221
        %3223 = vrot.lane.b32.xlu0 %v2151, 80
        %v3224 = vpop.permute.xlu0 %3223
        %3225 = vrot.lane.b32.xlu0 %v2155, 80
        %v3226 = vpop.permute.xlu0 %3225
        %3227 = vrot.lane.b32.xlu0 %v2161, 80
        %v3228 = vpop.permute.xlu0 %3227
        %3229 = vrot.lane.b32.xlu0 %v2165, 80
        %v3230 = vpop.permute.xlu0 %3229
        %3231 = vrot.lane.b32.xlu0 %v2171, 80
        %v3232 = vpop.permute.xlu0 %3231
        %3233 = vrot.lane.b32.xlu0 %v2175, 80
        %v3234 = vpop.permute.xlu0 %3233
        %3235 = vrot.lane.b32.xlu0 %v2181, 80
        %v3236 = vpop.permute.xlu0 %3235
        %3237 = vrot.lane.b32.xlu0 %v2185, 80
        %v3238 = vpop.permute.xlu0 %3237
        %3239 = vrot.lane.b32.xlu0 %v2191, 80
        %v3240 = vpop.permute.xlu0 %3239
        %3241 = vrot.lane.b32.xlu0 %v2195, 80
        %v3242 = vpop.permute.xlu0 %3241
        %3243 = vrot.lane.b32.xlu0 %v2201, 80
        %v3244 = vpop.permute.xlu0 %3243
        %3245 = vrot.lane.b32.xlu0 %v2205, 80
        %v3246 = vpop.permute.xlu0 %3245
        %3247 = vrot.lane.b32.xlu0 %v2211, 80
        %v3248 = vpop.permute.xlu0 %3247
        %3249 = vrot.lane.b32.xlu0 %v2215, 80
        %v3250 = vpop.permute.xlu0 %3249
        %3251 = vrot.lane.b32.xlu0 %v2221, 80
        %v3252 = vpop.permute.xlu0 %3251
        %3253 = vrot.lane.b32.xlu0 %v2225, 80
        %v3254 = vpop.permute.xlu0 %3253
        %3255 = vrot.lane.b32.xlu0 %v2231, 80
        %v3256 = vpop.permute.xlu0 %3255
        %3257 = vrot.lane.b32.xlu0 %v2235, 80
        %v3258 = vpop.permute.xlu0 %3257
        %3259 = vrot.lane.b32.xlu0 %v2241, 80
        %v3260 = vpop.permute.xlu0 %3259
        %3261 = vrot.lane.b32.xlu0 %v2245, 80
        %v3262 = vpop.permute.xlu0 %3261
        %3263 = vrot.lane.b32.xlu0 %v2251, 80
        %v3264 = vpop.permute.xlu0 %3263
        %3265 = vrot.lane.b32.xlu0 %v2255, 80
        %v3266 = vpop.permute.xlu0 %3265
        %3267 = vrot.lane.b32.xlu0 %v2261, 80
        %v3268 = vpop.permute.xlu0 %3267
        %3269 = vrot.lane.b32.xlu0 %v2265, 80
        %v3270 = vpop.permute.xlu0 %3269
        %3271 = vrot.lane.b32.xlu0 %v2271, 80
        %v3272 = vpop.permute.xlu0 %3271
        %3273 = vrot.lane.b32.xlu0 %v2275, 80
        %v3274 = vpop.permute.xlu0 %3273
        %3275 = vrot.lane.b32.xlu0 %v2281, 80
        %v3276 = vpop.permute.xlu0 %3275
        %3277 = vrot.lane.b32.xlu0 %v2285, 80
        %v3278 = vpop.permute.xlu0 %3277
        %v3311 = vmul.f32 %v2129, 0.25
        %v3312 = vmul.f32 %v2133, 0.25
        %v3313 = vmul.f32 %v2139, 0.25
        %v3314 = vmul.f32 %v2143, 0.25
        %v3315 = vmul.f32 %v2149, 0.25
        %v3316 = vmul.f32 %v2153, 0.25
        %v3317 = vmul.f32 %v2159, 0.25
        %v3318 = vmul.f32 %v2163, 0.25
        %v3319 = vmul.f32 %v2169, 0.25
        %v3320 = vmul.f32 %v2173, 0.25
        %v3321 = vmul.f32 %v2179, 0.25
        %v3322 = vmul.f32 %v2183, 0.25
        %v3323 = vmul.f32 %v2189, 0.25
        %v3324 = vmul.f32 %v2193, 0.25
        %v3325 = vmul.f32 %v2199, 0.25
        %v3326 = vmul.f32 %v2203, 0.25
        %v3327 = vmul.f32 %v2209, 0.25
        %v3328 = vmul.f32 %v2213, 0.25
        %v3329 = vmul.f32 %v2219, 0.25
        %v3330 = vmul.f32 %v2223, 0.25
        %v3331 = vmul.f32 %v2229, 0.25
        %v3332 = vmul.f32 %v2233, 0.25
        %v3333 = vmul.f32 %v2239, 0.25
        %v3334 = vmul.f32 %v2243, 0.25
        %v3335 = vmul.f32 %v2249, 0.25
        %v3336 = vmul.f32 %v2253, 0.25
        %v3337 = vmul.f32 %v2259, 0.25
        %v3338 = vmul.f32 %v2263, 0.25
        %v3339 = vmul.f32 %v2269, 0.25
        %v3340 = vmul.f32 %v2273, 0.25
        %v3341 = vmul.f32 %v2279, 0.25
        %v3342 = vmul.f32 %v2283, 0.25
        %v3343 = vmul.f32 %v2320, 0.25
        %v3344 = vmul.f32 %v2322, 0.25
        %v3345 = vmul.f32 %v2324, 0.25
        %v3346 = vmul.f32 %v2326, 0.25
        %v3347 = vmul.f32 %v2328, 0.25
        %v3348 = vmul.f32 %v2330, 0.25
        %v3349 = vmul.f32 %v2332, 0.25
        %v3350 = vmul.f32 %v2334, 0.25
        %v3351 = vmul.f32 %v2336, 0.25
        %v3352 = vmul.f32 %v2338, 0.25
        %v3353 = vmul.f32 %v2340, 0.25
        %v3354 = vmul.f32 %v2342, 0.25
        %v3355 = vmul.f32 %v2344, 0.25
        %v3356 = vmul.f32 %v2346, 0.25
        %v3357 = vmul.f32 %v2348, 0.25
        %v3358 = vmul.f32 %v2350, 0.25
        %v3359 = vmul.f32 %v2352, 0.25
        %v3360 = vmul.f32 %v2354, 0.25
        %v3361 = vmul.f32 %v2356, 0.25
        %v3362 = vmul.f32 %v2358, 0.25
        %v3363 = vmul.f32 %v2360, 0.25
        %v3364 = vmul.f32 %v2362, 0.25
        %v3365 = vmul.f32 %v2364, 0.25
        %v3366 = vmul.f32 %v2366, 0.25
        %v3367 = vmul.f32 %v2368, 0.25
        %v3368 = vmul.f32 %v2370, 0.25
        %v3369 = vmul.f32 %v2372, 0.25
        %v3370 = vmul.f32 %v2374, 0.25
        %v3371 = vmul.f32 %v2376, 0.25
        %v3372 = vmul.f32 %v2378, 0.25
        %v3373 = vmul.f32 %v2380, 0.25
        %v3374 = vmul.f32 %v2382, 0.25
        %v3375 = vmul.f32 %v2416, 0.25
        %v3376 = vmul.f32 %v2418, 0.25
        %v3377 = vmul.f32 %v2420, 0.25
        %v3378 = vmul.f32 %v2422, 0.25
        %v3379 = vmul.f32 %v2424, 0.25
        %v3380 = vmul.f32 %v2426, 0.25
        %v3381 = vmul.f32 %v2428, 0.25
        %v3382 = vmul.f32 %v2430, 0.25
        %v3383 = vmul.f32 %v2432, 0.25
        %v3384 = vmul.f32 %v2434, 0.25
        %v3385 = vmul.f32 %v2436, 0.25
        %v3386 = vmul.f32 %v2438, 0.25
        %v3387 = vmul.f32 %v2440, 0.25
        %v3388 = vmul.f32 %v2442, 0.25
        %v3389 = vmul.f32 %v2444, 0.25
        %v3390 = vmul.f32 %v2446, 0.25
        %v3391 = vmul.f32 %v2448, 0.25
        %v3392 = vmul.f32 %v2450, 0.25
        %v3393 = vmul.f32 %v2452, 0.25
        %v3394 = vmul.f32 %v2454, 0.25
        %v3395 = vmul.f32 %v2456, 0.25
        %v3396 = vmul.f32 %v2458, 0.25
        %v3397 = vmul.f32 %v2460, 0.25
        %v3398 = vmul.f32 %v2462, 0.25
        %v3399 = vmul.f32 %v2464, 0.25
        %v3400 = vmul.f32 %v2466, 0.25
        %v3401 = vmul.f32 %v2468, 0.25
        %v3402 = vmul.f32 %v2470, 0.25
        %v3403 = vmul.f32 %v2472, 0.25
        %v3404 = vmul.f32 %v2474, 0.25
        %v3405 = vmul.f32 %v2476, 0.25
        %v3406 = vmul.f32 %v2478, 0.25
        %v3407 = vmul.f32 %v2512, 0.25
        %v3408 = vmul.f32 %v2514, 0.25
        %v3409 = vmul.f32 %v2516, 0.25
        %v3410 = vmul.f32 %v2518, 0.25
        %v3411 = vmul.f32 %v2520, 0.25
        %v3412 = vmul.f32 %v2522, 0.25
        %v3413 = vmul.f32 %v2524, 0.25
        %v3414 = vmul.f32 %v2526, 0.25
        %v3415 = vmul.f32 %v2528, 0.25
        %v3416 = vmul.f32 %v2530, 0.25
        %v3417 = vmul.f32 %v2532, 0.25
        %v3418 = vmul.f32 %v2534, 0.25
        %v3419 = vmul.f32 %v2536, 0.25
        %v3420 = vmul.f32 %v2538, 0.25
        %v3421 = vmul.f32 %v2540, 0.25
        %v3422 = vmul.f32 %v2542, 0.25
        %v3423 = vmul.f32 %v2544, 0.25
        %v3424 = vmul.f32 %v2546, 0.25
        %v3425 = vmul.f32 %v2548, 0.25
        %v3426 = vmul.f32 %v2550, 0.25
        %v3427 = vmul.f32 %v2552, 0.25
        %v3428 = vmul.f32 %v2554, 0.25
        %v3429 = vmul.f32 %v2556, 0.25
        %v3430 = vmul.f32 %v2558, 0.25
        %v3431 = vmul.f32 %v2560, 0.25
        %v3432 = vmul.f32 %v2562, 0.25
        %v3433 = vmul.f32 %v2564, 0.25
        %v3434 = vmul.f32 %v2566, 0.25
        %v3435 = vmul.f32 %v2568, 0.25
        %v3436 = vmul.f32 %v2570, 0.25
        %v3437 = vmul.f32 %v2572, 0.25
        %v3438 = vmul.f32 %v2574, 0.25
        %v3439 = vpack.c.bf16 %v3312, %v3311
        %v3440 = vpack.c.bf16 %v3314, %v3313
        %v3441 = vpack.c.bf16 %v3316, %v3315
        %v3442 = vpack.c.bf16 %v3318, %v3317
        %v3443 = vpack.c.bf16 %v3320, %v3319
        %v3444 = vpack.c.bf16 %v3322, %v3321
        %v3445 = vpack.c.bf16 %v3324, %v3323
        %v3446 = vpack.c.bf16 %v3326, %v3325
        %v3447 = vpack.c.bf16 %v3328, %v3327
        %v3448 = vpack.c.bf16 %v3330, %v3329
        %v3449 = vpack.c.bf16 %v3332, %v3331
        %v3450 = vpack.c.bf16 %v3334, %v3333
        %v3451 = vpack.c.bf16 %v3336, %v3335
        %v3452 = vpack.c.bf16 %v3338, %v3337
        %v3453 = vpack.c.bf16 %v3340, %v3339
        %v3454 = vpack.c.bf16 %v3342, %v3341
        %v3455 = vpack.c.bf16 %v3344, %v3343
        %v3456 = vpack.c.bf16 %v3346, %v3345
        %v3457 = vpack.c.bf16 %v3348, %v3347
        %v3458 = vpack.c.bf16 %v3350, %v3349
        %v3459 = vpack.c.bf16 %v3352, %v3351
        %v3460 = vpack.c.bf16 %v3354, %v3353
        %v3461 = vpack.c.bf16 %v3356, %v3355
        %v3462 = vpack.c.bf16 %v3358, %v3357
        %v3463 = vpack.c.bf16 %v3360, %v3359
        %v3464 = vpack.c.bf16 %v3362, %v3361
        %v3465 = vpack.c.bf16 %v3364, %v3363
        %v3466 = vpack.c.bf16 %v3366, %v3365
        %v3467 = vpack.c.bf16 %v3368, %v3367
        %v3468 = vpack.c.bf16 %v3370, %v3369
        %v3469 = vpack.c.bf16 %v3372, %v3371
        %v3470 = vpack.c.bf16 %v3374, %v3373
        %v3471 = vpack.c.bf16 %v3376, %v3375
        %v3472 = vpack.c.bf16 %v3378, %v3377
        %v3473 = vpack.c.bf16 %v3380, %v3379
        %v3474 = vpack.c.bf16 %v3382, %v3381
        %v3475 = vpack.c.bf16 %v3384, %v3383
        %v3476 = vpack.c.bf16 %v3386, %v3385
        %v3477 = vpack.c.bf16 %v3388, %v3387
        %v3478 = vpack.c.bf16 %v3390, %v3389
        %v3479 = vpack.c.bf16 %v3392, %v3391
        %v3480 = vpack.c.bf16 %v3394, %v3393
        %v3481 = vpack.c.bf16 %v3396, %v3395
        %v3482 = vpack.c.bf16 %v3398, %v3397
        %v3483 = vpack.c.bf16 %v3400, %v3399
        %v3484 = vpack.c.bf16 %v3402, %v3401
        %v3485 = vpack.c.bf16 %v3404, %v3403
        %v3486 = vpack.c.bf16 %v3406, %v3405
        %v3487 = vpack.c.bf16 %v3408, %v3407
        %v3488 = vpack.c.bf16 %v3410, %v3409
        %v3489 = vpack.c.bf16 %v3412, %v3411
        %v3490 = vpack.c.bf16 %v3414, %v3413
        %v3491 = vpack.c.bf16 %v3416, %v3415
        %v3492 = vpack.c.bf16 %v3418, %v3417
        %v3493 = vpack.c.bf16 %v3420, %v3419
        %v3494 = vpack.c.bf16 %v3422, %v3421
        %v3495 = vpack.c.bf16 %v3424, %v3423
        %v3496 = vpack.c.bf16 %v3426, %v3425
        %v3497 = vpack.c.bf16 %v3428, %v3427
        %v3498 = vpack.c.bf16 %v3430, %v3429
        %v3499 = vpack.c.bf16 %v3432, %v3431
        %v3500 = vpack.c.bf16 %v3434, %v3433
        %v3501 = vpack.c.bf16 %v3436, %v3435
        %v3502 = vpack.c.bf16 %v3438, %v3437
        %v3503 = vpack.c.bf16 %v2610, %v2608
        %v3504 = vpack.c.bf16 %v2614, %v2612
        %v3505 = vpack.c.bf16 %v2618, %v2616
        %v3506 = vpack.c.bf16 %v2622, %v2620
        %v3507 = vpack.c.bf16 %v2626, %v2624
        %v3508 = vpack.c.bf16 %v2630, %v2628
        %v3509 = vpack.c.bf16 %v2634, %v2632
        %v3510 = vpack.c.bf16 %v2638, %v2636
        %v3511 = vpack.c.bf16 %v2642, %v2640
        %v3512 = vpack.c.bf16 %v2646, %v2644
        %v3513 = vpack.c.bf16 %v2650, %v2648
        %v3514 = vpack.c.bf16 %v2654, %v2652
        %v3515 = vpack.c.bf16 %v2658, %v2656
        %v3516 = vpack.c.bf16 %v2662, %v2660
        %v3517 = vpack.c.bf16 %v2666, %v2664
        %v3518 = vpack.c.bf16 %v2670, %v2668
        %v3519 = vpack.c.bf16 %v2706, %v2704
        %v3520 = vpack.c.bf16 %v2710, %v2708
        %v3521 = vpack.c.bf16 %v2714, %v2712
        %v3522 = vpack.c.bf16 %v2718, %v2716
        %v3523 = vpack.c.bf16 %v2722, %v2720
        %v3524 = vpack.c.bf16 %v2726, %v2724
        %v3525 = vpack.c.bf16 %v2730, %v2728
        %v3526 = vpack.c.bf16 %v2734, %v2732
        %v3527 = vpack.c.bf16 %v2738, %v2736
        %v3528 = vpack.c.bf16 %v2742, %v2740
        %v3529 = vpack.c.bf16 %v2746, %v2744
        %v3530 = vpack.c.bf16 %v2750, %v2748
        %v3531 = vpack.c.bf16 %v2754, %v2752
        %v3532 = vpack.c.bf16 %v2758, %v2756
        %v3533 = vpack.c.bf16 %v2762, %v2760
        %v3534 = vpack.c.bf16 %v2766, %v2764
        %v3535 = vpack.c.bf16 %v2802, %v2800
        %v3536 = vpack.c.bf16 %v2806, %v2804
        %v3537 = vpack.c.bf16 %v2810, %v2808
        %v3538 = vpack.c.bf16 %v2814, %v2812
        %v3539 = vpack.c.bf16 %v2818, %v2816
        %v3540 = vpack.c.bf16 %v2822, %v2820
        %v3541 = vpack.c.bf16 %v2826, %v2824
        %v3542 = vpack.c.bf16 %v2830, %v2828
        %v3543 = vpack.c.bf16 %v2834, %v2832
        %v3544 = vpack.c.bf16 %v2838, %v2836
        %v3545 = vpack.c.bf16 %v2842, %v2840
        %v3546 = vpack.c.bf16 %v2846, %v2844
        %v3547 = vpack.c.bf16 %v2850, %v2848
        %v3548 = vpack.c.bf16 %v2854, %v2852
        %v3549 = vpack.c.bf16 %v2858, %v2856
        %v3550 = vpack.c.bf16 %v2862, %v2860
        %v3551 = vpack.c.bf16 %v2898, %v2896
        %v3552 = vpack.c.bf16 %v2902, %v2900
        %v3553 = vpack.c.bf16 %v2906, %v2904
        %v3554 = vpack.c.bf16 %v2910, %v2908
        %v3555 = vpack.c.bf16 %v2914, %v2912
        %v3556 = vpack.c.bf16 %v2918, %v2916
        %v3557 = vpack.c.bf16 %v2922, %v2920
        %v3558 = vpack.c.bf16 %v2926, %v2924
        %v3559 = vpack.c.bf16 %v2930, %v2928
        %v3560 = vpack.c.bf16 %v2934, %v2932
        %v3561 = vpack.c.bf16 %v2938, %v2936
        %v3562 = vpack.c.bf16 %v2942, %v2940
        %v3563 = vpack.c.bf16 %v2946, %v2944
        %v3564 = vpack.c.bf16 %v2950, %v2948
        %v3565 = vpack.c.bf16 %v2954, %v2952
        %v3566 = vpack.c.bf16 %v2958, %v2956
        %v3567 = vpack.c.bf16 %v2135, %v2131
        %v3568 = vpack.c.bf16 %v2145, %v2141
        %v3569 = vpack.c.bf16 %v2155, %v2151
        %v3570 = vpack.c.bf16 %v2165, %v2161
        %v3571 = vpack.c.bf16 %v2175, %v2171
        %v3572 = vpack.c.bf16 %v2185, %v2181
        %v3573 = vpack.c.bf16 %v2195, %v2191
        %v3574 = vpack.c.bf16 %v2205, %v2201
        %v3575 = vpack.c.bf16 %v2215, %v2211
        %v3576 = vpack.c.bf16 %v2225, %v2221
        %v3577 = vpack.c.bf16 %v2235, %v2231
        %v3578 = vpack.c.bf16 %v2245, %v2241
        %v3579 = vpack.c.bf16 %v2255, %v2251
        %v3580 = vpack.c.bf16 %v2265, %v2261
        %v3581 = vpack.c.bf16 %v2275, %v2271
        %v3582 = vpack.c.bf16 %v2285, %v2281
        %v3583 = vpack.c.bf16 %v3026, %v3024
        %v3584 = vpack.c.bf16 %v3030, %v3028
        %v3585 = vpack.c.bf16 %v3034, %v3032
        %v3586 = vpack.c.bf16 %v3038, %v3036
        %v3587 = vpack.c.bf16 %v3042, %v3040
        %v3588 = vpack.c.bf16 %v3046, %v3044
        %v3589 = vpack.c.bf16 %v3050, %v3048
        %v3590 = vpack.c.bf16 %v3054, %v3052
        %v3591 = vpack.c.bf16 %v3058, %v3056
        %v3592 = vpack.c.bf16 %v3062, %v3060
        %v3593 = vpack.c.bf16 %v3066, %v3064
        %v3594 = vpack.c.bf16 %v3070, %v3068
        %v3595 = vpack.c.bf16 %v3074, %v3072
        %v3596 = vpack.c.bf16 %v3078, %v3076
        %v3597 = vpack.c.bf16 %v3082, %v3080
        %v3598 = vpack.c.bf16 %v3086, %v3084
        %v3599 = vpack.c.bf16 %v3122, %v3120
        %v3600 = vpack.c.bf16 %v3126, %v3124
        %v3601 = vpack.c.bf16 %v3130, %v3128
        %v3602 = vpack.c.bf16 %v3134, %v3132
        %v3603 = vpack.c.bf16 %v3138, %v3136
        %v3604 = vpack.c.bf16 %v3142, %v3140
        %v3605 = vpack.c.bf16 %v3146, %v3144
        %v3606 = vpack.c.bf16 %v3150, %v3148
        %v3607 = vpack.c.bf16 %v3154, %v3152
        %v3608 = vpack.c.bf16 %v3158, %v3156
        %v3609 = vpack.c.bf16 %v3162, %v3160
        %v3610 = vpack.c.bf16 %v3166, %v3164
        %v3611 = vpack.c.bf16 %v3170, %v3168
        %v3612 = vpack.c.bf16 %v3174, %v3172
        %v3613 = vpack.c.bf16 %v3178, %v3176
        %v3614 = vpack.c.bf16 %v3182, %v3180
        %v3615 = vpack.c.bf16 %v3218, %v3216
        %v3616 = vpack.c.bf16 %v3222, %v3220
        %v3617 = vpack.c.bf16 %v3226, %v3224
        %v3618 = vpack.c.bf16 %v3230, %v3228
        %v3619 = vpack.c.bf16 %v3234, %v3232
        %v3620 = vpack.c.bf16 %v3238, %v3236
        %v3621 = vpack.c.bf16 %v3242, %v3240
        %v3622 = vpack.c.bf16 %v3246, %v3244
        %v3623 = vpack.c.bf16 %v3250, %v3248
        %v3624 = vpack.c.bf16 %v3254, %v3252
        %v3625 = vpack.c.bf16 %v3258, %v3256
        %v3626 = vpack.c.bf16 %v3262, %v3260
        %v3627 = vpack.c.bf16 %v3266, %v3264
        %v3628 = vpack.c.bf16 %v3270, %v3268
        %v3629 = vpack.c.bf16 %v3274, %v3272
        %v3630 = vpack.c.bf16 %v3278, %v3276
        %v3631 = vld [vmem:[#allocation6] sm:$0xff]
        %v3632 = vld [vmem:[#allocation6 + $0x8] sm:$0xff]
        %v3633 = vld [vmem:[#allocation6 + $0x10] sm:$0xff]
        %v3634 = vld [vmem:[#allocation6 + $0x18] sm:$0xff]
        %v3635 = vld [vmem:[#allocation6 + $0x20] sm:$0xff]
        %v3636 = vld [vmem:[#allocation6 + $0x28] sm:$0xff]
        %v3637 = vld [vmem:[#allocation6 + $0x30] sm:$0xff]
        %v3638 = vld [vmem:[#allocation6 + $0x38] sm:$0xff]
        %v3639 = vld [vmem:[#allocation6 + $0x40] sm:$0xff]
        %v3640 = vld [vmem:[#allocation6 + $0x48] sm:$0xff]
        %v3641 = vld [vmem:[#allocation6 + $0x50] sm:$0xff]
        %v3642 = vld [vmem:[#allocation6 + $0x58] sm:$0xff]
        %v3643 = vld [vmem:[#allocation6 + $0x60] sm:$0xff]
        %v3644 = vld [vmem:[#allocation6 + $0x68] sm:$0xff]
        %v3645 = vld [vmem:[#allocation6 + $0x70] sm:$0xff]
        %v3646 = vld [vmem:[#allocation6 + $0x78] sm:$0xff]
        %vm3647 = vcmask 130048
        %v3649 = vsel %vm3647, %v3439, 0
        %v3652 = vsel %vm3647, %v3440, 0
        %v3655 = vsel %vm3647, %v3441, 0
        %v3658 = vsel %vm3647, %v3442, 0
        %v3661 = vsel %vm3647, %v3443, 0
        %v3664 = vsel %vm3647, %v3444, 0
        %v3667 = vsel %vm3647, %v3445, 0
        %v3670 = vsel %vm3647, %v3446, 0
        %v3673 = vsel %vm3647, %v3503, 0
        %v3676 = vsel %vm3647, %v3504, 0
        %v3679 = vsel %vm3647, %v3505, 0
        %v3682 = vsel %vm3647, %v3506, 0
        %v3685 = vsel %vm3647, %v3507, 0
        %v3688 = vsel %vm3647, %v3508, 0
        %v3691 = vsel %vm3647, %v3509, 0
        %v3694 = vsel %vm3647, %v3510, 0
        %3696 = vmatprep.subr.bf16.mxu0 0
        %3697 = vmatpush1.bf16.xpose.msra.mxu0 %v3673
        %3698 = vmatprep.subr.bf16.mxu0 0
        %3699 = vmatpush1.bf16.xpose.msra.mxu0 %v3676
        %3700 = vmatprep.subr.bf16.mxu0 0
        %3701 = vmatpush1.bf16.xpose.msra.mxu0 %v3679
        %3702 = vmatprep.subr.bf16.mxu0 0
        %3703 = vmatpush1.bf16.xpose.msra.mxu0 %v3682
        %3704 = vmatprep.subr.bf16.mxu0 0
        %3705 = vmatpush1.bf16.xpose.msra.mxu0 %v3685
        %3706 = vmatprep.subr.bf16.mxu0 0
        %3707 = vmatpush1.bf16.xpose.msra.mxu0 %v3688
        %3708 = vmatprep.subr.bf16.mxu0 0
        %3709 = vmatpush1.bf16.xpose.msra.mxu0 %v3691
        %3710 = vmatprep.subr.bf16.mxu0 0
        %3711 = vmatpush1.bf16.xpose.msra.mxu0 %v3694
        %3712 = vmatprep.subr.bf16.mxu0 0
        %3713 = vmatpush1.bf16.xpose.msra.mxu0 0
        %3714 = vmatprep.subr.bf16.mxu0 0
        %3715 = vmatpush1.bf16.xpose.msra.mxu0 0
        %3716 = vmatprep.subr.bf16.mxu0 0
        %3717 = vmatpush1.bf16.xpose.msra.mxu0 0
        %3718 = vmatprep.subr.bf16.mxu0 0
        %3719 = vmatpush1.bf16.xpose.msra.mxu0 0
        %3720 = vmatprep.subr.bf16.mxu0 0
        %3721 = vmatpush1.bf16.xpose.msra.mxu0 0
        %3722 = vmatprep.subr.bf16.mxu0 0
        %3723 = vmatpush1.bf16.xpose.msra.mxu0 0
        %3724 = vmatprep.subr.bf16.mxu0 0
        %3725 = vmatpush1.bf16.xpose.msra.mxu0 0
        %3726 = vmatprep.subr.bf16.mxu0 0
        %3727 = vmatpush1.bf16.xpose.msra.mxu0 0
        %3728 = vmatprep.mubr.bf16.mxu0 0
        %3729 = vmatmul.mubr.bf16.gmra.mrb[0].mxu0 %v3649
        %v3730 = vpop.f32.mrb[0].mxu0
        %v3731 = vadd.f32 %v3631, %v3730
        %v3732 = vpop.f32.mrb[0].mxu0
        %v3733 = vpop.f32.mrb[0].mxu0
        %v3734 = vadd.f32 %v3632, %v3733
        %v3735 = vpop.f32.mrb[0].mxu0
        %3736 = vmatprep.mubr.bf16.mxu0 0
        %3737 = vmatmul.mubr.bf16.gmra.mrb[0].mxu0 %v3652
        %v3738 = vpop.f32.mrb[0].mxu0
        %v3739 = vadd.f32 %v3633, %v3738
        %v3740 = vpop.f32.mrb[0].mxu0
        %v3741 = vpop.f32.mrb[0].mxu0
        %v3742 = vadd.f32 %v3634, %v3741
        %v3743 = vpop.f32.mrb[0].mxu0
        %3744 = vmatprep.mubr.bf16.mxu0 0
        %3745 = vmatmul.mubr.bf16.gmra.mrb[0].mxu0 %v3655
        %v3746 = vpop.f32.mrb[0].mxu0
        %v3747 = vadd.f32 %v3635, %v3746
        %v3748 = vpop.f32.mrb[0].mxu0
        %v3749 = vpop.f32.mrb[0].mxu0
        %v3750 = vadd.f32 %v3636, %v3749
        %v3751 = vpop.f32.mrb[0].mxu0
        %3752 = vmatprep.mubr.bf16.mxu0 0
        %3753 = vmatmul.mubr.bf16.gmra.mrb[0].mxu0 %v3658
        %v3754 = vpop.f32.mrb[0].mxu0
        %v3755 = vadd.f32 %v3637, %v3754
        %v3756 = vpop.f32.mrb[0].mxu0
        %v3757 = vpop.f32.mrb[0].mxu0
        %v3758 = vadd.f32 %v3638, %v3757
        %v3759 = vpop.f32.mrb[0].mxu0
        %3760 = vmatprep.mubr.bf16.mxu0 0
        %3761 = vmatmul.mubr.bf16.gmra.mrb[0].mxu0 %v3661
        %v3762 = vpop.f32.mrb[0].mxu0
        %v3763 = vadd.f32 %v3639, %v3762
        %v3764 = vpop.f32.mrb[0].mxu0
        %v3765 = vpop.f32.mrb[0].mxu0
        %v3766 = vadd.f32 %v3640, %v3765
        %v3767 = vpop.f32.mrb[0].mxu0
        %3768 = vmatprep.mubr.bf16.mxu0 0
        %3769 = vmatmul.mubr.bf16.gmra.mrb[0].mxu0 %v3664
        %v3770 = vpop.f32.mrb[0].mxu0
        %v3771 = vadd.f32 %v3641, %v3770
        %v3772 = vpop.f32.mrb[0].mxu0
        %v3773 = vpop.f32.mrb[0].mxu0
        %v3774 = vadd.f32 %v3642, %v3773
        %v3775 = vpop.f32.mrb[0].mxu0
        %3776 = vmatprep.mubr.bf16.mxu0 0
        %3777 = vmatmul.mubr.bf16.gmra.mrb[0].mxu0 %v3667
        %v3778 = vpop.f32.mrb[0].mxu0
        %v3779 = vadd.f32 %v3643, %v3778
        %v3780 = vpop.f32.mrb[0].mxu0
        %v3781 = vpop.f32.mrb[0].mxu0
        %v3782 = vadd.f32 %v3644, %v3781
        %v3783 = vpop.f32.mrb[0].mxu0
        %3784 = vmatprep.mubr.bf16.mxu0 0
        %3785 = vmatmul.mubr.bf16.gmra.mrb[0].mxu0 %v3670
        %v3786 = vpop.f32.mrb[0].mxu0
        %v3787 = vadd.f32 %v3645, %v3786
        %v3788 = vpop.f32.mrb[0].mxu0
        %v3789 = vpop.f32.mrb[0].mxu0
        %v3790 = vadd.f32 %v3646, %v3789
        %v3791 = vpop.f32.mrb[0].mxu0
        %3792 = vdwg.mxu0
        %v3794 = vsel %vm3647, %v3447, 0
        %v3797 = vsel %vm3647, %v3448, 0
        %v3800 = vsel %vm3647, %v3449, 0
        %v3803 = vsel %vm3647, %v3450, 0
        %v3806 = vsel %vm3647, %v3451, 0
        %v3809 = vsel %vm3647, %v3452, 0
        %v3812 = vsel %vm3647, %v3453, 0
        %v3815 = vsel %vm3647, %v3454, 0
        %v3818 = vsel %vm3647, %v3511, 0
        %v3821 = vsel %vm3647, %v3512, 0
        %v3824 = vsel %vm3647, %v3513, 0
        %v3827 = vsel %vm3647, %v3514, 0
        %v3830 = vsel %vm3647, %v3515, 0
        %v3833 = vsel %vm3647, %v3516, 0
        %v3836 = vsel %vm3647, %v3517, 0
        %v3839 = vsel %vm3647, %v3518, 0
        %3841 = vmatprep.subr.bf16.mxu0 0
        %3842 = vmatpush1.bf16.xpose.msra.mxu0 %v3818
        %3843 = vmatprep.subr.bf16.mxu0 0
        %3844 = vmatpush1.bf16.xpose.msra.mxu0 %v3821
        %3845 = vmatprep.subr.bf16.mxu0 0
        %3846 = vmatpush1.bf16.xpose.msra.mxu0 %v3824
        %3847 = vmatprep.subr.bf16.mxu0 0
        %3848 = vmatpush1.bf16.xpose.msra.mxu0 %v3827
        %3849 = vmatprep.subr.bf16.mxu0 0
        %3850 = vmatpush1.bf16.xpose.msra.mxu0 %v3830
        %3851 = vmatprep.subr.bf16.mxu0 0
        %3852 = vmatpush1.bf16.xpose.msra.mxu0 %v3833
        %3853 = vmatprep.subr.bf16.mxu0 0
        %3854 = vmatpush1.bf16.xpose.msra.mxu0 %v3836
        %3855 = vmatprep.subr.bf16.mxu0 0
        %3856 = vmatpush1.bf16.xpose.msra.mxu0 %v3839
        %3857 = vmatprep.subr.bf16.mxu0 0
        %3858 = vmatpush1.bf16.xpose.msra.mxu0 0
        %3859 = vmatprep.subr.bf16.mxu0 0
        %3860 = vmatpush1.bf16.xpose.msra.mxu0 0
        %3861 = vmatprep.subr.bf16.mxu0 0
        %3862 = vmatpush1.bf16.xpose.msra.mxu0 0
        %3863 = vmatprep.subr.bf16.mxu0 0
        %3864 = vmatpush1.bf16.xpose.msra.mxu0 0
        %3865 = vmatprep.subr.bf16.mxu0 0
        %3866 = vmatpush1.bf16.xpose.msra.mxu0 0
        %3867 = vmatprep.subr.bf16.mxu0 0
        %3868 = vmatpush1.bf16.xpose.msra.mxu0 0
        %3869 = vmatprep.subr.bf16.mxu0 0
        %3870 = vmatpush1.bf16.xpose.msra.mxu0 0
        %3871 = vmatprep.subr.bf16.mxu0 0
        %3872 = vmatpush1.bf16.xpose.msra.mxu0 0
        %3873 = vmatprep.mubr.bf16.mxu0 0
        %3874 = vmatmul.mubr.bf16.gmra.mrb[0].mxu0 %v3794
        %v3875 = vpop.f32.mrb[0].mxu0
        %v3876 = vadd.f32 %v3631, %v3875
        %v3877 = vpop.f32.mrb[0].mxu0
        %v3878 = vpop.f32.mrb[0].mxu0
        %v3879 = vadd.f32 %v3632, %v3878
        %v3880 = vpop.f32.mrb[0].mxu0
        %3881 = vmatprep.mubr.bf16.mxu0 0
        %3882 = vmatmul.mubr.bf16.gmra.mrb[0].mxu0 %v3797
        %v3883 = vpop.f32.mrb[0].mxu0
        %v3884 = vadd.f32 %v3633, %v3883
        %v3885 = vpop.f32.mrb[0].mxu0
        %v3886 = vpop.f32.mrb[0].mxu0
        %v3887 = vadd.f32 %v3634, %v3886
        %v3888 = vpop.f32.mrb[0].mxu0
        %3889 = vmatprep.mubr.bf16.mxu0 0
        %3890 = vmatmul.mubr.bf16.gmra.mrb[0].mxu0 %v3800
        %v3891 = vpop.f32.mrb[0].mxu0
        %v3892 = vadd.f32 %v3635, %v3891
        %v3893 = vpop.f32.mrb[0].mxu0
        %v3894 = vpop.f32.mrb[0].mxu0
        %v3895 = vadd.f32 %v3636, %v3894
        %v3896 = vpop.f32.mrb[0].mxu0
        %3897 = vmatprep.mubr.bf16.mxu0 0
        %3898 = vmatmul.mubr.bf16.gmra.mrb[0].mxu0 %v3803
        %v3899 = vpop.f32.mrb[0].mxu0
        %v3900 = vadd.f32 %v3637, %v3899
        %v3901 = vpop.f32.mrb[0].mxu0
        %v3902 = vpop.f32.mrb[0].mxu0
        %v3903 = vadd.f32 %v3638, %v3902
        %v3904 = vpop.f32.mrb[0].mxu0
        %3905 = vmatprep.mubr.bf16.mxu0 0
        %3906 = vmatmul.mubr.bf16.gmra.mrb[0].mxu0 %v3806
        %v3907 = vpop.f32.mrb[0].mxu0
        %v3908 = vadd.f32 %v3639, %v3907
        %v3909 = vpop.f32.mrb[0].mxu0
        %v3910 = vpop.f32.mrb[0].mxu0
        %v3911 = vadd.f32 %v3640, %v3910
        %v3912 = vpop.f32.mrb[0].mxu0
        %3913 = vmatprep.mubr.bf16.mxu0 0
        %3914 = vmatmul.mubr.bf16.gmra.mrb[0].mxu0 %v3809
        %v3915 = vpop.f32.mrb[0].mxu0
        %v3916 = vadd.f32 %v3641, %v3915
        %v3917 = vpop.f32.mrb[0].mxu0
        %v3918 = vpop.f32.mrb[0].mxu0
        %v3919 = vadd.f32 %v3642, %v3918
        %v3920 = vpop.f32.mrb[0].mxu0
        %3921 = vmatprep.mubr.bf16.mxu0 0
        %3922 = vmatmul.mubr.bf16.gmra.mrb[0].mxu0 %v3812
        %v3923 = vpop.f32.mrb[0].mxu0
        %v3924 = vadd.f32 %v3643, %v3923
        %v3925 = vpop.f32.mrb[0].mxu0
        %v3926 = vpop.f32.mrb[0].mxu0
        %v3927 = vadd.f32 %v3644, %v3926
        %v3928 = vpop.f32.mrb[0].mxu0
        %3929 = vmatprep.mubr.bf16.mxu0 0
        %3930 = vmatmul.mubr.bf16.gmra.mrb[0].mxu0 %v3815
        %v3931 = vpop.f32.mrb[0].mxu0
        %v3932 = vadd.f32 %v3645, %v3931
        %v3933 = vpop.f32.mrb[0].mxu0
        %v3934 = vpop.f32.mrb[0].mxu0
        %v3935 = vadd.f32 %v3646, %v3934
        %v3936 = vpop.f32.mrb[0].mxu0
        %3937 = vdwg.mxu0
        %v3939 = vsel %vm3647, %v3455, 0
        %v3942 = vsel %vm3647, %v3456, 0
        %v3945 = vsel %vm3647, %v3457, 0
        %v3948 = vsel %vm3647, %v3458, 0
        %v3951 = vsel %vm3647, %v3459, 0
        %v3954 = vsel %vm3647, %v3460, 0
        %v3957 = vsel %vm3647, %v3461, 0
        %v3960 = vsel %vm3647, %v3462, 0
        %v3963 = vsel %vm3647, %v3519, 0
        %v3966 = vsel %vm3647, %v3520, 0
        %v3969 = vsel %vm3647, %v3521, 0
        %v3972 = vsel %vm3647, %v3522, 0
        %v3975 = vsel %vm3647, %v3523, 0
        %v3978 = vsel %vm3647, %v3524, 0
        %v3981 = vsel %vm3647, %v3525, 0
        %v3984 = vsel %vm3647, %v3526, 0
        %3986 = vmatprep.subr.bf16.mxu0 0
        %3987 = vmatpush1.bf16.xpose.msra.mxu0 %v3963
        %3988 = vmatprep.subr.bf16.mxu0 0
        %3989 = vmatpush1.bf16.xpose.msra.mxu0 %v3966
        %3990 = vmatprep.subr.bf16.mxu0 0
        %3991 = vmatpush1.bf16.xpose.msra.mxu0 %v3969
        %3992 = vmatprep.subr.bf16.mxu0 0
        %3993 = vmatpush1.bf16.xpose.msra.mxu0 %v3972
        %3994 = vmatprep.subr.bf16.mxu0 0
        %3995 = vmatpush1.bf16.xpose.msra.mxu0 %v3975
        %3996 = vmatprep.subr.bf16.mxu0 0
        %3997 = vmatpush1.bf16.xpose.msra.mxu0 %v3978
        %3998 = vmatprep.subr.bf16.mxu0 0
        %3999 = vmatpush1.bf16.xpose.msra.mxu0 %v3981
        %4000 = vmatprep.subr.bf16.mxu0 0
        %4001 = vmatpush1.bf16.xpose.msra.mxu0 %v3984
        %4002 = vmatprep.subr.bf16.mxu0 0
        %4003 = vmatpush1.bf16.xpose.msra.mxu0 0
        %4004 = vmatprep.subr.bf16.mxu0 0
        %4005 = vmatpush1.bf16.xpose.msra.mxu0 0
        %4006 = vmatprep.subr.bf16.mxu0 0
        %4007 = vmatpush1.bf16.xpose.msra.mxu0 0
        %4008 = vmatprep.subr.bf16.mxu0 0
        %4009 = vmatpush1.bf16.xpose.msra.mxu0 0
        %4010 = vmatprep.subr.bf16.mxu0 0
        %4011 = vmatpush1.bf16.xpose.msra.mxu0 0
        %4012 = vmatprep.subr.bf16.mxu0 0
        %4013 = vmatpush1.bf16.xpose.msra.mxu0 0
        %4014 = vmatprep.subr.bf16.mxu0 0
        %4015 = vmatpush1.bf16.xpose.msra.mxu0 0
        %4016 = vmatprep.subr.bf16.mxu0 0
        %4017 = vmatpush1.bf16.xpose.msra.mxu0 0
        %4018 = vmatprep.mubr.bf16.mxu0 0
        %4019 = vmatmul.mubr.bf16.gmra.mrb[0].mxu0 %v3939
        %v4020 = vpop.f32.mrb[0].mxu0
        %v4021 = vadd.f32 %v3631, %v4020
        %v4022 = vpop.f32.mrb[0].mxu0
        %v4023 = vpop.f32.mrb[0].mxu0
        %v4024 = vadd.f32 %v3632, %v4023
        %v4025 = vpop.f32.mrb[0].mxu0
        %4026 = vmatprep.mubr.bf16.mxu0 0
        %4027 = vmatmul.mubr.bf16.gmra.mrb[0].mxu0 %v3942
        %v4028 = vpop.f32.mrb[0].mxu0
        %v4029 = vadd.f32 %v3633, %v4028
        %v4030 = vpop.f32.mrb[0].mxu0
        %v4031 = vpop.f32.mrb[0].mxu0
        %v4032 = vadd.f32 %v3634, %v4031
        %v4033 = vpop.f32.mrb[0].mxu0
        %4034 = vmatprep.mubr.bf16.mxu0 0
        %4035 = vmatmul.mubr.bf16.gmra.mrb[0].mxu0 %v3945
        %v4036 = vpop.f32.mrb[0].mxu0
        %v4037 = vadd.f32 %v3635, %v4036
        %v4038 = vpop.f32.mrb[0].mxu0
        %v4039 = vpop.f32.mrb[0].mxu0
        %v4040 = vadd.f32 %v3636, %v4039
        %v4041 = vpop.f32.mrb[0].mxu0
        %4042 = vmatprep.mubr.bf16.mxu0 0
        %4043 = vmatmul.mubr.bf16.gmra.mrb[0].mxu0 %v3948
        %v4044 = vpop.f32.mrb[0].mxu0
        %v4045 = vadd.f32 %v3637, %v4044
        %v4046 = vpop.f32.mrb[0].mxu0
        %v4047 = vpop.f32.mrb[0].mxu0
        %v4048 = vadd.f32 %v3638, %v4047
        %v4049 = vpop.f32.mrb[0].mxu0
        %4050 = vmatprep.mubr.bf16.mxu0 0
        %4051 = vmatmul.mubr.bf16.gmra.mrb[0].mxu0 %v3951
        %v4052 = vpop.f32.mrb[0].mxu0
        %v4053 = vadd.f32 %v3639, %v4052
        %v4054 = vpop.f32.mrb[0].mxu0
        %v4055 = vpop.f32.mrb[0].mxu0
        %v4056 = vadd.f32 %v3640, %v4055
        %v4057 = vpop.f32.mrb[0].mxu0
        %4058 = vmatprep.mubr.bf16.mxu0 0
        %4059 = vmatmul.mubr.bf16.gmra.mrb[0].mxu0 %v3954
        %v4060 = vpop.f32.mrb[0].mxu0
        %v4061 = vadd.f32 %v3641, %v4060
        %v4062 = vpop.f32.mrb[0].mxu0
        %v4063 = vpop.f32.mrb[0].mxu0
        %v4064 = vadd.f32 %v3642, %v4063
        %v4065 = vpop.f32.mrb[0].mxu0
        %4066 = vmatprep.mubr.bf16.mxu0 0
        %4067 = vmatmul.mubr.bf16.gmra.mrb[0].mxu0 %v3957
        %v4068 = vpop.f32.mrb[0].mxu0
        %v4069 = vadd.f32 %v3643, %v4068
        %v4070 = vpop.f32.mrb[0].mxu0
        %v4071 = vpop.f32.mrb[0].mxu0
        %v4072 = vadd.f32 %v3644, %v4071
        %v4073 = vpop.f32.mrb[0].mxu0
        %4074 = vmatprep.mubr.bf16.mxu0 0
        %4075 = vmatmul.mubr.bf16.gmra.mrb[0].mxu0 %v3960
        %v4076 = vpop.f32.mrb[0].mxu0
        %v4077 = vadd.f32 %v3645, %v4076
        %v4078 = vpop.f32.mrb[0].mxu0
        %v4079 = vpop.f32.mrb[0].mxu0
        %v4080 = vadd.f32 %v3646, %v4079
        %v4081 = vpop.f32.mrb[0].mxu0
        %4082 = vdwg.mxu0
        %v4084 = vsel %vm3647, %v3463, 0
        %v4087 = vsel %vm3647, %v3464, 0
        %v4090 = vsel %vm3647, %v3465, 0
        %v4093 = vsel %vm3647, %v3466, 0
        %v4096 = vsel %vm3647, %v3467, 0
        %v4099 = vsel %vm3647, %v3468, 0
        %v4102 = vsel %vm3647, %v3469, 0
        %v4105 = vsel %vm3647, %v3470, 0
        %v4108 = vsel %vm3647, %v3527, 0
        %v4111 = vsel %vm3647, %v3528, 0
        %v4114 = vsel %vm3647, %v3529, 0
        %v4117 = vsel %vm3647, %v3530, 0
        %v4120 = vsel %vm3647, %v3531, 0
        %v4123 = vsel %vm3647, %v3532, 0
        %v4126 = vsel %vm3647, %v3533, 0
        %v4129 = vsel %vm3647, %v3534, 0
        %4131 = vmatprep.subr.bf16.mxu0 0
        %4132 = vmatpush1.bf16.xpose.msra.mxu0 %v4108
        %4133 = vmatprep.subr.bf16.mxu0 0
        %4134 = vmatpush1.bf16.xpose.msra.mxu0 %v4111
        %4135 = vmatprep.subr.bf16.mxu0 0
        %4136 = vmatpush1.bf16.xpose.msra.mxu0 %v4114
        %4137 = vmatprep.subr.bf16.mxu0 0
        %4138 = vmatpush1.bf16.xpose.msra.mxu0 %v4117
        %4139 = vmatprep.subr.bf16.mxu0 0
        %4140 = vmatpush1.bf16.xpose.msra.mxu0 %v4120
        %4141 = vmatprep.subr.bf16.mxu0 0
        %4142 = vmatpush1.bf16.xpose.msra.mxu0 %v4123
        %4143 = vmatprep.subr.bf16.mxu0 0
        %4144 = vmatpush1.bf16.xpose.msra.mxu0 %v4126
        %4145 = vmatprep.subr.bf16.mxu0 0
        %4146 = vmatpush1.bf16.xpose.msra.mxu0 %v4129
        %4147 = vmatprep.subr.bf16.mxu0 0
        %4148 = vmatpush1.bf16.xpose.msra.mxu0 0
        %4149 = vmatprep.subr.bf16.mxu0 0
        %4150 = vmatpush1.bf16.xpose.msra.mxu0 0
        %4151 = vmatprep.subr.bf16.mxu0 0
        %4152 = vmatpush1.bf16.xpose.msra.mxu0 0
        %4153 = vmatprep.subr.bf16.mxu0 0
        %4154 = vmatpush1.bf16.xpose.msra.mxu0 0
        %4155 = vmatprep.subr.bf16.mxu0 0
        %4156 = vmatpush1.bf16.xpose.msra.mxu0 0
        %4157 = vmatprep.subr.bf16.mxu0 0
        %4158 = vmatpush1.bf16.xpose.msra.mxu0 0
        %4159 = vmatprep.subr.bf16.mxu0 0
        %4160 = vmatpush1.bf16.xpose.msra.mxu0 0
        %4161 = vmatprep.subr.bf16.mxu0 0
        %4162 = vmatpush1.bf16.xpose.msra.mxu0 0
        %4163 = vmatprep.mubr.bf16.mxu0 0
        %4164 = vmatmul.mubr.bf16.gmra.mrb[0].mxu0 %v4084
        %v4165 = vpop.f32.mrb[0].mxu0
        %v4166 = vadd.f32 %v3631, %v4165
        %v4167 = vpop.f32.mrb[0].mxu0
        %v4168 = vpop.f32.mrb[0].mxu0
        %v4169 = vadd.f32 %v3632, %v4168
        %v4170 = vpop.f32.mrb[0].mxu0
        %4171 = vmatprep.mubr.bf16.mxu0 0
        %4172 = vmatmul.mubr.bf16.gmra.mrb[0].mxu0 %v4087
        %v4173 = vpop.f32.mrb[0].mxu0
        %v4174 = vadd.f32 %v3633, %v4173
        %v4175 = vpop.f32.mrb[0].mxu0
        %v4176 = vpop.f32.mrb[0].mxu0
        %v4177 = vadd.f32 %v3634, %v4176
        %v4178 = vpop.f32.mrb[0].mxu0
        %4179 = vmatprep.mubr.bf16.mxu0 0
        %4180 = vmatmul.mubr.bf16.gmra.mrb[0].mxu0 %v4090
        %v4181 = vpop.f32.mrb[0].mxu0
        %v4182 = vadd.f32 %v3635, %v4181
        %v4183 = vpop.f32.mrb[0].mxu0
        %v4184 = vpop.f32.mrb[0].mxu0
        %v4185 = vadd.f32 %v3636, %v4184
        %v4186 = vpop.f32.mrb[0].mxu0
        %4187 = vmatprep.mubr.bf16.mxu0 0
        %4188 = vmatmul.mubr.bf16.gmra.mrb[0].mxu0 %v4093
        %v4189 = vpop.f32.mrb[0].mxu0
        %v4190 = vadd.f32 %v3637, %v4189
        %v4191 = vpop.f32.mrb[0].mxu0
        %v4192 = vpop.f32.mrb[0].mxu0
        %v4193 = vadd.f32 %v3638, %v4192
        %v4194 = vpop.f32.mrb[0].mxu0
        %4195 = vmatprep.mubr.bf16.mxu0 0
        %4196 = vmatmul.mubr.bf16.gmra.mrb[0].mxu0 %v4096
        %v4197 = vpop.f32.mrb[0].mxu0
        %v4198 = vadd.f32 %v3639, %v4197
        %v4199 = vpop.f32.mrb[0].mxu0
        %v4200 = vpop.f32.mrb[0].mxu0
        %v4201 = vadd.f32 %v3640, %v4200
        %v4202 = vpop.f32.mrb[0].mxu0
        %4203 = vmatprep.mubr.bf16.mxu0 0
        %4204 = vmatmul.mubr.bf16.gmra.mrb[0].mxu0 %v4099
        %v4205 = vpop.f32.mrb[0].mxu0
        %v4206 = vadd.f32 %v3641, %v4205
        %v4207 = vpop.f32.mrb[0].mxu0
        %v4208 = vpop.f32.mrb[0].mxu0
        %v4209 = vadd.f32 %v3642, %v4208
        %v4210 = vpop.f32.mrb[0].mxu0
        %4211 = vmatprep.mubr.bf16.mxu0 0
        %4212 = vmatmul.mubr.bf16.gmra.mrb[0].mxu0 %v4102
        %v4213 = vpop.f32.mrb[0].mxu0
        %v4214 = vadd.f32 %v3643, %v4213
        %v4215 = vpop.f32.mrb[0].mxu0
        %v4216 = vpop.f32.mrb[0].mxu0
        %v4217 = vadd.f32 %v3644, %v4216
        %v4218 = vpop.f32.mrb[0].mxu0
        %4219 = vmatprep.mubr.bf16.mxu0 0
        %4220 = vmatmul.mubr.bf16.gmra.mrb[0].mxu0 %v4105
        %v4221 = vpop.f32.mrb[0].mxu0
        %v4222 = vadd.f32 %v3645, %v4221
        %v4223 = vpop.f32.mrb[0].mxu0
        %v4224 = vpop.f32.mrb[0].mxu0
        %v4225 = vadd.f32 %v3646, %v4224
        %v4226 = vpop.f32.mrb[0].mxu0
        %4227 = vdwg.mxu0
        %v4229 = vsel %vm3647, %v3471, 0
        %v4232 = vsel %vm3647, %v3472, 0
        %v4235 = vsel %vm3647, %v3473, 0
        %v4238 = vsel %vm3647, %v3474, 0
        %v4241 = vsel %vm3647, %v3475, 0
        %v4244 = vsel %vm3647, %v3476, 0
        %v4247 = vsel %vm3647, %v3477, 0
        %v4250 = vsel %vm3647, %v3478, 0
        %v4253 = vsel %vm3647, %v3535, 0
        %v4256 = vsel %vm3647, %v3536, 0
        %v4259 = vsel %vm3647, %v3537, 0
        %v4262 = vsel %vm3647, %v3538, 0
        %v4265 = vsel %vm3647, %v3539, 0
        %v4268 = vsel %vm3647, %v3540, 0
        %v4271 = vsel %vm3647, %v3541, 0
        %v4274 = vsel %vm3647, %v3542, 0
        %4276 = vmatprep.subr.bf16.mxu0 0
        %4277 = vmatpush1.bf16.xpose.msra.mxu0 %v4253
        %4278 = vmatprep.subr.bf16.mxu0 0
        %4279 = vmatpush1.bf16.xpose.msra.mxu0 %v4256
        %4280 = vmatprep.subr.bf16.mxu0 0
        %4281 = vmatpush1.bf16.xpose.msra.mxu0 %v4259
        %4282 = vmatprep.subr.bf16.mxu0 0
        %4283 = vmatpush1.bf16.xpose.msra.mxu0 %v4262
        %4284 = vmatprep.subr.bf16.mxu0 0
        %4285 = vmatpush1.bf16.xpose.msra.mxu0 %v4265
        %4286 = vmatprep.subr.bf16.mxu0 0
        %4287 = vmatpush1.bf16.xpose.msra.mxu0 %v4268
        %4288 = vmatprep.subr.bf16.mxu0 0
        %4289 = vmatpush1.bf16.xpose.msra.mxu0 %v4271
        %4290 = vmatprep.subr.bf16.mxu0 0
        %4291 = vmatpush1.bf16.xpose.msra.mxu0 %v4274
        %4292 = vmatprep.subr.bf16.mxu0 0
        %4293 = vmatpush1.bf16.xpose.msra.mxu0 0
        %4294 = vmatprep.subr.bf16.mxu0 0
        %4295 = vmatpush1.bf16.xpose.msra.mxu0 0
        %4296 = vmatprep.subr.bf16.mxu0 0
        %4297 = vmatpush1.bf16.xpose.msra.mxu0 0
        %4298 = vmatprep.subr.bf16.mxu0 0
        %4299 = vmatpush1.bf16.xpose.msra.mxu0 0
        %4300 = vmatprep.subr.bf16.mxu0 0
        %4301 = vmatpush1.bf16.xpose.msra.mxu0 0
        %4302 = vmatprep.subr.bf16.mxu0 0
        %4303 = vmatpush1.bf16.xpose.msra.mxu0 0
        %4304 = vmatprep.subr.bf16.mxu0 0
        %4305 = vmatpush1.bf16.xpose.msra.mxu0 0
        %4306 = vmatprep.subr.bf16.mxu0 0
        %4307 = vmatpush1.bf16.xpose.msra.mxu0 0
        %4308 = vmatprep.mubr.bf16.mxu0 0
        %4309 = vmatmul.mubr.bf16.gmra.mrb[0].mxu0 %v4229
        %v4310 = vpop.f32.mrb[0].mxu0
        %v4311 = vadd.f32 %v3631, %v4310
        %v4312 = vpop.f32.mrb[0].mxu0
        %v4313 = vpop.f32.mrb[0].mxu0
        %v4314 = vadd.f32 %v3632, %v4313
        %v4315 = vpop.f32.mrb[0].mxu0
        %4316 = vmatprep.mubr.bf16.mxu0 0
        %4317 = vmatmul.mubr.bf16.gmra.mrb[0].mxu0 %v4232
        %v4318 = vpop.f32.mrb[0].mxu0
        %v4319 = vadd.f32 %v3633, %v4318
        %v4320 = vpop.f32.mrb[0].mxu0
        %v4321 = vpop.f32.mrb[0].mxu0
        %v4322 = vadd.f32 %v3634, %v4321
        %v4323 = vpop.f32.mrb[0].mxu0
        %4324 = vmatprep.mubr.bf16.mxu0 0
        %4325 = vmatmul.mubr.bf16.gmra.mrb[0].mxu0 %v4235
        %v4326 = vpop.f32.mrb[0].mxu0
        %v4327 = vadd.f32 %v3635, %v4326
        %v4328 = vpop.f32.mrb[0].mxu0
        %v4329 = vpop.f32.mrb[0].mxu0
        %v4330 = vadd.f32 %v3636, %v4329
        %v4331 = vpop.f32.mrb[0].mxu0
        %4332 = vmatprep.mubr.bf16.mxu0 0
        %4333 = vmatmul.mubr.bf16.gmra.mrb[0].mxu0 %v4238
        %v4334 = vpop.f32.mrb[0].mxu0
        %v4335 = vadd.f32 %v3637, %v4334
        %v4336 = vpop.f32.mrb[0].mxu0
        %v4337 = vpop.f32.mrb[0].mxu0
        %v4338 = vadd.f32 %v3638, %v4337
        %v4339 = vpop.f32.mrb[0].mxu0
        %4340 = vmatprep.mubr.bf16.mxu0 0
        %4341 = vmatmul.mubr.bf16.gmra.mrb[0].mxu0 %v4241
        %v4342 = vpop.f32.mrb[0].mxu0
        %v4343 = vadd.f32 %v3639, %v4342
        %v4344 = vpop.f32.mrb[0].mxu0
        %v4345 = vpop.f32.mrb[0].mxu0
        %v4346 = vadd.f32 %v3640, %v4345
        %v4347 = vpop.f32.mrb[0].mxu0
        %4348 = vmatprep.mubr.bf16.mxu0 0
        %4349 = vmatmul.mubr.bf16.gmra.mrb[0].mxu0 %v4244
        %v4350 = vpop.f32.mrb[0].mxu0
        %v4351 = vadd.f32 %v3641, %v4350
        %v4352 = vpop.f32.mrb[0].mxu0
        %v4353 = vpop.f32.mrb[0].mxu0
        %v4354 = vadd.f32 %v3642, %v4353
        %v4355 = vpop.f32.mrb[0].mxu0
        %4356 = vmatprep.mubr.bf16.mxu0 0
        %4357 = vmatmul.mubr.bf16.gmra.mrb[0].mxu0 %v4247
        %v4358 = vpop.f32.mrb[0].mxu0
        %v4359 = vadd.f32 %v3643, %v4358
        %v4360 = vpop.f32.mrb[0].mxu0
        %v4361 = vpop.f32.mrb[0].mxu0
        %v4362 = vadd.f32 %v3644, %v4361
        %v4363 = vpop.f32.mrb[0].mxu0
        %4364 = vmatprep.mubr.bf16.mxu0 0
        %4365 = vmatmul.mubr.bf16.gmra.mrb[0].mxu0 %v4250
        %v4366 = vpop.f32.mrb[0].mxu0
        %v4367 = vadd.f32 %v3645, %v4366
        %v4368 = vpop.f32.mrb[0].mxu0
        %v4369 = vpop.f32.mrb[0].mxu0
        %v4370 = vadd.f32 %v3646, %v4369
        %v4371 = vpop.f32.mrb[0].mxu0
        %4372 = vdwg.mxu0
        %v4374 = vsel %vm3647, %v3479, 0
        %v4377 = vsel %vm3647, %v3480, 0
        %v4380 = vsel %vm3647, %v3481, 0
        %v4383 = vsel %vm3647, %v3482, 0
        %v4386 = vsel %vm3647, %v3483, 0
        %v4389 = vsel %vm3647, %v3484, 0
        %v4392 = vsel %vm3647, %v3485, 0
        %v4395 = vsel %vm3647, %v3486, 0
        %v4398 = vsel %vm3647, %v3543, 0
        %v4401 = vsel %vm3647, %v3544, 0
        %v4404 = vsel %vm3647, %v3545, 0
        %v4407 = vsel %vm3647, %v3546, 0
        %v4410 = vsel %vm3647, %v3547, 0
        %v4413 = vsel %vm3647, %v3548, 0
        %v4416 = vsel %vm3647, %v3549, 0
        %v4419 = vsel %vm3647, %v3550, 0
        %4421 = vmatprep.subr.bf16.mxu0 0
        %4422 = vmatpush1.bf16.xpose.msra.mxu0 %v4398
        %4423 = vmatprep.subr.bf16.mxu0 0
        %4424 = vmatpush1.bf16.xpose.msra.mxu0 %v4401
        %4425 = vmatprep.subr.bf16.mxu0 0
        %4426 = vmatpush1.bf16.xpose.msra.mxu0 %v4404
        %4427 = vmatprep.subr.bf16.mxu0 0
        %4428 = vmatpush1.bf16.xpose.msra.mxu0 %v4407
        %4429 = vmatprep.subr.bf16.mxu0 0
        %4430 = vmatpush1.bf16.xpose.msra.mxu0 %v4410
        %4431 = vmatprep.subr.bf16.mxu0 0
        %4432 = vmatpush1.bf16.xpose.msra.mxu0 %v4413
        %4433 = vmatprep.subr.bf16.mxu0 0
        %4434 = vmatpush1.bf16.xpose.msra.mxu0 %v4416
        %4435 = vmatprep.subr.bf16.mxu0 0
        %4436 = vmatpush1.bf16.xpose.msra.mxu0 %v4419
        %4437 = vmatprep.subr.bf16.mxu0 0
        %4438 = vmatpush1.bf16.xpose.msra.mxu0 0
        %4439 = vmatprep.subr.bf16.mxu0 0
        %4440 = vmatpush1.bf16.xpose.msra.mxu0 0
        %4441 = vmatprep.subr.bf16.mxu0 0
        %4442 = vmatpush1.bf16.xpose.msra.mxu0 0
        %4443 = vmatprep.subr.bf16.mxu0 0
        %4444 = vmatpush1.bf16.xpose.msra.mxu0 0
        %4445 = vmatprep.subr.bf16.mxu0 0
        %4446 = vmatpush1.bf16.xpose.msra.mxu0 0
        %4447 = vmatprep.subr.bf16.mxu0 0
        %4448 = vmatpush1.bf16.xpose.msra.mxu0 0
        %4449 = vmatprep.subr.bf16.mxu0 0
        %4450 = vmatpush1.bf16.xpose.msra.mxu0 0
        %4451 = vmatprep.subr.bf16.mxu0 0
        %4452 = vmatpush1.bf16.xpose.msra.mxu0 0
        %4453 = vmatprep.mubr.bf16.mxu0 0
        %4454 = vmatmul.mubr.bf16.gmra.mrb[0].mxu0 %v4374
        %v4455 = vpop.f32.mrb[0].mxu0
        %v4456 = vadd.f32 %v3631, %v4455
        %v4457 = vpop.f32.mrb[0].mxu0
        %v4458 = vpop.f32.mrb[0].mxu0
        %v4459 = vadd.f32 %v3632, %v4458
        %v4460 = vpop.f32.mrb[0].mxu0
        %4461 = vmatprep.mubr.bf16.mxu0 0
        %4462 = vmatmul.mubr.bf16.gmra.mrb[0].mxu0 %v4377
        %v4463 = vpop.f32.mrb[0].mxu0
        %v4464 = vadd.f32 %v3633, %v4463
        %v4465 = vpop.f32.mrb[0].mxu0
        %v4466 = vpop.f32.mrb[0].mxu0
        %v4467 = vadd.f32 %v3634, %v4466
        %v4468 = vpop.f32.mrb[0].mxu0
        %4469 = vmatprep.mubr.bf16.mxu0 0
        %4470 = vmatmul.mubr.bf16.gmra.mrb[0].mxu0 %v4380
        %v4471 = vpop.f32.mrb[0].mxu0
        %v4472 = vadd.f32 %v3635, %v4471
        %v4473 = vpop.f32.mrb[0].mxu0
        %v4474 = vpop.f32.mrb[0].mxu0
        %v4475 = vadd.f32 %v3636, %v4474
        %v4476 = vpop.f32.mrb[0].mxu0
        %4477 = vmatprep.mubr.bf16.mxu0 0
        %4478 = vmatmul.mubr.bf16.gmra.mrb[0].mxu0 %v4383
        %v4479 = vpop.f32.mrb[0].mxu0
        %v4480 = vadd.f32 %v3637, %v4479
        %v4481 = vpop.f32.mrb[0].mxu0
        %v4482 = vpop.f32.mrb[0].mxu0
        %v4483 = vadd.f32 %v3638, %v4482
        %v4484 = vpop.f32.mrb[0].mxu0
        %4485 = vmatprep.mubr.bf16.mxu0 0
        %4486 = vmatmul.mubr.bf16.gmra.mrb[0].mxu0 %v4386
        %v4487 = vpop.f32.mrb[0].mxu0
        %v4488 = vadd.f32 %v3639, %v4487
        %v4489 = vpop.f32.mrb[0].mxu0
        %v4490 = vpop.f32.mrb[0].mxu0
        %v4491 = vadd.f32 %v3640, %v4490
        %v4492 = vpop.f32.mrb[0].mxu0
        %4493 = vmatprep.mubr.bf16.mxu0 0
        %4494 = vmatmul.mubr.bf16.gmra.mrb[0].mxu0 %v4389
        %v4495 = vpop.f32.mrb[0].mxu0
        %v4496 = vadd.f32 %v3641, %v4495
        %v4497 = vpop.f32.mrb[0].mxu0
        %v4498 = vpop.f32.mrb[0].mxu0
        %v4499 = vadd.f32 %v3642, %v4498
        %v4500 = vpop.f32.mrb[0].mxu0
        %4501 = vmatprep.mubr.bf16.mxu0 0
        %4502 = vmatmul.mubr.bf16.gmra.mrb[0].mxu0 %v4392
        %v4503 = vpop.f32.mrb[0].mxu0
        %v4504 = vadd.f32 %v3643, %v4503
        %v4505 = vpop.f32.mrb[0].mxu0
        %v4506 = vpop.f32.mrb[0].mxu0
        %v4507 = vadd.f32 %v3644, %v4506
        %v4508 = vpop.f32.mrb[0].mxu0
        %4509 = vmatprep.mubr.bf16.mxu0 0
        %4510 = vmatmul.mubr.bf16.gmra.mrb[0].mxu0 %v4395
        %v4511 = vpop.f32.mrb[0].mxu0
        %v4512 = vadd.f32 %v3645, %v4511
        %v4513 = vpop.f32.mrb[0].mxu0
        %v4514 = vpop.f32.mrb[0].mxu0
        %v4515 = vadd.f32 %v3646, %v4514
        %v4516 = vpop.f32.mrb[0].mxu0
        %4517 = vdwg.mxu0
        %v4519 = vsel %vm3647, %v3487, 0
        %v4522 = vsel %vm3647, %v3488, 0
        %v4525 = vsel %vm3647, %v3489, 0
        %v4528 = vsel %vm3647, %v3490, 0
        %v4531 = vsel %vm3647, %v3491, 0
        %v4534 = vsel %vm3647, %v3492, 0
        %v4537 = vsel %vm3647, %v3493, 0
        %v4540 = vsel %vm3647, %v3494, 0
        %v4543 = vsel %vm3647, %v3551, 0
        %v4546 = vsel %vm3647, %v3552, 0
        %v4549 = vsel %vm3647, %v3553, 0
        %v4552 = vsel %vm3647, %v3554, 0
        %v4555 = vsel %vm3647, %v3555, 0
        %v4558 = vsel %vm3647, %v3556, 0
        %v4561 = vsel %vm3647, %v3557, 0
        %v4564 = vsel %vm3647, %v3558, 0
        %4566 = vmatprep.subr.bf16.mxu0 0
        %4567 = vmatpush1.bf16.xpose.msra.mxu0 %v4543
        %4568 = vmatprep.subr.bf16.mxu0 0
        %4569 = vmatpush1.bf16.xpose.msra.mxu0 %v4546
        %4570 = vmatprep.subr.bf16.mxu0 0
        %4571 = vmatpush1.bf16.xpose.msra.mxu0 %v4549
        %4572 = vmatprep.subr.bf16.mxu0 0
        %4573 = vmatpush1.bf16.xpose.msra.mxu0 %v4552
        %4574 = vmatprep.subr.bf16.mxu0 0
        %4575 = vmatpush1.bf16.xpose.msra.mxu0 %v4555
        %4576 = vmatprep.subr.bf16.mxu0 0
        %4577 = vmatpush1.bf16.xpose.msra.mxu0 %v4558
        %4578 = vmatprep.subr.bf16.mxu0 0
        %4579 = vmatpush1.bf16.xpose.msra.mxu0 %v4561
        %4580 = vmatprep.subr.bf16.mxu0 0
        %4581 = vmatpush1.bf16.xpose.msra.mxu0 %v4564
        %4582 = vmatprep.subr.bf16.mxu0 0
        %4583 = vmatpush1.bf16.xpose.msra.mxu0 0
        %4584 = vmatprep.subr.bf16.mxu0 0
        %4585 = vmatpush1.bf16.xpose.msra.mxu0 0
        %4586 = vmatprep.subr.bf16.mxu0 0
        %4587 = vmatpush1.bf16.xpose.msra.mxu0 0
        %4588 = vmatprep.subr.bf16.mxu0 0
        %4589 = vmatpush1.bf16.xpose.msra.mxu0 0
        %4590 = vmatprep.subr.bf16.mxu0 0
        %4591 = vmatpush1.bf16.xpose.msra.mxu0 0
        %4592 = vmatprep.subr.bf16.mxu0 0
        %4593 = vmatpush1.bf16.xpose.msra.mxu0 0
        %4594 = vmatprep.subr.bf16.mxu0 0
        %4595 = vmatpush1.bf16.xpose.msra.mxu0 0
        %4596 = vmatprep.subr.bf16.mxu0 0
        %4597 = vmatpush1.bf16.xpose.msra.mxu0 0
        %4598 = vmatprep.mubr.bf16.mxu0 0
        %4599 = vmatmul.mubr.bf16.gmra.mrb[0].mxu0 %v4519
        %v4600 = vpop.f32.mrb[0].mxu0
        %v4601 = vadd.f32 %v3631, %v4600
        %v4602 = vpop.f32.mrb[0].mxu0
        %v4603 = vpop.f32.mrb[0].mxu0
        %v4604 = vadd.f32 %v3632, %v4603
        %v4605 = vpop.f32.mrb[0].mxu0
        %4606 = vmatprep.mubr.bf16.mxu0 0
        %4607 = vmatmul.mubr.bf16.gmra.mrb[0].mxu0 %v4522
        %v4608 = vpop.f32.mrb[0].mxu0
        %v4609 = vadd.f32 %v3633, %v4608
        %v4610 = vpop.f32.mrb[0].mxu0
        %v4611 = vpop.f32.mrb[0].mxu0
        %v4612 = vadd.f32 %v3634, %v4611
        %v4613 = vpop.f32.mrb[0].mxu0
        %4614 = vmatprep.mubr.bf16.mxu0 0
        %4615 = vmatmul.mubr.bf16.gmra.mrb[0].mxu0 %v4525
        %v4616 = vpop.f32.mrb[0].mxu0
        %v4617 = vadd.f32 %v3635, %v4616
        %v4618 = vpop.f32.mrb[0].mxu0
        %v4619 = vpop.f32.mrb[0].mxu0
        %v4620 = vadd.f32 %v3636, %v4619
        %v4621 = vpop.f32.mrb[0].mxu0
        %4622 = vmatprep.mubr.bf16.mxu0 0
        %4623 = vmatmul.mubr.bf16.gmra.mrb[0].mxu0 %v4528
        %v4624 = vpop.f32.mrb[0].mxu0
        %v4625 = vadd.f32 %v3637, %v4624
        %v4626 = vpop.f32.mrb[0].mxu0
        %v4627 = vpop.f32.mrb[0].mxu0
        %v4628 = vadd.f32 %v3638, %v4627
        %v4629 = vpop.f32.mrb[0].mxu0
        %4630 = vmatprep.mubr.bf16.mxu0 0
        %4631 = vmatmul.mubr.bf16.gmra.mrb[0].mxu0 %v4531
        %v4632 = vpop.f32.mrb[0].mxu0
        %v4633 = vadd.f32 %v3639, %v4632
        %v4634 = vpop.f32.mrb[0].mxu0
        %v4635 = vpop.f32.mrb[0].mxu0
        %v4636 = vadd.f32 %v3640, %v4635
        %v4637 = vpop.f32.mrb[0].mxu0
        %4638 = vmatprep.mubr.bf16.mxu0 0
        %4639 = vmatmul.mubr.bf16.gmra.mrb[0].mxu0 %v4534
        %v4640 = vpop.f32.mrb[0].mxu0
        %v4641 = vadd.f32 %v3641, %v4640
        %v4642 = vpop.f32.mrb[0].mxu0
        %v4643 = vpop.f32.mrb[0].mxu0
        %v4644 = vadd.f32 %v3642, %v4643
        %v4645 = vpop.f32.mrb[0].mxu0
        %4646 = vmatprep.mubr.bf16.mxu0 0
        %4647 = vmatmul.mubr.bf16.gmra.mrb[0].mxu0 %v4537
        %v4648 = vpop.f32.mrb[0].mxu0
        %v4649 = vadd.f32 %v3643, %v4648
        %v4650 = vpop.f32.mrb[0].mxu0
        %v4651 = vpop.f32.mrb[0].mxu0
        %v4652 = vadd.f32 %v3644, %v4651
        %v4653 = vpop.f32.mrb[0].mxu0
        %4654 = vmatprep.mubr.bf16.mxu0 0
        %4655 = vmatmul.mubr.bf16.gmra.mrb[0].mxu0 %v4540
        %v4656 = vpop.f32.mrb[0].mxu0
        %v4657 = vadd.f32 %v3645, %v4656
        %v4658 = vpop.f32.mrb[0].mxu0
        %v4659 = vpop.f32.mrb[0].mxu0
        %v4660 = vadd.f32 %v3646, %v4659
        %v4661 = vpop.f32.mrb[0].mxu0
        %4662 = vdwg.mxu0
        %v4664 = vsel %vm3647, %v3495, 0
        %v4667 = vsel %vm3647, %v3496, 0
        %v4670 = vsel %vm3647, %v3497, 0
        %v4673 = vsel %vm3647, %v3498, 0
        %v4676 = vsel %vm3647, %v3499, 0
        %v4679 = vsel %vm3647, %v3500, 0
        %v4682 = vsel %vm3647, %v3501, 0
        %v4685 = vsel %vm3647, %v3502, 0
        %v4688 = vsel %vm3647, %v3559, 0
        %v4691 = vsel %vm3647, %v3560, 0
        %v4694 = vsel %vm3647, %v3561, 0
        %v4697 = vsel %vm3647, %v3562, 0
        %v4700 = vsel %vm3647, %v3563, 0
        %v4703 = vsel %vm3647, %v3564, 0
        %v4706 = vsel %vm3647, %v3565, 0
        %v4709 = vsel %vm3647, %v3566, 0
        %4711 = vmatprep.subr.bf16.mxu0 0
        %4712 = vmatpush1.bf16.xpose.msra.mxu0 %v4688
        %4713 = vmatprep.subr.bf16.mxu0 0
        %4714 = vmatpush1.bf16.xpose.msra.mxu0 %v4691
        %4715 = vmatprep.subr.bf16.mxu0 0
        %4716 = vmatpush1.bf16.xpose.msra.mxu0 %v4694
        %4717 = vmatprep.subr.bf16.mxu0 0
        %4718 = vmatpush1.bf16.xpose.msra.mxu0 %v4697
        %4719 = vmatprep.subr.bf16.mxu0 0
        %4720 = vmatpush1.bf16.xpose.msra.mxu0 %v4700
        %4721 = vmatprep.subr.bf16.mxu0 0
        %4722 = vmatpush1.bf16.xpose.msra.mxu0 %v4703
        %4723 = vmatprep.subr.bf16.mxu0 0
        %4724 = vmatpush1.bf16.xpose.msra.mxu0 %v4706
        %4725 = vmatprep.subr.bf16.mxu0 0
        %4726 = vmatpush1.bf16.xpose.msra.mxu0 %v4709
        %4727 = vmatprep.subr.bf16.mxu0 0
        %4728 = vmatpush1.bf16.xpose.msra.mxu0 0
        %4729 = vmatprep.subr.bf16.mxu0 0
        %4730 = vmatpush1.bf16.xpose.msra.mxu0 0
        %4731 = vmatprep.subr.bf16.mxu0 0
        %4732 = vmatpush1.bf16.xpose.msra.mxu0 0
        %4733 = vmatprep.subr.bf16.mxu0 0
        %4734 = vmatpush1.bf16.xpose.msra.mxu0 0
        %4735 = vmatprep.subr.bf16.mxu0 0
        %4736 = vmatpush1.bf16.xpose.msra.mxu0 0
        %4737 = vmatprep.subr.bf16.mxu0 0
        %4738 = vmatpush1.bf16.xpose.msra.mxu0 0
        %4739 = vmatprep.subr.bf16.mxu0 0
        %4740 = vmatpush1.bf16.xpose.msra.mxu0 0
        %4741 = vmatprep.subr.bf16.mxu0 0
        %4742 = vmatpush1.bf16.xpose.msra.mxu0 0
        %4743 = vmatprep.mubr.bf16.mxu0 0
        %4744 = vmatmul.mubr.bf16.gmra.mrb[0].mxu0 %v4664
        %v4745 = vpop.f32.mrb[0].mxu0
        %v4746 = vadd.f32 %v3631, %v4745
        %v4747 = vpop.f32.mrb[0].mxu0
        %v4748 = vpop.f32.mrb[0].mxu0
        %v4749 = vadd.f32 %v3632, %v4748
        %v4750 = vpop.f32.mrb[0].mxu0
        %4751 = vmatprep.mubr.bf16.mxu0 0
        %4752 = vmatmul.mubr.bf16.gmra.mrb[0].mxu0 %v4667
        %v4753 = vpop.f32.mrb[0].mxu0
        %v4754 = vadd.f32 %v3633, %v4753
        %v4755 = vpop.f32.mrb[0].mxu0
        %v4756 = vpop.f32.mrb[0].mxu0
        %v4757 = vadd.f32 %v3634, %v4756
        %v4758 = vpop.f32.mrb[0].mxu0
        %4759 = vmatprep.mubr.bf16.mxu0 0
        %4760 = vmatmul.mubr.bf16.gmra.mrb[0].mxu0 %v4670
        %v4761 = vpop.f32.mrb[0].mxu0
        %v4762 = vadd.f32 %v3635, %v4761
        %v4763 = vpop.f32.mrb[0].mxu0
        %v4764 = vpop.f32.mrb[0].mxu0
        %v4765 = vadd.f32 %v3636, %v4764
        %v4766 = vpop.f32.mrb[0].mxu0
        %4767 = vmatprep.mubr.bf16.mxu0 0
        %4768 = vmatmul.mubr.bf16.gmra.mrb[0].mxu0 %v4673
        %v4769 = vpop.f32.mrb[0].mxu0
        %v4770 = vadd.f32 %v3637, %v4769
        %v4771 = vpop.f32.mrb[0].mxu0
        %v4772 = vpop.f32.mrb[0].mxu0
        %v4773 = vadd.f32 %v3638, %v4772
        %v4774 = vpop.f32.mrb[0].mxu0
        %4775 = vmatprep.mubr.bf16.mxu0 0
        %4776 = vmatmul.mubr.bf16.gmra.mrb[0].mxu0 %v4676
        %v4777 = vpop.f32.mrb[0].mxu0
        %v4778 = vadd.f32 %v3639, %v4777
        %v4779 = vpop.f32.mrb[0].mxu0
        %v4780 = vpop.f32.mrb[0].mxu0
        %v4781 = vadd.f32 %v3640, %v4780
        %v4782 = vpop.f32.mrb[0].mxu0
        %4783 = vmatprep.mubr.bf16.mxu0 0
        %4784 = vmatmul.mubr.bf16.gmra.mrb[0].mxu0 %v4679
        %v4785 = vpop.f32.mrb[0].mxu0
        %v4786 = vadd.f32 %v3641, %v4785
        %v4787 = vpop.f32.mrb[0].mxu0
        %v4788 = vpop.f32.mrb[0].mxu0
        %v4789 = vadd.f32 %v3642, %v4788
        %v4790 = vpop.f32.mrb[0].mxu0
        %4791 = vmatprep.mubr.bf16.mxu0 0
        %4792 = vmatmul.mubr.bf16.gmra.mrb[0].mxu0 %v4682
        %v4793 = vpop.f32.mrb[0].mxu0
        %v4794 = vadd.f32 %v3643, %v4793
        %v4795 = vpop.f32.mrb[0].mxu0
        %v4796 = vpop.f32.mrb[0].mxu0
        %v4797 = vadd.f32 %v3644, %v4796
        %v4798 = vpop.f32.mrb[0].mxu0
        %4799 = vmatprep.mubr.bf16.mxu0 0
        %4800 = vmatmul.mubr.bf16.gmra.mrb[0].mxu0 %v4685
        %v4801 = vpop.f32.mrb[0].mxu0
        %v4802 = vadd.f32 %v3645, %v4801
        %v4803 = vpop.f32.mrb[0].mxu0
        %v4804 = vpop.f32.mrb[0].mxu0
        %v4805 = vadd.f32 %v3646, %v4804
        %v4806 = vpop.f32.mrb[0].mxu0
        %4807 = vdwg.mxu0
        %4808 = vmax.xlane.f32.xlu0 %v3731
        %v4809 = vpop.xlane.xlu0 %4808
        %4810 = vmax.xlane.f32.xlu0 %v3734
        %v4811 = vpop.xlane.xlu0 %4810
        %4812 = vmax.xlane.f32.xlu0 %v3739
        %v4813 = vpop.xlane.xlu0 %4812
        %4814 = vmax.xlane.f32.xlu0 %v3742
        %v4815 = vpop.xlane.xlu0 %4814
        %4816 = vmax.xlane.f32.xlu0 %v3747
        %v4817 = vpop.xlane.xlu0 %4816
        %4818 = vmax.xlane.f32.xlu0 %v3750
        %v4819 = vpop.xlane.xlu0 %4818
        %4820 = vmax.xlane.f32.xlu0 %v3755
        %v4821 = vpop.xlane.xlu0 %4820
        %4822 = vmax.xlane.f32.xlu0 %v3758
        %v4823 = vpop.xlane.xlu0 %4822
        %4824 = vmax.xlane.f32.xlu0 %v3763
        %v4825 = vpop.xlane.xlu0 %4824
        %4826 = vmax.xlane.f32.xlu0 %v3766
        %v4827 = vpop.xlane.xlu0 %4826
        %4828 = vmax.xlane.f32.xlu0 %v3771
        %v4829 = vpop.xlane.xlu0 %4828
        %4830 = vmax.xlane.f32.xlu0 %v3774
        %v4831 = vpop.xlane.xlu0 %4830
        %4832 = vmax.xlane.f32.xlu0 %v3779
        %v4833 = vpop.xlane.xlu0 %4832
        %4834 = vmax.xlane.f32.xlu0 %v3782
        %v4835 = vpop.xlane.xlu0 %4834
        %4836 = vmax.xlane.f32.xlu0 %v3787
        %v4837 = vpop.xlane.xlu0 %4836
        %4838 = vmax.xlane.f32.xlu0 %v3790
        %v4839 = vpop.xlane.xlu0 %4838
        %4840 = vmax.xlane.f32.xlu0 %v3876
        %v4841 = vpop.xlane.xlu0 %4840
        %4842 = vmax.xlane.f32.xlu0 %v3879
        %v4843 = vpop.xlane.xlu0 %4842
        %4844 = vmax.xlane.f32.xlu0 %v3884
        %v4845 = vpop.xlane.xlu0 %4844
        %4846 = vmax.xlane.f32.xlu0 %v3887
        %v4847 = vpop.xlane.xlu0 %4846
        %4848 = vmax.xlane.f32.xlu0 %v3892
        %v4849 = vpop.xlane.xlu0 %4848
        %4850 = vmax.xlane.f32.xlu0 %v3895
        %v4851 = vpop.xlane.xlu0 %4850
        %4852 = vmax.xlane.f32.xlu0 %v3900
        %v4853 = vpop.xlane.xlu0 %4852
        %4854 = vmax.xlane.f32.xlu0 %v3903
        %v4855 = vpop.xlane.xlu0 %4854
        %4856 = vmax.xlane.f32.xlu0 %v3908
        %v4857 = vpop.xlane.xlu0 %4856
        %4858 = vmax.xlane.f32.xlu0 %v3911
        %v4859 = vpop.xlane.xlu0 %4858
        %4860 = vmax.xlane.f32.xlu0 %v3916
        %v4861 = vpop.xlane.xlu0 %4860
        %4862 = vmax.xlane.f32.xlu0 %v3919
        %v4863 = vpop.xlane.xlu0 %4862
        %4864 = vmax.xlane.f32.xlu0 %v3924
        %v4865 = vpop.xlane.xlu0 %4864
        %4866 = vmax.xlane.f32.xlu0 %v3927
        %v4867 = vpop.xlane.xlu0 %4866
        %4868 = vmax.xlane.f32.xlu0 %v3932
        %v4869 = vpop.xlane.xlu0 %4868
        %4870 = vmax.xlane.f32.xlu0 %v3935
        %v4871 = vpop.xlane.xlu0 %4870
        %4872 = vmax.xlane.f32.xlu0 %v4021
        %v4873 = vpop.xlane.xlu0 %4872
        %4874 = vmax.xlane.f32.xlu0 %v4024
        %v4875 = vpop.xlane.xlu0 %4874
        %4876 = vmax.xlane.f32.xlu0 %v4029
        %v4877 = vpop.xlane.xlu0 %4876
        %4878 = vmax.xlane.f32.xlu0 %v4032
        %v4879 = vpop.xlane.xlu0 %4878
        %4880 = vmax.xlane.f32.xlu0 %v4037
        %v4881 = vpop.xlane.xlu0 %4880
        %4882 = vmax.xlane.f32.xlu0 %v4040
        %v4883 = vpop.xlane.xlu0 %4882
        %4884 = vmax.xlane.f32.xlu0 %v4045
        %v4885 = vpop.xlane.xlu0 %4884
        %4886 = vmax.xlane.f32.xlu0 %v4048
        %v4887 = vpop.xlane.xlu0 %4886
        %4888 = vmax.xlane.f32.xlu0 %v4053
        %v4889 = vpop.xlane.xlu0 %4888
        %4890 = vmax.xlane.f32.xlu0 %v4056
        %v4891 = vpop.xlane.xlu0 %4890
        %4892 = vmax.xlane.f32.xlu0 %v4061
        %v4893 = vpop.xlane.xlu0 %4892
        %4894 = vmax.xlane.f32.xlu0 %v4064
        %v4895 = vpop.xlane.xlu0 %4894
        %4896 = vmax.xlane.f32.xlu0 %v4069
        %v4897 = vpop.xlane.xlu0 %4896
        %4898 = vmax.xlane.f32.xlu0 %v4072
        %v4899 = vpop.xlane.xlu0 %4898
        %4900 = vmax.xlane.f32.xlu0 %v4077
        %v4901 = vpop.xlane.xlu0 %4900
        %4902 = vmax.xlane.f32.xlu0 %v4080
        %v4903 = vpop.xlane.xlu0 %4902
        %4904 = vmax.xlane.f32.xlu0 %v4166
        %v4905 = vpop.xlane.xlu0 %4904
        %4906 = vmax.xlane.f32.xlu0 %v4169
        %v4907 = vpop.xlane.xlu0 %4906
        %4908 = vmax.xlane.f32.xlu0 %v4174
        %v4909 = vpop.xlane.xlu0 %4908
        %4910 = vmax.xlane.f32.xlu0 %v4177
        %v4911 = vpop.xlane.xlu0 %4910
        %4912 = vmax.xlane.f32.xlu0 %v4182
        %v4913 = vpop.xlane.xlu0 %4912
        %4914 = vmax.xlane.f32.xlu0 %v4185
        %v4915 = vpop.xlane.xlu0 %4914
        %4916 = vmax.xlane.f32.xlu0 %v4190
        %v4917 = vpop.xlane.xlu0 %4916
        %4918 = vmax.xlane.f32.xlu0 %v4193
        %v4919 = vpop.xlane.xlu0 %4918
        %4920 = vmax.xlane.f32.xlu0 %v4198
        %v4921 = vpop.xlane.xlu0 %4920
        %4922 = vmax.xlane.f32.xlu0 %v4201
        %v4923 = vpop.xlane.xlu0 %4922
        %4924 = vmax.xlane.f32.xlu0 %v4206
        %v4925 = vpop.xlane.xlu0 %4924
        %4926 = vmax.xlane.f32.xlu0 %v4209
        %v4927 = vpop.xlane.xlu0 %4926
        %4928 = vmax.xlane.f32.xlu0 %v4214
        %v4929 = vpop.xlane.xlu0 %4928
        %4930 = vmax.xlane.f32.xlu0 %v4217
        %v4931 = vpop.xlane.xlu0 %4930
        %4932 = vmax.xlane.f32.xlu0 %v4222
        %v4933 = vpop.xlane.xlu0 %4932
        %4934 = vmax.xlane.f32.xlu0 %v4225
        %v4935 = vpop.xlane.xlu0 %4934
        %4936 = vmax.xlane.f32.xlu0 %v4311
        %v4937 = vpop.xlane.xlu0 %4936
        %4938 = vmax.xlane.f32.xlu0 %v4314
        %v4939 = vpop.xlane.xlu0 %4938
        %4940 = vmax.xlane.f32.xlu0 %v4319
        %v4941 = vpop.xlane.xlu0 %4940
        %4942 = vmax.xlane.f32.xlu0 %v4322
        %v4943 = vpop.xlane.xlu0 %4942
        %4944 = vmax.xlane.f32.xlu0 %v4327
        %v4945 = vpop.xlane.xlu0 %4944
        %4946 = vmax.xlane.f32.xlu0 %v4330
        %v4947 = vpop.xlane.xlu0 %4946
        %4948 = vmax.xlane.f32.xlu0 %v4335
        %v4949 = vpop.xlane.xlu0 %4948
        %4950 = vmax.xlane.f32.xlu0 %v4338
        %v4951 = vpop.xlane.xlu0 %4950
        %4952 = vmax.xlane.f32.xlu0 %v4343
        %v4953 = vpop.xlane.xlu0 %4952
        %4954 = vmax.xlane.f32.xlu0 %v4346
        %v4955 = vpop.xlane.xlu0 %4954
        %4956 = vmax.xlane.f32.xlu0 %v4351
        %v4957 = vpop.xlane.xlu0 %4956
        %4958 = vmax.xlane.f32.xlu0 %v4354
        %v4959 = vpop.xlane.xlu0 %4958
        %4960 = vmax.xlane.f32.xlu0 %v4359
        %v4961 = vpop.xlane.xlu0 %4960
        %4962 = vmax.xlane.f32.xlu0 %v4362
        %v4963 = vpop.xlane.xlu0 %4962
        %4964 = vmax.xlane.f32.xlu0 %v4367
        %v4965 = vpop.xlane.xlu0 %4964
        %4966 = vmax.xlane.f32.xlu0 %v4370
        %v4967 = vpop.xlane.xlu0 %4966
        %4968 = vmax.xlane.f32.xlu0 %v4456
        %v4969 = vpop.xlane.xlu0 %4968
        %4970 = vmax.xlane.f32.xlu0 %v4459
        %v4971 = vpop.xlane.xlu0 %4970
        %4972 = vmax.xlane.f32.xlu0 %v4464
        %v4973 = vpop.xlane.xlu0 %4972
        %4974 = vmax.xlane.f32.xlu0 %v4467
        %v4975 = vpop.xlane.xlu0 %4974
        %4976 = vmax.xlane.f32.xlu0 %v4472
        %v4977 = vpop.xlane.xlu0 %4976
        %4978 = vmax.xlane.f32.xlu0 %v4475
        %v4979 = vpop.xlane.xlu0 %4978
        %4980 = vmax.xlane.f32.xlu0 %v4480
        %v4981 = vpop.xlane.xlu0 %4980
        %4982 = vmax.xlane.f32.xlu0 %v4483
        %v4983 = vpop.xlane.xlu0 %4982
        %4984 = vmax.xlane.f32.xlu0 %v4488
        %v4985 = vpop.xlane.xlu0 %4984
        %4986 = vmax.xlane.f32.xlu0 %v4491
        %v4987 = vpop.xlane.xlu0 %4986
        %4988 = vmax.xlane.f32.xlu0 %v4496
        %v4989 = vpop.xlane.xlu0 %4988
        %4990 = vmax.xlane.f32.xlu0 %v4499
        %v4991 = vpop.xlane.xlu0 %4990
        %4992 = vmax.xlane.f32.xlu0 %v4504
        %v4993 = vpop.xlane.xlu0 %4992
        %4994 = vmax.xlane.f32.xlu0 %v4507
        %v4995 = vpop.xlane.xlu0 %4994
        %4996 = vmax.xlane.f32.xlu0 %v4512
        %v4997 = vpop.xlane.xlu0 %4996
        %4998 = vmax.xlane.f32.xlu0 %v4515
        %v4999 = vpop.xlane.xlu0 %4998
        %5000 = vmax.xlane.f32.xlu0 %v4601
        %v5001 = vpop.xlane.xlu0 %5000
        %5002 = vmax.xlane.f32.xlu0 %v4604
        %v5003 = vpop.xlane.xlu0 %5002
        %5004 = vmax.xlane.f32.xlu0 %v4609
        %v5005 = vpop.xlane.xlu0 %5004
        %5006 = vmax.xlane.f32.xlu0 %v4612
        %v5007 = vpop.xlane.xlu0 %5006
        %5008 = vmax.xlane.f32.xlu0 %v4617
        %v5009 = vpop.xlane.xlu0 %5008
        %5010 = vmax.xlane.f32.xlu0 %v4620
        %v5011 = vpop.xlane.xlu0 %5010
        %5012 = vmax.xlane.f32.xlu0 %v4625
        %v5013 = vpop.xlane.xlu0 %5012
        %5014 = vmax.xlane.f32.xlu0 %v4628
        %v5015 = vpop.xlane.xlu0 %5014
        %5016 = vmax.xlane.f32.xlu0 %v4633
        %v5017 = vpop.xlane.xlu0 %5016
        %5018 = vmax.xlane.f32.xlu0 %v4636
        %v5019 = vpop.xlane.xlu0 %5018
        %5020 = vmax.xlane.f32.xlu0 %v4641
        %v5021 = vpop.xlane.xlu0 %5020
        %5022 = vmax.xlane.f32.xlu0 %v4644
        %v5023 = vpop.xlane.xlu0 %5022
        %5024 = vmax.xlane.f32.xlu0 %v4649
        %v5025 = vpop.xlane.xlu0 %5024
        %5026 = vmax.xlane.f32.xlu0 %v4652
        %v5027 = vpop.xlane.xlu0 %5026
        %5028 = vmax.xlane.f32.xlu0 %v4657
        %v5029 = vpop.xlane.xlu0 %5028
        %5030 = vmax.xlane.f32.xlu0 %v4660
        %v5031 = vpop.xlane.xlu0 %5030
        %5032 = vmax.xlane.f32.xlu0 %v4746
        %v5033 = vpop.xlane.xlu0 %5032
        %5034 = vmax.xlane.f32.xlu0 %v4749
        %v5035 = vpop.xlane.xlu0 %5034
        %5036 = vmax.xlane.f32.xlu0 %v4754
        %v5037 = vpop.xlane.xlu0 %5036
        %5038 = vmax.xlane.f32.xlu0 %v4757
        %v5039 = vpop.xlane.xlu0 %5038
        %5040 = vmax.xlane.f32.xlu0 %v4762
        %v5041 = vpop.xlane.xlu0 %5040
        %5042 = vmax.xlane.f32.xlu0 %v4765
        %v5043 = vpop.xlane.xlu0 %5042
        %5044 = vmax.xlane.f32.xlu0 %v4770
        %v5045 = vpop.xlane.xlu0 %5044
        %5046 = vmax.xlane.f32.xlu0 %v4773
        %v5047 = vpop.xlane.xlu0 %5046
        %5048 = vmax.xlane.f32.xlu0 %v4778
        %v5049 = vpop.xlane.xlu0 %5048
        %5050 = vmax.xlane.f32.xlu0 %v4781
        %v5051 = vpop.xlane.xlu0 %5050
        %5052 = vmax.xlane.f32.xlu0 %v4786
        %v5053 = vpop.xlane.xlu0 %5052
        %5054 = vmax.xlane.f32.xlu0 %v4789
        %v5055 = vpop.xlane.xlu0 %5054
        %5056 = vmax.xlane.f32.xlu0 %v4794
        %v5057 = vpop.xlane.xlu0 %5056
        %5058 = vmax.xlane.f32.xlu0 %v4797
        %v5059 = vpop.xlane.xlu0 %5058
        %5060 = vmax.xlane.f32.xlu0 %v4802
        %v5061 = vpop.xlane.xlu0 %5060
        %5062 = vmax.xlane.f32.xlu0 %v4805
        %v5063 = vpop.xlane.xlu0 %5062
        %v5064 = vsub.f32 %v3731, %v4809
        %v5065 = vsub.f32 %v3734, %v4811
        %v5066 = vsub.f32 %v3739, %v4813
        %v5067 = vsub.f32 %v3742, %v4815
        %v5068 = vsub.f32 %v3747, %v4817
        %v5069 = vsub.f32 %v3750, %v4819
        %v5070 = vsub.f32 %v3755, %v4821
        %v5071 = vsub.f32 %v3758, %v4823
        %v5072 = vsub.f32 %v3763, %v4825
        %v5073 = vsub.f32 %v3766, %v4827
        %v5074 = vsub.f32 %v3771, %v4829
        %v5075 = vsub.f32 %v3774, %v4831
        %v5076 = vsub.f32 %v3779, %v4833
        %v5077 = vsub.f32 %v3782, %v4835
        %v5078 = vsub.f32 %v3787, %v4837
        %v5079 = vsub.f32 %v3790, %v4839
        %v5080 = vsub.f32 %v3876, %v4841
        %v5081 = vsub.f32 %v3879, %v4843
        %v5082 = vsub.f32 %v3884, %v4845
        %v5083 = vsub.f32 %v3887, %v4847
        %v5084 = vsub.f32 %v3892, %v4849
        %v5085 = vsub.f32 %v3895, %v4851
        %v5086 = vsub.f32 %v3900, %v4853
        %v5087 = vsub.f32 %v3903, %v4855
        %v5088 = vsub.f32 %v3908, %v4857
        %v5089 = vsub.f32 %v3911, %v4859
        %v5090 = vsub.f32 %v3916, %v4861
        %v5091 = vsub.f32 %v3919, %v4863
        %v5092 = vsub.f32 %v3924, %v4865
        %v5093 = vsub.f32 %v3927, %v4867
        %v5094 = vsub.f32 %v3932, %v4869
        %v5095 = vsub.f32 %v3935, %v4871
        %v5096 = vsub.f32 %v4021, %v4873
        %v5097 = vsub.f32 %v4024, %v4875
        %v5098 = vsub.f32 %v4029, %v4877
        %v5099 = vsub.f32 %v4032, %v4879
        %v5100 = vsub.f32 %v4037, %v4881
        %v5101 = vsub.f32 %v4040, %v4883
        %v5102 = vsub.f32 %v4045, %v4885
        %v5103 = vsub.f32 %v4048, %v4887
        %v5104 = vsub.f32 %v4053, %v4889
        %v5105 = vsub.f32 %v4056, %v4891
        %v5106 = vsub.f32 %v4061, %v4893
        %v5107 = vsub.f32 %v4064, %v4895
        %v5108 = vsub.f32 %v4069, %v4897
        %v5109 = vsub.f32 %v4072, %v4899
        %v5110 = vsub.f32 %v4077, %v4901
        %v5111 = vsub.f32 %v4080, %v4903
        %v5112 = vsub.f32 %v4166, %v4905
        %v5113 = vsub.f32 %v4169, %v4907
        %v5114 = vsub.f32 %v4174, %v4909
        %v5115 = vsub.f32 %v4177, %v4911
        %v5116 = vsub.f32 %v4182, %v4913
        %v5117 = vsub.f32 %v4185, %v4915
        %v5118 = vsub.f32 %v4190, %v4917
        %v5119 = vsub.f32 %v4193, %v4919
        %v5120 = vsub.f32 %v4198, %v4921
        %v5121 = vsub.f32 %v4201, %v4923
        %v5122 = vsub.f32 %v4206, %v4925
        %v5123 = vsub.f32 %v4209, %v4927
        %v5124 = vsub.f32 %v4214, %v4929
        %v5125 = vsub.f32 %v4217, %v4931
        %v5126 = vsub.f32 %v4222, %v4933
        %v5127 = vsub.f32 %v4225, %v4935
        %v5128 = vsub.f32 %v4311, %v4937
        %v5129 = vsub.f32 %v4314, %v4939
        %v5130 = vsub.f32 %v4319, %v4941
        %v5131 = vsub.f32 %v4322, %v4943
        %v5132 = vsub.f32 %v4327, %v4945
        %v5133 = vsub.f32 %v4330, %v4947
        %v5134 = vsub.f32 %v4335, %v4949
        %v5135 = vsub.f32 %v4338, %v4951
        %v5136 = vsub.f32 %v4343, %v4953
        %v5137 = vsub.f32 %v4346, %v4955
        %v5138 = vsub.f32 %v4351, %v4957
        %v5139 = vsub.f32 %v4354, %v4959
        %v5140 = vsub.f32 %v4359, %v4961
        %v5141 = vsub.f32 %v4362, %v4963
        %v5142 = vsub.f32 %v4367, %v4965
        %v5143 = vsub.f32 %v4370, %v4967
        %v5144 = vsub.f32 %v4456, %v4969
        %v5145 = vsub.f32 %v4459, %v4971
        %v5146 = vsub.f32 %v4464, %v4973
        %v5147 = vsub.f32 %v4467, %v4975
        %v5148 = vsub.f32 %v4472, %v4977
        %v5149 = vsub.f32 %v4475, %v4979
        %v5150 = vsub.f32 %v4480, %v4981
        %v5151 = vsub.f32 %v4483, %v4983
        %v5152 = vsub.f32 %v4488, %v4985
        %v5153 = vsub.f32 %v4491, %v4987
        %v5154 = vsub.f32 %v4496, %v4989
        %v5155 = vsub.f32 %v4499, %v4991
        %v5156 = vsub.f32 %v4504, %v4993
        %v5157 = vsub.f32 %v4507, %v4995
        %v5158 = vsub.f32 %v4512, %v4997
        %v5159 = vsub.f32 %v4515, %v4999
        %v5160 = vsub.f32 %v4601, %v5001
        %v5161 = vsub.f32 %v4604, %v5003
        %v5162 = vsub.f32 %v4609, %v5005
        %v5163 = vsub.f32 %v4612, %v5007
        %v5164 = vsub.f32 %v4617, %v5009
        %v5165 = vsub.f32 %v4620, %v5011
        %v5166 = vsub.f32 %v4625, %v5013
        %v5167 = vsub.f32 %v4628, %v5015
        %v5168 = vsub.f32 %v4633, %v5017
        %v5169 = vsub.f32 %v4636, %v5019
        %v5170 = vsub.f32 %v4641, %v5021
        %v5171 = vsub.f32 %v4644, %v5023
        %v5172 = vsub.f32 %v4649, %v5025
        %v5173 = vsub.f32 %v4652, %v5027
        %v5174 = vsub.f32 %v4657, %v5029
        %v5175 = vsub.f32 %v4660, %v5031
        %v5176 = vsub.f32 %v4746, %v5033
        %v5177 = vsub.f32 %v4749, %v5035
        %v5178 = vsub.f32 %v4754, %v5037
        %v5179 = vsub.f32 %v4757, %v5039
        %v5180 = vsub.f32 %v4762, %v5041
        %v5181 = vsub.f32 %v4765, %v5043
        %v5182 = vsub.f32 %v4770, %v5045
        %v5183 = vsub.f32 %v4773, %v5047
        %v5184 = vsub.f32 %v4778, %v5049
        %v5185 = vsub.f32 %v4781, %v5051
        %v5186 = vsub.f32 %v4786, %v5053
        %v5187 = vsub.f32 %v4789, %v5055
        %v5188 = vsub.f32 %v4794, %v5057
        %v5189 = vsub.f32 %v4797, %v5059
        %v5190 = vsub.f32 %v4802, %v5061
        %v5191 = vsub.f32 %v4805, %v5063
        %v5192 = vmul.f32 %v5064, 1.442695
        %v5193 = vpow.pop %v5192
        %v5194 = vmul.f32 %v5065, 1.442695
        %v5195 = vpow.pop %v5194
        %v5196 = vmul.f32 %v5066, 1.442695
        %v5197 = vpow.pop %v5196
        %v5198 = vmul.f32 %v5067, 1.442695
        %v5199 = vpow.pop %v5198
        %v5200 = vmul.f32 %v5068, 1.442695
        %v5201 = vpow.pop %v5200
        %v5202 = vmul.f32 %v5069, 1.442695
        %v5203 = vpow.pop %v5202
        %v5204 = vmul.f32 %v5070, 1.442695
        %v5205 = vpow.pop %v5204
        %v5206 = vmul.f32 %v5071, 1.442695
        %v5207 = vpow.pop %v5206
        %v5208 = vmul.f32 %v5072, 1.442695
        %v5209 = vpow.pop %v5208
        %v5210 = vmul.f32 %v5073, 1.442695
        %v5211 = vpow.pop %v5210
        %v5212 = vmul.f32 %v5074, 1.442695
        %v5213 = vpow.pop %v5212
        %v5214 = vmul.f32 %v5075, 1.442695
        %v5215 = vpow.pop %v5214
        %v5216 = vmul.f32 %v5076, 1.442695
        %v5217 = vpow.pop %v5216
        %v5218 = vmul.f32 %v5077, 1.442695
        %v5219 = vpow.pop %v5218
        %v5220 = vmul.f32 %v5078, 1.442695
        %v5221 = vpow.pop %v5220
        %v5222 = vmul.f32 %v5079, 1.442695
        %v5223 = vpow.pop %v5222
        %v5224 = vmul.f32 %v5080, 1.442695
        %v5225 = vpow.pop %v5224
        %v5226 = vmul.f32 %v5081, 1.442695
        %v5227 = vpow.pop %v5226
        %v5228 = vmul.f32 %v5082, 1.442695
        %v5229 = vpow.pop %v5228
        %v5230 = vmul.f32 %v5083, 1.442695
        %v5231 = vpow.pop %v5230
        %v5232 = vmul.f32 %v5084, 1.442695
        %v5233 = vpow.pop %v5232
        %v5234 = vmul.f32 %v5085, 1.442695
        %v5235 = vpow.pop %v5234
        %v5236 = vmul.f32 %v5086, 1.442695
        %v5237 = vpow.pop %v5236
        %v5238 = vmul.f32 %v5087, 1.442695
        %v5239 = vpow.pop %v5238
        %v5240 = vmul.f32 %v5088, 1.442695
        %v5241 = vpow.pop %v5240
        %v5242 = vmul.f32 %v5089, 1.442695
        %v5243 = vpow.pop %v5242
        %v5244 = vmul.f32 %v5090, 1.442695
        %v5245 = vpow.pop %v5244
        %v5246 = vmul.f32 %v5091, 1.442695
        %v5247 = vpow.pop %v5246
        %v5248 = vmul.f32 %v5092, 1.442695
        %v5249 = vpow.pop %v5248
        %v5250 = vmul.f32 %v5093, 1.442695
        %v5251 = vpow.pop %v5250
        %v5252 = vmul.f32 %v5094, 1.442695
        %v5253 = vpow.pop %v5252
        %v5254 = vmul.f32 %v5095, 1.442695
        %v5255 = vpow.pop %v5254
        %v5256 = vmul.f32 %v5096, 1.442695
        %v5257 = vpow.pop %v5256
        %v5258 = vmul.f32 %v5097, 1.442695
        %v5259 = vpow.pop %v5258
        %v5260 = vmul.f32 %v5098, 1.442695
        %v5261 = vpow.pop %v5260
        %v5262 = vmul.f32 %v5099, 1.442695
        %v5263 = vpow.pop %v5262
        %v5264 = vmul.f32 %v5100, 1.442695
        %v5265 = vpow.pop %v5264
        %v5266 = vmul.f32 %v5101, 1.442695
        %v5267 = vpow.pop %v5266
        %v5268 = vmul.f32 %v5102, 1.442695
        %v5269 = vpow.pop %v5268
        %v5270 = vmul.f32 %v5103, 1.442695
        %v5271 = vpow.pop %v5270
        %v5272 = vmul.f32 %v5104, 1.442695
        %v5273 = vpow.pop %v5272
        %v5274 = vmul.f32 %v5105, 1.442695
        %v5275 = vpow.pop %v5274
        %v5276 = vmul.f32 %v5106, 1.442695
        %v5277 = vpow.pop %v5276
        %v5278 = vmul.f32 %v5107, 1.442695
        %v5279 = vpow.pop %v5278
        %v5280 = vmul.f32 %v5108, 1.442695
        %v5281 = vpow.pop %v5280
        %v5282 = vmul.f32 %v5109, 1.442695
        %v5283 = vpow.pop %v5282
        %v5284 = vmul.f32 %v5110, 1.442695
        %v5285 = vpow.pop %v5284
        %v5286 = vmul.f32 %v5111, 1.442695
        %v5287 = vpow.pop %v5286
        %v5288 = vmul.f32 %v5112, 1.442695
        %v5289 = vpow.pop %v5288
        %v5290 = vmul.f32 %v5113, 1.442695
        %v5291 = vpow.pop %v5290
        %v5292 = vmul.f32 %v5114, 1.442695
        %v5293 = vpow.pop %v5292
        %v5294 = vmul.f32 %v5115, 1.442695
        %v5295 = vpow.pop %v5294
        %v5296 = vmul.f32 %v5116, 1.442695
        %v5297 = vpow.pop %v5296
        %v5298 = vmul.f32 %v5117, 1.442695
        %v5299 = vpow.pop %v5298
        %v5300 = vmul.f32 %v5118, 1.442695
        %v5301 = vpow.pop %v5300
        %v5302 = vmul.f32 %v5119, 1.442695
        %v5303 = vpow.pop %v5302
        %v5304 = vmul.f32 %v5120, 1.442695
        %v5305 = vpow.pop %v5304
        %v5306 = vmul.f32 %v5121, 1.442695
        %v5307 = vpow.pop %v5306
        %v5308 = vmul.f32 %v5122, 1.442695
        %v5309 = vpow.pop %v5308
        %v5310 = vmul.f32 %v5123, 1.442695
        %v5311 = vpow.pop %v5310
        %v5312 = vmul.f32 %v5124, 1.442695
        %v5313 = vpow.pop %v5312
        %v5314 = vmul.f32 %v5125, 1.442695
        %v5315 = vpow.pop %v5314
        %v5316 = vmul.f32 %v5126, 1.442695
        %v5317 = vpow.pop %v5316
        %v5318 = vmul.f32 %v5127, 1.442695
        %v5319 = vpow.pop %v5318
        %v5320 = vmul.f32 %v5128, 1.442695
        %v5321 = vpow.pop %v5320
        %v5322 = vmul.f32 %v5129, 1.442695
        %v5323 = vpow.pop %v5322
        %v5324 = vmul.f32 %v5130, 1.442695
        %v5325 = vpow.pop %v5324
        %v5326 = vmul.f32 %v5131, 1.442695
        %v5327 = vpow.pop %v5326
        %v5328 = vmul.f32 %v5132, 1.442695
        %v5329 = vpow.pop %v5328
        %v5330 = vmul.f32 %v5133, 1.442695
        %v5331 = vpow.pop %v5330
        %v5332 = vmul.f32 %v5134, 1.442695
        %v5333 = vpow.pop %v5332
        %v5334 = vmul.f32 %v5135, 1.442695
        %v5335 = vpow.pop %v5334
        %v5336 = vmul.f32 %v5136, 1.442695
        %v5337 = vpow.pop %v5336
        %v5338 = vmul.f32 %v5137, 1.442695
        %v5339 = vpow.pop %v5338
        %v5340 = vmul.f32 %v5138, 1.442695
        %v5341 = vpow.pop %v5340
        %v5342 = vmul.f32 %v5139, 1.442695
        %v5343 = vpow.pop %v5342
        %v5344 = vmul.f32 %v5140, 1.442695
        %v5345 = vpow.pop %v5344
        %v5346 = vmul.f32 %v5141, 1.442695
        %v5347 = vpow.pop %v5346
        %v5348 = vmul.f32 %v5142, 1.442695
        %v5349 = vpow.pop %v5348
        %v5350 = vmul.f32 %v5143, 1.442695
        %v5351 = vpow.pop %v5350
        %v5352 = vmul.f32 %v5144, 1.442695
        %v5353 = vpow.pop %v5352
        %v5354 = vmul.f32 %v5145, 1.442695
        %v5355 = vpow.pop %v5354
        %v5356 = vmul.f32 %v5146, 1.442695
        %v5357 = vpow.pop %v5356
        %v5358 = vmul.f32 %v5147, 1.442695
        %v5359 = vpow.pop %v5358
        %v5360 = vmul.f32 %v5148, 1.442695
        %v5361 = vpow.pop %v5360
        %v5362 = vmul.f32 %v5149, 1.442695
        %v5363 = vpow.pop %v5362
        %v5364 = vmul.f32 %v5150, 1.442695
        %v5365 = vpow.pop %v5364
        %v5366 = vmul.f32 %v5151, 1.442695
        %v5367 = vpow.pop %v5366
        %v5368 = vmul.f32 %v5152, 1.442695
        %v5369 = vpow.pop %v5368
        %v5370 = vmul.f32 %v5153, 1.442695
        %v5371 = vpow.pop %v5370
        %v5372 = vmul.f32 %v5154, 1.442695
        %v5373 = vpow.pop %v5372
        %v5374 = vmul.f32 %v5155, 1.442695
        %v5375 = vpow.pop %v5374
        %v5376 = vmul.f32 %v5156, 1.442695
        %v5377 = vpow.pop %v5376
        %v5378 = vmul.f32 %v5157, 1.442695
        %v5379 = vpow.pop %v5378
        %v5380 = vmul.f32 %v5158, 1.442695
        %v5381 = vpow.pop %v5380
        %v5382 = vmul.f32 %v5159, 1.442695
        %v5383 = vpow.pop %v5382
        %v5384 = vmul.f32 %v5160, 1.442695
        %v5385 = vpow.pop %v5384
        %v5386 = vmul.f32 %v5161, 1.442695
        %v5387 = vpow.pop %v5386
        %v5388 = vmul.f32 %v5162, 1.442695
        %v5389 = vpow.pop %v5388
        %v5390 = vmul.f32 %v5163, 1.442695
        %v5391 = vpow.pop %v5390
        %v5392 = vmul.f32 %v5164, 1.442695
        %v5393 = vpow.pop %v5392
        %v5394 = vmul.f32 %v5165, 1.442695
        %v5395 = vpow.pop %v5394
        %v5396 = vmul.f32 %v5166, 1.442695
        %v5397 = vpow.pop %v5396
        %v5398 = vmul.f32 %v5167, 1.442695
        %v5399 = vpow.pop %v5398
        %v5400 = vmul.f32 %v5168, 1.442695
        %v5401 = vpow.pop %v5400
        %v5402 = vmul.f32 %v5169, 1.442695
        %v5403 = vpow.pop %v5402
        %v5404 = vmul.f32 %v5170, 1.442695
        %v5405 = vpow.pop %v5404
        %v5406 = vmul.f32 %v5171, 1.442695
        %v5407 = vpow.pop %v5406
        %v5408 = vmul.f32 %v5172, 1.442695
        %v5409 = vpow.pop %v5408
        %v5410 = vmul.f32 %v5173, 1.442695
        %v5411 = vpow.pop %v5410
        %v5412 = vmul.f32 %v5174, 1.442695
        %v5413 = vpow.pop %v5412
        %v5414 = vmul.f32 %v5175, 1.442695
        %v5415 = vpow.pop %v5414
        %v5416 = vmul.f32 %v5176, 1.442695
        %v5417 = vpow.pop %v5416
        %v5418 = vmul.f32 %v5177, 1.442695
        %v5419 = vpow.pop %v5418
        %v5420 = vmul.f32 %v5178, 1.442695
        %v5421 = vpow.pop %v5420
        %v5422 = vmul.f32 %v5179, 1.442695
        %v5423 = vpow.pop %v5422
        %v5424 = vmul.f32 %v5180, 1.442695
        %v5425 = vpow.pop %v5424
        %v5426 = vmul.f32 %v5181, 1.442695
        %v5427 = vpow.pop %v5426
        %v5428 = vmul.f32 %v5182, 1.442695
        %v5429 = vpow.pop %v5428
        %v5430 = vmul.f32 %v5183, 1.442695
        %v5431 = vpow.pop %v5430
        %v5432 = vmul.f32 %v5184, 1.442695
        %v5433 = vpow.pop %v5432
        %v5434 = vmul.f32 %v5185, 1.442695
        %v5435 = vpow.pop %v5434
        %v5436 = vmul.f32 %v5186, 1.442695
        %v5437 = vpow.pop %v5436
        %v5438 = vmul.f32 %v5187, 1.442695
        %v5439 = vpow.pop %v5438
        %v5440 = vmul.f32 %v5188, 1.442695
        %v5441 = vpow.pop %v5440
        %v5442 = vmul.f32 %v5189, 1.442695
        %v5443 = vpow.pop %v5442
        %v5444 = vmul.f32 %v5190, 1.442695
        %v5445 = vpow.pop %v5444
        %v5446 = vmul.f32 %v5191, 1.442695
        %v5447 = vpow.pop %v5446
        %5448 = vadd.xlane.f32.xlu0 %v5193
        %v5449 = vpop.xlane.xlu0 %5448
        %5450 = vadd.xlane.f32.xlu0 %v5195
        %v5451 = vpop.xlane.xlu0 %5450
        %5452 = vadd.xlane.f32.xlu0 %v5197
        %v5453 = vpop.xlane.xlu0 %5452
        %5454 = vadd.xlane.f32.xlu0 %v5199
        %v5455 = vpop.xlane.xlu0 %5454
        %5456 = vadd.xlane.f32.xlu0 %v5201
        %v5457 = vpop.xlane.xlu0 %5456
        %5458 = vadd.xlane.f32.xlu0 %v5203
        %v5459 = vpop.xlane.xlu0 %5458
        %5460 = vadd.xlane.f32.xlu0 %v5205
        %v5461 = vpop.xlane.xlu0 %5460
        %5462 = vadd.xlane.f32.xlu0 %v5207
        %v5463 = vpop.xlane.xlu0 %5462
        %5464 = vadd.xlane.f32.xlu0 %v5209
        %v5465 = vpop.xlane.xlu0 %5464
        %5466 = vadd.xlane.f32.xlu0 %v5211
        %v5467 = vpop.xlane.xlu0 %5466
        %5468 = vadd.xlane.f32.xlu0 %v5213
        %v5469 = vpop.xlane.xlu0 %5468
        %5470 = vadd.xlane.f32.xlu0 %v5215
        %v5471 = vpop.xlane.xlu0 %5470
        %5472 = vadd.xlane.f32.xlu0 %v5217
        %v5473 = vpop.xlane.xlu0 %5472
        %5474 = vadd.xlane.f32.xlu0 %v5219
        %v5475 = vpop.xlane.xlu0 %5474
        %5476 = vadd.xlane.f32.xlu0 %v5221
        %v5477 = vpop.xlane.xlu0 %5476
        %5478 = vadd.xlane.f32.xlu0 %v5223
        %v5479 = vpop.xlane.xlu0 %5478
        %5480 = vadd.xlane.f32.xlu0 %v5225
        %v5481 = vpop.xlane.xlu0 %5480
        %5482 = vadd.xlane.f32.xlu0 %v5227
        %v5483 = vpop.xlane.xlu0 %5482
        %5484 = vadd.xlane.f32.xlu0 %v5229
        %v5485 = vpop.xlane.xlu0 %5484
        %5486 = vadd.xlane.f32.xlu0 %v5231
        %v5487 = vpop.xlane.xlu0 %5486
        %5488 = vadd.xlane.f32.xlu0 %v5233
        %v5489 = vpop.xlane.xlu0 %5488
        %5490 = vadd.xlane.f32.xlu0 %v5235
        %v5491 = vpop.xlane.xlu0 %5490
        %5492 = vadd.xlane.f32.xlu0 %v5237
        %v5493 = vpop.xlane.xlu0 %5492
        %5494 = vadd.xlane.f32.xlu0 %v5239
        %v5495 = vpop.xlane.xlu0 %5494
        %5496 = vadd.xlane.f32.xlu0 %v5241
        %v5497 = vpop.xlane.xlu0 %5496
        %5498 = vadd.xlane.f32.xlu0 %v5243
        %v5499 = vpop.xlane.xlu0 %5498
        %5500 = vadd.xlane.f32.xlu0 %v5245
        %v5501 = vpop.xlane.xlu0 %5500
        %5502 = vadd.xlane.f32.xlu0 %v5247
        %v5503 = vpop.xlane.xlu0 %5502
        %5504 = vadd.xlane.f32.xlu0 %v5249
        %v5505 = vpop.xlane.xlu0 %5504
        %5506 = vadd.xlane.f32.xlu0 %v5251
        %v5507 = vpop.xlane.xlu0 %5506
        %5508 = vadd.xlane.f32.xlu0 %v5253
        %v5509 = vpop.xlane.xlu0 %5508
        %5510 = vadd.xlane.f32.xlu0 %v5255
        %v5511 = vpop.xlane.xlu0 %5510
        %5512 = vadd.xlane.f32.xlu0 %v5257
        %v5513 = vpop.xlane.xlu0 %5512
        %5514 = vadd.xlane.f32.xlu0 %v5259
        %v5515 = vpop.xlane.xlu0 %5514
        %5516 = vadd.xlane.f32.xlu0 %v5261
        %v5517 = vpop.xlane.xlu0 %5516
        %5518 = vadd.xlane.f32.xlu0 %v5263
        %v5519 = vpop.xlane.xlu0 %5518
        %5520 = vadd.xlane.f32.xlu0 %v5265
        %v5521 = vpop.xlane.xlu0 %5520
        %5522 = vadd.xlane.f32.xlu0 %v5267
        %v5523 = vpop.xlane.xlu0 %5522
        %5524 = vadd.xlane.f32.xlu0 %v5269
        %v5525 = vpop.xlane.xlu0 %5524
        %5526 = vadd.xlane.f32.xlu0 %v5271
        %v5527 = vpop.xlane.xlu0 %5526
        %5528 = vadd.xlane.f32.xlu0 %v5273
        %v5529 = vpop.xlane.xlu0 %5528
        %5530 = vadd.xlane.f32.xlu0 %v5275
        %v5531 = vpop.xlane.xlu0 %5530
        %5532 = vadd.xlane.f32.xlu0 %v5277
        %v5533 = vpop.xlane.xlu0 %5532
        %5534 = vadd.xlane.f32.xlu0 %v5279
        %v5535 = vpop.xlane.xlu0 %5534
        %5536 = vadd.xlane.f32.xlu0 %v5281
        %v5537 = vpop.xlane.xlu0 %5536
        %5538 = vadd.xlane.f32.xlu0 %v5283
        %v5539 = vpop.xlane.xlu0 %5538
        %5540 = vadd.xlane.f32.xlu0 %v5285
        %v5541 = vpop.xlane.xlu0 %5540
        %5542 = vadd.xlane.f32.xlu0 %v5287
        %v5543 = vpop.xlane.xlu0 %5542
        %5544 = vadd.xlane.f32.xlu0 %v5289
        %v5545 = vpop.xlane.xlu0 %5544
        %5546 = vadd.xlane.f32.xlu0 %v5291
        %v5547 = vpop.xlane.xlu0 %5546
        %5548 = vadd.xlane.f32.xlu0 %v5293
        %v5549 = vpop.xlane.xlu0 %5548
        %5550 = vadd.xlane.f32.xlu0 %v5295
        %v5551 = vpop.xlane.xlu0 %5550
        %5552 = vadd.xlane.f32.xlu0 %v5297
        %v5553 = vpop.xlane.xlu0 %5552
        %5554 = vadd.xlane.f32.xlu0 %v5299
        %v5555 = vpop.xlane.xlu0 %5554
        %5556 = vadd.xlane.f32.xlu0 %v5301
        %v5557 = vpop.xlane.xlu0 %5556
        %5558 = vadd.xlane.f32.xlu0 %v5303
        %v5559 = vpop.xlane.xlu0 %5558
        %5560 = vadd.xlane.f32.xlu0 %v5305
        %v5561 = vpop.xlane.xlu0 %5560
        %5562 = vadd.xlane.f32.xlu0 %v5307
        %v5563 = vpop.xlane.xlu0 %5562
        %5564 = vadd.xlane.f32.xlu0 %v5309
        %v5565 = vpop.xlane.xlu0 %5564
        %5566 = vadd.xlane.f32.xlu0 %v5311
        %v5567 = vpop.xlane.xlu0 %5566
        %5568 = vadd.xlane.f32.xlu0 %v5313
        %v5569 = vpop.xlane.xlu0 %5568
        %5570 = vadd.xlane.f32.xlu0 %v5315
        %v5571 = vpop.xlane.xlu0 %5570
        %5572 = vadd.xlane.f32.xlu0 %v5317
        %v5573 = vpop.xlane.xlu0 %5572
        %5574 = vadd.xlane.f32.xlu0 %v5319
        %v5575 = vpop.xlane.xlu0 %5574
        %5576 = vadd.xlane.f32.xlu0 %v5321
        %v5577 = vpop.xlane.xlu0 %5576
        %5578 = vadd.xlane.f32.xlu0 %v5323
        %v5579 = vpop.xlane.xlu0 %5578
        %5580 = vadd.xlane.f32.xlu0 %v5325
        %v5581 = vpop.xlane.xlu0 %5580
        %5582 = vadd.xlane.f32.xlu0 %v5327
        %v5583 = vpop.xlane.xlu0 %5582
        %5584 = vadd.xlane.f32.xlu0 %v5329
        %v5585 = vpop.xlane.xlu0 %5584
        %5586 = vadd.xlane.f32.xlu0 %v5331
        %v5587 = vpop.xlane.xlu0 %5586
        %5588 = vadd.xlane.f32.xlu0 %v5333
        %v5589 = vpop.xlane.xlu0 %5588
        %5590 = vadd.xlane.f32.xlu0 %v5335
        %v5591 = vpop.xlane.xlu0 %5590
        %5592 = vadd.xlane.f32.xlu0 %v5337
        %v5593 = vpop.xlane.xlu0 %5592
        %5594 = vadd.xlane.f32.xlu0 %v5339
        %v5595 = vpop.xlane.xlu0 %5594
        %5596 = vadd.xlane.f32.xlu0 %v5341
        %v5597 = vpop.xlane.xlu0 %5596
        %5598 = vadd.xlane.f32.xlu0 %v5343
        %v5599 = vpop.xlane.xlu0 %5598
        %5600 = vadd.xlane.f32.xlu0 %v5345
        %v5601 = vpop.xlane.xlu0 %5600
        %5602 = vadd.xlane.f32.xlu0 %v5347
        %v5603 = vpop.xlane.xlu0 %5602
        %5604 = vadd.xlane.f32.xlu0 %v5349
        %v5605 = vpop.xlane.xlu0 %5604
        %5606 = vadd.xlane.f32.xlu0 %v5351
        %v5607 = vpop.xlane.xlu0 %5606
        %5608 = vadd.xlane.f32.xlu0 %v5353
        %v5609 = vpop.xlane.xlu0 %5608
        %5610 = vadd.xlane.f32.xlu0 %v5355
        %v5611 = vpop.xlane.xlu0 %5610
        %5612 = vadd.xlane.f32.xlu0 %v5357
        %v5613 = vpop.xlane.xlu0 %5612
        %5614 = vadd.xlane.f32.xlu0 %v5359
        %v5615 = vpop.xlane.xlu0 %5614
        %5616 = vadd.xlane.f32.xlu0 %v5361
        %v5617 = vpop.xlane.xlu0 %5616
        %5618 = vadd.xlane.f32.xlu0 %v5363
        %v5619 = vpop.xlane.xlu0 %5618
        %5620 = vadd.xlane.f32.xlu0 %v5365
        %v5621 = vpop.xlane.xlu0 %5620
        %5622 = vadd.xlane.f32.xlu0 %v5367
        %v5623 = vpop.xlane.xlu0 %5622
        %5624 = vadd.xlane.f32.xlu0 %v5369
        %v5625 = vpop.xlane.xlu0 %5624
        %5626 = vadd.xlane.f32.xlu0 %v5371
        %v5627 = vpop.xlane.xlu0 %5626
        %5628 = vadd.xlane.f32.xlu0 %v5373
        %v5629 = vpop.xlane.xlu0 %5628
        %5630 = vadd.xlane.f32.xlu0 %v5375
        %v5631 = vpop.xlane.xlu0 %5630
        %5632 = vadd.xlane.f32.xlu0 %v5377
        %v5633 = vpop.xlane.xlu0 %5632
        %5634 = vadd.xlane.f32.xlu0 %v5379
        %v5635 = vpop.xlane.xlu0 %5634
        %5636 = vadd.xlane.f32.xlu0 %v5381
        %v5637 = vpop.xlane.xlu0 %5636
        %5638 = vadd.xlane.f32.xlu0 %v5383
        %v5639 = vpop.xlane.xlu0 %5638
        %5640 = vadd.xlane.f32.xlu0 %v5385
        %v5641 = vpop.xlane.xlu0 %5640
        %5642 = vadd.xlane.f32.xlu0 %v5387
        %v5643 = vpop.xlane.xlu0 %5642
        %5644 = vadd.xlane.f32.xlu0 %v5389
        %v5645 = vpop.xlane.xlu0 %5644
        %5646 = vadd.xlane.f32.xlu0 %v5391
        %v5647 = vpop.xlane.xlu0 %5646
        %5648 = vadd.xlane.f32.xlu0 %v5393
        %v5649 = vpop.xlane.xlu0 %5648
        %5650 = vadd.xlane.f32.xlu0 %v5395
        %v5651 = vpop.xlane.xlu0 %5650
        %5652 = vadd.xlane.f32.xlu0 %v5397
        %v5653 = vpop.xlane.xlu0 %5652
        %5654 = vadd.xlane.f32.xlu0 %v5399
        %v5655 = vpop.xlane.xlu0 %5654
        %5656 = vadd.xlane.f32.xlu0 %v5401
        %v5657 = vpop.xlane.xlu0 %5656
        %5658 = vadd.xlane.f32.xlu0 %v5403
        %v5659 = vpop.xlane.xlu0 %5658
        %5660 = vadd.xlane.f32.xlu0 %v5405
        %v5661 = vpop.xlane.xlu0 %5660
        %5662 = vadd.xlane.f32.xlu0 %v5407
        %v5663 = vpop.xlane.xlu0 %5662
        %5664 = vadd.xlane.f32.xlu0 %v5409
        %v5665 = vpop.xlane.xlu0 %5664
        %5666 = vadd.xlane.f32.xlu0 %v5411
        %v5667 = vpop.xlane.xlu0 %5666
        %5668 = vadd.xlane.f32.xlu0 %v5413
        %v5669 = vpop.xlane.xlu0 %5668
        %5670 = vadd.xlane.f32.xlu0 %v5415
        %v5671 = vpop.xlane.xlu0 %5670
        %5672 = vadd.xlane.f32.xlu0 %v5417
        %v5673 = vpop.xlane.xlu0 %5672
        %5674 = vadd.xlane.f32.xlu0 %v5419
        %v5675 = vpop.xlane.xlu0 %5674
        %5676 = vadd.xlane.f32.xlu0 %v5421
        %v5677 = vpop.xlane.xlu0 %5676
        %5678 = vadd.xlane.f32.xlu0 %v5423
        %v5679 = vpop.xlane.xlu0 %5678
        %5680 = vadd.xlane.f32.xlu0 %v5425
        %v5681 = vpop.xlane.xlu0 %5680
        %5682 = vadd.xlane.f32.xlu0 %v5427
        %v5683 = vpop.xlane.xlu0 %5682
        %5684 = vadd.xlane.f32.xlu0 %v5429
        %v5685 = vpop.xlane.xlu0 %5684
        %5686 = vadd.xlane.f32.xlu0 %v5431
        %v5687 = vpop.xlane.xlu0 %5686
        %5688 = vadd.xlane.f32.xlu0 %v5433
        %v5689 = vpop.xlane.xlu0 %5688
        %5690 = vadd.xlane.f32.xlu0 %v5435
        %v5691 = vpop.xlane.xlu0 %5690
        %5692 = vadd.xlane.f32.xlu0 %v5437
        %v5693 = vpop.xlane.xlu0 %5692
        %5694 = vadd.xlane.f32.xlu0 %v5439
        %v5695 = vpop.xlane.xlu0 %5694
        %5696 = vadd.xlane.f32.xlu0 %v5441
        %v5697 = vpop.xlane.xlu0 %5696
        %5698 = vadd.xlane.f32.xlu0 %v5443
        %v5699 = vpop.xlane.xlu0 %5698
        %5700 = vadd.xlane.f32.xlu0 %v5445
        %v5701 = vpop.xlane.xlu0 %5700
        %5702 = vadd.xlane.f32.xlu0 %v5447
        %v5703 = vpop.xlane.xlu0 %5702
        %v5704 = vrcp.pop %v5449
        %v5705 = vrcp.pop %v5451
        %v5706 = vrcp.pop %v5453
        %v5707 = vrcp.pop %v5455
        %v5708 = vrcp.pop %v5457
        %v5709 = vrcp.pop %v5459
        %v5710 = vrcp.pop %v5461
        %v5711 = vrcp.pop %v5463
        %v5712 = vrcp.pop %v5465
        %v5713 = vrcp.pop %v5467
        %v5714 = vrcp.pop %v5469
        %v5715 = vrcp.pop %v5471
        %v5716 = vrcp.pop %v5473
        %v5717 = vrcp.pop %v5475
        %v5718 = vrcp.pop %v5477
        %v5719 = vrcp.pop %v5479
        %v5720 = vrcp.pop %v5481
        %v5721 = vrcp.pop %v5483
        %v5722 = vrcp.pop %v5485
        %v5723 = vrcp.pop %v5487
        %v5724 = vrcp.pop %v5489
        %v5725 = vrcp.pop %v5491
        %v5726 = vrcp.pop %v5493
        %v5727 = vrcp.pop %v5495
        %v5728 = vrcp.pop %v5497
        %v5729 = vrcp.pop %v5499
        %v5730 = vrcp.pop %v5501
        %v5731 = vrcp.pop %v5503
        %v5732 = vrcp.pop %v5505
        %v5733 = vrcp.pop %v5507
        %v5734 = vrcp.pop %v5509
        %v5735 = vrcp.pop %v5511
        %v5736 = vrcp.pop %v5513
        %v5737 = vrcp.pop %v5515
        %v5738 = vrcp.pop %v5517
        %v5739 = vrcp.pop %v5519
        %v5740 = vrcp.pop %v5521
        %v5741 = vrcp.pop %v5523
        %v5742 = vrcp.pop %v5525
        %v5743 = vrcp.pop %v5527
        %v5744 = vrcp.pop %v5529
        %v5745 = vrcp.pop %v5531
        %v5746 = vrcp.pop %v5533
        %v5747 = vrcp.pop %v5535
        %v5748 = vrcp.pop %v5537
        %v5749 = vrcp.pop %v5539
        %v5750 = vrcp.pop %v5541
        %v5751 = vrcp.pop %v5543
        %v5752 = vrcp.pop %v5545
        %v5753 = vrcp.pop %v5547
        %v5754 = vrcp.pop %v5549
        %v5755 = vrcp.pop %v5551
        %v5756 = vrcp.pop %v5553
        %v5757 = vrcp.pop %v5555
        %v5758 = vrcp.pop %v5557
        %v5759 = vrcp.pop %v5559
        %v5760 = vrcp.pop %v5561
        %v5761 = vrcp.pop %v5563
        %v5762 = vrcp.pop %v5565
        %v5763 = vrcp.pop %v5567
        %v5764 = vrcp.pop %v5569
        %v5765 = vrcp.pop %v5571
        %v5766 = vrcp.pop %v5573
        %v5767 = vrcp.pop %v5575
        %v5768 = vrcp.pop %v5577
        %v5769 = vrcp.pop %v5579
        %v5770 = vrcp.pop %v5581
        %v5771 = vrcp.pop %v5583
        %v5772 = vrcp.pop %v5585
        %v5773 = vrcp.pop %v5587
        %v5774 = vrcp.pop %v5589
        %v5775 = vrcp.pop %v5591
        %v5776 = vrcp.pop %v5593
        %v5777 = vrcp.pop %v5595
        %v5778 = vrcp.pop %v5597
        %v5779 = vrcp.pop %v5599
        %v5780 = vrcp.pop %v5601
        %v5781 = vrcp.pop %v5603
        %v5782 = vrcp.pop %v5605
        %v5783 = vrcp.pop %v5607
        %v5784 = vrcp.pop %v5609
        %v5785 = vrcp.pop %v5611
        %v5786 = vrcp.pop %v5613
        %v5787 = vrcp.pop %v5615
        %v5788 = vrcp.pop %v5617
        %v5789 = vrcp.pop %v5619
        %v5790 = vrcp.pop %v5621
        %v5791 = vrcp.pop %v5623
        %v5792 = vrcp.pop %v5625
        %v5793 = vrcp.pop %v5627
        %v5794 = vrcp.pop %v5629
        %v5795 = vrcp.pop %v5631
        %v5796 = vrcp.pop %v5633
        %v5797 = vrcp.pop %v5635
        %v5798 = vrcp.pop %v5637
        %v5799 = vrcp.pop %v5639
        %v5800 = vrcp.pop %v5641
        %v5801 = vrcp.pop %v5643
        %v5802 = vrcp.pop %v5645
        %v5803 = vrcp.pop %v5647
        %v5804 = vrcp.pop %v5649
        %v5805 = vrcp.pop %v5651
        %v5806 = vrcp.pop %v5653
        %v5807 = vrcp.pop %v5655
        %v5808 = vrcp.pop %v5657
        %v5809 = vrcp.pop %v5659
        %v5810 = vrcp.pop %v5661
        %v5811 = vrcp.pop %v5663
        %v5812 = vrcp.pop %v5665
        %v5813 = vrcp.pop %v5667
        %v5814 = vrcp.pop %v5669
        %v5815 = vrcp.pop %v5671
        %v5816 = vrcp.pop %v5673
        %v5817 = vrcp.pop %v5675
        %v5818 = vrcp.pop %v5677
        %v5819 = vrcp.pop %v5679
        %v5820 = vrcp.pop %v5681
        %v5821 = vrcp.pop %v5683
        %v5822 = vrcp.pop %v5685
        %v5823 = vrcp.pop %v5687
        %v5824 = vrcp.pop %v5689
        %v5825 = vrcp.pop %v5691
        %v5826 = vrcp.pop %v5693
        %v5827 = vrcp.pop %v5695
        %v5828 = vrcp.pop %v5697
        %v5829 = vrcp.pop %v5699
        %v5830 = vrcp.pop %v5701
        %v5831 = vrcp.pop %v5703
        %v5832 = vmul.f32 %v5193, %v5704
        %v5833 = vmul.f32 %v5195, %v5705
        %v5834 = vmul.f32 %v5197, %v5706
        %v5835 = vmul.f32 %v5199, %v5707
        %v5836 = vmul.f32 %v5201, %v5708
        %v5837 = vmul.f32 %v5203, %v5709
        %v5838 = vmul.f32 %v5205, %v5710
        %v5839 = vmul.f32 %v5207, %v5711
        %v5840 = vmul.f32 %v5209, %v5712
        %v5841 = vmul.f32 %v5211, %v5713
        %v5842 = vmul.f32 %v5213, %v5714
        %v5843 = vmul.f32 %v5215, %v5715
        %v5844 = vmul.f32 %v5217, %v5716
        %v5845 = vmul.f32 %v5219, %v5717
        %v5846 = vmul.f32 %v5221, %v5718
        %v5847 = vmul.f32 %v5223, %v5719
        %v5848 = vmul.f32 %v5225, %v5720
        %v5849 = vmul.f32 %v5227, %v5721
        %v5850 = vmul.f32 %v5229, %v5722
        %v5851 = vmul.f32 %v5231, %v5723
        %v5852 = vmul.f32 %v5233, %v5724
        %v5853 = vmul.f32 %v5235, %v5725
        %v5854 = vmul.f32 %v5237, %v5726
        %v5855 = vmul.f32 %v5239, %v5727
        %v5856 = vmul.f32 %v5241, %v5728
        %v5857 = vmul.f32 %v5243, %v5729
        %v5858 = vmul.f32 %v5245, %v5730
        %v5859 = vmul.f32 %v5247, %v5731
        %v5860 = vmul.f32 %v5249, %v5732
        %v5861 = vmul.f32 %v5251, %v5733
        %v5862 = vmul.f32 %v5253, %v5734
        %v5863 = vmul.f32 %v5255, %v5735
        %v5864 = vmul.f32 %v5257, %v5736
        %v5865 = vmul.f32 %v5259, %v5737
        %v5866 = vmul.f32 %v5261, %v5738
        %v5867 = vmul.f32 %v5263, %v5739
        %v5868 = vmul.f32 %v5265, %v5740
        %v5869 = vmul.f32 %v5267, %v5741
        %v5870 = vmul.f32 %v5269, %v5742
        %v5871 = vmul.f32 %v5271, %v5743
        %v5872 = vmul.f32 %v5273, %v5744
        %v5873 = vmul.f32 %v5275, %v5745
        %v5874 = vmul.f32 %v5277, %v5746
        %v5875 = vmul.f32 %v5279, %v5747
        %v5876 = vmul.f32 %v5281, %v5748
        %v5877 = vmul.f32 %v5283, %v5749
        %v5878 = vmul.f32 %v5285, %v5750
        %v5879 = vmul.f32 %v5287, %v5751
        %v5880 = vmul.f32 %v5289, %v5752
        %v5881 = vmul.f32 %v5291, %v5753
        %v5882 = vmul.f32 %v5293, %v5754
        %v5883 = vmul.f32 %v5295, %v5755
        %v5884 = vmul.f32 %v5297, %v5756
        %v5885 = vmul.f32 %v5299, %v5757
        %v5886 = vmul.f32 %v5301, %v5758
        %v5887 = vmul.f32 %v5303, %v5759
        %v5888 = vmul.f32 %v5305, %v5760
        %v5889 = vmul.f32 %v5307, %v5761
        %v5890 = vmul.f32 %v5309, %v5762
        %v5891 = vmul.f32 %v5311, %v5763
        %v5892 = vmul.f32 %v5313, %v5764
        %v5893 = vmul.f32 %v5315, %v5765
        %v5894 = vmul.f32 %v5317, %v5766
        %v5895 = vmul.f32 %v5319, %v5767
        %v5896 = vmul.f32 %v5321, %v5768
        %v5897 = vmul.f32 %v5323, %v5769
        %v5898 = vmul.f32 %v5325, %v5770
        %v5899 = vmul.f32 %v5327, %v5771
        %v5900 = vmul.f32 %v5329, %v5772
        %v5901 = vmul.f32 %v5331, %v5773
        %v5902 = vmul.f32 %v5333, %v5774
        %v5903 = vmul.f32 %v5335, %v5775
        %v5904 = vmul.f32 %v5337, %v5776
        %v5905 = vmul.f32 %v5339, %v5777
        %v5906 = vmul.f32 %v5341, %v5778
        %v5907 = vmul.f32 %v5343, %v5779
        %v5908 = vmul.f32 %v5345, %v5780
        %v5909 = vmul.f32 %v5347, %v5781
        %v5910 = vmul.f32 %v5349, %v5782
        %v5911 = vmul.f32 %v5351, %v5783
        %v5912 = vmul.f32 %v5353, %v5784
        %v5913 = vmul.f32 %v5355, %v5785
        %v5914 = vmul.f32 %v5357, %v5786
        %v5915 = vmul.f32 %v5359, %v5787
        %v5916 = vmul.f32 %v5361, %v5788
        %v5917 = vmul.f32 %v5363, %v5789
        %v5918 = vmul.f32 %v5365, %v5790
        %v5919 = vmul.f32 %v5367, %v5791
        %v5920 = vmul.f32 %v5369, %v5792
        %v5921 = vmul.f32 %v5371, %v5793
        %v5922 = vmul.f32 %v5373, %v5794
        %v5923 = vmul.f32 %v5375, %v5795
        %v5924 = vmul.f32 %v5377, %v5796
        %v5925 = vmul.f32 %v5379, %v5797
        %v5926 = vmul.f32 %v5381, %v5798
        %v5927 = vmul.f32 %v5383, %v5799
        %v5928 = vmul.f32 %v5385, %v5800
        %v5929 = vmul.f32 %v5387, %v5801
        %v5930 = vmul.f32 %v5389, %v5802
        %v5931 = vmul.f32 %v5391, %v5803
        %v5932 = vmul.f32 %v5393, %v5804
        %v5933 = vmul.f32 %v5395, %v5805
        %v5934 = vmul.f32 %v5397, %v5806
        %v5935 = vmul.f32 %v5399, %v5807
        %v5936 = vmul.f32 %v5401, %v5808
        %v5937 = vmul.f32 %v5403, %v5809
        %v5938 = vmul.f32 %v5405, %v5810
        %v5939 = vmul.f32 %v5407, %v5811
        %v5940 = vmul.f32 %v5409, %v5812
        %v5941 = vmul.f32 %v5411, %v5813
        %v5942 = vmul.f32 %v5413, %v5814
        %v5943 = vmul.f32 %v5415, %v5815
        %v5944 = vmul.f32 %v5417, %v5816
        %v5945 = vmul.f32 %v5419, %v5817
        %v5946 = vmul.f32 %v5421, %v5818
        %v5947 = vmul.f32 %v5423, %v5819
        %v5948 = vmul.f32 %v5425, %v5820
        %v5949 = vmul.f32 %v5427, %v5821
        %v5950 = vmul.f32 %v5429, %v5822
        %v5951 = vmul.f32 %v5431, %v5823
        %v5952 = vmul.f32 %v5433, %v5824
        %v5953 = vmul.f32 %v5435, %v5825
        %v5954 = vmul.f32 %v5437, %v5826
        %v5955 = vmul.f32 %v5439, %v5827
        %v5956 = vmul.f32 %v5441, %v5828
        %v5957 = vmul.f32 %v5443, %v5829
        %v5958 = vmul.f32 %v5445, %v5830
        %v5959 = vmul.f32 %v5447, %v5831
        %v5960 = vpack.c.bf16 %v5833, %v5832
        %v5961 = vpack.c.bf16 %v5835, %v5834
        %v5962 = vpack.c.bf16 %v5837, %v5836
        %v5963 = vpack.c.bf16 %v5839, %v5838
        %v5964 = vpack.c.bf16 %v5841, %v5840
        %v5965 = vpack.c.bf16 %v5843, %v5842
        %v5966 = vpack.c.bf16 %v5845, %v5844
        %v5967 = vpack.c.bf16 %v5847, %v5846
        %v5968 = vpack.c.bf16 %v5849, %v5848
        %v5969 = vpack.c.bf16 %v5851, %v5850
        %v5970 = vpack.c.bf16 %v5853, %v5852
        %v5971 = vpack.c.bf16 %v5855, %v5854
        %v5972 = vpack.c.bf16 %v5857, %v5856
        %v5973 = vpack.c.bf16 %v5859, %v5858
        %v5974 = vpack.c.bf16 %v5861, %v5860
        %v5975 = vpack.c.bf16 %v5863, %v5862
        %v5976 = vpack.c.bf16 %v5865, %v5864
        %v5977 = vpack.c.bf16 %v5867, %v5866
        %v5978 = vpack.c.bf16 %v5869, %v5868
        %v5979 = vpack.c.bf16 %v5871, %v5870
        %v5980 = vpack.c.bf16 %v5873, %v5872
        %v5981 = vpack.c.bf16 %v5875, %v5874
        %v5982 = vpack.c.bf16 %v5877, %v5876
        %v5983 = vpack.c.bf16 %v5879, %v5878
        %v5984 = vpack.c.bf16 %v5881, %v5880
        %v5985 = vpack.c.bf16 %v5883, %v5882
        %v5986 = vpack.c.bf16 %v5885, %v5884
        %v5987 = vpack.c.bf16 %v5887, %v5886
        %v5988 = vpack.c.bf16 %v5889, %v5888
        %v5989 = vpack.c.bf16 %v5891, %v5890
        %v5990 = vpack.c.bf16 %v5893, %v5892
        %v5991 = vpack.c.bf16 %v5895, %v5894
        %v5992 = vpack.c.bf16 %v5897, %v5896
        %v5993 = vpack.c.bf16 %v5899, %v5898
        %v5994 = vpack.c.bf16 %v5901, %v5900
        %v5995 = vpack.c.bf16 %v5903, %v5902
        %v5996 = vpack.c.bf16 %v5905, %v5904
        %v5997 = vpack.c.bf16 %v5907, %v5906
        %v5998 = vpack.c.bf16 %v5909, %v5908
        %v5999 = vpack.c.bf16 %v5911, %v5910
        %v6000 = vpack.c.bf16 %v5913, %v5912
        %v6001 = vpack.c.bf16 %v5915, %v5914
        %v6002 = vpack.c.bf16 %v5917, %v5916
        %v6003 = vpack.c.bf16 %v5919, %v5918
        %v6004 = vpack.c.bf16 %v5921, %v5920
        %v6005 = vpack.c.bf16 %v5923, %v5922
        %v6006 = vpack.c.bf16 %v5925, %v5924
        %v6007 = vpack.c.bf16 %v5927, %v5926
        %v6008 = vpack.c.bf16 %v5929, %v5928
        %v6009 = vpack.c.bf16 %v5931, %v5930
        %v6010 = vpack.c.bf16 %v5933, %v5932
        %v6011 = vpack.c.bf16 %v5935, %v5934
        %v6012 = vpack.c.bf16 %v5937, %v5936
        %v6013 = vpack.c.bf16 %v5939, %v5938
        %v6014 = vpack.c.bf16 %v5941, %v5940
        %v6015 = vpack.c.bf16 %v5943, %v5942
        %v6016 = vpack.c.bf16 %v5945, %v5944
        %v6017 = vpack.c.bf16 %v5947, %v5946
        %v6018 = vpack.c.bf16 %v5949, %v5948
        %v6019 = vpack.c.bf16 %v5951, %v5950
        %v6020 = vpack.c.bf16 %v5953, %v5952
        %v6021 = vpack.c.bf16 %v5955, %v5954
        %v6022 = vpack.c.bf16 %v5957, %v5956
        %v6023 = vpack.c.bf16 %v5959, %v5958
        %6024 = vmatprep.subr.bf16.mxu0 0
        %6025 = vmatpush1.bf16.msra.mxu0 %v3567
        %6026 = vmatprep.subr.bf16.mxu0 0
        %6027 = vmatpush1.bf16.msra.mxu0 %v3568
        %6028 = vmatprep.subr.bf16.mxu0 0
        %6029 = vmatpush1.bf16.msra.mxu0 %v3569
        %6030 = vmatprep.subr.bf16.mxu0 0
        %6031 = vmatpush1.bf16.msra.mxu0 %v3570
        %6032 = vmatprep.subr.bf16.mxu0 0
        %6033 = vmatpush1.bf16.msra.mxu0 %v3571
        %6034 = vmatprep.subr.bf16.mxu0 0
        %6035 = vmatpush1.bf16.msra.mxu0 %v3572
        %6036 = vmatprep.subr.bf16.mxu0 0
        %6037 = vmatpush1.bf16.msra.mxu0 %v3573
        %6038 = vmatprep.subr.bf16.mxu0 0
        %6039 = vmatpush1.bf16.msra.mxu0 %v3574
        %6040 = vmatprep.subr.bf16.mxu0 0
        %6041 = vmatpush1.bf16.msra.mxu0 0
        %6042 = vmatprep.subr.bf16.mxu0 0
        %6043 = vmatpush1.bf16.msra.mxu0 0
        %6044 = vmatprep.subr.bf16.mxu0 0
        %6045 = vmatpush1.bf16.msra.mxu0 0
        %6046 = vmatprep.subr.bf16.mxu0 0
        %6047 = vmatpush1.bf16.msra.mxu0 0
        %6048 = vmatprep.subr.bf16.mxu0 0
        %6049 = vmatpush1.bf16.msra.mxu0 0
        %6050 = vmatprep.subr.bf16.mxu0 0
        %6051 = vmatpush1.bf16.msra.mxu0 0
        %6052 = vmatprep.subr.bf16.mxu0 0
        %6053 = vmatpush1.bf16.msra.mxu0 0
        %6054 = vmatprep.subr.bf16.mxu0 0
        %6055 = vmatpush1.bf16.msra.mxu0 0
        %6056 = vmatprep.mubr.bf16.mxu0 0
        %6057 = vmatmul.mubr.bf16.gmra.mrb[0].mxu0 %v5960
        %v6058 = vpop.f32.mrb[0].mxu0
        %v6059 = vadd.f32 0.0, %v6058
        %v6060 = vpop.f32.mrb[0].mxu0
        %v6061 = vpop.f32.mrb[0].mxu0
        %v6062 = vadd.f32 0.0, %v6061
        %v6063 = vpop.f32.mrb[0].mxu0
        %6064 = vmatprep.mubr.bf16.mxu0 0
        %6065 = vmatmul.mubr.bf16.gmra.mrb[0].mxu0 %v5961
        %v6066 = vpop.f32.mrb[0].mxu0
        %v6067 = vadd.f32 0.0, %v6066
        %v6068 = vpop.f32.mrb[0].mxu0
        %v6069 = vpop.f32.mrb[0].mxu0
        %v6070 = vadd.f32 0.0, %v6069
        %v6071 = vpop.f32.mrb[0].mxu0
        %6072 = vmatprep.mubr.bf16.mxu0 0
        %6073 = vmatmul.mubr.bf16.gmra.mrb[0].mxu0 %v5962
        %v6074 = vpop.f32.mrb[0].mxu0
        %v6075 = vadd.f32 0.0, %v6074
        %v6076 = vpop.f32.mrb[0].mxu0
        %v6077 = vpop.f32.mrb[0].mxu0
        %v6078 = vadd.f32 0.0, %v6077
        %v6079 = vpop.f32.mrb[0].mxu0
        %6080 = vmatprep.mubr.bf16.mxu0 0
        %6081 = vmatmul.mubr.bf16.gmra.mrb[0].mxu0 %v5963
        %v6082 = vpop.f32.mrb[0].mxu0
        %v6083 = vadd.f32 0.0, %v6082
        %v6084 = vpop.f32.mrb[0].mxu0
        %v6085 = vpop.f32.mrb[0].mxu0
        %v6086 = vadd.f32 0.0, %v6085
        %v6087 = vpop.f32.mrb[0].mxu0
        %6088 = vmatprep.mubr.bf16.mxu0 0
        %6089 = vmatmul.mubr.bf16.gmra.mrb[0].mxu0 %v5964
        %v6090 = vpop.f32.mrb[0].mxu0
        %v6091 = vadd.f32 0.0, %v6090
        %v6092 = vpop.f32.mrb[0].mxu0
        %v6093 = vpop.f32.mrb[0].mxu0
        %v6094 = vadd.f32 0.0, %v6093
        %v6095 = vpop.f32.mrb[0].mxu0
        %6096 = vmatprep.mubr.bf16.mxu0 0
        %6097 = vmatmul.mubr.bf16.gmra.mrb[0].mxu0 %v5965
        %v6098 = vpop.f32.mrb[0].mxu0
        %v6099 = vadd.f32 0.0, %v6098
        %v6100 = vpop.f32.mrb[0].mxu0
        %v6101 = vpop.f32.mrb[0].mxu0
        %v6102 = vadd.f32 0.0, %v6101
        %v6103 = vpop.f32.mrb[0].mxu0
        %6104 = vmatprep.mubr.bf16.mxu0 0
        %6105 = vmatmul.mubr.bf16.gmra.mrb[0].mxu0 %v5966
        %v6106 = vpop.f32.mrb[0].mxu0
        %v6107 = vadd.f32 0.0, %v6106
        %v6108 = vpop.f32.mrb[0].mxu0
        %v6109 = vpop.f32.mrb[0].mxu0
        %v6110 = vadd.f32 0.0, %v6109
        %v6111 = vpop.f32.mrb[0].mxu0
        %6112 = vmatprep.mubr.bf16.mxu0 0
        %6113 = vmatmul.mubr.bf16.gmra.mrb[0].mxu0 %v5967
        %v6114 = vpop.f32.mrb[0].mxu0
        %v6115 = vadd.f32 0.0, %v6114
        %v6116 = vpop.f32.mrb[0].mxu0
        %v6117 = vpop.f32.mrb[0].mxu0
        %v6118 = vadd.f32 0.0, %v6117
        %v6119 = vpop.f32.mrb[0].mxu0
        %6120 = vdwg.mxu0
        %6121 = vmatprep.subr.bf16.mxu0 0
        %6122 = vmatpush1.bf16.msra.mxu0 %v3575
        %6123 = vmatprep.subr.bf16.mxu0 0
        %6124 = vmatpush1.bf16.msra.mxu0 %v3576
        %6125 = vmatprep.subr.bf16.mxu0 0
        %6126 = vmatpush1.bf16.msra.mxu0 %v3577
        %6127 = vmatprep.subr.bf16.mxu0 0
        %6128 = vmatpush1.bf16.msra.mxu0 %v3578
        %6129 = vmatprep.subr.bf16.mxu0 0
        %6130 = vmatpush1.bf16.msra.mxu0 %v3579
        %6131 = vmatprep.subr.bf16.mxu0 0
        %6132 = vmatpush1.bf16.msra.mxu0 %v3580
        %6133 = vmatprep.subr.bf16.mxu0 0
        %6134 = vmatpush1.bf16.msra.mxu0 %v3581
        %6135 = vmatprep.subr.bf16.mxu0 0
        %6136 = vmatpush1.bf16.msra.mxu0 %v3582
        %6137 = vmatprep.subr.bf16.mxu0 0
        %6138 = vmatpush1.bf16.msra.mxu0 0
        %6139 = vmatprep.subr.bf16.mxu0 0
        %6140 = vmatpush1.bf16.msra.mxu0 0
        %6141 = vmatprep.subr.bf16.mxu0 0
        %6142 = vmatpush1.bf16.msra.mxu0 0
        %6143 = vmatprep.subr.bf16.mxu0 0
        %6144 = vmatpush1.bf16.msra.mxu0 0
        %6145 = vmatprep.subr.bf16.mxu0 0
        %6146 = vmatpush1.bf16.msra.mxu0 0
        %6147 = vmatprep.subr.bf16.mxu0 0
        %6148 = vmatpush1.bf16.msra.mxu0 0
        %6149 = vmatprep.subr.bf16.mxu0 0
        %6150 = vmatpush1.bf16.msra.mxu0 0
        %6151 = vmatprep.subr.bf16.mxu0 0
        %6152 = vmatpush1.bf16.msra.mxu0 0
        %6153 = vmatprep.mubr.bf16.mxu0 0
        %6154 = vmatmul.mubr.bf16.gmra.mrb[0].mxu0 %v5968
        %v6155 = vpop.f32.mrb[0].mxu0
        %v6156 = vadd.f32 0.0, %v6155
        %v6157 = vpop.f32.mrb[0].mxu0
        %v6158 = vpop.f32.mrb[0].mxu0
        %v6159 = vadd.f32 0.0, %v6158
        %v6160 = vpop.f32.mrb[0].mxu0
        %6161 = vmatprep.mubr.bf16.mxu0 0
        %6162 = vmatmul.mubr.bf16.gmra.mrb[0].mxu0 %v5969
        %v6163 = vpop.f32.mrb[0].mxu0
        %v6164 = vadd.f32 0.0, %v6163
        %v6165 = vpop.f32.mrb[0].mxu0
        %v6166 = vpop.f32.mrb[0].mxu0
        %v6167 = vadd.f32 0.0, %v6166
        %v6168 = vpop.f32.mrb[0].mxu0
        %6169 = vmatprep.mubr.bf16.mxu0 0
        %6170 = vmatmul.mubr.bf16.gmra.mrb[0].mxu0 %v5970
        %v6171 = vpop.f32.mrb[0].mxu0
        %v6172 = vadd.f32 0.0, %v6171
        %v6173 = vpop.f32.mrb[0].mxu0
        %v6174 = vpop.f32.mrb[0].mxu0
        %v6175 = vadd.f32 0.0, %v6174
        %v6176 = vpop.f32.mrb[0].mxu0
        %6177 = vmatprep.mubr.bf16.mxu0 0
        %6178 = vmatmul.mubr.bf16.gmra.mrb[0].mxu0 %v5971
        %v6179 = vpop.f32.mrb[0].mxu0
        %v6180 = vadd.f32 0.0, %v6179
        %v6181 = vpop.f32.mrb[0].mxu0
        %v6182 = vpop.f32.mrb[0].mxu0
        %v6183 = vadd.f32 0.0, %v6182
        %v6184 = vpop.f32.mrb[0].mxu0
        %6185 = vmatprep.mubr.bf16.mxu0 0
        %6186 = vmatmul.mubr.bf16.gmra.mrb[0].mxu0 %v5972
        %v6187 = vpop.f32.mrb[0].mxu0
        %v6188 = vadd.f32 0.0, %v6187
        %v6189 = vpop.f32.mrb[0].mxu0
        %v6190 = vpop.f32.mrb[0].mxu0
        %v6191 = vadd.f32 0.0, %v6190
        %v6192 = vpop.f32.mrb[0].mxu0
        %6193 = vmatprep.mubr.bf16.mxu0 0
        %6194 = vmatmul.mubr.bf16.gmra.mrb[0].mxu0 %v5973
        %v6195 = vpop.f32.mrb[0].mxu0
        %v6196 = vadd.f32 0.0, %v6195
        %v6197 = vpop.f32.mrb[0].mxu0
        %v6198 = vpop.f32.mrb[0].mxu0
        %v6199 = vadd.f32 0.0, %v6198
        %v6200 = vpop.f32.mrb[0].mxu0
        %6201 = vmatprep.mubr.bf16.mxu0 0
        %6202 = vmatmul.mubr.bf16.gmra.mrb[0].mxu0 %v5974
        %v6203 = vpop.f32.mrb[0].mxu0
        %v6204 = vadd.f32 0.0, %v6203
        %v6205 = vpop.f32.mrb[0].mxu0
        %v6206 = vpop.f32.mrb[0].mxu0
        %v6207 = vadd.f32 0.0, %v6206
        %v6208 = vpop.f32.mrb[0].mxu0
        %6209 = vmatprep.mubr.bf16.mxu0 0
        %6210 = vmatmul.mubr.bf16.gmra.mrb[0].mxu0 %v5975
        %v6211 = vpop.f32.mrb[0].mxu0
        %v6212 = vadd.f32 0.0, %v6211
        %v6213 = vpop.f32.mrb[0].mxu0
        %v6214 = vpop.f32.mrb[0].mxu0
        %v6215 = vadd.f32 0.0, %v6214
        %v6216 = vpop.f32.mrb[0].mxu0
        %6217 = vdwg.mxu0
        %6218 = vmatprep.subr.bf16.mxu0 0
        %6219 = vmatpush1.bf16.msra.mxu0 %v3583
        %6220 = vmatprep.subr.bf16.mxu0 0
        %6221 = vmatpush1.bf16.msra.mxu0 %v3584
        %6222 = vmatprep.subr.bf16.mxu0 0
        %6223 = vmatpush1.bf16.msra.mxu0 %v3585
        %6224 = vmatprep.subr.bf16.mxu0 0
        %6225 = vmatpush1.bf16.msra.mxu0 %v3586
        %6226 = vmatprep.subr.bf16.mxu0 0
        %6227 = vmatpush1.bf16.msra.mxu0 %v3587
        %6228 = vmatprep.subr.bf16.mxu0 0
        %6229 = vmatpush1.bf16.msra.mxu0 %v3588
        %6230 = vmatprep.subr.bf16.mxu0 0
        %6231 = vmatpush1.bf16.msra.mxu0 %v3589
        %6232 = vmatprep.subr.bf16.mxu0 0
        %6233 = vmatpush1.bf16.msra.mxu0 %v3590
        %6234 = vmatprep.subr.bf16.mxu0 0
        %6235 = vmatpush1.bf16.msra.mxu0 0
        %6236 = vmatprep.subr.bf16.mxu0 0
        %6237 = vmatpush1.bf16.msra.mxu0 0
        %6238 = vmatprep.subr.bf16.mxu0 0
        %6239 = vmatpush1.bf16.msra.mxu0 0
        %6240 = vmatprep.subr.bf16.mxu0 0
        %6241 = vmatpush1.bf16.msra.mxu0 0
        %6242 = vmatprep.subr.bf16.mxu0 0
        %6243 = vmatpush1.bf16.msra.mxu0 0
        %6244 = vmatprep.subr.bf16.mxu0 0
        %6245 = vmatpush1.bf16.msra.mxu0 0
        %6246 = vmatprep.subr.bf16.mxu0 0
        %6247 = vmatpush1.bf16.msra.mxu0 0
        %6248 = vmatprep.subr.bf16.mxu0 0
        %6249 = vmatpush1.bf16.msra.mxu0 0
        %6250 = vmatprep.mubr.bf16.mxu0 0
        %6251 = vmatmul.mubr.bf16.gmra.mrb[0].mxu0 %v5976
        %v6252 = vpop.f32.mrb[0].mxu0
        %v6253 = vadd.f32 0.0, %v6252
        %v6254 = vpop.f32.mrb[0].mxu0
        %v6255 = vpop.f32.mrb[0].mxu0
        %v6256 = vadd.f32 0.0, %v6255
        %v6257 = vpop.f32.mrb[0].mxu0
        %6258 = vmatprep.mubr.bf16.mxu0 0
        %6259 = vmatmul.mubr.bf16.gmra.mrb[0].mxu0 %v5977
        %v6260 = vpop.f32.mrb[0].mxu0
        %v6261 = vadd.f32 0.0, %v6260
        %v6262 = vpop.f32.mrb[0].mxu0
        %v6263 = vpop.f32.mrb[0].mxu0
        %v6264 = vadd.f32 0.0, %v6263
        %v6265 = vpop.f32.mrb[0].mxu0
        %6266 = vmatprep.mubr.bf16.mxu0 0
        %6267 = vmatmul.mubr.bf16.gmra.mrb[0].mxu0 %v5978
        %v6268 = vpop.f32.mrb[0].mxu0
        %v6269 = vadd.f32 0.0, %v6268
        %v6270 = vpop.f32.mrb[0].mxu0
        %v6271 = vpop.f32.mrb[0].mxu0
        %v6272 = vadd.f32 0.0, %v6271
        %v6273 = vpop.f32.mrb[0].mxu0
        %6274 = vmatprep.mubr.bf16.mxu0 0
        %6275 = vmatmul.mubr.bf16.gmra.mrb[0].mxu0 %v5979
        %v6276 = vpop.f32.mrb[0].mxu0
        %v6277 = vadd.f32 0.0, %v6276
        %v6278 = vpop.f32.mrb[0].mxu0
        %v6279 = vpop.f32.mrb[0].mxu0
        %v6280 = vadd.f32 0.0, %v6279
        %v6281 = vpop.f32.mrb[0].mxu0
        %6282 = vmatprep.mubr.bf16.mxu0 0
        %6283 = vmatmul.mubr.bf16.gmra.mrb[0].mxu0 %v5980
        %v6284 = vpop.f32.mrb[0].mxu0
        %v6285 = vadd.f32 0.0, %v6284
        %v6286 = vpop.f32.mrb[0].mxu0
        %v6287 = vpop.f32.mrb[0].mxu0
        %v6288 = vadd.f32 0.0, %v6287
        %v6289 = vpop.f32.mrb[0].mxu0
        %6290 = vmatprep.mubr.bf16.mxu0 0
        %6291 = vmatmul.mubr.bf16.gmra.mrb[0].mxu0 %v5981
        %v6292 = vpop.f32.mrb[0].mxu0
        %v6293 = vadd.f32 0.0, %v6292
        %v6294 = vpop.f32.mrb[0].mxu0
        %v6295 = vpop.f32.mrb[0].mxu0
        %v6296 = vadd.f32 0.0, %v6295
        %v6297 = vpop.f32.mrb[0].mxu0
        %6298 = vmatprep.mubr.bf16.mxu0 0
        %6299 = vmatmul.mubr.bf16.gmra.mrb[0].mxu0 %v5982
        %v6300 = vpop.f32.mrb[0].mxu0
        %v6301 = vadd.f32 0.0, %v6300
        %v6302 = vpop.f32.mrb[0].mxu0
        %v6303 = vpop.f32.mrb[0].mxu0
        %v6304 = vadd.f32 0.0, %v6303
        %v6305 = vpop.f32.mrb[0].mxu0
        %6306 = vmatprep.mubr.bf16.mxu0 0
        %6307 = vmatmul.mubr.bf16.gmra.mrb[0].mxu0 %v5983
        %v6308 = vpop.f32.mrb[0].mxu0
        %v6309 = vadd.f32 0.0, %v6308
        %v6310 = vpop.f32.mrb[0].mxu0
        %v6311 = vpop.f32.mrb[0].mxu0
        %v6312 = vadd.f32 0.0, %v6311
        %v6313 = vpop.f32.mrb[0].mxu0
        %6314 = vdwg.mxu0
        %6315 = vmatprep.subr.bf16.mxu0 0
        %6316 = vmatpush1.bf16.msra.mxu0 %v3591
        %6317 = vmatprep.subr.bf16.mxu0 0
        %6318 = vmatpush1.bf16.msra.mxu0 %v3592
        %6319 = vmatprep.subr.bf16.mxu0 0
        %6320 = vmatpush1.bf16.msra.mxu0 %v3593
        %6321 = vmatprep.subr.bf16.mxu0 0
        %6322 = vmatpush1.bf16.msra.mxu0 %v3594
        %6323 = vmatprep.subr.bf16.mxu0 0
        %6324 = vmatpush1.bf16.msra.mxu0 %v3595
        %6325 = vmatprep.subr.bf16.mxu0 0
        %6326 = vmatpush1.bf16.msra.mxu0 %v3596
        %6327 = vmatprep.subr.bf16.mxu0 0
        %6328 = vmatpush1.bf16.msra.mxu0 %v3597
        %6329 = vmatprep.subr.bf16.mxu0 0
        %6330 = vmatpush1.bf16.msra.mxu0 %v3598
        %6331 = vmatprep.subr.bf16.mxu0 0
        %6332 = vmatpush1.bf16.msra.mxu0 0
        %6333 = vmatprep.subr.bf16.mxu0 0
        %6334 = vmatpush1.bf16.msra.mxu0 0
        %6335 = vmatprep.subr.bf16.mxu0 0
        %6336 = vmatpush1.bf16.msra.mxu0 0
        %6337 = vmatprep.subr.bf16.mxu0 0
        %6338 = vmatpush1.bf16.msra.mxu0 0
        %6339 = vmatprep.subr.bf16.mxu0 0
        %6340 = vmatpush1.bf16.msra.mxu0 0
        %6341 = vmatprep.subr.bf16.mxu0 0
        %6342 = vmatpush1.bf16.msra.mxu0 0
        %6343 = vmatprep.subr.bf16.mxu0 0
        %6344 = vmatpush1.bf16.msra.mxu0 0
        %6345 = vmatprep.subr.bf16.mxu0 0
        %6346 = vmatpush1.bf16.msra.mxu0 0
        %6347 = vmatprep.mubr.bf16.mxu0 0
        %6348 = vmatmul.mubr.bf16.gmra.mrb[0].mxu0 %v5984
        %v6349 = vpop.f32.mrb[0].mxu0
        %v6350 = vadd.f32 0.0, %v6349
        %v6351 = vpop.f32.mrb[0].mxu0
        %v6352 = vpop.f32.mrb[0].mxu0
        %v6353 = vadd.f32 0.0, %v6352
        %v6354 = vpop.f32.mrb[0].mxu0
        %6355 = vmatprep.mubr.bf16.mxu0 0
        %6356 = vmatmul.mubr.bf16.gmra.mrb[0].mxu0 %v5985
        %v6357 = vpop.f32.mrb[0].mxu0
        %v6358 = vadd.f32 0.0, %v6357
        %v6359 = vpop.f32.mrb[0].mxu0
        %v6360 = vpop.f32.mrb[0].mxu0
        %v6361 = vadd.f32 0.0, %v6360
        %v6362 = vpop.f32.mrb[0].mxu0
        %6363 = vmatprep.mubr.bf16.mxu0 0
        %6364 = vmatmul.mubr.bf16.gmra.mrb[0].mxu0 %v5986
        %v6365 = vpop.f32.mrb[0].mxu0
        %v6366 = vadd.f32 0.0, %v6365
        %v6367 = vpop.f32.mrb[0].mxu0
        %v6368 = vpop.f32.mrb[0].mxu0
        %v6369 = vadd.f32 0.0, %v6368
        %v6370 = vpop.f32.mrb[0].mxu0
        %6371 = vmatprep.mubr.bf16.mxu0 0
        %6372 = vmatmul.mubr.bf16.gmra.mrb[0].mxu0 %v5987
        %v6373 = vpop.f32.mrb[0].mxu0
        %v6374 = vadd.f32 0.0, %v6373
        %v6375 = vpop.f32.mrb[0].mxu0
        %v6376 = vpop.f32.mrb[0].mxu0
        %v6377 = vadd.f32 0.0, %v6376
        %v6378 = vpop.f32.mrb[0].mxu0
        %6379 = vmatprep.mubr.bf16.mxu0 0
        %6380 = vmatmul.mubr.bf16.gmra.mrb[0].mxu0 %v5988
        %v6381 = vpop.f32.mrb[0].mxu0
        %v6382 = vadd.f32 0.0, %v6381
        %v6383 = vpop.f32.mrb[0].mxu0
        %v6384 = vpop.f32.mrb[0].mxu0
        %v6385 = vadd.f32 0.0, %v6384
        %v6386 = vpop.f32.mrb[0].mxu0
        %6387 = vmatprep.mubr.bf16.mxu0 0
        %6388 = vmatmul.mubr.bf16.gmra.mrb[0].mxu0 %v5989
        %v6389 = vpop.f32.mrb[0].mxu0
        %v6390 = vadd.f32 0.0, %v6389
        %v6391 = vpop.f32.mrb[0].mxu0
        %v6392 = vpop.f32.mrb[0].mxu0
        %v6393 = vadd.f32 0.0, %v6392
        %v6394 = vpop.f32.mrb[0].mxu0
        %6395 = vmatprep.mubr.bf16.mxu0 0
        %6396 = vmatmul.mubr.bf16.gmra.mrb[0].mxu0 %v5990
        %v6397 = vpop.f32.mrb[0].mxu0
        %v6398 = vadd.f32 0.0, %v6397
        %v6399 = vpop.f32.mrb[0].mxu0
        %v6400 = vpop.f32.mrb[0].mxu0
        %v6401 = vadd.f32 0.0, %v6400
        %v6402 = vpop.f32.mrb[0].mxu0
        %6403 = vmatprep.mubr.bf16.mxu0 0
        %6404 = vmatmul.mubr.bf16.gmra.mrb[0].mxu0 %v5991
        %v6405 = vpop.f32.mrb[0].mxu0
        %v6406 = vadd.f32 0.0, %v6405
        %v6407 = vpop.f32.mrb[0].mxu0
        %v6408 = vpop.f32.mrb[0].mxu0
        %v6409 = vadd.f32 0.0, %v6408
        %v6410 = vpop.f32.mrb[0].mxu0
        %6411 = vdwg.mxu0
        %6412 = vmatprep.subr.bf16.mxu0 0
        %6413 = vmatpush1.bf16.msra.mxu0 %v3599
        %6414 = vmatprep.subr.bf16.mxu0 0
        %6415 = vmatpush1.bf16.msra.mxu0 %v3600
        %6416 = vmatprep.subr.bf16.mxu0 0
        %6417 = vmatpush1.bf16.msra.mxu0 %v3601
        %6418 = vmatprep.subr.bf16.mxu0 0
        %6419 = vmatpush1.bf16.msra.mxu0 %v3602
        %6420 = vmatprep.subr.bf16.mxu0 0
        %6421 = vmatpush1.bf16.msra.mxu0 %v3603
        %6422 = vmatprep.subr.bf16.mxu0 0
        %6423 = vmatpush1.bf16.msra.mxu0 %v3604
        %6424 = vmatprep.subr.bf16.mxu0 0
        %6425 = vmatpush1.bf16.msra.mxu0 %v3605
        %6426 = vmatprep.subr.bf16.mxu0 0
        %6427 = vmatpush1.bf16.msra.mxu0 %v3606
        %6428 = vmatprep.subr.bf16.mxu0 0
        %6429 = vmatpush1.bf16.msra.mxu0 0
        %6430 = vmatprep.subr.bf16.mxu0 0
        %6431 = vmatpush1.bf16.msra.mxu0 0
        %6432 = vmatprep.subr.bf16.mxu0 0
        %6433 = vmatpush1.bf16.msra.mxu0 0
        %6434 = vmatprep.subr.bf16.mxu0 0
        %6435 = vmatpush1.bf16.msra.mxu0 0
        %6436 = vmatprep.subr.bf16.mxu0 0
        %6437 = vmatpush1.bf16.msra.mxu0 0
        %6438 = vmatprep.subr.bf16.mxu0 0
        %6439 = vmatpush1.bf16.msra.mxu0 0
        %6440 = vmatprep.subr.bf16.mxu0 0
        %6441 = vmatpush1.bf16.msra.mxu0 0
        %6442 = vmatprep.subr.bf16.mxu0 0
        %6443 = vmatpush1.bf16.msra.mxu0 0
        %6444 = vmatprep.mubr.bf16.mxu0 0
        %6445 = vmatmul.mubr.bf16.gmra.mrb[0].mxu0 %v5992
        %v6446 = vpop.f32.mrb[0].mxu0
        %v6447 = vadd.f32 0.0, %v6446
        %v6448 = vpop.f32.mrb[0].mxu0
        %v6449 = vpop.f32.mrb[0].mxu0
        %v6450 = vadd.f32 0.0, %v6449
        %v6451 = vpop.f32.mrb[0].mxu0
        %6452 = vmatprep.mubr.bf16.mxu0 0
        %6453 = vmatmul.mubr.bf16.gmra.mrb[0].mxu0 %v5993
        %v6454 = vpop.f32.mrb[0].mxu0
        %v6455 = vadd.f32 0.0, %v6454
        %v6456 = vpop.f32.mrb[0].mxu0
        %v6457 = vpop.f32.mrb[0].mxu0
        %v6458 = vadd.f32 0.0, %v6457
        %v6459 = vpop.f32.mrb[0].mxu0
        %6460 = vmatprep.mubr.bf16.mxu0 0
        %6461 = vmatmul.mubr.bf16.gmra.mrb[0].mxu0 %v5994
        %v6462 = vpop.f32.mrb[0].mxu0
        %v6463 = vadd.f32 0.0, %v6462
        %v6464 = vpop.f32.mrb[0].mxu0
        %v6465 = vpop.f32.mrb[0].mxu0
        %v6466 = vadd.f32 0.0, %v6465
        %v6467 = vpop.f32.mrb[0].mxu0
        %6468 = vmatprep.mubr.bf16.mxu0 0
        %6469 = vmatmul.mubr.bf16.gmra.mrb[0].mxu0 %v5995
        %v6470 = vpop.f32.mrb[0].mxu0
        %v6471 = vadd.f32 0.0, %v6470
        %v6472 = vpop.f32.mrb[0].mxu0
        %v6473 = vpop.f32.mrb[0].mxu0
        %v6474 = vadd.f32 0.0, %v6473
        %v6475 = vpop.f32.mrb[0].mxu0
        %6476 = vmatprep.mubr.bf16.mxu0 0
        %6477 = vmatmul.mubr.bf16.gmra.mrb[0].mxu0 %v5996
        %v6478 = vpop.f32.mrb[0].mxu0
        %v6479 = vadd.f32 0.0, %v6478
        %v6480 = vpop.f32.mrb[0].mxu0
        %v6481 = vpop.f32.mrb[0].mxu0
        %v6482 = vadd.f32 0.0, %v6481
        %v6483 = vpop.f32.mrb[0].mxu0
        %6484 = vmatprep.mubr.bf16.mxu0 0
        %6485 = vmatmul.mubr.bf16.gmra.mrb[0].mxu0 %v5997
        %v6486 = vpop.f32.mrb[0].mxu0
        %v6487 = vadd.f32 0.0, %v6486
        %v6488 = vpop.f32.mrb[0].mxu0
        %v6489 = vpop.f32.mrb[0].mxu0
        %v6490 = vadd.f32 0.0, %v6489
        %v6491 = vpop.f32.mrb[0].mxu0
        %6492 = vmatprep.mubr.bf16.mxu0 0
        %6493 = vmatmul.mubr.bf16.gmra.mrb[0].mxu0 %v5998
        %v6494 = vpop.f32.mrb[0].mxu0
        %v6495 = vadd.f32 0.0, %v6494
        %v6496 = vpop.f32.mrb[0].mxu0
        %v6497 = vpop.f32.mrb[0].mxu0
        %v6498 = vadd.f32 0.0, %v6497
        %v6499 = vpop.f32.mrb[0].mxu0
        %6500 = vmatprep.mubr.bf16.mxu0 0
        %6501 = vmatmul.mubr.bf16.gmra.mrb[0].mxu0 %v5999
        %v6502 = vpop.f32.mrb[0].mxu0
        %v6503 = vadd.f32 0.0, %v6502
        %v6504 = vpop.f32.mrb[0].mxu0
        %v6505 = vpop.f32.mrb[0].mxu0
        %v6506 = vadd.f32 0.0, %v6505
        %v6507 = vpop.f32.mrb[0].mxu0
        %6508 = vdwg.mxu0
        %6509 = vmatprep.subr.bf16.mxu0 0
        %6510 = vmatpush1.bf16.msra.mxu0 %v3607
        %6511 = vmatprep.subr.bf16.mxu0 0
        %6512 = vmatpush1.bf16.msra.mxu0 %v3608
        %6513 = vmatprep.subr.bf16.mxu0 0
        %6514 = vmatpush1.bf16.msra.mxu0 %v3609
        %6515 = vmatprep.subr.bf16.mxu0 0
        %6516 = vmatpush1.bf16.msra.mxu0 %v3610
        %6517 = vmatprep.subr.bf16.mxu0 0
        %6518 = vmatpush1.bf16.msra.mxu0 %v3611
        %6519 = vmatprep.subr.bf16.mxu0 0
        %6520 = vmatpush1.bf16.msra.mxu0 %v3612
        %6521 = vmatprep.subr.bf16.mxu0 0
        %6522 = vmatpush1.bf16.msra.mxu0 %v3613
        %6523 = vmatprep.subr.bf16.mxu0 0
        %6524 = vmatpush1.bf16.msra.mxu0 %v3614
        %6525 = vmatprep.subr.bf16.mxu0 0
        %6526 = vmatpush1.bf16.msra.mxu0 0
        %6527 = vmatprep.subr.bf16.mxu0 0
        %6528 = vmatpush1.bf16.msra.mxu0 0
        %6529 = vmatprep.subr.bf16.mxu0 0
        %6530 = vmatpush1.bf16.msra.mxu0 0
        %6531 = vmatprep.subr.bf16.mxu0 0
        %6532 = vmatpush1.bf16.msra.mxu0 0
        %6533 = vmatprep.subr.bf16.mxu0 0
        %6534 = vmatpush1.bf16.msra.mxu0 0
        %6535 = vmatprep.subr.bf16.mxu0 0
        %6536 = vmatpush1.bf16.msra.mxu0 0
        %6537 = vmatprep.subr.bf16.mxu0 0
        %6538 = vmatpush1.bf16.msra.mxu0 0
        %6539 = vmatprep.subr.bf16.mxu0 0
        %6540 = vmatpush1.bf16.msra.mxu0 0
        %6541 = vmatprep.mubr.bf16.mxu0 0
        %6542 = vmatmul.mubr.bf16.gmra.mrb[0].mxu0 %v6000
        %v6543 = vpop.f32.mrb[0].mxu0
        %v6544 = vadd.f32 0.0, %v6543
        %v6545 = vpop.f32.mrb[0].mxu0
        %v6546 = vpop.f32.mrb[0].mxu0
        %v6547 = vadd.f32 0.0, %v6546
        %v6548 = vpop.f32.mrb[0].mxu0
        %6549 = vmatprep.mubr.bf16.mxu0 0
        %6550 = vmatmul.mubr.bf16.gmra.mrb[0].mxu0 %v6001
        %v6551 = vpop.f32.mrb[0].mxu0
        %v6552 = vadd.f32 0.0, %v6551
        %v6553 = vpop.f32.mrb[0].mxu0
        %v6554 = vpop.f32.mrb[0].mxu0
        %v6555 = vadd.f32 0.0, %v6554
        %v6556 = vpop.f32.mrb[0].mxu0
        %6557 = vmatprep.mubr.bf16.mxu0 0
        %6558 = vmatmul.mubr.bf16.gmra.mrb[0].mxu0 %v6002
        %v6559 = vpop.f32.mrb[0].mxu0
        %v6560 = vadd.f32 0.0, %v6559
        %v6561 = vpop.f32.mrb[0].mxu0
        %v6562 = vpop.f32.mrb[0].mxu0
        %v6563 = vadd.f32 0.0, %v6562
        %v6564 = vpop.f32.mrb[0].mxu0
        %6565 = vmatprep.mubr.bf16.mxu0 0
        %6566 = vmatmul.mubr.bf16.gmra.mrb[0].mxu0 %v6003
        %v6567 = vpop.f32.mrb[0].mxu0
        %v6568 = vadd.f32 0.0, %v6567
        %v6569 = vpop.f32.mrb[0].mxu0
        %v6570 = vpop.f32.mrb[0].mxu0
        %v6571 = vadd.f32 0.0, %v6570
        %v6572 = vpop.f32.mrb[0].mxu0
        %6573 = vmatprep.mubr.bf16.mxu0 0
        %6574 = vmatmul.mubr.bf16.gmra.mrb[0].mxu0 %v6004
        %v6575 = vpop.f32.mrb[0].mxu0
        %v6576 = vadd.f32 0.0, %v6575
        %v6577 = vpop.f32.mrb[0].mxu0
        %v6578 = vpop.f32.mrb[0].mxu0
        %v6579 = vadd.f32 0.0, %v6578
        %v6580 = vpop.f32.mrb[0].mxu0
        %6581 = vmatprep.mubr.bf16.mxu0 0
        %6582 = vmatmul.mubr.bf16.gmra.mrb[0].mxu0 %v6005
        %v6583 = vpop.f32.mrb[0].mxu0
        %v6584 = vadd.f32 0.0, %v6583
        %v6585 = vpop.f32.mrb[0].mxu0
        %v6586 = vpop.f32.mrb[0].mxu0
        %v6587 = vadd.f32 0.0, %v6586
        %v6588 = vpop.f32.mrb[0].mxu0
        %6589 = vmatprep.mubr.bf16.mxu0 0
        %6590 = vmatmul.mubr.bf16.gmra.mrb[0].mxu0 %v6006
        %v6591 = vpop.f32.mrb[0].mxu0
        %v6592 = vadd.f32 0.0, %v6591
        %v6593 = vpop.f32.mrb[0].mxu0
        %v6594 = vpop.f32.mrb[0].mxu0
        %v6595 = vadd.f32 0.0, %v6594
        %v6596 = vpop.f32.mrb[0].mxu0
        %6597 = vmatprep.mubr.bf16.mxu0 0
        %6598 = vmatmul.mubr.bf16.gmra.mrb[0].mxu0 %v6007
        %v6599 = vpop.f32.mrb[0].mxu0
        %v6600 = vadd.f32 0.0, %v6599
        %v6601 = vpop.f32.mrb[0].mxu0
        %v6602 = vpop.f32.mrb[0].mxu0
        %v6603 = vadd.f32 0.0, %v6602
        %v6604 = vpop.f32.mrb[0].mxu0
        %6605 = vdwg.mxu0
        %6606 = vmatprep.subr.bf16.mxu0 0
        %6607 = vmatpush1.bf16.msra.mxu0 %v3615
        %6608 = vmatprep.subr.bf16.mxu0 0
        %6609 = vmatpush1.bf16.msra.mxu0 %v3616
        %6610 = vmatprep.subr.bf16.mxu0 0
        %6611 = vmatpush1.bf16.msra.mxu0 %v3617
        %6612 = vmatprep.subr.bf16.mxu0 0
        %6613 = vmatpush1.bf16.msra.mxu0 %v3618
        %6614 = vmatprep.subr.bf16.mxu0 0
        %6615 = vmatpush1.bf16.msra.mxu0 %v3619
        %6616 = vmatprep.subr.bf16.mxu0 0
        %6617 = vmatpush1.bf16.msra.mxu0 %v3620
        %6618 = vmatprep.subr.bf16.mxu0 0
        %6619 = vmatpush1.bf16.msra.mxu0 %v3621
        %6620 = vmatprep.subr.bf16.mxu0 0
        %6621 = vmatpush1.bf16.msra.mxu0 %v3622
        %6622 = vmatprep.subr.bf16.mxu0 0
        %6623 = vmatpush1.bf16.msra.mxu0 0
        %6624 = vmatprep.subr.bf16.mxu0 0
        %6625 = vmatpush1.bf16.msra.mxu0 0
        %6626 = vmatprep.subr.bf16.mxu0 0
        %6627 = vmatpush1.bf16.msra.mxu0 0
        %6628 = vmatprep.subr.bf16.mxu0 0
        %6629 = vmatpush1.bf16.msra.mxu0 0
        %6630 = vmatprep.subr.bf16.mxu0 0
        %6631 = vmatpush1.bf16.msra.mxu0 0
        %6632 = vmatprep.subr.bf16.mxu0 0
        %6633 = vmatpush1.bf16.msra.mxu0 0
        %6634 = vmatprep.subr.bf16.mxu0 0
        %6635 = vmatpush1.bf16.msra.mxu0 0
        %6636 = vmatprep.subr.bf16.mxu0 0
        %6637 = vmatpush1.bf16.msra.mxu0 0
        %6638 = vmatprep.mubr.bf16.mxu0 0
        %6639 = vmatmul.mubr.bf16.gmra.mrb[0].mxu0 %v6008
        %v6640 = vpop.f32.mrb[0].mxu0
        %v6641 = vadd.f32 0.0, %v6640
        %v6642 = vpop.f32.mrb[0].mxu0
        %v6643 = vpop.f32.mrb[0].mxu0
        %v6644 = vadd.f32 0.0, %v6643
        %v6645 = vpop.f32.mrb[0].mxu0
        %6646 = vmatprep.mubr.bf16.mxu0 0
        %6647 = vmatmul.mubr.bf16.gmra.mrb[0].mxu0 %v6009
        %v6648 = vpop.f32.mrb[0].mxu0
        %v6649 = vadd.f32 0.0, %v6648
        %v6650 = vpop.f32.mrb[0].mxu0
        %v6651 = vpop.f32.mrb[0].mxu0
        %v6652 = vadd.f32 0.0, %v6651
        %v6653 = vpop.f32.mrb[0].mxu0
        %6654 = vmatprep.mubr.bf16.mxu0 0
        %6655 = vmatmul.mubr.bf16.gmra.mrb[0].mxu0 %v6010
        %v6656 = vpop.f32.mrb[0].mxu0
        %v6657 = vadd.f32 0.0, %v6656
        %v6658 = vpop.f32.mrb[0].mxu0
        %v6659 = vpop.f32.mrb[0].mxu0
        %v6660 = vadd.f32 0.0, %v6659
        %v6661 = vpop.f32.mrb[0].mxu0
        %6662 = vmatprep.mubr.bf16.mxu0 0
        %6663 = vmatmul.mubr.bf16.gmra.mrb[0].mxu0 %v6011
        %v6664 = vpop.f32.mrb[0].mxu0
        %v6665 = vadd.f32 0.0, %v6664
        %v6666 = vpop.f32.mrb[0].mxu0
        %v6667 = vpop.f32.mrb[0].mxu0
        %v6668 = vadd.f32 0.0, %v6667
        %v6669 = vpop.f32.mrb[0].mxu0
        %6670 = vmatprep.mubr.bf16.mxu0 0
        %6671 = vmatmul.mubr.bf16.gmra.mrb[0].mxu0 %v6012
        %v6672 = vpop.f32.mrb[0].mxu0
        %v6673 = vadd.f32 0.0, %v6672
        %v6674 = vpop.f32.mrb[0].mxu0
        %v6675 = vpop.f32.mrb[0].mxu0
        %v6676 = vadd.f32 0.0, %v6675
        %v6677 = vpop.f32.mrb[0].mxu0
        %6678 = vmatprep.mubr.bf16.mxu0 0
        %6679 = vmatmul.mubr.bf16.gmra.mrb[0].mxu0 %v6013
        %v6680 = vpop.f32.mrb[0].mxu0
        %v6681 = vadd.f32 0.0, %v6680
        %v6682 = vpop.f32.mrb[0].mxu0
        %v6683 = vpop.f32.mrb[0].mxu0
        %v6684 = vadd.f32 0.0, %v6683
        %v6685 = vpop.f32.mrb[0].mxu0
        %6686 = vmatprep.mubr.bf16.mxu0 0
        %6687 = vmatmul.mubr.bf16.gmra.mrb[0].mxu0 %v6014
        %v6688 = vpop.f32.mrb[0].mxu0
        %v6689 = vadd.f32 0.0, %v6688
        %v6690 = vpop.f32.mrb[0].mxu0
        %v6691 = vpop.f32.mrb[0].mxu0
        %v6692 = vadd.f32 0.0, %v6691
        %v6693 = vpop.f32.mrb[0].mxu0
        %6694 = vmatprep.mubr.bf16.mxu0 0
        %6695 = vmatmul.mubr.bf16.gmra.mrb[0].mxu0 %v6015
        %v6696 = vpop.f32.mrb[0].mxu0
        %v6697 = vadd.f32 0.0, %v6696
        %v6698 = vpop.f32.mrb[0].mxu0
        %v6699 = vpop.f32.mrb[0].mxu0
        %v6700 = vadd.f32 0.0, %v6699
        %v6701 = vpop.f32.mrb[0].mxu0
        %6702 = vdwg.mxu0
        %6703 = vmatprep.subr.bf16.mxu0 0
        %6704 = vmatpush1.bf16.msra.mxu0 %v3623
        %6705 = vmatprep.subr.bf16.mxu0 0
        %6706 = vmatpush1.bf16.msra.mxu0 %v3624
        %6707 = vmatprep.subr.bf16.mxu0 0
        %6708 = vmatpush1.bf16.msra.mxu0 %v3625
        %6709 = vmatprep.subr.bf16.mxu0 0
        %6710 = vmatpush1.bf16.msra.mxu0 %v3626
        %6711 = vmatprep.subr.bf16.mxu0 0
        %6712 = vmatpush1.bf16.msra.mxu0 %v3627
        %6713 = vmatprep.subr.bf16.mxu0 0
        %6714 = vmatpush1.bf16.msra.mxu0 %v3628
        %6715 = vmatprep.subr.bf16.mxu0 0
        %6716 = vmatpush1.bf16.msra.mxu0 %v3629
        %6717 = vmatprep.subr.bf16.mxu0 0
        %6718 = vmatpush1.bf16.msra.mxu0 %v3630
        %6719 = vmatprep.subr.bf16.mxu0 0
        %6720 = vmatpush1.bf16.msra.mxu0 0
        %6721 = vmatprep.subr.bf16.mxu0 0
        %6722 = vmatpush1.bf16.msra.mxu0 0
        %6723 = vmatprep.subr.bf16.mxu0 0
        %6724 = vmatpush1.bf16.msra.mxu0 0
        %6725 = vmatprep.subr.bf16.mxu0 0
        %6726 = vmatpush1.bf16.msra.mxu0 0
        %6727 = vmatprep.subr.bf16.mxu0 0
        %6728 = vmatpush1.bf16.msra.mxu0 0
        %6729 = vmatprep.subr.bf16.mxu0 0
        %6730 = vmatpush1.bf16.msra.mxu0 0
        %6731 = vmatprep.subr.bf16.mxu0 0
        %6732 = vmatpush1.bf16.msra.mxu0 0
        %6733 = vmatprep.subr.bf16.mxu0 0
        %6734 = vmatpush1.bf16.msra.mxu0 0
        %6735 = vmatprep.mubr.bf16.mxu0 0
        %6736 = vmatmul.mubr.bf16.gmra.mrb[0].mxu0 %v6016
        %v6737 = vpop.f32.mrb[0].mxu0
        %v6738 = vadd.f32 0.0, %v6737
        %v6739 = vpop.f32.mrb[0].mxu0
        %v6740 = vpop.f32.mrb[0].mxu0
        %v6741 = vadd.f32 0.0, %v6740
        %v6742 = vpop.f32.mrb[0].mxu0
        %6743 = vmatprep.mubr.bf16.mxu0 0
        %6744 = vmatmul.mubr.bf16.gmra.mrb[0].mxu0 %v6017
        %v6745 = vpop.f32.mrb[0].mxu0
        %v6746 = vadd.f32 0.0, %v6745
        %v6747 = vpop.f32.mrb[0].mxu0
        %v6748 = vpop.f32.mrb[0].mxu0
        %v6749 = vadd.f32 0.0, %v6748
        %v6750 = vpop.f32.mrb[0].mxu0
        %6751 = vmatprep.mubr.bf16.mxu0 0
        %6752 = vmatmul.mubr.bf16.gmra.mrb[0].mxu0 %v6018
        %v6753 = vpop.f32.mrb[0].mxu0
        %v6754 = vadd.f32 0.0, %v6753
        %v6755 = vpop.f32.mrb[0].mxu0
        %v6756 = vpop.f32.mrb[0].mxu0
        %v6757 = vadd.f32 0.0, %v6756
        %v6758 = vpop.f32.mrb[0].mxu0
        %6759 = vmatprep.mubr.bf16.mxu0 0
        %6760 = vmatmul.mubr.bf16.gmra.mrb[0].mxu0 %v6019
        %v6761 = vpop.f32.mrb[0].mxu0
        %v6762 = vadd.f32 0.0, %v6761
        %v6763 = vpop.f32.mrb[0].mxu0
        %v6764 = vpop.f32.mrb[0].mxu0
        %v6765 = vadd.f32 0.0, %v6764
        %v6766 = vpop.f32.mrb[0].mxu0
        %6767 = vmatprep.mubr.bf16.mxu0 0
        %6768 = vmatmul.mubr.bf16.gmra.mrb[0].mxu0 %v6020
        %v6769 = vpop.f32.mrb[0].mxu0
        %v6770 = vadd.f32 0.0, %v6769
        %v6771 = vpop.f32.mrb[0].mxu0
        %v6772 = vpop.f32.mrb[0].mxu0
        %v6773 = vadd.f32 0.0, %v6772
        %v6774 = vpop.f32.mrb[0].mxu0
        %6775 = vmatprep.mubr.bf16.mxu0 0
        %6776 = vmatmul.mubr.bf16.gmra.mrb[0].mxu0 %v6021
        %v6777 = vpop.f32.mrb[0].mxu0
        %v6778 = vadd.f32 0.0, %v6777
        %v6779 = vpop.f32.mrb[0].mxu0
        %v6780 = vpop.f32.mrb[0].mxu0
        %v6781 = vadd.f32 0.0, %v6780
        %v6782 = vpop.f32.mrb[0].mxu0
        %6783 = vmatprep.mubr.bf16.mxu0 0
        %6784 = vmatmul.mubr.bf16.gmra.mrb[0].mxu0 %v6022
        %v6785 = vpop.f32.mrb[0].mxu0
        %v6786 = vadd.f32 0.0, %v6785
        %v6787 = vpop.f32.mrb[0].mxu0
        %v6788 = vpop.f32.mrb[0].mxu0
        %v6789 = vadd.f32 0.0, %v6788
        %v6790 = vpop.f32.mrb[0].mxu0
        %6791 = vmatprep.mubr.bf16.mxu0 0
        %6792 = vmatmul.mubr.bf16.gmra.mrb[0].mxu0 %v6023
        %v6793 = vpop.f32.mrb[0].mxu0
        %v6794 = vadd.f32 0.0, %v6793
        %v6795 = vpop.f32.mrb[0].mxu0
        %v6796 = vpop.f32.mrb[0].mxu0
        %v6797 = vadd.f32 0.0, %v6796
        %v6798 = vpop.f32.mrb[0].mxu0
        %6799 = vdwg.mxu0
        %6832 = vrot.lane.b32.xlu0 %v6253, 16
        %v6833 = vpop.permute.xlu0 %6832
        %6834 = vrot.lane.b32.xlu0 %v6256, 16
        %v6835 = vpop.permute.xlu0 %6834
        %6836 = vrot.lane.b32.xlu0 %v6261, 16
        %v6837 = vpop.permute.xlu0 %6836
        %6838 = vrot.lane.b32.xlu0 %v6264, 16
        %v6839 = vpop.permute.xlu0 %6838
        %6840 = vrot.lane.b32.xlu0 %v6269, 16
        %v6841 = vpop.permute.xlu0 %6840
        %6842 = vrot.lane.b32.xlu0 %v6272, 16
        %v6843 = vpop.permute.xlu0 %6842
        %6844 = vrot.lane.b32.xlu0 %v6277, 16
        %v6845 = vpop.permute.xlu0 %6844
        %6846 = vrot.lane.b32.xlu0 %v6280, 16
        %v6847 = vpop.permute.xlu0 %6846
        %6848 = vrot.lane.b32.xlu0 %v6285, 16
        %v6849 = vpop.permute.xlu0 %6848
        %6850 = vrot.lane.b32.xlu0 %v6288, 16
        %v6851 = vpop.permute.xlu0 %6850
        %6852 = vrot.lane.b32.xlu0 %v6293, 16
        %v6853 = vpop.permute.xlu0 %6852
        %6854 = vrot.lane.b32.xlu0 %v6296, 16
        %v6855 = vpop.permute.xlu0 %6854
        %6856 = vrot.lane.b32.xlu0 %v6301, 16
        %v6857 = vpop.permute.xlu0 %6856
        %6858 = vrot.lane.b32.xlu0 %v6304, 16
        %v6859 = vpop.permute.xlu0 %6858
        %6860 = vrot.lane.b32.xlu0 %v6309, 16
        %v6861 = vpop.permute.xlu0 %6860
        %6862 = vrot.lane.b32.xlu0 %v6312, 16
        %v6863 = vpop.permute.xlu0 %6862
        %6864 = vrot.lane.b32.xlu0 %v6350, 16
        %v6865 = vpop.permute.xlu0 %6864
        %6866 = vrot.lane.b32.xlu0 %v6353, 16
        %v6867 = vpop.permute.xlu0 %6866
        %6868 = vrot.lane.b32.xlu0 %v6358, 16
        %v6869 = vpop.permute.xlu0 %6868
        %6870 = vrot.lane.b32.xlu0 %v6361, 16
        %v6871 = vpop.permute.xlu0 %6870
        %6872 = vrot.lane.b32.xlu0 %v6366, 16
        %v6873 = vpop.permute.xlu0 %6872
        %6874 = vrot.lane.b32.xlu0 %v6369, 16
        %v6875 = vpop.permute.xlu0 %6874
        %6876 = vrot.lane.b32.xlu0 %v6374, 16
        %v6877 = vpop.permute.xlu0 %6876
        %6878 = vrot.lane.b32.xlu0 %v6377, 16
        %v6879 = vpop.permute.xlu0 %6878
        %6880 = vrot.lane.b32.xlu0 %v6382, 16
        %v6881 = vpop.permute.xlu0 %6880
        %6882 = vrot.lane.b32.xlu0 %v6385, 16
        %v6883 = vpop.permute.xlu0 %6882
        %6884 = vrot.lane.b32.xlu0 %v6390, 16
        %v6885 = vpop.permute.xlu0 %6884
        %6886 = vrot.lane.b32.xlu0 %v6393, 16
        %v6887 = vpop.permute.xlu0 %6886
        %6888 = vrot.lane.b32.xlu0 %v6398, 16
        %v6889 = vpop.permute.xlu0 %6888
        %6890 = vrot.lane.b32.xlu0 %v6401, 16
        %v6891 = vpop.permute.xlu0 %6890
        %6892 = vrot.lane.b32.xlu0 %v6406, 16
        %v6893 = vpop.permute.xlu0 %6892
        %6894 = vrot.lane.b32.xlu0 %v6409, 16
        %v6895 = vpop.permute.xlu0 %6894
        %6960 = vrot.lane.b32.xlu0 %v6447, 32
        %v6961 = vpop.permute.xlu0 %6960
        %6962 = vrot.lane.b32.xlu0 %v6450, 32
        %v6963 = vpop.permute.xlu0 %6962
        %6964 = vrot.lane.b32.xlu0 %v6455, 32
        %v6965 = vpop.permute.xlu0 %6964
        %6966 = vrot.lane.b32.xlu0 %v6458, 32
        %v6967 = vpop.permute.xlu0 %6966
        %6968 = vrot.lane.b32.xlu0 %v6463, 32
        %v6969 = vpop.permute.xlu0 %6968
        %6970 = vrot.lane.b32.xlu0 %v6466, 32
        %v6971 = vpop.permute.xlu0 %6970
        %6972 = vrot.lane.b32.xlu0 %v6471, 32
        %v6973 = vpop.permute.xlu0 %6972
        %6974 = vrot.lane.b32.xlu0 %v6474, 32
        %v6975 = vpop.permute.xlu0 %6974
        %6976 = vrot.lane.b32.xlu0 %v6479, 32
        %v6977 = vpop.permute.xlu0 %6976
        %6978 = vrot.lane.b32.xlu0 %v6482, 32
        %v6979 = vpop.permute.xlu0 %6978
        %6980 = vrot.lane.b32.xlu0 %v6487, 32
        %v6981 = vpop.permute.xlu0 %6980
        %6982 = vrot.lane.b32.xlu0 %v6490, 32
        %v6983 = vpop.permute.xlu0 %6982
        %6984 = vrot.lane.b32.xlu0 %v6495, 32
        %v6985 = vpop.permute.xlu0 %6984
        %6986 = vrot.lane.b32.xlu0 %v6498, 32
        %v6987 = vpop.permute.xlu0 %6986
        %6988 = vrot.lane.b32.xlu0 %v6503, 32
        %v6989 = vpop.permute.xlu0 %6988
        %6990 = vrot.lane.b32.xlu0 %v6506, 32
        %v6991 = vpop.permute.xlu0 %6990
        %6992 = vrot.lane.b32.xlu0 %v6544, 32
        %v6993 = vpop.permute.xlu0 %6992
        %6994 = vrot.lane.b32.xlu0 %v6547, 32
        %v6995 = vpop.permute.xlu0 %6994
        %6996 = vrot.lane.b32.xlu0 %v6552, 32
        %v6997 = vpop.permute.xlu0 %6996
        %6998 = vrot.lane.b32.xlu0 %v6555, 32
        %v6999 = vpop.permute.xlu0 %6998
        %7000 = vrot.lane.b32.xlu0 %v6560, 32
        %v7001 = vpop.permute.xlu0 %7000
        %7002 = vrot.lane.b32.xlu0 %v6563, 32
        %v7003 = vpop.permute.xlu0 %7002
        %7004 = vrot.lane.b32.xlu0 %v6568, 32
        %v7005 = vpop.permute.xlu0 %7004
        %7006 = vrot.lane.b32.xlu0 %v6571, 32
        %v7007 = vpop.permute.xlu0 %7006
        %7008 = vrot.lane.b32.xlu0 %v6576, 32
        %v7009 = vpop.permute.xlu0 %7008
        %7010 = vrot.lane.b32.xlu0 %v6579, 32
        %v7011 = vpop.permute.xlu0 %7010
        %7012 = vrot.lane.b32.xlu0 %v6584, 32
        %v7013 = vpop.permute.xlu0 %7012
        %7014 = vrot.lane.b32.xlu0 %v6587, 32
        %v7015 = vpop.permute.xlu0 %7014
        %7016 = vrot.lane.b32.xlu0 %v6592, 32
        %v7017 = vpop.permute.xlu0 %7016
        %7018 = vrot.lane.b32.xlu0 %v6595, 32
        %v7019 = vpop.permute.xlu0 %7018
        %7020 = vrot.lane.b32.xlu0 %v6600, 32
        %v7021 = vpop.permute.xlu0 %7020
        %7022 = vrot.lane.b32.xlu0 %v6603, 32
        %v7023 = vpop.permute.xlu0 %7022
        %7088 = vrot.lane.b32.xlu0 %v6641, 48
        %v7089 = vpop.permute.xlu0 %7088
        %7090 = vrot.lane.b32.xlu0 %v6644, 48
        %v7091 = vpop.permute.xlu0 %7090
        %7092 = vrot.lane.b32.xlu0 %v6649, 48
        %v7093 = vpop.permute.xlu0 %7092
        %7094 = vrot.lane.b32.xlu0 %v6652, 48
        %v7095 = vpop.permute.xlu0 %7094
        %7096 = vrot.lane.b32.xlu0 %v6657, 48
        %v7097 = vpop.permute.xlu0 %7096
        %7098 = vrot.lane.b32.xlu0 %v6660, 48
        %v7099 = vpop.permute.xlu0 %7098
        %7100 = vrot.lane.b32.xlu0 %v6665, 48
        %v7101 = vpop.permute.xlu0 %7100
        %7102 = vrot.lane.b32.xlu0 %v6668, 48
        %v7103 = vpop.permute.xlu0 %7102
        %7104 = vrot.lane.b32.xlu0 %v6673, 48
        %v7105 = vpop.permute.xlu0 %7104
        %7106 = vrot.lane.b32.xlu0 %v6676, 48
        %v7107 = vpop.permute.xlu0 %7106
        %7108 = vrot.lane.b32.xlu0 %v6681, 48
        %v7109 = vpop.permute.xlu0 %7108
        %7110 = vrot.lane.b32.xlu0 %v6684, 48
        %v7111 = vpop.permute.xlu0 %7110
        %7112 = vrot.lane.b32.xlu0 %v6689, 48
        %v7113 = vpop.permute.xlu0 %7112
        %7114 = vrot.lane.b32.xlu0 %v6692, 48
        %v7115 = vpop.permute.xlu0 %7114
        %7116 = vrot.lane.b32.xlu0 %v6697, 48
        %v7117 = vpop.permute.xlu0 %7116
        %7118 = vrot.lane.b32.xlu0 %v6700, 48
        %v7119 = vpop.permute.xlu0 %7118
        %7120 = vrot.lane.b32.xlu0 %v6738, 48
        %v7121 = vpop.permute.xlu0 %7120
        %7122 = vrot.lane.b32.xlu0 %v6741, 48
        %v7123 = vpop.permute.xlu0 %7122
        %7124 = vrot.lane.b32.xlu0 %v6746, 48
        %v7125 = vpop.permute.xlu0 %7124
        %7126 = vrot.lane.b32.xlu0 %v6749, 48
        %v7127 = vpop.permute.xlu0 %7126
        %7128 = vrot.lane.b32.xlu0 %v6754, 48
        %v7129 = vpop.permute.xlu0 %7128
        %7130 = vrot.lane.b32.xlu0 %v6757, 48
        %v7131 = vpop.permute.xlu0 %7130
        %7132 = vrot.lane.b32.xlu0 %v6762, 48
        %v7133 = vpop.permute.xlu0 %7132
        %7134 = vrot.lane.b32.xlu0 %v6765, 48
        %v7135 = vpop.permute.xlu0 %7134
        %7136 = vrot.lane.b32.xlu0 %v6770, 48
        %v7137 = vpop.permute.xlu0 %7136
        %7138 = vrot.lane.b32.xlu0 %v6773, 48
        %v7139 = vpop.permute.xlu0 %7138
        %7140 = vrot.lane.b32.xlu0 %v6778, 48
        %v7141 = vpop.permute.xlu0 %7140
        %7142 = vrot.lane.b32.xlu0 %v6781, 48
        %v7143 = vpop.permute.xlu0 %7142
        %7144 = vrot.lane.b32.xlu0 %v6786, 48
        %v7145 = vpop.permute.xlu0 %7144
        %7146 = vrot.lane.b32.xlu0 %v6789, 48
        %v7147 = vpop.permute.xlu0 %7146
        %7148 = vrot.lane.b32.xlu0 %v6794, 48
        %v7149 = vpop.permute.xlu0 %7148
        %7150 = vrot.lane.b32.xlu0 %v6797, 48
        %v7151 = vpop.permute.xlu0 %7150
        %v7184 = vsel %vm3647, %v6059, %v6833
        %v7185 = vsel %vm3647, %v6062, %v6835
        %v7186 = vsel %vm3647, %v6067, %v6837
        %v7187 = vsel %vm3647, %v6070, %v6839
        %v7188 = vsel %vm3647, %v6075, %v6841
        %v7189 = vsel %vm3647, %v6078, %v6843
        %v7190 = vsel %vm3647, %v6083, %v6845
        %v7191 = vsel %vm3647, %v6086, %v6847
        %v7192 = vsel %vm3647, %v6091, %v6849
        %v7193 = vsel %vm3647, %v6094, %v6851
        %v7194 = vsel %vm3647, %v6099, %v6853
        %v7195 = vsel %vm3647, %v6102, %v6855
        %v7196 = vsel %vm3647, %v6107, %v6857
        %v7197 = vsel %vm3647, %v6110, %v6859
        %v7198 = vsel %vm3647, %v6115, %v6861
        %v7199 = vsel %vm3647, %v6118, %v6863
        %v7200 = vsel %vm3647, %v6156, %v6865
        %v7201 = vsel %vm3647, %v6159, %v6867
        %v7202 = vsel %vm3647, %v6164, %v6869
        %v7203 = vsel %vm3647, %v6167, %v6871
        %v7204 = vsel %vm3647, %v6172, %v6873
        %v7205 = vsel %vm3647, %v6175, %v6875
        %v7206 = vsel %vm3647, %v6180, %v6877
        %v7207 = vsel %vm3647, %v6183, %v6879
        %v7208 = vsel %vm3647, %v6188, %v6881
        %v7209 = vsel %vm3647, %v6191, %v6883
        %v7210 = vsel %vm3647, %v6196, %v6885
        %v7211 = vsel %vm3647, %v6199, %v6887
        %v7212 = vsel %vm3647, %v6204, %v6889
        %v7213 = vsel %vm3647, %v6207, %v6891
        %v7214 = vsel %vm3647, %v6212, %v6893
        %v7215 = vsel %vm3647, %v6215, %v6895
        %vm7216 = vcmask 261120
        %v7217 = vsel %vm7216, %v7184, %v6961
        %v7218 = vsel %vm7216, %v7185, %v6963
        %v7219 = vsel %vm7216, %v7186, %v6965
        %v7220 = vsel %vm7216, %v7187, %v6967
        %v7221 = vsel %vm7216, %v7188, %v6969
        %v7222 = vsel %vm7216, %v7189, %v6971
        %v7223 = vsel %vm7216, %v7190, %v6973
        %v7224 = vsel %vm7216, %v7191, %v6975
        %v7225 = vsel %vm7216, %v7192, %v6977
        %v7226 = vsel %vm7216, %v7193, %v6979
        %v7227 = vsel %vm7216, %v7194, %v6981
        %v7228 = vsel %vm7216, %v7195, %v6983
        %v7229 = vsel %vm7216, %v7196, %v6985
        %v7230 = vsel %vm7216, %v7197, %v6987
        %v7231 = vsel %vm7216, %v7198, %v6989
        %v7232 = vsel %vm7216, %v7199, %v6991
        %v7233 = vsel %vm7216, %v7200, %v6993
        %v7234 = vsel %vm7216, %v7201, %v6995
        %v7235 = vsel %vm7216, %v7202, %v6997
        %v7236 = vsel %vm7216, %v7203, %v6999
        %v7237 = vsel %vm7216, %v7204, %v7001
        %v7238 = vsel %vm7216, %v7205, %v7003
        %v7239 = vsel %vm7216, %v7206, %v7005
        %v7240 = vsel %vm7216, %v7207, %v7007
        %v7241 = vsel %vm7216, %v7208, %v7009
        %v7242 = vsel %vm7216, %v7209, %v7011
        %v7243 = vsel %vm7216, %v7210, %v7013
        %v7244 = vsel %vm7216, %v7211, %v7015
        %v7245 = vsel %vm7216, %v7212, %v7017
        %v7246 = vsel %vm7216, %v7213, %v7019
        %v7247 = vsel %vm7216, %v7214, %v7021
        %v7248 = vsel %vm7216, %v7215, %v7023
        %vm7249 = vcmask 392192
        %v7250 = vsel %vm7249, %v7217, %v7089
        %v7251 = vsel %vm7249, %v7218, %v7091
        %v7252 = vsel %vm7249, %v7219, %v7093
        %v7253 = vsel %vm7249, %v7220, %v7095
        %v7254 = vsel %vm7249, %v7221, %v7097
        %v7255 = vsel %vm7249, %v7222, %v7099
        %v7256 = vsel %vm7249, %v7223, %v7101
        %v7257 = vsel %vm7249, %v7224, %v7103
        %v7258 = vsel %vm7249, %v7225, %v7105
        %v7259 = vsel %vm7249, %v7226, %v7107
        %v7260 = vsel %vm7249, %v7227, %v7109
        %v7261 = vsel %vm7249, %v7228, %v7111
        %v7262 = vsel %vm7249, %v7229, %v7113
        %v7263 = vsel %vm7249, %v7230, %v7115
        %v7264 = vsel %vm7249, %v7231, %v7117
        %v7265 = vsel %vm7249, %v7232, %v7119
        %v7266 = vsel %vm7249, %v7233, %v7121
        %v7267 = vsel %vm7249, %v7234, %v7123
        %v7268 = vsel %vm7249, %v7235, %v7125
        %v7269 = vsel %vm7249, %v7236, %v7127
        %v7270 = vsel %vm7249, %v7237, %v7129
        %v7271 = vsel %vm7249, %v7238, %v7131
        %v7272 = vsel %vm7249, %v7239, %v7133
        %v7273 = vsel %vm7249, %v7240, %v7135
        %v7274 = vsel %vm7249, %v7241, %v7137
        %v7275 = vsel %vm7249, %v7242, %v7139
        %v7276 = vsel %vm7249, %v7243, %v7141
        %v7277 = vsel %vm7249, %v7244, %v7143
        %v7278 = vsel %vm7249, %v7245, %v7145
        %v7279 = vsel %vm7249, %v7246, %v7147
        %v7280 = vsel %vm7249, %v7247, %v7149
        %v7281 = vsel %vm7249, %v7248, %v7151
        %v7282 = vpack.c.bf16 %v7251, %v7250
        %v7283 = vpack.c.bf16 %v7253, %v7252
        %v7284 = vpack.c.bf16 %v7255, %v7254
        %v7285 = vpack.c.bf16 %v7257, %v7256
        %v7286 = vpack.c.bf16 %v7259, %v7258
        %v7287 = vpack.c.bf16 %v7261, %v7260
        %v7288 = vpack.c.bf16 %v7263, %v7262
        %v7289 = vpack.c.bf16 %v7265, %v7264
        %v7290 = vpack.c.bf16 %v7267, %v7266
        %v7291 = vpack.c.bf16 %v7269, %v7268
        %v7292 = vpack.c.bf16 %v7271, %v7270
        %v7293 = vpack.c.bf16 %v7273, %v7272
        %v7294 = vpack.c.bf16 %v7275, %v7274
        %v7295 = vpack.c.bf16 %v7277, %v7276
        %v7296 = vpack.c.bf16 %v7279, %v7278
        %v7297 = vpack.c.bf16 %v7281, %v7280
        %v7298 = vld [vmem:[%s878] sm:$0xf]
        %v7299 = vld [vmem:[%s878 + $0x4] sm:$0xf]
        %v7300 = vld [vmem:[%s878 + $0x8] sm:$0xf]
        %v7301 = vld [vmem:[%s878 + $0xc] sm:$0xf]
        %v7302 = vld [vmem:[%s878 + $0x10] sm:$0xf]
        %v7303 = vld [vmem:[%s878 + $0x14] sm:$0xf]
        %v7304 = vld [vmem:[%s878 + $0x18] sm:$0xf]
        %v7305 = vld [vmem:[%s878 + $0x1c] sm:$0xf]
        %v7306 = vld [vmem:[%s886] sm:$0x1]
        %v7308 = vlaneseq
        %v7309 = vshrl.u32 %v7308, 7
        %v7310 = vsub.s32 0, %v7309
        %v7311 = vrot.slane %v7306, %v7310
        %v7321 = vunpack.c.l.b16 %v7298
        %v7322 = vunpack.c.l.b16 %v7299
        %v7323 = vunpack.c.l.b16 %v7300
        %v7324 = vunpack.c.l.b16 %v7301
        %v7325 = vunpack.c.l.b16 %v7302
        %v7326 = vunpack.c.l.b16 %v7303
        %v7327 = vunpack.c.l.b16 %v7304
        %v7328 = vunpack.c.l.b16 %v7305
        %v7329 = vpack.c.b16 %v7322, %v7321
        %v7330 = vpack.c.b16 %v7324, %v7323
        %v7331 = vpack.c.b16 %v7326, %v7325
        %v7332 = vpack.c.b16 %v7328, %v7327
        %v7338 = vsel %vm1476, %v7282, 0
        %v7341 = vsel %vm1476, %v7283, 0
        %v7344 = vsel %vm1476, %v7284, 0
        %v7347 = vsel %vm1476, %v7285, 0
        %v7350 = vsel %vm1476, %v7286, 0
        %v7353 = vsel %vm1476, %v7287, 0
        %v7356 = vsel %vm1476, %v7288, 0
        %v7359 = vsel %vm1476, %v7289, 0
        %v7362 = vsel %vm1476, %v7290, 0
        %v7365 = vsel %vm1476, %v7291, 0
        %v7368 = vsel %vm1476, %v7292, 0
        %v7371 = vsel %vm1476, %v7293, 0
        %v7374 = vsel %vm1476, %v7294, 0
        %v7377 = vsel %vm1476, %v7295, 0
        %v7380 = vsel %vm1476, %v7296, 0
        %v7383 = vsel %vm1476, %v7297, 0
        %7385 = vmatprep.subr.bf16.mxu0 0
        %7386 = vmatpush1.bf16.msra.mxu0 %v7329
        %7387 = vmatprep.subr.bf16.mxu0 0
        %7388 = vmatpush1.bf16.msra.mxu0 %v7330
        %7389 = vmatprep.subr.bf16.mxu0 0
        %7390 = vmatpush1.bf16.msra.mxu0 %v7331
        %7391 = vmatprep.subr.bf16.mxu0 0
        %7392 = vmatpush1.bf16.msra.mxu0 %v7332
        %7393 = vmatprep.subr.bf16.mxu0 0
        %7394 = vmatpush1.bf16.msra.mxu0 0
        %7395 = vmatprep.subr.bf16.mxu0 0
        %7396 = vmatpush1.bf16.msra.mxu0 0
        %7397 = vmatprep.subr.bf16.mxu0 0
        %7398 = vmatpush1.bf16.msra.mxu0 0
        %7399 = vmatprep.subr.bf16.mxu0 0
        %7400 = vmatpush1.bf16.msra.mxu0 0
        %7401 = vmatprep.subr.bf16.mxu0 0
        %7402 = vmatpush1.bf16.msra.mxu0 0
        %7403 = vmatprep.subr.bf16.mxu0 0
        %7404 = vmatpush1.bf16.msra.mxu0 0
        %7405 = vmatprep.subr.bf16.mxu0 0
        %7406 = vmatpush1.bf16.msra.mxu0 0
        %7407 = vmatprep.subr.bf16.mxu0 0
        %7408 = vmatpush1.bf16.msra.mxu0 0
        %7409 = vmatprep.subr.bf16.mxu0 0
        %7410 = vmatpush1.bf16.msra.mxu0 0
        %7411 = vmatprep.subr.bf16.mxu0 0
        %7412 = vmatpush1.bf16.msra.mxu0 0
        %7413 = vmatprep.subr.bf16.mxu0 0
        %7414 = vmatpush1.bf16.msra.mxu0 0
        %7415 = vmatprep.subr.bf16.mxu0 0
        %7416 = vmatpush1.bf16.msra.mxu0 0
        %7417 = vmatprep.mubr.bf16.mxu0 0
        %7418 = vmatmul.mubr.bf16.gmra.mrb[0].mxu0 %v7338
        %v7419 = vpop.f32.mrb[0].mxu0
        %v7420 = vadd.f32 %v7311, %v7419
        %v7421 = vpop.f32.mrb[0].mxu0
        %v7422 = vpop.f32.mrb[0].mxu0
        %v7423 = vadd.f32 %v7311, %v7422
        %v7424 = vpop.f32.mrb[0].mxu0
        %7425 = vmatprep.mubr.bf16.mxu0 0
        %7426 = vmatmul.mubr.bf16.gmra.mrb[0].mxu0 %v7341
        %v7427 = vpop.f32.mrb[0].mxu0
        %v7428 = vadd.f32 %v7311, %v7427
        %v7429 = vpop.f32.mrb[0].mxu0
        %v7430 = vpop.f32.mrb[0].mxu0
        %v7431 = vadd.f32 %v7311, %v7430
        %v7432 = vpop.f32.mrb[0].mxu0
        %7433 = vmatprep.mubr.bf16.mxu0 0
        %7434 = vmatmul.mubr.bf16.gmra.mrb[0].mxu0 %v7344
        %v7435 = vpop.f32.mrb[0].mxu0
        %v7436 = vadd.f32 %v7311, %v7435
        %v7437 = vpop.f32.mrb[0].mxu0
        %v7438 = vpop.f32.mrb[0].mxu0
        %v7439 = vadd.f32 %v7311, %v7438
        %v7440 = vpop.f32.mrb[0].mxu0
        %7441 = vmatprep.mubr.bf16.mxu0 0
        %7442 = vmatmul.mubr.bf16.gmra.mrb[0].mxu0 %v7347
        %v7443 = vpop.f32.mrb[0].mxu0
        %v7444 = vadd.f32 %v7311, %v7443
        %v7445 = vpop.f32.mrb[0].mxu0
        %v7446 = vpop.f32.mrb[0].mxu0
        %v7447 = vadd.f32 %v7311, %v7446
        %v7448 = vpop.f32.mrb[0].mxu0
        %7449 = vmatprep.mubr.bf16.mxu0 0
        %7450 = vmatmul.mubr.bf16.gmra.mrb[0].mxu0 %v7350
        %v7451 = vpop.f32.mrb[0].mxu0
        %v7452 = vadd.f32 %v7311, %v7451
        %v7453 = vpop.f32.mrb[0].mxu0
        %v7454 = vpop.f32.mrb[0].mxu0
        %v7455 = vadd.f32 %v7311, %v7454
        %v7456 = vpop.f32.mrb[0].mxu0
        %7457 = vmatprep.mubr.bf16.mxu0 0
        %7458 = vmatmul.mubr.bf16.gmra.mrb[0].mxu0 %v7353
        %v7459 = vpop.f32.mrb[0].mxu0
        %v7460 = vadd.f32 %v7311, %v7459
        %v7461 = vpop.f32.mrb[0].mxu0
        %v7462 = vpop.f32.mrb[0].mxu0
        %v7463 = vadd.f32 %v7311, %v7462
        %v7464 = vpop.f32.mrb[0].mxu0
        %7465 = vmatprep.mubr.bf16.mxu0 0
        %7466 = vmatmul.mubr.bf16.gmra.mrb[0].mxu0 %v7356
        %v7467 = vpop.f32.mrb[0].mxu0
        %v7468 = vadd.f32 %v7311, %v7467
        %v7469 = vpop.f32.mrb[0].mxu0
        %v7470 = vpop.f32.mrb[0].mxu0
        %v7471 = vadd.f32 %v7311, %v7470
        %v7472 = vpop.f32.mrb[0].mxu0
        %7473 = vmatprep.mubr.bf16.mxu0 0
        %7474 = vmatmul.mubr.bf16.gmra.mrb[0].mxu0 %v7359
        %v7475 = vpop.f32.mrb[0].mxu0
        %v7476 = vadd.f32 %v7311, %v7475
        %v7477 = vpop.f32.mrb[0].mxu0
        %v7478 = vpop.f32.mrb[0].mxu0
        %v7479 = vadd.f32 %v7311, %v7478
        %v7480 = vpop.f32.mrb[0].mxu0
        %7481 = vmatprep.mubr.bf16.mxu0 0
        %7482 = vmatmul.mubr.bf16.gmra.mrb[0].mxu0 %v7362
        %v7483 = vpop.f32.mrb[0].mxu0
        %v7484 = vadd.f32 %v7311, %v7483
        %v7485 = vpop.f32.mrb[0].mxu0
        %v7486 = vpop.f32.mrb[0].mxu0
        %v7487 = vadd.f32 %v7311, %v7486
        %v7488 = vpop.f32.mrb[0].mxu0
        %7489 = vmatprep.mubr.bf16.mxu0 0
        %7490 = vmatmul.mubr.bf16.gmra.mrb[0].mxu0 %v7365
        %v7491 = vpop.f32.mrb[0].mxu0
        %v7492 = vadd.f32 %v7311, %v7491
        %v7493 = vpop.f32.mrb[0].mxu0
        %v7494 = vpop.f32.mrb[0].mxu0
        %v7495 = vadd.f32 %v7311, %v7494
        %v7496 = vpop.f32.mrb[0].mxu0
        %7497 = vmatprep.mubr.bf16.mxu0 0
        %7498 = vmatmul.mubr.bf16.gmra.mrb[0].mxu0 %v7368
        %v7499 = vpop.f32.mrb[0].mxu0
        %v7500 = vadd.f32 %v7311, %v7499
        %v7501 = vpop.f32.mrb[0].mxu0
        %v7502 = vpop.f32.mrb[0].mxu0
        %v7503 = vadd.f32 %v7311, %v7502
        %v7504 = vpop.f32.mrb[0].mxu0
        %7505 = vmatprep.mubr.bf16.mxu0 0
        %7506 = vmatmul.mubr.bf16.gmra.mrb[0].mxu0 %v7371
        %v7507 = vpop.f32.mrb[0].mxu0
        %v7508 = vadd.f32 %v7311, %v7507
        %v7509 = vpop.f32.mrb[0].mxu0
        %v7510 = vpop.f32.mrb[0].mxu0
        %v7511 = vadd.f32 %v7311, %v7510
        %v7512 = vpop.f32.mrb[0].mxu0
        %7513 = vmatprep.mubr.bf16.mxu0 0
        %7514 = vmatmul.mubr.bf16.gmra.mrb[0].mxu0 %v7374
        %v7515 = vpop.f32.mrb[0].mxu0
        %v7516 = vadd.f32 %v7311, %v7515
        %v7517 = vpop.f32.mrb[0].mxu0
        %v7518 = vpop.f32.mrb[0].mxu0
        %v7519 = vadd.f32 %v7311, %v7518
        %v7520 = vpop.f32.mrb[0].mxu0
        %7521 = vmatprep.mubr.bf16.mxu0 0
        %7522 = vmatmul.mubr.bf16.gmra.mrb[0].mxu0 %v7377
        %v7523 = vpop.f32.mrb[0].mxu0
        %v7524 = vadd.f32 %v7311, %v7523
        %v7525 = vpop.f32.mrb[0].mxu0
        %v7526 = vpop.f32.mrb[0].mxu0
        %v7527 = vadd.f32 %v7311, %v7526
        %v7528 = vpop.f32.mrb[0].mxu0
        %7529 = vmatprep.mubr.bf16.mxu0 0
        %7530 = vmatmul.mubr.bf16.gmra.mrb[0].mxu0 %v7380
        %v7531 = vpop.f32.mrb[0].mxu0
        %v7532 = vadd.f32 %v7311, %v7531
        %v7533 = vpop.f32.mrb[0].mxu0
        %v7534 = vpop.f32.mrb[0].mxu0
        %v7535 = vadd.f32 %v7311, %v7534
        %v7536 = vpop.f32.mrb[0].mxu0
        %7537 = vmatprep.mubr.bf16.mxu0 0
        %7538 = vmatmul.mubr.bf16.gmra.mrb[0].mxu0 %v7383
        %v7539 = vpop.f32.mrb[0].mxu0
        %v7540 = vadd.f32 %v7311, %v7539
        %v7541 = vpop.f32.mrb[0].mxu0
        %v7542 = vpop.f32.mrb[0].mxu0
        %v7543 = vadd.f32 %v7311, %v7542
        %v7544 = vpop.f32.mrb[0].mxu0
        %7545 = vdwg.mxu0
        %v7546 = vadd.f32 %v1442, %v7420
        %v7547 = vadd.f32 %v1443, %v7423
        %v7548 = vadd.f32 %v1444, %v7428
        %v7549 = vadd.f32 %v1445, %v7431
        %v7550 = vadd.f32 %v1446, %v7436
        %v7551 = vadd.f32 %v1447, %v7439
        %v7552 = vadd.f32 %v1448, %v7444
        %v7553 = vadd.f32 %v1449, %v7447
        %v7554 = vadd.f32 %v1450, %v7452
        %v7555 = vadd.f32 %v1451, %v7455
        %v7556 = vadd.f32 %v1452, %v7460
        %v7557 = vadd.f32 %v1453, %v7463
        %v7558 = vadd.f32 %v1454, %v7468
        %v7559 = vadd.f32 %v1455, %v7471
        %v7560 = vadd.f32 %v1456, %v7476
        %v7561 = vadd.f32 %v1457, %v7479
        %v7562 = vadd.f32 %v1458, %v7484
        %v7563 = vadd.f32 %v1459, %v7487
        %v7564 = vadd.f32 %v1460, %v7492
        %v7565 = vadd.f32 %v1461, %v7495
        %v7566 = vadd.f32 %v1462, %v7500
        %v7567 = vadd.f32 %v1463, %v7503
        %v7568 = vadd.f32 %v1464, %v7508
        %v7569 = vadd.f32 %v1465, %v7511
        %v7570 = vadd.f32 %v1466, %v7516
        %v7571 = vadd.f32 %v1467, %v7519
        %v7572 = vadd.f32 %v1468, %v7524
        %v7573 = vadd.f32 %v1469, %v7527
        %v7574 = vadd.f32 %v1470, %v7532
        %v7575 = vadd.f32 %v1471, %v7535
        %v7576 = vadd.f32 %v1472, %v7540
        %v7577 = vadd.f32 %v1473, %v7543
        %v7578 = vld [vmem:[%s894] sm:$0x1]
        %v7579 = vld [vmem:[%s902] sm:$0x1]
        %v7580 = vsel %vm1476, %v7546, 0.0
        %7581 = vadd.xlane.f32.xlu0 %v7580
        %v7582 = vpop.xlane.xlu0 %7581
        %v7583 = vsel %vm1476, %v7547, 0.0
        %7584 = vadd.xlane.f32.xlu0 %v7583
        %v7585 = vpop.xlane.xlu0 %7584
        %v7586 = vsel %vm1476, %v7548, 0.0
        %7587 = vadd.xlane.f32.xlu0 %v7586
        %v7588 = vpop.xlane.xlu0 %7587
        %v7589 = vsel %vm1476, %v7549, 0.0
        %7590 = vadd.xlane.f32.xlu0 %v7589
        %v7591 = vpop.xlane.xlu0 %7590
        %v7592 = vsel %vm1476, %v7550, 0.0
        %7593 = vadd.xlane.f32.xlu0 %v7592
        %v7594 = vpop.xlane.xlu0 %7593
        %v7595 = vsel %vm1476, %v7551, 0.0
        %7596 = vadd.xlane.f32.xlu0 %v7595
        %v7597 = vpop.xlane.xlu0 %7596
        %v7598 = vsel %vm1476, %v7552, 0.0
        %7599 = vadd.xlane.f32.xlu0 %v7598
        %v7600 = vpop.xlane.xlu0 %7599
        %v7601 = vsel %vm1476, %v7553, 0.0
        %7602 = vadd.xlane.f32.xlu0 %v7601
        %v7603 = vpop.xlane.xlu0 %7602
        %v7604 = vsel %vm1476, %v7554, 0.0
        %7605 = vadd.xlane.f32.xlu0 %v7604
        %v7606 = vpop.xlane.xlu0 %7605
        %v7607 = vsel %vm1476, %v7555, 0.0
        %7608 = vadd.xlane.f32.xlu0 %v7607
        %v7609 = vpop.xlane.xlu0 %7608
        %v7610 = vsel %vm1476, %v7556, 0.0
        %7611 = vadd.xlane.f32.xlu0 %v7610
        %v7612 = vpop.xlane.xlu0 %7611
        %v7613 = vsel %vm1476, %v7557, 0.0
        %7614 = vadd.xlane.f32.xlu0 %v7613
        %v7615 = vpop.xlane.xlu0 %7614
        %v7616 = vsel %vm1476, %v7558, 0.0
        %7617 = vadd.xlane.f32.xlu0 %v7616
        %v7618 = vpop.xlane.xlu0 %7617
        %v7619 = vsel %vm1476, %v7559, 0.0
        %7620 = vadd.xlane.f32.xlu0 %v7619
        %v7621 = vpop.xlane.xlu0 %7620
        %v7622 = vsel %vm1476, %v7560, 0.0
        %7623 = vadd.xlane.f32.xlu0 %v7622
        %v7624 = vpop.xlane.xlu0 %7623
        %v7625 = vsel %vm1476, %v7561, 0.0
        %7626 = vadd.xlane.f32.xlu0 %v7625
        %v7627 = vpop.xlane.xlu0 %7626
        %v7628 = vsel %vm1476, %v7562, 0.0
        %7629 = vadd.xlane.f32.xlu0 %v7628
        %v7630 = vpop.xlane.xlu0 %7629
        %v7631 = vsel %vm1476, %v7563, 0.0
        %7632 = vadd.xlane.f32.xlu0 %v7631
        %v7633 = vpop.xlane.xlu0 %7632
        %v7634 = vsel %vm1476, %v7564, 0.0
        %7635 = vadd.xlane.f32.xlu0 %v7634
        %v7636 = vpop.xlane.xlu0 %7635
        %v7637 = vsel %vm1476, %v7565, 0.0
        %7638 = vadd.xlane.f32.xlu0 %v7637
        %v7639 = vpop.xlane.xlu0 %7638
        %v7640 = vsel %vm1476, %v7566, 0.0
        %7641 = vadd.xlane.f32.xlu0 %v7640
        %v7642 = vpop.xlane.xlu0 %7641
        %v7643 = vsel %vm1476, %v7567, 0.0
        %7644 = vadd.xlane.f32.xlu0 %v7643
        %v7645 = vpop.xlane.xlu0 %7644
        %v7646 = vsel %vm1476, %v7568, 0.0
        %7647 = vadd.xlane.f32.xlu0 %v7646
        %v7648 = vpop.xlane.xlu0 %7647
        %v7649 = vsel %vm1476, %v7569, 0.0
        %7650 = vadd.xlane.f32.xlu0 %v7649
        %v7651 = vpop.xlane.xlu0 %7650
        %v7652 = vsel %vm1476, %v7570, 0.0
        %7653 = vadd.xlane.f32.xlu0 %v7652
        %v7654 = vpop.xlane.xlu0 %7653
        %v7655 = vsel %vm1476, %v7571, 0.0
        %7656 = vadd.xlane.f32.xlu0 %v7655
        %v7657 = vpop.xlane.xlu0 %7656
        %v7658 = vsel %vm1476, %v7572, 0.0
        %7659 = vadd.xlane.f32.xlu0 %v7658
        %v7660 = vpop.xlane.xlu0 %7659
        %v7661 = vsel %vm1476, %v7573, 0.0
        %7662 = vadd.xlane.f32.xlu0 %v7661
        %v7663 = vpop.xlane.xlu0 %7662
        %v7664 = vsel %vm1476, %v7574, 0.0
        %7665 = vadd.xlane.f32.xlu0 %v7664
        %v7666 = vpop.xlane.xlu0 %7665
        %v7667 = vsel %vm1476, %v7575, 0.0
        %7668 = vadd.xlane.f32.xlu0 %v7667
        %v7669 = vpop.xlane.xlu0 %7668
        %v7670 = vsel %vm1476, %v7576, 0.0
        %7671 = vadd.xlane.f32.xlu0 %v7670
        %v7672 = vpop.xlane.xlu0 %7671
        %v7673 = vsel %vm1476, %v7577, 0.0
        %7674 = vadd.xlane.f32.xlu0 %v7673
        %v7675 = vpop.xlane.xlu0 %7674
        %v7676 = vmul.f32 %v7582, %v1573
        %v7677 = vmul.f32 %v7585, %v1573
        %v7678 = vmul.f32 %v7588, %v1573
        %v7679 = vmul.f32 %v7591, %v1573
        %v7680 = vmul.f32 %v7594, %v1573
        %v7681 = vmul.f32 %v7597, %v1573
        %v7682 = vmul.f32 %v7600, %v1573
        %v7683 = vmul.f32 %v7603, %v1573
        %v7684 = vmul.f32 %v7606, %v1573
        %v7685 = vmul.f32 %v7609, %v1573
        %v7686 = vmul.f32 %v7612, %v1573
        %v7687 = vmul.f32 %v7615, %v1573
        %v7688 = vmul.f32 %v7618, %v1573
        %v7689 = vmul.f32 %v7621, %v1573
        %v7690 = vmul.f32 %v7624, %v1573
        %v7691 = vmul.f32 %v7627, %v1573
        %v7692 = vmul.f32 %v7630, %v1573
        %v7693 = vmul.f32 %v7633, %v1573
        %v7694 = vmul.f32 %v7636, %v1573
        %v7695 = vmul.f32 %v7639, %v1573
        %v7696 = vmul.f32 %v7642, %v1573
        %v7697 = vmul.f32 %v7645, %v1573
        %v7698 = vmul.f32 %v7648, %v1573
        %v7699 = vmul.f32 %v7651, %v1573
        %v7700 = vmul.f32 %v7654, %v1573
        %v7701 = vmul.f32 %v7657, %v1573
        %v7702 = vmul.f32 %v7660, %v1573
        %v7703 = vmul.f32 %v7663, %v1573
        %v7704 = vmul.f32 %v7666, %v1573
        %v7705 = vmul.f32 %v7669, %v1573
        %v7706 = vmul.f32 %v7672, %v1573
        %v7707 = vmul.f32 %v7675, %v1573
        %v7708 = vsub.f32 %v7546, %v7676
        %v7709 = vsub.f32 %v7547, %v7677
        %v7710 = vsub.f32 %v7548, %v7678
        %v7711 = vsub.f32 %v7549, %v7679
        %v7712 = vsub.f32 %v7550, %v7680
        %v7713 = vsub.f32 %v7551, %v7681
        %v7714 = vsub.f32 %v7552, %v7682
        %v7715 = vsub.f32 %v7553, %v7683
        %v7716 = vsub.f32 %v7554, %v7684
        %v7717 = vsub.f32 %v7555, %v7685
        %v7718 = vsub.f32 %v7556, %v7686
        %v7719 = vsub.f32 %v7557, %v7687
        %v7720 = vsub.f32 %v7558, %v7688
        %v7721 = vsub.f32 %v7559, %v7689
        %v7722 = vsub.f32 %v7560, %v7690
        %v7723 = vsub.f32 %v7561, %v7691
        %v7724 = vsub.f32 %v7562, %v7692
        %v7725 = vsub.f32 %v7563, %v7693
        %v7726 = vsub.f32 %v7564, %v7694
        %v7727 = vsub.f32 %v7565, %v7695
        %v7728 = vsub.f32 %v7566, %v7696
        %v7729 = vsub.f32 %v7567, %v7697
        %v7730 = vsub.f32 %v7568, %v7698
        %v7731 = vsub.f32 %v7569, %v7699
        %v7732 = vsub.f32 %v7570, %v7700
        %v7733 = vsub.f32 %v7571, %v7701
        %v7734 = vsub.f32 %v7572, %v7702
        %v7735 = vsub.f32 %v7573, %v7703
        %v7736 = vsub.f32 %v7574, %v7704
        %v7737 = vsub.f32 %v7575, %v7705
        %v7738 = vsub.f32 %v7576, %v7706
        %v7739 = vsub.f32 %v7577, %v7707
        %v7740 = vmul.f32 %v7708, %v7708
        %v7741 = vmul.f32 %v7709, %v7709
        %v7742 = vmul.f32 %v7710, %v7710
        %v7743 = vmul.f32 %v7711, %v7711
        %v7744 = vmul.f32 %v7712, %v7712
        %v7745 = vmul.f32 %v7713, %v7713
        %v7746 = vmul.f32 %v7714, %v7714
        %v7747 = vmul.f32 %v7715, %v7715
        %v7748 = vmul.f32 %v7716, %v7716
        %v7749 = vmul.f32 %v7717, %v7717
        %v7750 = vmul.f32 %v7718, %v7718
        %v7751 = vmul.f32 %v7719, %v7719
        %v7752 = vmul.f32 %v7720, %v7720
        %v7753 = vmul.f32 %v7721, %v7721
        %v7754 = vmul.f32 %v7722, %v7722
        %v7755 = vmul.f32 %v7723, %v7723
        %v7756 = vmul.f32 %v7724, %v7724
        %v7757 = vmul.f32 %v7725, %v7725
        %v7758 = vmul.f32 %v7726, %v7726
        %v7759 = vmul.f32 %v7727, %v7727
        %v7760 = vmul.f32 %v7728, %v7728
        %v7761 = vmul.f32 %v7729, %v7729
        %v7762 = vmul.f32 %v7730, %v7730
        %v7763 = vmul.f32 %v7731, %v7731
        %v7764 = vmul.f32 %v7732, %v7732
        %v7765 = vmul.f32 %v7733, %v7733
        %v7766 = vmul.f32 %v7734, %v7734
        %v7767 = vmul.f32 %v7735, %v7735
        %v7768 = vmul.f32 %v7736, %v7736
        %v7769 = vmul.f32 %v7737, %v7737
        %v7770 = vmul.f32 %v7738, %v7738
        %v7771 = vmul.f32 %v7739, %v7739
        %v7772 = vsel %vm1476, %v7740, 0.0
        %7773 = vadd.xlane.f32.xlu0 %v7772
        %v7774 = vpop.xlane.xlu0 %7773
        %v7775 = vsel %vm1476, %v7741, 0.0
        %7776 = vadd.xlane.f32.xlu0 %v7775
        %v7777 = vpop.xlane.xlu0 %7776
        %v7778 = vsel %vm1476, %v7742, 0.0
        %7779 = vadd.xlane.f32.xlu0 %v7778
        %v7780 = vpop.xlane.xlu0 %7779
        %v7781 = vsel %vm1476, %v7743, 0.0
        %7782 = vadd.xlane.f32.xlu0 %v7781
        %v7783 = vpop.xlane.xlu0 %7782
        %v7784 = vsel %vm1476, %v7744, 0.0
        %7785 = vadd.xlane.f32.xlu0 %v7784
        %v7786 = vpop.xlane.xlu0 %7785
        %v7787 = vsel %vm1476, %v7745, 0.0
        %7788 = vadd.xlane.f32.xlu0 %v7787
        %v7789 = vpop.xlane.xlu0 %7788
        %v7790 = vsel %vm1476, %v7746, 0.0
        %7791 = vadd.xlane.f32.xlu0 %v7790
        %v7792 = vpop.xlane.xlu0 %7791
        %v7793 = vsel %vm1476, %v7747, 0.0
        %7794 = vadd.xlane.f32.xlu0 %v7793
        %v7795 = vpop.xlane.xlu0 %7794
        %v7796 = vsel %vm1476, %v7748, 0.0
        %7797 = vadd.xlane.f32.xlu0 %v7796
        %v7798 = vpop.xlane.xlu0 %7797
        %v7799 = vsel %vm1476, %v7749, 0.0
        %7800 = vadd.xlane.f32.xlu0 %v7799
        %v7801 = vpop.xlane.xlu0 %7800
        %v7802 = vsel %vm1476, %v7750, 0.0
        %7803 = vadd.xlane.f32.xlu0 %v7802
        %v7804 = vpop.xlane.xlu0 %7803
        %v7805 = vsel %vm1476, %v7751, 0.0
        %7806 = vadd.xlane.f32.xlu0 %v7805
        %v7807 = vpop.xlane.xlu0 %7806
        %v7808 = vsel %vm1476, %v7752, 0.0
        %7809 = vadd.xlane.f32.xlu0 %v7808
        %v7810 = vpop.xlane.xlu0 %7809
        %v7811 = vsel %vm1476, %v7753, 0.0
        %7812 = vadd.xlane.f32.xlu0 %v7811
        %v7813 = vpop.xlane.xlu0 %7812
        %v7814 = vsel %vm1476, %v7754, 0.0
        %7815 = vadd.xlane.f32.xlu0 %v7814
        %v7816 = vpop.xlane.xlu0 %7815
        %v7817 = vsel %vm1476, %v7755, 0.0
        %7818 = vadd.xlane.f32.xlu0 %v7817
        %v7819 = vpop.xlane.xlu0 %7818
        %v7820 = vsel %vm1476, %v7756, 0.0
        %7821 = vadd.xlane.f32.xlu0 %v7820
        %v7822 = vpop.xlane.xlu0 %7821
        %v7823 = vsel %vm1476, %v7757, 0.0
        %7824 = vadd.xlane.f32.xlu0 %v7823
        %v7825 = vpop.xlane.xlu0 %7824
        %v7826 = vsel %vm1476, %v7758, 0.0
        %7827 = vadd.xlane.f32.xlu0 %v7826
        %v7828 = vpop.xlane.xlu0 %7827
        %v7829 = vsel %vm1476, %v7759, 0.0
        %7830 = vadd.xlane.f32.xlu0 %v7829
        %v7831 = vpop.xlane.xlu0 %7830
        %v7832 = vsel %vm1476, %v7760, 0.0
        %7833 = vadd.xlane.f32.xlu0 %v7832
        %v7834 = vpop.xlane.xlu0 %7833
        %v7835 = vsel %vm1476, %v7761, 0.0
        %7836 = vadd.xlane.f32.xlu0 %v7835
        %v7837 = vpop.xlane.xlu0 %7836
        %v7838 = vsel %vm1476, %v7762, 0.0
        %7839 = vadd.xlane.f32.xlu0 %v7838
        %v7840 = vpop.xlane.xlu0 %7839
        %v7841 = vsel %vm1476, %v7763, 0.0
        %7842 = vadd.xlane.f32.xlu0 %v7841
        %v7843 = vpop.xlane.xlu0 %7842
        %v7844 = vsel %vm1476, %v7764, 0.0
        %7845 = vadd.xlane.f32.xlu0 %v7844
        %v7846 = vpop.xlane.xlu0 %7845
        %v7847 = vsel %vm1476, %v7765, 0.0
        %7848 = vadd.xlane.f32.xlu0 %v7847
        %v7849 = vpop.xlane.xlu0 %7848
        %v7850 = vsel %vm1476, %v7766, 0.0
        %7851 = vadd.xlane.f32.xlu0 %v7850
        %v7852 = vpop.xlane.xlu0 %7851
        %v7853 = vsel %vm1476, %v7767, 0.0
        %7854 = vadd.xlane.f32.xlu0 %v7853
        %v7855 = vpop.xlane.xlu0 %7854
        %v7856 = vsel %vm1476, %v7768, 0.0
        %7857 = vadd.xlane.f32.xlu0 %v7856
        %v7858 = vpop.xlane.xlu0 %7857
        %v7859 = vsel %vm1476, %v7769, 0.0
        %7860 = vadd.xlane.f32.xlu0 %v7859
        %v7861 = vpop.xlane.xlu0 %7860
        %v7862 = vsel %vm1476, %v7770, 0.0
        %7863 = vadd.xlane.f32.xlu0 %v7862
        %v7864 = vpop.xlane.xlu0 %7863
        %v7865 = vsel %vm1476, %v7771, 0.0
        %7866 = vadd.xlane.f32.xlu0 %v7865
        %v7867 = vpop.xlane.xlu0 %7866
        %v7868 = vmul.f32 %v7774, %v1573
        %v7869 = vmul.f32 %v7777, %v1573
        %v7870 = vmul.f32 %v7780, %v1573
        %v7871 = vmul.f32 %v7783, %v1573
        %v7872 = vmul.f32 %v7786, %v1573
        %v7873 = vmul.f32 %v7789, %v1573
        %v7874 = vmul.f32 %v7792, %v1573
        %v7875 = vmul.f32 %v7795, %v1573
        %v7876 = vmul.f32 %v7798, %v1573
        %v7877 = vmul.f32 %v7801, %v1573
        %v7878 = vmul.f32 %v7804, %v1573
        %v7879 = vmul.f32 %v7807, %v1573
        %v7880 = vmul.f32 %v7810, %v1573
        %v7881 = vmul.f32 %v7813, %v1573
        %v7882 = vmul.f32 %v7816, %v1573
        %v7883 = vmul.f32 %v7819, %v1573
        %v7884 = vmul.f32 %v7822, %v1573
        %v7885 = vmul.f32 %v7825, %v1573
        %v7886 = vmul.f32 %v7828, %v1573
        %v7887 = vmul.f32 %v7831, %v1573
        %v7888 = vmul.f32 %v7834, %v1573
        %v7889 = vmul.f32 %v7837, %v1573
        %v7890 = vmul.f32 %v7840, %v1573
        %v7891 = vmul.f32 %v7843, %v1573
        %v7892 = vmul.f32 %v7846, %v1573
        %v7893 = vmul.f32 %v7849, %v1573
        %v7894 = vmul.f32 %v7852, %v1573
        %v7895 = vmul.f32 %v7855, %v1573
        %v7896 = vmul.f32 %v7858, %v1573
        %v7897 = vmul.f32 %v7861, %v1573
        %v7898 = vmul.f32 %v7864, %v1573
        %v7899 = vmul.f32 %v7867, %v1573
        %v7900 = vadd.f32 %v7868, 1e-05
        %v7901 = vadd.f32 %v7869, 1e-05
        %v7902 = vadd.f32 %v7870, 1e-05
        %v7903 = vadd.f32 %v7871, 1e-05
        %v7904 = vadd.f32 %v7872, 1e-05
        %v7905 = vadd.f32 %v7873, 1e-05
        %v7906 = vadd.f32 %v7874, 1e-05
        %v7907 = vadd.f32 %v7875, 1e-05
        %v7908 = vadd.f32 %v7876, 1e-05
        %v7909 = vadd.f32 %v7877, 1e-05
        %v7910 = vadd.f32 %v7878, 1e-05
        %v7911 = vadd.f32 %v7879, 1e-05
        %v7912 = vadd.f32 %v7880, 1e-05
        %v7913 = vadd.f32 %v7881, 1e-05
        %v7914 = vadd.f32 %v7882, 1e-05
        %v7915 = vadd.f32 %v7883, 1e-05
        %v7916 = vadd.f32 %v7884, 1e-05
        %v7917 = vadd.f32 %v7885, 1e-05
        %v7918 = vadd.f32 %v7886, 1e-05
        %v7919 = vadd.f32 %v7887, 1e-05
        %v7920 = vadd.f32 %v7888, 1e-05
        %v7921 = vadd.f32 %v7889, 1e-05
        %v7922 = vadd.f32 %v7890, 1e-05
        %v7923 = vadd.f32 %v7891, 1e-05
        %v7924 = vadd.f32 %v7892, 1e-05
        %v7925 = vadd.f32 %v7893, 1e-05
        %v7926 = vadd.f32 %v7894, 1e-05
        %v7927 = vadd.f32 %v7895, 1e-05
        %v7928 = vadd.f32 %v7896, 1e-05
        %v7929 = vadd.f32 %v7897, 1e-05
        %v7930 = vadd.f32 %v7898, 1e-05
        %v7931 = vadd.f32 %v7899, 1e-05
        %v7932 = vrsqrt.pop %v7900
        %v7933 = vrsqrt.pop %v7901
        %v7934 = vrsqrt.pop %v7902
        %v7935 = vrsqrt.pop %v7903
        %v7936 = vrsqrt.pop %v7904
        %v7937 = vrsqrt.pop %v7905
        %v7938 = vrsqrt.pop %v7906
        %v7939 = vrsqrt.pop %v7907
        %v7940 = vrsqrt.pop %v7908
        %v7941 = vrsqrt.pop %v7909
        %v7942 = vrsqrt.pop %v7910
        %v7943 = vrsqrt.pop %v7911
        %v7944 = vrsqrt.pop %v7912
        %v7945 = vrsqrt.pop %v7913
        %v7946 = vrsqrt.pop %v7914
        %v7947 = vrsqrt.pop %v7915
        %v7948 = vrsqrt.pop %v7916
        %v7949 = vrsqrt.pop %v7917
        %v7950 = vrsqrt.pop %v7918
        %v7951 = vrsqrt.pop %v7919
        %v7952 = vrsqrt.pop %v7920
        %v7953 = vrsqrt.pop %v7921
        %v7954 = vrsqrt.pop %v7922
        %v7955 = vrsqrt.pop %v7923
        %v7956 = vrsqrt.pop %v7924
        %v7957 = vrsqrt.pop %v7925
        %v7958 = vrsqrt.pop %v7926
        %v7959 = vrsqrt.pop %v7927
        %v7960 = vrsqrt.pop %v7928
        %v7961 = vrsqrt.pop %v7929
        %v7962 = vrsqrt.pop %v7930
        %v7963 = vrsqrt.pop %v7931
        %v7964 = vmul.f32 %v7708, %v7932
        %v7965 = vmul.f32 %v7709, %v7933
        %v7966 = vmul.f32 %v7710, %v7934
        %v7967 = vmul.f32 %v7711, %v7935
        %v7968 = vmul.f32 %v7712, %v7936
        %v7969 = vmul.f32 %v7713, %v7937
        %v7970 = vmul.f32 %v7714, %v7938
        %v7971 = vmul.f32 %v7715, %v7939
        %v7972 = vmul.f32 %v7716, %v7940
        %v7973 = vmul.f32 %v7717, %v7941
        %v7974 = vmul.f32 %v7718, %v7942
        %v7975 = vmul.f32 %v7719, %v7943
        %v7976 = vmul.f32 %v7720, %v7944
        %v7977 = vmul.f32 %v7721, %v7945
        %v7978 = vmul.f32 %v7722, %v7946
        %v7979 = vmul.f32 %v7723, %v7947
        %v7980 = vmul.f32 %v7724, %v7948
        %v7981 = vmul.f32 %v7725, %v7949
        %v7982 = vmul.f32 %v7726, %v7950
        %v7983 = vmul.f32 %v7727, %v7951
        %v7984 = vmul.f32 %v7728, %v7952
        %v7985 = vmul.f32 %v7729, %v7953
        %v7986 = vmul.f32 %v7730, %v7954
        %v7987 = vmul.f32 %v7731, %v7955
        %v7988 = vmul.f32 %v7732, %v7956
        %v7989 = vmul.f32 %v7733, %v7957
        %v7990 = vmul.f32 %v7734, %v7958
        %v7991 = vmul.f32 %v7735, %v7959
        %v7992 = vmul.f32 %v7736, %v7960
        %v7993 = vmul.f32 %v7737, %v7961
        %v7994 = vmul.f32 %v7738, %v7962
        %v7995 = vmul.f32 %v7739, %v7963
        %v7997 = vlaneseq
        %v7998 = vshrl.u32 %v7997, 7
        %v7999 = vsub.s32 0, %v7998
        %v8000 = vrot.slane %v7578, %v7999
        %v8002 = vmul.f32 %v7964, %v8000
        %v8003 = vmul.f32 %v7965, %v8000
        %v8004 = vmul.f32 %v7966, %v8000
        %v8005 = vmul.f32 %v7967, %v8000
        %v8006 = vmul.f32 %v7968, %v8000
        %v8007 = vmul.f32 %v7969, %v8000
        %v8008 = vmul.f32 %v7970, %v8000
        %v8009 = vmul.f32 %v7971, %v8000
        %v8010 = vmul.f32 %v7972, %v8000
        %v8011 = vmul.f32 %v7973, %v8000
        %v8012 = vmul.f32 %v7974, %v8000
        %v8013 = vmul.f32 %v7975, %v8000
        %v8014 = vmul.f32 %v7976, %v8000
        %v8015 = vmul.f32 %v7977, %v8000
        %v8016 = vmul.f32 %v7978, %v8000
        %v8017 = vmul.f32 %v7979, %v8000
        %v8018 = vmul.f32 %v7980, %v8000
        %v8019 = vmul.f32 %v7981, %v8000
        %v8020 = vmul.f32 %v7982, %v8000
        %v8021 = vmul.f32 %v7983, %v8000
        %v8022 = vmul.f32 %v7984, %v8000
        %v8023 = vmul.f32 %v7985, %v8000
        %v8024 = vmul.f32 %v7986, %v8000
        %v8025 = vmul.f32 %v7987, %v8000
        %v8026 = vmul.f32 %v7988, %v8000
        %v8027 = vmul.f32 %v7989, %v8000
        %v8028 = vmul.f32 %v7990, %v8000
        %v8029 = vmul.f32 %v7991, %v8000
        %v8030 = vmul.f32 %v7992, %v8000
        %v8031 = vmul.f32 %v7993, %v8000
        %v8032 = vmul.f32 %v7994, %v8000
        %v8033 = vmul.f32 %v7995, %v8000
        %v8035 = vlaneseq
        %v8036 = vshrl.u32 %v8035, 7
        %v8037 = vsub.s32 0, %v8036
        %v8038 = vrot.slane %v7579, %v8037
        %v8040 = vadd.f32 %v8002, %v8038
        %v8041 = vadd.f32 %v8003, %v8038
        %v8042 = vadd.f32 %v8004, %v8038
        %v8043 = vadd.f32 %v8005, %v8038
        %v8044 = vadd.f32 %v8006, %v8038
        %v8045 = vadd.f32 %v8007, %v8038
        %v8046 = vadd.f32 %v8008, %v8038
        %v8047 = vadd.f32 %v8009, %v8038
        %v8048 = vadd.f32 %v8010, %v8038
        %v8049 = vadd.f32 %v8011, %v8038
        %v8050 = vadd.f32 %v8012, %v8038
        %v8051 = vadd.f32 %v8013, %v8038
        %v8052 = vadd.f32 %v8014, %v8038
        %v8053 = vadd.f32 %v8015, %v8038
        %v8054 = vadd.f32 %v8016, %v8038
        %v8055 = vadd.f32 %v8017, %v8038
        %v8056 = vadd.f32 %v8018, %v8038
        %v8057 = vadd.f32 %v8019, %v8038
        %v8058 = vadd.f32 %v8020, %v8038
        %v8059 = vadd.f32 %v8021, %v8038
        %v8060 = vadd.f32 %v8022, %v8038
        %v8061 = vadd.f32 %v8023, %v8038
        %v8062 = vadd.f32 %v8024, %v8038
        %v8063 = vadd.f32 %v8025, %v8038
        %v8064 = vadd.f32 %v8026, %v8038
        %v8065 = vadd.f32 %v8027, %v8038
        %v8066 = vadd.f32 %v8028, %v8038
        %v8067 = vadd.f32 %v8029, %v8038
        %v8068 = vadd.f32 %v8030, %v8038
        %v8069 = vadd.f32 %v8031, %v8038
        %v8070 = vadd.f32 %v8032, %v8038
        %v8071 = vadd.f32 %v8033, %v8038
        %v8072 = vpack.c.bf16 %v8041, %v8040
        %v8073 = vpack.c.bf16 %v8043, %v8042
        %v8074 = vpack.c.bf16 %v8045, %v8044
        %v8075 = vpack.c.bf16 %v8047, %v8046
        %v8076 = vpack.c.bf16 %v8049, %v8048
        %v8077 = vpack.c.bf16 %v8051, %v8050
        %v8078 = vpack.c.bf16 %v8053, %v8052
        %v8079 = vpack.c.bf16 %v8055, %v8054
        %v8080 = vpack.c.bf16 %v8057, %v8056
        %v8081 = vpack.c.bf16 %v8059, %v8058
        %v8082 = vpack.c.bf16 %v8061, %v8060
        %v8083 = vpack.c.bf16 %v8063, %v8062
        %v8084 = vpack.c.bf16 %v8065, %v8064
        %v8085 = vpack.c.bf16 %v8067, %v8066
        %v8086 = vpack.c.bf16 %v8069, %v8068
        %v8087 = vpack.c.bf16 %v8071, %v8070
        %v8088 = vld [vmem:[%s911] sm:$0xff]
        %v8089 = vld [vmem:[%s911 + $0x8] sm:$0xff]
        %v8090 = vld [vmem:[%s911 + $0x10] sm:$0xff]
        %v8091 = vld [vmem:[%s911 + $0x18] sm:$0xff]
        %v8092 = vld [vmem:[%s911 + $0x20] sm:$0xff]
        %v8093 = vld [vmem:[%s911 + $0x28] sm:$0xff]
        %v8094 = vld [vmem:[%s911 + $0x30] sm:$0xff]
        %v8095 = vld [vmem:[%s911 + $0x38] sm:$0xff]
        %v8096 = vld [vmem:[%s920] sm:$0x3]
        %v8098 = vlaneseq
        %v8099 = vshrl.u32 %v8098, 7
        %v8100 = vsub.s32 0, %v8099
        %v8101 = vrot.slane %v8096, %v8100
        %v8102 = vlaneseq
        %v8103 = vshrl.u32 %v8102, 7
        %v8104 = vsub.s32 1, %v8103
        %v8105 = vrot.slane %v8096, %v8104
        %v8116 = vunpack.c.l.b16 %v8088
        %v8117 = vunpack.c.h.b16 %v8088
        %v8118 = vunpack.c.l.b16 %v8089
        %v8119 = vunpack.c.h.b16 %v8089
        %v8120 = vunpack.c.l.b16 %v8090
        %v8121 = vunpack.c.h.b16 %v8090
        %v8122 = vunpack.c.l.b16 %v8091
        %v8123 = vunpack.c.h.b16 %v8091
        %v8124 = vunpack.c.l.b16 %v8092
        %v8125 = vunpack.c.h.b16 %v8092
        %v8126 = vunpack.c.l.b16 %v8093
        %v8127 = vunpack.c.h.b16 %v8093
        %v8128 = vunpack.c.l.b16 %v8094
        %v8129 = vunpack.c.h.b16 %v8094
        %v8130 = vunpack.c.l.b16 %v8095
        %v8131 = vunpack.c.h.b16 %v8095
        %v8132 = vpack.c.b16 %v8118, %v8116
        %v8133 = vpack.c.b16 %v8119, %v8117
        %v8134 = vpack.c.b16 %v8122, %v8120
        %v8135 = vpack.c.b16 %v8123, %v8121
        %v8136 = vpack.c.b16 %v8126, %v8124
        %v8137 = vpack.c.b16 %v8127, %v8125
        %v8138 = vpack.c.b16 %v8130, %v8128
        %v8139 = vpack.c.b16 %v8131, %v8129
        %v8149 = vsel %vm1476, %v8072, 0
        %v8152 = vsel %vm1476, %v8073, 0
        %v8155 = vsel %vm1476, %v8074, 0
        %v8158 = vsel %vm1476, %v8075, 0
        %v8161 = vsel %vm1476, %v8076, 0
        %v8164 = vsel %vm1476, %v8077, 0
        %v8167 = vsel %vm1476, %v8078, 0
        %v8170 = vsel %vm1476, %v8079, 0
        %v8173 = vsel %vm1476, %v8080, 0
        %v8176 = vsel %vm1476, %v8081, 0
        %v8179 = vsel %vm1476, %v8082, 0
        %v8182 = vsel %vm1476, %v8083, 0
        %v8185 = vsel %vm1476, %v8084, 0
        %v8188 = vsel %vm1476, %v8085, 0
        %v8191 = vsel %vm1476, %v8086, 0
        %v8194 = vsel %vm1476, %v8087, 0
        %8196 = vmatprep.subr.bf16.mxu0 %v8133
        %8197 = vmatpush1.bf16.msra.mxu0 %v8132
        %8198 = vmatprep.subr.bf16.mxu0 %v8135
        %8199 = vmatpush1.bf16.msra.mxu0 %v8134
        %8200 = vmatprep.subr.bf16.mxu0 %v8137
        %8201 = vmatpush1.bf16.msra.mxu0 %v8136
        %8202 = vmatprep.subr.bf16.mxu0 %v8139
        %8203 = vmatpush1.bf16.msra.mxu0 %v8138
        %8204 = vmatprep.subr.bf16.mxu0 0
        %8205 = vmatpush1.bf16.msra.mxu0 0
        %8206 = vmatprep.subr.bf16.mxu0 0
        %8207 = vmatpush1.bf16.msra.mxu0 0
        %8208 = vmatprep.subr.bf16.mxu0 0
        %8209 = vmatpush1.bf16.msra.mxu0 0
        %8210 = vmatprep.subr.bf16.mxu0 0
        %8211 = vmatpush1.bf16.msra.mxu0 0
        %8212 = vmatprep.subr.bf16.mxu0 0
        %8213 = vmatpush1.bf16.msra.mxu0 0
        %8214 = vmatprep.subr.bf16.mxu0 0
        %8215 = vmatpush1.bf16.msra.mxu0 0
        %8216 = vmatprep.subr.bf16.mxu0 0
        %8217 = vmatpush1.bf16.msra.mxu0 0
        %8218 = vmatprep.subr.bf16.mxu0 0
        %8219 = vmatpush1.bf16.msra.mxu0 0
        %8220 = vmatprep.subr.bf16.mxu0 0
        %8221 = vmatpush1.bf16.msra.mxu0 0
        %8222 = vmatprep.subr.bf16.mxu0 0
        %8223 = vmatpush1.bf16.msra.mxu0 0
        %8224 = vmatprep.subr.bf16.mxu0 0
        %8225 = vmatpush1.bf16.msra.mxu0 0
        %8226 = vmatprep.subr.bf16.mxu0 0
        %8227 = vmatpush1.bf16.msra.mxu0 0
        %8228 = vmatprep.mubr.bf16.mxu0 0
        %8229 = vmatmul.mubr.bf16.gmra.mrb[0].mxu0 %v8149
        %v8230 = vpop.f32.mrb[0].mxu0
        %v8231 = vadd.f32 %v8101, %v8230
        %v8232 = vpop.f32.mrb[0].mxu0
        %v8233 = vadd.f32 %v8105, %v8232
        %v8234 = vpop.f32.mrb[0].mxu0
        %v8235 = vadd.f32 %v8101, %v8234
        %v8236 = vpop.f32.mrb[0].mxu0
        %v8237 = vadd.f32 %v8105, %v8236
        %8238 = vmatprep.mubr.bf16.mxu0 0
        %8239 = vmatmul.mubr.bf16.gmra.mrb[0].mxu0 %v8152
        %v8240 = vpop.f32.mrb[0].mxu0
        %v8241 = vadd.f32 %v8101, %v8240
        %v8242 = vpop.f32.mrb[0].mxu0
        %v8243 = vadd.f32 %v8105, %v8242
        %v8244 = vpop.f32.mrb[0].mxu0
        %v8245 = vadd.f32 %v8101, %v8244
        %v8246 = vpop.f32.mrb[0].mxu0
        %v8247 = vadd.f32 %v8105, %v8246
        %8248 = vmatprep.mubr.bf16.mxu0 0
        %8249 = vmatmul.mubr.bf16.gmra.mrb[0].mxu0 %v8155
        %v8250 = vpop.f32.mrb[0].mxu0
        %v8251 = vadd.f32 %v8101, %v8250
        %v8252 = vpop.f32.mrb[0].mxu0
        %v8253 = vadd.f32 %v8105, %v8252
        %v8254 = vpop.f32.mrb[0].mxu0
        %v8255 = vadd.f32 %v8101, %v8254
        %v8256 = vpop.f32.mrb[0].mxu0
        %v8257 = vadd.f32 %v8105, %v8256
        %8258 = vmatprep.mubr.bf16.mxu0 0
        %8259 = vmatmul.mubr.bf16.gmra.mrb[0].mxu0 %v8158
        %v8260 = vpop.f32.mrb[0].mxu0
        %v8261 = vadd.f32 %v8101, %v8260
        %v8262 = vpop.f32.mrb[0].mxu0
        %v8263 = vadd.f32 %v8105, %v8262
        %v8264 = vpop.f32.mrb[0].mxu0
        %v8265 = vadd.f32 %v8101, %v8264
        %v8266 = vpop.f32.mrb[0].mxu0
        %v8267 = vadd.f32 %v8105, %v8266
        %8268 = vmatprep.mubr.bf16.mxu0 0
        %8269 = vmatmul.mubr.bf16.gmra.mrb[0].mxu0 %v8161
        %v8270 = vpop.f32.mrb[0].mxu0
        %v8271 = vadd.f32 %v8101, %v8270
        %v8272 = vpop.f32.mrb[0].mxu0
        %v8273 = vadd.f32 %v8105, %v8272
        %v8274 = vpop.f32.mrb[0].mxu0
        %v8275 = vadd.f32 %v8101, %v8274
        %v8276 = vpop.f32.mrb[0].mxu0
        %v8277 = vadd.f32 %v8105, %v8276
        %8278 = vmatprep.mubr.bf16.mxu0 0
        %8279 = vmatmul.mubr.bf16.gmra.mrb[0].mxu0 %v8164
        %v8280 = vpop.f32.mrb[0].mxu0
        %v8281 = vadd.f32 %v8101, %v8280
        %v8282 = vpop.f32.mrb[0].mxu0
        %v8283 = vadd.f32 %v8105, %v8282
        %v8284 = vpop.f32.mrb[0].mxu0
        %v8285 = vadd.f32 %v8101, %v8284
        %v8286 = vpop.f32.mrb[0].mxu0
        %v8287 = vadd.f32 %v8105, %v8286
        %8288 = vmatprep.mubr.bf16.mxu0 0
        %8289 = vmatmul.mubr.bf16.gmra.mrb[0].mxu0 %v8167
        %v8290 = vpop.f32.mrb[0].mxu0
        %v8291 = vadd.f32 %v8101, %v8290
        %v8292 = vpop.f32.mrb[0].mxu0
        %v8293 = vadd.f32 %v8105, %v8292
        %v8294 = vpop.f32.mrb[0].mxu0
        %v8295 = vadd.f32 %v8101, %v8294
        %v8296 = vpop.f32.mrb[0].mxu0
        %v8297 = vadd.f32 %v8105, %v8296
        %8298 = vmatprep.mubr.bf16.mxu0 0
        %8299 = vmatmul.mubr.bf16.gmra.mrb[0].mxu0 %v8170
        %v8300 = vpop.f32.mrb[0].mxu0
        %v8301 = vadd.f32 %v8101, %v8300
        %v8302 = vpop.f32.mrb[0].mxu0
        %v8303 = vadd.f32 %v8105, %v8302
        %v8304 = vpop.f32.mrb[0].mxu0
        %v8305 = vadd.f32 %v8101, %v8304
        %v8306 = vpop.f32.mrb[0].mxu0
        %v8307 = vadd.f32 %v8105, %v8306
        %8308 = vmatprep.mubr.bf16.mxu0 0
        %8309 = vmatmul.mubr.bf16.gmra.mrb[0].mxu0 %v8173
        %v8310 = vpop.f32.mrb[0].mxu0
        %v8311 = vadd.f32 %v8101, %v8310
        %v8312 = vpop.f32.mrb[0].mxu0
        %v8313 = vadd.f32 %v8105, %v8312
        %v8314 = vpop.f32.mrb[0].mxu0
        %v8315 = vadd.f32 %v8101, %v8314
        %v8316 = vpop.f32.mrb[0].mxu0
        %v8317 = vadd.f32 %v8105, %v8316
        %8318 = vmatprep.mubr.bf16.mxu0 0
        %8319 = vmatmul.mubr.bf16.gmra.mrb[0].mxu0 %v8176
        %v8320 = vpop.f32.mrb[0].mxu0
        %v8321 = vadd.f32 %v8101, %v8320
        %v8322 = vpop.f32.mrb[0].mxu0
        %v8323 = vadd.f32 %v8105, %v8322
        %v8324 = vpop.f32.mrb[0].mxu0
        %v8325 = vadd.f32 %v8101, %v8324
        %v8326 = vpop.f32.mrb[0].mxu0
        %v8327 = vadd.f32 %v8105, %v8326
        %8328 = vmatprep.mubr.bf16.mxu0 0
        %8329 = vmatmul.mubr.bf16.gmra.mrb[0].mxu0 %v8179
        %v8330 = vpop.f32.mrb[0].mxu0
        %v8331 = vadd.f32 %v8101, %v8330
        %v8332 = vpop.f32.mrb[0].mxu0
        %v8333 = vadd.f32 %v8105, %v8332
        %v8334 = vpop.f32.mrb[0].mxu0
        %v8335 = vadd.f32 %v8101, %v8334
        %v8336 = vpop.f32.mrb[0].mxu0
        %v8337 = vadd.f32 %v8105, %v8336
        %8338 = vmatprep.mubr.bf16.mxu0 0
        %8339 = vmatmul.mubr.bf16.gmra.mrb[0].mxu0 %v8182
        %v8340 = vpop.f32.mrb[0].mxu0
        %v8341 = vadd.f32 %v8101, %v8340
        %v8342 = vpop.f32.mrb[0].mxu0
        %v8343 = vadd.f32 %v8105, %v8342
        %v8344 = vpop.f32.mrb[0].mxu0
        %v8345 = vadd.f32 %v8101, %v8344
        %v8346 = vpop.f32.mrb[0].mxu0
        %v8347 = vadd.f32 %v8105, %v8346
        %8348 = vmatprep.mubr.bf16.mxu0 0
        %8349 = vmatmul.mubr.bf16.gmra.mrb[0].mxu0 %v8185
        %v8350 = vpop.f32.mrb[0].mxu0
        %v8351 = vadd.f32 %v8101, %v8350
        %v8352 = vpop.f32.mrb[0].mxu0
        %v8353 = vadd.f32 %v8105, %v8352
        %v8354 = vpop.f32.mrb[0].mxu0
        %v8355 = vadd.f32 %v8101, %v8354
        %v8356 = vpop.f32.mrb[0].mxu0
        %v8357 = vadd.f32 %v8105, %v8356
        %8358 = vmatprep.mubr.bf16.mxu0 0
        %8359 = vmatmul.mubr.bf16.gmra.mrb[0].mxu0 %v8188
        %v8360 = vpop.f32.mrb[0].mxu0
        %v8361 = vadd.f32 %v8101, %v8360
        %v8362 = vpop.f32.mrb[0].mxu0
        %v8363 = vadd.f32 %v8105, %v8362
        %v8364 = vpop.f32.mrb[0].mxu0
        %v8365 = vadd.f32 %v8101, %v8364
        %v8366 = vpop.f32.mrb[0].mxu0
        %v8367 = vadd.f32 %v8105, %v8366
        %8368 = vmatprep.mubr.bf16.mxu0 0
        %8369 = vmatmul.mubr.bf16.gmra.mrb[0].mxu0 %v8191
        %v8370 = vpop.f32.mrb[0].mxu0
        %v8371 = vadd.f32 %v8101, %v8370
        %v8372 = vpop.f32.mrb[0].mxu0
        %v8373 = vadd.f32 %v8105, %v8372
        %v8374 = vpop.f32.mrb[0].mxu0
        %v8375 = vadd.f32 %v8101, %v8374
        %v8376 = vpop.f32.mrb[0].mxu0
        %v8377 = vadd.f32 %v8105, %v8376
        %8378 = vmatprep.mubr.bf16.mxu0 0
        %8379 = vmatmul.mubr.bf16.gmra.mrb[0].mxu0 %v8194
        %v8380 = vpop.f32.mrb[0].mxu0
        %v8381 = vadd.f32 %v8101, %v8380
        %v8382 = vpop.f32.mrb[0].mxu0
        %v8383 = vadd.f32 %v8105, %v8382
        %v8384 = vpop.f32.mrb[0].mxu0
        %v8385 = vadd.f32 %v8101, %v8384
        %v8386 = vpop.f32.mrb[0].mxu0
        %v8387 = vadd.f32 %v8105, %v8386
        %8388 = vdwg.mxu0
        %v8389 = vpack.c.bf16 %v8235, %v8231
        %v8390 = vpack.c.bf16 %v8237, %v8233
        %v8391 = vpack.c.bf16 %v8245, %v8241
        %v8392 = vpack.c.bf16 %v8247, %v8243
        %v8393 = vpack.c.bf16 %v8255, %v8251
        %v8394 = vpack.c.bf16 %v8257, %v8253
        %v8395 = vpack.c.bf16 %v8265, %v8261
        %v8396 = vpack.c.bf16 %v8267, %v8263
        %v8397 = vpack.c.bf16 %v8275, %v8271
        %v8398 = vpack.c.bf16 %v8277, %v8273
        %v8399 = vpack.c.bf16 %v8285, %v8281
        %v8400 = vpack.c.bf16 %v8287, %v8283
        %v8401 = vpack.c.bf16 %v8295, %v8291
        %v8402 = vpack.c.bf16 %v8297, %v8293
        %v8403 = vpack.c.bf16 %v8305, %v8301
        %v8404 = vpack.c.bf16 %v8307, %v8303
        %v8405 = vpack.c.bf16 %v8315, %v8311
        %v8406 = vpack.c.bf16 %v8317, %v8313
        %v8407 = vpack.c.bf16 %v8325, %v8321
        %v8408 = vpack.c.bf16 %v8327, %v8323
        %v8409 = vpack.c.bf16 %v8335, %v8331
        %v8410 = vpack.c.bf16 %v8337, %v8333
        %v8411 = vpack.c.bf16 %v8345, %v8341
        %v8412 = vpack.c.bf16 %v8347, %v8343
        %v8413 = vpack.c.bf16 %v8355, %v8351
        %v8414 = vpack.c.bf16 %v8357, %v8353
        %v8415 = vpack.c.bf16 %v8365, %v8361
        %v8416 = vpack.c.bf16 %v8367, %v8363
        %v8417 = vpack.c.bf16 %v8375, %v8371
        %v8418 = vpack.c.bf16 %v8377, %v8373
        %v8419 = vpack.c.bf16 %v8385, %v8381
        %v8420 = vpack.c.bf16 %v8387, %v8383
        %v8421 = vmul.bf16 %v8389, 1071267802
        %v8422 = vmul.bf16 %v8390, 1071267802
        %v8423 = vmul.bf16 %v8391, 1071267802
        %v8424 = vmul.bf16 %v8392, 1071267802
        %v8425 = vmul.bf16 %v8393, 1071267802
        %v8426 = vmul.bf16 %v8394, 1071267802
        %v8427 = vmul.bf16 %v8395, 1071267802
        %v8428 = vmul.bf16 %v8396, 1071267802
        %v8429 = vmul.bf16 %v8397, 1071267802
        %v8430 = vmul.bf16 %v8398, 1071267802
        %v8431 = vmul.bf16 %v8399, 1071267802
        %v8432 = vmul.bf16 %v8400, 1071267802
        %v8433 = vmul.bf16 %v8401, 1071267802
        %v8434 = vmul.bf16 %v8402, 1071267802
        %v8435 = vmul.bf16 %v8403, 1071267802
        %v8436 = vmul.bf16 %v8404, 1071267802
        %v8437 = vmul.bf16 %v8405, 1071267802
        %v8438 = vmul.bf16 %v8406, 1071267802
        %v8439 = vmul.bf16 %v8407, 1071267802
        %v8440 = vmul.bf16 %v8408, 1071267802
        %v8441 = vmul.bf16 %v8409, 1071267802
        %v8442 = vmul.bf16 %v8410, 1071267802
        %v8443 = vmul.bf16 %v8411, 1071267802
        %v8444 = vmul.bf16 %v8412, 1071267802
        %v8445 = vmul.bf16 %v8413, 1071267802
        %v8446 = vmul.bf16 %v8414, 1071267802
        %v8447 = vmul.bf16 %v8415, 1071267802
        %v8448 = vmul.bf16 %v8416, 1071267802
        %v8449 = vmul.bf16 %v8417, 1071267802
        %v8450 = vmul.bf16 %v8418, 1071267802
        %v8451 = vmul.bf16 %v8419, 1071267802
        %v8452 = vmul.bf16 %v8420, 1071267802
        %v8453 = vxor.u32 %v8421, 2147516416
        %v8454 = vxor.u32 %v8422, 2147516416
        %v8455 = vxor.u32 %v8423, 2147516416
        %v8456 = vxor.u32 %v8424, 2147516416
        %v8457 = vxor.u32 %v8425, 2147516416
        %v8458 = vxor.u32 %v8426, 2147516416
        %v8459 = vxor.u32 %v8427, 2147516416
        %v8460 = vxor.u32 %v8428, 2147516416
        %v8461 = vxor.u32 %v8429, 2147516416
        %v8462 = vxor.u32 %v8430, 2147516416
        %v8463 = vxor.u32 %v8431, 2147516416
        %v8464 = vxor.u32 %v8432, 2147516416
        %v8465 = vxor.u32 %v8433, 2147516416
        %v8466 = vxor.u32 %v8434, 2147516416
        %v8467 = vxor.u32 %v8435, 2147516416
        %v8468 = vxor.u32 %v8436, 2147516416
        %v8469 = vxor.u32 %v8437, 2147516416
        %v8470 = vxor.u32 %v8438, 2147516416
        %v8471 = vxor.u32 %v8439, 2147516416
        %v8472 = vxor.u32 %v8440, 2147516416
        %v8473 = vxor.u32 %v8441, 2147516416
        %v8474 = vxor.u32 %v8442, 2147516416
        %v8475 = vxor.u32 %v8443, 2147516416
        %v8476 = vxor.u32 %v8444, 2147516416
        %v8477 = vxor.u32 %v8445, 2147516416
        %v8478 = vxor.u32 %v8446, 2147516416
        %v8479 = vxor.u32 %v8447, 2147516416
        %v8480 = vxor.u32 %v8448, 2147516416
        %v8481 = vxor.u32 %v8449, 2147516416
        %v8482 = vxor.u32 %v8450, 2147516416
        %v8483 = vxor.u32 %v8451, 2147516416
        %v8484 = vxor.u32 %v8452, 2147516416
        %v8486 = vmul.bf16 %v8453, 1069105081
        %v8487 = vpow.bf16.pop %v8486
        %v8489 = vmul.bf16 %v8454, 1069105081
        %v8490 = vpow.bf16.pop %v8489
        %v8492 = vmul.bf16 %v8455, 1069105081
        %v8493 = vpow.bf16.pop %v8492
        %v8495 = vmul.bf16 %v8456, 1069105081
        %v8496 = vpow.bf16.pop %v8495
        %v8498 = vmul.bf16 %v8457, 1069105081
        %v8499 = vpow.bf16.pop %v8498
        %v8501 = vmul.bf16 %v8458, 1069105081
        %v8502 = vpow.bf16.pop %v8501
        %v8504 = vmul.bf16 %v8459, 1069105081
        %v8505 = vpow.bf16.pop %v8504
        %v8507 = vmul.bf16 %v8460, 1069105081
        %v8508 = vpow.bf16.pop %v8507
        %v8510 = vmul.bf16 %v8461, 1069105081
        %v8511 = vpow.bf16.pop %v8510
        %v8513 = vmul.bf16 %v8462, 1069105081
        %v8514 = vpow.bf16.pop %v8513
        %v8516 = vmul.bf16 %v8463, 1069105081
        %v8517 = vpow.bf16.pop %v8516
        %v8519 = vmul.bf16 %v8464, 1069105081
        %v8520 = vpow.bf16.pop %v8519
        %v8522 = vmul.bf16 %v8465, 1069105081
        %v8523 = vpow.bf16.pop %v8522
        %v8525 = vmul.bf16 %v8466, 1069105081
        %v8526 = vpow.bf16.pop %v8525
        %v8528 = vmul.bf16 %v8467, 1069105081
        %v8529 = vpow.bf16.pop %v8528
        %v8531 = vmul.bf16 %v8468, 1069105081
        %v8532 = vpow.bf16.pop %v8531
        %v8534 = vmul.bf16 %v8469, 1069105081
        %v8535 = vpow.bf16.pop %v8534
        %v8537 = vmul.bf16 %v8470, 1069105081
        %v8538 = vpow.bf16.pop %v8537
        %v8540 = vmul.bf16 %v8471, 1069105081
        %v8541 = vpow.bf16.pop %v8540
        %v8543 = vmul.bf16 %v8472, 1069105081
        %v8544 = vpow.bf16.pop %v8543
        %v8546 = vmul.bf16 %v8473, 1069105081
        %v8547 = vpow.bf16.pop %v8546
        %v8549 = vmul.bf16 %v8474, 1069105081
        %v8550 = vpow.bf16.pop %v8549
        %v8552 = vmul.bf16 %v8475, 1069105081
        %v8553 = vpow.bf16.pop %v8552
        %v8555 = vmul.bf16 %v8476, 1069105081
        %v8556 = vpow.bf16.pop %v8555
        %v8558 = vmul.bf16 %v8477, 1069105081
        %v8559 = vpow.bf16.pop %v8558
        %v8561 = vmul.bf16 %v8478, 1069105081
        %v8562 = vpow.bf16.pop %v8561
        %v8564 = vmul.bf16 %v8479, 1069105081
        %v8565 = vpow.bf16.pop %v8564
        %v8567 = vmul.bf16 %v8480, 1069105081
        %v8568 = vpow.bf16.pop %v8567
        %v8570 = vmul.bf16 %v8481, 1069105081
        %v8571 = vpow.bf16.pop %v8570
        %v8573 = vmul.bf16 %v8482, 1069105081
        %v8574 = vpow.bf16.pop %v8573
        %v8576 = vmul.bf16 %v8483, 1069105081
        %v8577 = vpow.bf16.pop %v8576
        %v8579 = vmul.bf16 %v8484, 1069105081
        %v8580 = vpow.bf16.pop %v8579
        %v8581 = vadd.bf16 %v8487, 1065369472
        %v8582 = vadd.bf16 %v8490, 1065369472
        %v8583 = vadd.bf16 %v8493, 1065369472
        %v8584 = vadd.bf16 %v8496, 1065369472
        %v8585 = vadd.bf16 %v8499, 1065369472
        %v8586 = vadd.bf16 %v8502, 1065369472
        %v8587 = vadd.bf16 %v8505, 1065369472
        %v8588 = vadd.bf16 %v8508, 1065369472
        %v8589 = vadd.bf16 %v8511, 1065369472
        %v8590 = vadd.bf16 %v8514, 1065369472
        %v8591 = vadd.bf16 %v8517, 1065369472
        %v8592 = vadd.bf16 %v8520, 1065369472
        %v8593 = vadd.bf16 %v8523, 1065369472
        %v8594 = vadd.bf16 %v8526, 1065369472
        %v8595 = vadd.bf16 %v8529, 1065369472
        %v8596 = vadd.bf16 %v8532, 1065369472
        %v8597 = vadd.bf16 %v8535, 1065369472
        %v8598 = vadd.bf16 %v8538, 1065369472
        %v8599 = vadd.bf16 %v8541, 1065369472
        %v8600 = vadd.bf16 %v8544, 1065369472
        %v8601 = vadd.bf16 %v8547, 1065369472
        %v8602 = vadd.bf16 %v8550, 1065369472
        %v8603 = vadd.bf16 %v8553, 1065369472
        %v8604 = vadd.bf16 %v8556, 1065369472
        %v8605 = vadd.bf16 %v8559, 1065369472
        %v8606 = vadd.bf16 %v8562, 1065369472
        %v8607 = vadd.bf16 %v8565, 1065369472
        %v8608 = vadd.bf16 %v8568, 1065369472
        %v8609 = vadd.bf16 %v8571, 1065369472
        %v8610 = vadd.bf16 %v8574, 1065369472
        %v8611 = vadd.bf16 %v8577, 1065369472
        %v8612 = vadd.bf16 %v8580, 1065369472
        %v8613 = vrcp.bf16.pop %v8581
        %v8614 = vmul.bf16 1065369472, %v8613
        %v8615 = vrcp.bf16.pop %v8582
        %v8616 = vmul.bf16 1065369472, %v8615
        %v8617 = vrcp.bf16.pop %v8583
        %v8618 = vmul.bf16 1065369472, %v8617
        %v8619 = vrcp.bf16.pop %v8584
        %v8620 = vmul.bf16 1065369472, %v8619
        %v8621 = vrcp.bf16.pop %v8585
        %v8622 = vmul.bf16 1065369472, %v8621
        %v8623 = vrcp.bf16.pop %v8586
        %v8624 = vmul.bf16 1065369472, %v8623
        %v8625 = vrcp.bf16.pop %v8587
        %v8626 = vmul.bf16 1065369472, %v8625
        %v8627 = vrcp.bf16.pop %v8588
        %v8628 = vmul.bf16 1065369472, %v8627
        %v8629 = vrcp.bf16.pop %v8589
        %v8630 = vmul.bf16 1065369472, %v8629
        %v8631 = vrcp.bf16.pop %v8590
        %v8632 = vmul.bf16 1065369472, %v8631
        %v8633 = vrcp.bf16.pop %v8591
        %v8634 = vmul.bf16 1065369472, %v8633
        %v8635 = vrcp.bf16.pop %v8592
        %v8636 = vmul.bf16 1065369472, %v8635
        %v8637 = vrcp.bf16.pop %v8593
        %v8638 = vmul.bf16 1065369472, %v8637
        %v8639 = vrcp.bf16.pop %v8594
        %v8640 = vmul.bf16 1065369472, %v8639
        %v8641 = vrcp.bf16.pop %v8595
        %v8642 = vmul.bf16 1065369472, %v8641
        %v8643 = vrcp.bf16.pop %v8596
        %v8644 = vmul.bf16 1065369472, %v8643
        %v8645 = vrcp.bf16.pop %v8597
        %v8646 = vmul.bf16 1065369472, %v8645
        %v8647 = vrcp.bf16.pop %v8598
        %v8648 = vmul.bf16 1065369472, %v8647
        %v8649 = vrcp.bf16.pop %v8599
        %v8650 = vmul.bf16 1065369472, %v8649
        %v8651 = vrcp.bf16.pop %v8600
        %v8652 = vmul.bf16 1065369472, %v8651
        %v8653 = vrcp.bf16.pop %v8601
        %v8654 = vmul.bf16 1065369472, %v8653
        %v8655 = vrcp.bf16.pop %v8602
        %v8656 = vmul.bf16 1065369472, %v8655
        %v8657 = vrcp.bf16.pop %v8603
        %v8658 = vmul.bf16 1065369472, %v8657
        %v8659 = vrcp.bf16.pop %v8604
        %v8660 = vmul.bf16 1065369472, %v8659
        %v8661 = vrcp.bf16.pop %v8605
        %v8662 = vmul.bf16 1065369472, %v8661
        %v8663 = vrcp.bf16.pop %v8606
        %v8664 = vmul.bf16 1065369472, %v8663
        %v8665 = vrcp.bf16.pop %v8607
        %v8666 = vmul.bf16 1065369472, %v8665
        %v8667 = vrcp.bf16.pop %v8608
        %v8668 = vmul.bf16 1065369472, %v8667
        %v8669 = vrcp.bf16.pop %v8609
        %v8670 = vmul.bf16 1065369472, %v8669
        %v8671 = vrcp.bf16.pop %v8610
        %v8672 = vmul.bf16 1065369472, %v8671
        %v8673 = vrcp.bf16.pop %v8611
        %v8674 = vmul.bf16 1065369472, %v8673
        %v8675 = vrcp.bf16.pop %v8612
        %v8676 = vmul.bf16 1065369472, %v8675
        %v8677 = vmul.bf16 %v8389, %v8614
        %v8678 = vmul.bf16 %v8390, %v8616
        %v8679 = vmul.bf16 %v8391, %v8618
        %v8680 = vmul.bf16 %v8392, %v8620
        %v8681 = vmul.bf16 %v8393, %v8622
        %v8682 = vmul.bf16 %v8394, %v8624
        %v8683 = vmul.bf16 %v8395, %v8626
        %v8684 = vmul.bf16 %v8396, %v8628
        %v8685 = vmul.bf16 %v8397, %v8630
        %v8686 = vmul.bf16 %v8398, %v8632
        %v8687 = vmul.bf16 %v8399, %v8634
        %v8688 = vmul.bf16 %v8400, %v8636
        %v8689 = vmul.bf16 %v8401, %v8638
        %v8690 = vmul.bf16 %v8402, %v8640
        %v8691 = vmul.bf16 %v8403, %v8642
        %v8692 = vmul.bf16 %v8404, %v8644
        %v8693 = vmul.bf16 %v8405, %v8646
        %v8694 = vmul.bf16 %v8406, %v8648
        %v8695 = vmul.bf16 %v8407, %v8650
        %v8696 = vmul.bf16 %v8408, %v8652
        %v8697 = vmul.bf16 %v8409, %v8654
        %v8698 = vmul.bf16 %v8410, %v8656
        %v8699 = vmul.bf16 %v8411, %v8658
        %v8700 = vmul.bf16 %v8412, %v8660
        %v8701 = vmul.bf16 %v8413, %v8662
        %v8702 = vmul.bf16 %v8414, %v8664
        %v8703 = vmul.bf16 %v8415, %v8666
        %v8704 = vmul.bf16 %v8416, %v8668
        %v8705 = vmul.bf16 %v8417, %v8670
        %v8706 = vmul.bf16 %v8418, %v8672
        %v8707 = vmul.bf16 %v8419, %v8674
        %v8708 = vmul.bf16 %v8420, %v8676
        %v8709 = vld [vmem:[%s929] sm:$0xf]
        %v8710 = vld [vmem:[%s929 + $0x4] sm:$0xf]
        %v8711 = vld [vmem:[%s929 + $0x8] sm:$0xf]
        %v8712 = vld [vmem:[%s929 + $0xc] sm:$0xf]
        %v8713 = vld [vmem:[%s929 + $0x10] sm:$0xf]
        %v8714 = vld [vmem:[%s929 + $0x14] sm:$0xf]
        %v8715 = vld [vmem:[%s929 + $0x18] sm:$0xf]
        %v8716 = vld [vmem:[%s929 + $0x1c] sm:$0xf]
        %v8717 = vld [vmem:[%s929 + $0x20] sm:$0xf]
        %v8718 = vld [vmem:[%s929 + $0x24] sm:$0xf]
        %v8719 = vld [vmem:[%s929 + $0x28] sm:$0xf]
        %v8720 = vld [vmem:[%s929 + $0x2c] sm:$0xf]
        %v8721 = vld [vmem:[%s929 + $0x30] sm:$0xf]
        %v8722 = vld [vmem:[%s929 + $0x34] sm:$0xf]
        %v8723 = vld [vmem:[%s929 + $0x38] sm:$0xf]
        %v8724 = vld [vmem:[%s929 + $0x3c] sm:$0xf]
        %v8725 = vld [vmem:[%s929 + $0x40] sm:$0xf]
        %v8726 = vld [vmem:[%s929 + $0x44] sm:$0xf]
        %v8727 = vld [vmem:[%s929 + $0x48] sm:$0xf]
        %v8728 = vld [vmem:[%s929 + $0x4c] sm:$0xf]
        %v8729 = vld [vmem:[%s929 + $0x50] sm:$0xf]
        %v8730 = vld [vmem:[%s929 + $0x54] sm:$0xf]
        %v8731 = vld [vmem:[%s929 + $0x58] sm:$0xf]
        %v8732 = vld [vmem:[%s929 + $0x5c] sm:$0xf]
        %v8733 = vld [vmem:[%s929 + $0x60] sm:$0xf]
        %v8734 = vld [vmem:[%s929 + $0x64] sm:$0xf]
        %v8735 = vld [vmem:[%s929 + $0x68] sm:$0xf]
        %v8736 = vld [vmem:[%s929 + $0x6c] sm:$0xf]
        %v8737 = vld [vmem:[%s929 + $0x70] sm:$0xf]
        %v8738 = vld [vmem:[%s929 + $0x74] sm:$0xf]
        %v8739 = vld [vmem:[%s929 + $0x78] sm:$0xf]
        %v8740 = vld [vmem:[%s929 + $0x7c] sm:$0xf]
        %v8741 = vld [vmem:[%s937] sm:$0x1]
        %v8743 = vlaneseq
        %v8744 = vshrl.u32 %v8743, 7
        %v8745 = vsub.s32 0, %v8744
        %v8746 = vrot.slane %v8741, %v8745
        %v8780 = vunpack.c.l.b16 %v8709
        %v8781 = vunpack.c.l.b16 %v8710
        %v8782 = vunpack.c.l.b16 %v8711
        %v8783 = vunpack.c.l.b16 %v8712
        %v8784 = vunpack.c.l.b16 %v8713
        %v8785 = vunpack.c.l.b16 %v8714
        %v8786 = vunpack.c.l.b16 %v8715
        %v8787 = vunpack.c.l.b16 %v8716
        %v8788 = vunpack.c.l.b16 %v8717
        %v8789 = vunpack.c.l.b16 %v8718
        %v8790 = vunpack.c.l.b16 %v8719
        %v8791 = vunpack.c.l.b16 %v8720
        %v8792 = vunpack.c.l.b16 %v8721
        %v8793 = vunpack.c.l.b16 %v8722
        %v8794 = vunpack.c.l.b16 %v8723
        %v8795 = vunpack.c.l.b16 %v8724
        %v8796 = vunpack.c.l.b16 %v8725
        %v8797 = vunpack.c.l.b16 %v8726
        %v8798 = vunpack.c.l.b16 %v8727
        %v8799 = vunpack.c.l.b16 %v8728
        %v8800 = vunpack.c.l.b16 %v8729
        %v8801 = vunpack.c.l.b16 %v8730
        %v8802 = vunpack.c.l.b16 %v8731
        %v8803 = vunpack.c.l.b16 %v8732
        %v8804 = vunpack.c.l.b16 %v8733
        %v8805 = vunpack.c.l.b16 %v8734
        %v8806 = vunpack.c.l.b16 %v8735
        %v8807 = vunpack.c.l.b16 %v8736
        %v8808 = vunpack.c.l.b16 %v8737
        %v8809 = vunpack.c.l.b16 %v8738
        %v8810 = vunpack.c.l.b16 %v8739
        %v8811 = vunpack.c.l.b16 %v8740
        %v8812 = vpack.c.b16 %v8781, %v8780
        %v8813 = vpack.c.b16 %v8783, %v8782
        %v8814 = vpack.c.b16 %v8785, %v8784
        %v8815 = vpack.c.b16 %v8787, %v8786
        %v8816 = vpack.c.b16 %v8789, %v8788
        %v8817 = vpack.c.b16 %v8791, %v8790
        %v8818 = vpack.c.b16 %v8793, %v8792
        %v8819 = vpack.c.b16 %v8795, %v8794
        %v8820 = vpack.c.b16 %v8797, %v8796
        %v8821 = vpack.c.b16 %v8799, %v8798
        %v8822 = vpack.c.b16 %v8801, %v8800
        %v8823 = vpack.c.b16 %v8803, %v8802
        %v8824 = vpack.c.b16 %v8805, %v8804
        %v8825 = vpack.c.b16 %v8807, %v8806
        %v8826 = vpack.c.b16 %v8809, %v8808
        %v8827 = vpack.c.b16 %v8811, %v8810
        %8844 = vmatprep.subr.bf16.mxu0 0
        %8845 = vmatpush1.bf16.msra.mxu0 %v8812
        %8846 = vmatprep.subr.bf16.mxu0 0
        %8847 = vmatpush1.bf16.msra.mxu0 %v8813
        %8848 = vmatprep.subr.bf16.mxu0 0
        %8849 = vmatpush1.bf16.msra.mxu0 %v8814
        %8850 = vmatprep.subr.bf16.mxu0 0
        %8851 = vmatpush1.bf16.msra.mxu0 %v8815
        %8852 = vmatprep.subr.bf16.mxu0 0
        %8853 = vmatpush1.bf16.msra.mxu0 %v8816
        %8854 = vmatprep.subr.bf16.mxu0 0
        %8855 = vmatpush1.bf16.msra.mxu0 %v8817
        %8856 = vmatprep.subr.bf16.mxu0 0
        %8857 = vmatpush1.bf16.msra.mxu0 %v8818
        %8858 = vmatprep.subr.bf16.mxu0 0
        %8859 = vmatpush1.bf16.msra.mxu0 %v8819
        %8860 = vmatprep.subr.bf16.mxu0 0
        %8861 = vmatpush1.bf16.msra.mxu0 %v8820
        %8862 = vmatprep.subr.bf16.mxu0 0
        %8863 = vmatpush1.bf16.msra.mxu0 %v8821
        %8864 = vmatprep.subr.bf16.mxu0 0
        %8865 = vmatpush1.bf16.msra.mxu0 %v8822
        %8866 = vmatprep.subr.bf16.mxu0 0
        %8867 = vmatpush1.bf16.msra.mxu0 %v8823
        %8868 = vmatprep.subr.bf16.mxu0 0
        %8869 = vmatpush1.bf16.msra.mxu0 %v8824
        %8870 = vmatprep.subr.bf16.mxu0 0
        %8871 = vmatpush1.bf16.msra.mxu0 %v8825
        %8872 = vmatprep.subr.bf16.mxu0 0
        %8873 = vmatpush1.bf16.msra.mxu0 %v8826
        %8874 = vmatprep.subr.bf16.mxu0 0
        %8875 = vmatpush1.bf16.msra.mxu0 %v8827
        %8876 = vmatprep.mubr.bf16.mxu0 %v8678
        %8877 = vmatmul.mubr.bf16.gmra.mrb[0].mxu0 %v8677
        %v8878 = vpop.f32.mrb[0].mxu0
        %v8879 = vadd.f32 %v8746, %v8878
        %v8880 = vpop.f32.mrb[0].mxu0
        %v8881 = vpop.f32.mrb[0].mxu0
        %v8882 = vadd.f32 %v8746, %v8881
        %v8883 = vpop.f32.mrb[0].mxu0
        %8884 = vmatprep.mubr.bf16.mxu0 %v8680
        %8885 = vmatmul.mubr.bf16.gmra.mrb[0].mxu0 %v8679
        %v8886 = vpop.f32.mrb[0].mxu0
        %v8887 = vadd.f32 %v8746, %v8886
        %v8888 = vpop.f32.mrb[0].mxu0
        %v8889 = vpop.f32.mrb[0].mxu0
        %v8890 = vadd.f32 %v8746, %v8889
        %v8891 = vpop.f32.mrb[0].mxu0
        %8892 = vmatprep.mubr.bf16.mxu0 %v8682
        %8893 = vmatmul.mubr.bf16.gmra.mrb[0].mxu0 %v8681
        %v8894 = vpop.f32.mrb[0].mxu0
        %v8895 = vadd.f32 %v8746, %v8894
        %v8896 = vpop.f32.mrb[0].mxu0
        %v8897 = vpop.f32.mrb[0].mxu0
        %v8898 = vadd.f32 %v8746, %v8897
        %v8899 = vpop.f32.mrb[0].mxu0
        %8900 = vmatprep.mubr.bf16.mxu0 %v8684
        %8901 = vmatmul.mubr.bf16.gmra.mrb[0].mxu0 %v8683
        %v8902 = vpop.f32.mrb[0].mxu0
        %v8903 = vadd.f32 %v8746, %v8902
        %v8904 = vpop.f32.mrb[0].mxu0
        %v8905 = vpop.f32.mrb[0].mxu0
        %v8906 = vadd.f32 %v8746, %v8905
        %v8907 = vpop.f32.mrb[0].mxu0
        %8908 = vmatprep.mubr.bf16.mxu0 %v8686
        %8909 = vmatmul.mubr.bf16.gmra.mrb[0].mxu0 %v8685
        %v8910 = vpop.f32.mrb[0].mxu0
        %v8911 = vadd.f32 %v8746, %v8910
        %v8912 = vpop.f32.mrb[0].mxu0
        %v8913 = vpop.f32.mrb[0].mxu0
        %v8914 = vadd.f32 %v8746, %v8913
        %v8915 = vpop.f32.mrb[0].mxu0
        %8916 = vmatprep.mubr.bf16.mxu0 %v8688
        %8917 = vmatmul.mubr.bf16.gmra.mrb[0].mxu0 %v8687
        %v8918 = vpop.f32.mrb[0].mxu0
        %v8919 = vadd.f32 %v8746, %v8918
        %v8920 = vpop.f32.mrb[0].mxu0
        %v8921 = vpop.f32.mrb[0].mxu0
        %v8922 = vadd.f32 %v8746, %v8921
        %v8923 = vpop.f32.mrb[0].mxu0
        %8924 = vmatprep.mubr.bf16.mxu0 %v8690
        %8925 = vmatmul.mubr.bf16.gmra.mrb[0].mxu0 %v8689
        %v8926 = vpop.f32.mrb[0].mxu0
        %v8927 = vadd.f32 %v8746, %v8926
        %v8928 = vpop.f32.mrb[0].mxu0
        %v8929 = vpop.f32.mrb[0].mxu0
        %v8930 = vadd.f32 %v8746, %v8929
        %v8931 = vpop.f32.mrb[0].mxu0
        %8932 = vmatprep.mubr.bf16.mxu0 %v8692
        %8933 = vmatmul.mubr.bf16.gmra.mrb[0].mxu0 %v8691
        %v8934 = vpop.f32.mrb[0].mxu0
        %v8935 = vadd.f32 %v8746, %v8934
        %v8936 = vpop.f32.mrb[0].mxu0
        %v8937 = vpop.f32.mrb[0].mxu0
        %v8938 = vadd.f32 %v8746, %v8937
        %v8939 = vpop.f32.mrb[0].mxu0
        %8940 = vmatprep.mubr.bf16.mxu0 %v8694
        %8941 = vmatmul.mubr.bf16.gmra.mrb[0].mxu0 %v8693
        %v8942 = vpop.f32.mrb[0].mxu0
        %v8943 = vadd.f32 %v8746, %v8942
        %v8944 = vpop.f32.mrb[0].mxu0
        %v8945 = vpop.f32.mrb[0].mxu0
        %v8946 = vadd.f32 %v8746, %v8945
        %v8947 = vpop.f32.mrb[0].mxu0
        %8948 = vmatprep.mubr.bf16.mxu0 %v8696
        %8949 = vmatmul.mubr.bf16.gmra.mrb[0].mxu0 %v8695
        %v8950 = vpop.f32.mrb[0].mxu0
        %v8951 = vadd.f32 %v8746, %v8950
        %v8952 = vpop.f32.mrb[0].mxu0
        %v8953 = vpop.f32.mrb[0].mxu0
        %v8954 = vadd.f32 %v8746, %v8953
        %v8955 = vpop.f32.mrb[0].mxu0
        %8956 = vmatprep.mubr.bf16.mxu0 %v8698
        %8957 = vmatmul.mubr.bf16.gmra.mrb[0].mxu0 %v8697
        %v8958 = vpop.f32.mrb[0].mxu0
        %v8959 = vadd.f32 %v8746, %v8958
        %v8960 = vpop.f32.mrb[0].mxu0
        %v8961 = vpop.f32.mrb[0].mxu0
        %v8962 = vadd.f32 %v8746, %v8961
        %v8963 = vpop.f32.mrb[0].mxu0
        %8964 = vmatprep.mubr.bf16.mxu0 %v8700
        %8965 = vmatmul.mubr.bf16.gmra.mrb[0].mxu0 %v8699
        %v8966 = vpop.f32.mrb[0].mxu0
        %v8967 = vadd.f32 %v8746, %v8966
        %v8968 = vpop.f32.mrb[0].mxu0
        %v8969 = vpop.f32.mrb[0].mxu0
        %v8970 = vadd.f32 %v8746, %v8969
        %v8971 = vpop.f32.mrb[0].mxu0
        %8972 = vmatprep.mubr.bf16.mxu0 %v8702
        %8973 = vmatmul.mubr.bf16.gmra.mrb[0].mxu0 %v8701
        %v8974 = vpop.f32.mrb[0].mxu0
        %v8975 = vadd.f32 %v8746, %v8974
        %v8976 = vpop.f32.mrb[0].mxu0
        %v8977 = vpop.f32.mrb[0].mxu0
        %v8978 = vadd.f32 %v8746, %v8977
        %v8979 = vpop.f32.mrb[0].mxu0
        %8980 = vmatprep.mubr.bf16.mxu0 %v8704
        %8981 = vmatmul.mubr.bf16.gmra.mrb[0].mxu0 %v8703
        %v8982 = vpop.f32.mrb[0].mxu0
        %v8983 = vadd.f32 %v8746, %v8982
        %v8984 = vpop.f32.mrb[0].mxu0
        %v8985 = vpop.f32.mrb[0].mxu0
        %v8986 = vadd.f32 %v8746, %v8985
        %v8987 = vpop.f32.mrb[0].mxu0
        %8988 = vmatprep.mubr.bf16.mxu0 %v8706
        %8989 = vmatmul.mubr.bf16.gmra.mrb[0].mxu0 %v8705
        %v8990 = vpop.f32.mrb[0].mxu0
        %v8991 = vadd.f32 %v8746, %v8990
        %v8992 = vpop.f32.mrb[0].mxu0
        %v8993 = vpop.f32.mrb[0].mxu0
        %v8994 = vadd.f32 %v8746, %v8993
        %v8995 = vpop.f32.mrb[0].mxu0
        %8996 = vmatprep.mubr.bf16.mxu0 %v8708
        %8997 = vmatmul.mubr.bf16.gmra.mrb[0].mxu0 %v8707
        %v8998 = vpop.f32.mrb[0].mxu0
        %v8999 = vadd.f32 %v8746, %v8998
        %v9000 = vpop.f32.mrb[0].mxu0
        %v9001 = vpop.f32.mrb[0].mxu0
        %v9002 = vadd.f32 %v8746, %v9001
        %v9003 = vpop.f32.mrb[0].mxu0
        %9004 = vdwg.mxu0
        %v9005 = vadd.f32 %v7546, %v8879
        %v9006 = vadd.f32 %v7547, %v8882
        %v9007 = vadd.f32 %v7548, %v8887
        %v9008 = vadd.f32 %v7549, %v8890
        %v9009 = vadd.f32 %v7550, %v8895
        %v9010 = vadd.f32 %v7551, %v8898
        %v9011 = vadd.f32 %v7552, %v8903
        %v9012 = vadd.f32 %v7553, %v8906
        %v9013 = vadd.f32 %v7554, %v8911
        %v9014 = vadd.f32 %v7555, %v8914
        %v9015 = vadd.f32 %v7556, %v8919
        %v9016 = vadd.f32 %v7557, %v8922
        %v9017 = vadd.f32 %v7558, %v8927
        %v9018 = vadd.f32 %v7559, %v8930
        %v9019 = vadd.f32 %v7560, %v8935
        %v9020 = vadd.f32 %v7561, %v8938
        %v9021 = vadd.f32 %v7562, %v8943
        %v9022 = vadd.f32 %v7563, %v8946
        %v9023 = vadd.f32 %v7564, %v8951
        %v9024 = vadd.f32 %v7565, %v8954
        %v9025 = vadd.f32 %v7566, %v8959
        %v9026 = vadd.f32 %v7567, %v8962
        %v9027 = vadd.f32 %v7568, %v8967
        %v9028 = vadd.f32 %v7569, %v8970
        %v9029 = vadd.f32 %v7570, %v8975
        %v9030 = vadd.f32 %v7571, %v8978
        %v9031 = vadd.f32 %v7572, %v8983
        %v9032 = vadd.f32 %v7573, %v8986
        %v9033 = vadd.f32 %v7574, %v8991
        %v9034 = vadd.f32 %v7575, %v8994
        %v9035 = vadd.f32 %v7576, %v8999
        %v9036 = vadd.f32 %v7577, %v9002
        %9037 = vst.msk [vmem:[#allocation2] sm:$0xff] %vm1476, %v9005
        %9038 = vst.msk [vmem:[#allocation2 + $0x8] sm:$0xff] %vm1476, %v9006
        %9039 = vst.msk [vmem:[#allocation2 + $0x10] sm:$0xff] %vm1476, %v9007
        %9040 = vst.msk [vmem:[#allocation2 + $0x18] sm:$0xff] %vm1476, %v9008
        %9041 = vst.msk [vmem:[#allocation2 + $0x20] sm:$0xff] %vm1476, %v9009
        %9042 = vst.msk [vmem:[#allocation2 + $0x28] sm:$0xff] %vm1476, %v9010
        %9043 = vst.msk [vmem:[#allocation2 + $0x30] sm:$0xff] %vm1476, %v9011
        %9044 = vst.msk [vmem:[#allocation2 + $0x38] sm:$0xff] %vm1476, %v9012
        %9045 = vst.msk [vmem:[#allocation2 + $0x40] sm:$0xff] %vm1476, %v9013
        %9046 = vst.msk [vmem:[#allocation2 + $0x48] sm:$0xff] %vm1476, %v9014
        %9047 = vst.msk [vmem:[#allocation2 + $0x50] sm:$0xff] %vm1476, %v9015
        %9048 = vst.msk [vmem:[#allocation2 + $0x58] sm:$0xff] %vm1476, %v9016
        %9049 = vst.msk [vmem:[#allocation2 + $0x60] sm:$0xff] %vm1476, %v9017
        %9050 = vst.msk [vmem:[#allocation2 + $0x68] sm:$0xff] %vm1476, %v9018
        %9051 = vst.msk [vmem:[#allocation2 + $0x70] sm:$0xff] %vm1476, %v9019
        %9052 = vst.msk [vmem:[#allocation2 + $0x78] sm:$0xff] %vm1476, %v9020
        %9053 = vst.msk [vmem:[#allocation2 + $0x80] sm:$0xff] %vm1476, %v9021
        %9054 = vst.msk [vmem:[#allocation2 + $0x88] sm:$0xff] %vm1476, %v9022
        %9055 = vst.msk [vmem:[#allocation2 + $0x90] sm:$0xff] %vm1476, %v9023
        %9056 = vst.msk [vmem:[#allocation2 + $0x98] sm:$0xff] %vm1476, %v9024
        %9057 = vst.msk [vmem:[#allocation2 + $0xa0] sm:$0xff] %vm1476, %v9025
        %9058 = vst.msk [vmem:[#allocation2 + $0xa8] sm:$0xff] %vm1476, %v9026
        %9059 = vst.msk [vmem:[#allocation2 + $0xb0] sm:$0xff] %vm1476, %v9027
        %9060 = vst.msk [vmem:[#allocation2 + $0xb8] sm:$0xff] %vm1476, %v9028
        %9061 = vst.msk [vmem:[#allocation2 + $0xc0] sm:$0xff] %vm1476, %v9029
        %9062 = vst.msk [vmem:[#allocation2 + $0xc8] sm:$0xff] %vm1476, %v9030
        %9063 = vst.msk [vmem:[#allocation2 + $0xd0] sm:$0xff] %vm1476, %v9031
        %9064 = vst.msk [vmem:[#allocation2 + $0xd8] sm:$0xff] %vm1476, %v9032
        %9065 = vst.msk [vmem:[#allocation2 + $0xe0] sm:$0xff] %vm1476, %v9033
        %9066 = vst.msk [vmem:[#allocation2 + $0xe8] sm:$0xff] %vm1476, %v9034
        %9067 = vst.msk [vmem:[#allocation2 + $0xf0] sm:$0xff] %vm1476, %v9035
        %9068 = vst.msk [vmem:[#allocation2 + $0xf8] sm:$0xff] %vm1476, %v9036
        %p9069 = scmp.eq.s32.totalorder %s56, 2
        // Predicated region
        $region157: #{tpu_custom_call.1} parent=83 // pred_check
          %p9070 = pneg %p9069
        $region158: #{tpu_custom_call.1} parent=83 // pred_check_branch
          %9072 = sbr.rel (%p9070) target = $region160
        $region159: #{tpu_custom_call.1} parent=83 // pred_region
          %v9073 = vpack.c.bf16 %v9006, %v9005
          %v9074 = vpack.c.bf16 %v9008, %v9007
          %v9075 = vpack.c.bf16 %v9010, %v9009
          %v9076 = vpack.c.bf16 %v9012, %v9011
          %v9077 = vpack.c.bf16 %v9014, %v9013
          %v9078 = vpack.c.bf16 %v9016, %v9015
          %v9079 = vpack.c.bf16 %v9018, %v9017
          %v9080 = vpack.c.bf16 %v9020, %v9019
          %v9081 = vpack.c.bf16 %v9022, %v9021
          %v9082 = vpack.c.bf16 %v9024, %v9023
          %v9083 = vpack.c.bf16 %v9026, %v9025
          %v9084 = vpack.c.bf16 %v9028, %v9027
          %v9085 = vpack.c.bf16 %v9030, %v9029
          %v9086 = vpack.c.bf16 %v9032, %v9031
          %v9087 = vpack.c.bf16 %v9034, %v9033
          %v9088 = vpack.c.bf16 %v9036, %v9035
          %v9105 = vunpack.c.l.b16 %v9073
          %v9106 = vunpack.c.h.b16 %v9073
          %v9107 = vunpack.c.l.b16 %v9074
          %v9108 = vunpack.c.h.b16 %v9074
          %v9109 = vunpack.c.l.b16 %v9075
          %v9110 = vunpack.c.h.b16 %v9075
          %v9111 = vunpack.c.l.b16 %v9076
          %v9112 = vunpack.c.h.b16 %v9076
          %v9113 = vunpack.c.l.b16 %v9077
          %v9114 = vunpack.c.h.b16 %v9077
          %v9115 = vunpack.c.l.b16 %v9078
          %v9116 = vunpack.c.h.b16 %v9078
          %v9117 = vunpack.c.l.b16 %v9079
          %v9118 = vunpack.c.h.b16 %v9079
          %v9119 = vunpack.c.l.b16 %v9080
          %v9120 = vunpack.c.h.b16 %v9080
          %v9121 = vunpack.c.l.b16 %v9081
          %v9122 = vunpack.c.h.b16 %v9081
          %v9123 = vunpack.c.l.b16 %v9082
          %v9124 = vunpack.c.h.b16 %v9082
          %v9125 = vunpack.c.l.b16 %v9083
          %v9126 = vunpack.c.h.b16 %v9083
          %v9127 = vunpack.c.l.b16 %v9084
          %v9128 = vunpack.c.h.b16 %v9084
          %v9129 = vunpack.c.l.b16 %v9085
          %v9130 = vunpack.c.h.b16 %v9085
          %v9131 = vunpack.c.l.b16 %v9086
          %v9132 = vunpack.c.h.b16 %v9086
          %v9133 = vunpack.c.l.b16 %v9087
          %v9134 = vunpack.c.h.b16 %v9087
          %v9135 = vunpack.c.l.b16 %v9088
          %v9136 = vunpack.c.h.b16 %v9088
          %v9137 = vpack.c.b16 %v9105, %v9105
          %v9138 = vpack.c.b16 %v9106, %v9106
          %v9139 = vpack.c.b16 %v9107, %v9107
          %v9140 = vpack.c.b16 %v9108, %v9108
          %v9141 = vpack.c.b16 %v9109, %v9109
          %v9142 = vpack.c.b16 %v9110, %v9110
          %v9143 = vpack.c.b16 %v9111, %v9111
          %v9144 = vpack.c.b16 %v9112, %v9112
          %v9145 = vpack.c.b16 %v9113, %v9113
          %v9146 = vpack.c.b16 %v9114, %v9114
          %v9147 = vpack.c.b16 %v9115, %v9115
          %v9148 = vpack.c.b16 %v9116, %v9116
          %v9149 = vpack.c.b16 %v9117, %v9117
          %v9150 = vpack.c.b16 %v9118, %v9118
          %v9151 = vpack.c.b16 %v9119, %v9119
          %v9152 = vpack.c.b16 %v9120, %v9120
          %v9153 = vpack.c.b16 %v9121, %v9121
          %v9154 = vpack.c.b16 %v9122, %v9122
          %v9155 = vpack.c.b16 %v9123, %v9123
          %v9156 = vpack.c.b16 %v9124, %v9124
          %v9157 = vpack.c.b16 %v9125, %v9125
          %v9158 = vpack.c.b16 %v9126, %v9126
          %v9159 = vpack.c.b16 %v9127, %v9127
          %v9160 = vpack.c.b16 %v9128, %v9128
          %v9161 = vpack.c.b16 %v9129, %v9129
          %v9162 = vpack.c.b16 %v9130, %v9130
          %v9163 = vpack.c.b16 %v9131, %v9131
          %v9164 = vpack.c.b16 %v9132, %v9132
          %v9165 = vpack.c.b16 %v9133, %v9133
          %v9166 = vpack.c.b16 %v9134, %v9134
          %v9167 = vpack.c.b16 %v9135, %v9135
          %v9168 = vpack.c.b16 %v9136, %v9136
          %vm9201 = vcmask 519168
          %9202 = vst.msk [vmem:[#allocation29] sm:$0xf] %vm9201, %v9137
          %9203 = vst.msk [vmem:[#allocation29 + $0x4] sm:$0xf] %vm9201, %v9138
          %9204 = vst.msk [vmem:[#allocation29 + $0x8] sm:$0xf] %vm9201, %v9139
          %9205 = vst.msk [vmem:[#allocation29 + $0xc] sm:$0xf] %vm9201, %v9140
          %9206 = vst.msk [vmem:[#allocation29 + $0x10] sm:$0xf] %vm9201, %v9141
          %9207 = vst.msk [vmem:[#allocation29 + $0x14] sm:$0xf] %vm9201, %v9142
          %9208 = vst.msk [vmem:[#allocation29 + $0x18] sm:$0xf] %vm9201, %v9143
          %9209 = vst.msk [vmem:[#allocation29 + $0x1c] sm:$0xf] %vm9201, %v9144
          %9210 = vst.msk [vmem:[#allocation29 + $0x20] sm:$0xf] %vm9201, %v9145
          %9211 = vst.msk [vmem:[#allocation29 + $0x24] sm:$0xf] %vm9201, %v9146
          %9212 = vst.msk [vmem:[#allocation29 + $0x28] sm:$0xf] %vm9201, %v9147
          %9213 = vst.msk [vmem:[#allocation29 + $0x2c] sm:$0xf] %vm9201, %v9148
          %9214 = vst.msk [vmem:[#allocation29 + $0x30] sm:$0xf] %vm9201, %v9149
          %9215 = vst.msk [vmem:[#allocation29 + $0x34] sm:$0xf] %vm9201, %v9150
          %9216 = vst.msk [vmem:[#allocation29 + $0x38] sm:$0xf] %vm9201, %v9151
          %9217 = vst.msk [vmem:[#allocation29 + $0x3c] sm:$0xf] %vm9201, %v9152
          %9218 = vst.msk [vmem:[#allocation29 + $0x40] sm:$0xf] %vm9201, %v9153
          %9219 = vst.msk [vmem:[#allocation29 + $0x44] sm:$0xf] %vm9201, %v9154
          %9220 = vst.msk [vmem:[#allocation29 + $0x48] sm:$0xf] %vm9201, %v9155
          %9221 = vst.msk [vmem:[#allocation29 + $0x4c] sm:$0xf] %vm9201, %v9156
          %9222 = vst.msk [vmem:[#allocation29 + $0x50] sm:$0xf] %vm9201, %v9157
          %9223 = vst.msk [vmem:[#allocation29 + $0x54] sm:$0xf] %vm9201, %v9158
          %9224 = vst.msk [vmem:[#allocation29 + $0x58] sm:$0xf] %vm9201, %v9159
          %9225 = vst.msk [vmem:[#allocation29 + $0x5c] sm:$0xf] %vm9201, %v9160
          %9226 = vst.msk [vmem:[#allocation29 + $0x60] sm:$0xf] %vm9201, %v9161
          %9227 = vst.msk [vmem:[#allocation29 + $0x64] sm:$0xf] %vm9201, %v9162
          %9228 = vst.msk [vmem:[#allocation29 + $0x68] sm:$0xf] %vm9201, %v9163
          %9229 = vst.msk [vmem:[#allocation29 + $0x6c] sm:$0xf] %vm9201, %v9164
          %9230 = vst.msk [vmem:[#allocation29 + $0x70] sm:$0xf] %vm9201, %v9165
          %9231 = vst.msk [vmem:[#allocation29 + $0x74] sm:$0xf] %vm9201, %v9166
          %9232 = vst.msk [vmem:[#allocation29 + $0x78] sm:$0xf] %vm9201, %v9167
          %9233 = vst.msk [vmem:[#allocation29 + $0x7c] sm:$0xf] %vm9201, %v9168
        $region160: #{tpu_custom_call.1} parent=83 // pred_fallthru
          _
        // Predicated region
        $region161: #{tpu_custom_call.1} parent=83 // pred_check
          %p9234 = pneg %p497
        $region162: #{tpu_custom_call.1} parent=83 // pred_check_branch
          %9236 = sbr.rel (%p9234) target = $region164
        $region163: #{tpu_custom_call.1} parent=83 // pred_region
          %s9237 = smul.u32 2, %s55
          %s9239 = ssub.s32 2048, 2048
          %9240 = vsyncadd [#allocation5], %s9239
          %s9241 = smul.addr %s9237, 16
          %s9242 = smul.addr %s9241, 64
          %s9243 = scalar_lea.hbm %s16, %s9242
          %s9244 = sshll.u32 [#allocation29], 4
          %s9245 = int_to_ptr.vmem [resolvable:$true] %s9244
          %9250 = dma.vmem_to_hbm [thread:$0]  %s9245, 2048, %s9243, [#allocation5], 64, 64, 4
        $region164: #{tpu_custom_call.1} parent=83 // pred_fallthru
          _
        // Predicated region
        $region165: #{tpu_custom_call.1} parent=83 // pred_check
          %p9251 = pneg %p497
        $region166: #{tpu_custom_call.1} parent=83 // pred_check_branch
          %9253 = sbr.rel (%p9251) target = $region168
        $region167: #{tpu_custom_call.1} parent=83 // pred_region
          %9254 = dma.done [#allocation5], 2048
        $region168: #{tpu_custom_call.1} parent=83 // pred_fallthru
          _
      $region84: #{tpu_custom_call.1} parent=5 // pred_fallthru
        _
      %p9255 = scmp.le.s32.totalorder 2, %s46
      // Predicated region
      $region169: #{tpu_custom_call.1} parent=5 // pred_check
        %p9256 = pneg %p9255
      $region170: #{tpu_custom_call.1} parent=5 // pred_check_branch
        %9258 = sbr.rel (%p9256) target = $region172
      $region171: #{tpu_custom_call.1} parent=5 // pred_region
        %s9259 = ssub.s32 %s46, 2
      $region172: #{tpu_custom_call.1} parent=5 // pred_fallthru
        _
    $region6: #{tpu_custom_call.1} parent=1 // loop_footer
      %s50 = sadd.s32 1, %s46
    $region7: #{tpu_custom_call.1} parent=1 // loop_footer_branch
      %45 = sbr.rel target = $region3
    $region8: #{tpu_custom_call.1} parent=1 // loop_exit
      _
    %9260 = vsyncpa [#allocation4], 1
    %s9261 = scalar_lea.sflag [#allocation4], 1
    %9262 = vsyncpa %s9261, 1
    %9263 = vsyncpa [#allocation7], 1
    %9264 = vsyncpa [#allocation10], 1
    %s9265 = scalar_lea.sflag [#allocation10], 1
    %9266 = vsyncpa %s9265, 1
    %9267 = vsyncpa [#allocation13], 1
    %s9268 = scalar_lea.sflag [#allocation13], 1
    %9269 = vsyncpa %s9268, 1
    %9270 = vsyncpa [#allocation16], 1
    %s9271 = scalar_lea.sflag [#allocation16], 1
    %9272 = vsyncpa %s9271, 1
    %9273 = vsyncpa [#allocation19], 1
    %s9274 = scalar_lea.sflag [#allocation19], 1
    %9275 = vsyncpa %s9274, 1
    %9276 = vsyncpa [#allocation22], 1
    %s9277 = scalar_lea.sflag [#allocation22], 1
    %9278 = vsyncpa %s9277, 1
    %9279 = vsyncpa [#allocation25], 1
    %s9280 = scalar_lea.sflag [#allocation25], 1
    %9281 = vsyncpa %s9280, 1
    %9282 = vsyncpa [#allocation28], 1
    %s9283 = scalar_lea.sflag [#allocation28], 1
    %9284 = vsyncpa %s9283, 1
    %9285 = vsyncpa [#allocation5], 1
    %s9286 = scalar_lea.sflag [#allocation5], 1
    %9287 = vsyncpa %s9286, 1

</llo_original>
